<compile_context>
chip_gen: v6e
topology: v6e:2x2x1
jax: 0.10.0
libtpu: 0.0.40
codegen_flags: <defaults>
</compile_context>

<pallas_src>
import functools

import jax
import jax.numpy as jnp
from jax.experimental import pallas as pl
from jax.experimental.pallas import tpu as pltpu

_LANE = 128


# ----------------------------------------------------------------- VMEM budget (per gen)

def _infer_vmem_limit():
    """~80% of per-core VMEM from get_tpu_info; conservative 48 MiB if unavailable."""
    cap = None
    try:
        cap = int(pltpu.get_tpu_info().vmem_capacity_bytes)
    except Exception:
        cap = None
    if cap is None or cap <= 0 or cap > (128 << 20):
        return 48 << 20                     # safe on v5e / v6e / v7x
    return max(32 << 20, int(cap * 0.8))


_VMEM_LIMIT = _infer_vmem_limit()


# ------------------------------------------------------------------ Buffered(1) probe

def _probe_single_buffer():
    """Return pl.Buffered(1) if this jax build supports single-buffering a BlockSpec
    (used for grid-invariant weight/scale operands), else None (graceful fallback)."""
    try:
        mode = pl.Buffered(1)

        def _copy(x_ref, o_ref):
            o_ref[...] = x_ref[...]

        fn = pl.pallas_call(
            _copy,
            out_shape=jax.ShapeDtypeStruct((8, _LANE), jnp.float32),
            grid=(1,),
            in_specs=[pl.BlockSpec((8, _LANE), lambda i: (0, 0), pipeline_mode=mode)],
            out_specs=pl.BlockSpec((8, _LANE), lambda i: (0, 0)),
        )
        jax.block_until_ready(fn(jnp.zeros((8, _LANE), jnp.float32)))
        return mode
    except Exception:   # older jax: no pipeline_mode / Buffered -> plain double buffering
        return None


_SINGLE_BUF = _probe_single_buffer()


def _const_spec(block_shape, index_map):
    """BlockSpec for an operand whose block index never changes across the grid.
    Single-buffer it when supported (no point double-buffering an invariant weight)."""
    if _SINGLE_BUF is not None:
        return pl.BlockSpec(block_shape, index_map, pipeline_mode=_SINGLE_BUF)
    return pl.BlockSpec(block_shape, index_map)


def _pad_lanes(c):
    """Round a channel count up to a multiple of 128 (min 128): lane-dense stores and
    128-aligned pack-column offsets everywhere."""
    return max(_LANE, ((c + _LANE - 1) // _LANE) * _LANE)


def _pick_row_tile(m, bytes_per_row, fixed_bytes):
    """Largest row tile that divides m and keeps the double-buffered blocks in budget."""
    budget = _VMEM_LIMIT - fixed_bytes
    for t in (2048, 1024, 512, 256, 128, 64, 32, 16, 8):
        if t <= m and m % t == 0 and 2 * t * bytes_per_row <= budget:
            return t
    return m


# ---------------------------------------------------------------- fused stride-1 kernel

def _fused_block_kernel(x_ref, s1_ref, b1_ref, w1_ref, s2_ref, b2_ref, w2_ref,
                        o_ref, o1p_ref, yp_ref, pack_ref, *, hh, ww, has_ws):
    """Whole BasicWideBlock (stride 1) for one image, entirely in VMEM.

    BN1+ReLU -> conv3x3 (one K-packed matmul) -> BN2+ReLU -> conv3x3 (one K-packed
    matmul, 1x1 shortcut folded in via K-concat) -> + identity.  Only x and the final
    output touch HBM.
    """
    cin_p = x_ref.shape[-1]
    cout_p = o_ref.shape[-1]
    ws_off = cin_p if has_ws else 0

    # ---- halo-only zeroing (interior is fully overwritten every step; zero each step
    #      so the pattern is safe under "parallel" megacore partitioning) -------------
    o1p_ref[0:1, :, :] = jnp.zeros((1, ww + 2, cin_p), jnp.float32)
    o1p_ref[hh + 1:hh + 2, :, :] = jnp.zeros((1, ww + 2, cin_p), jnp.float32)
    o1p_ref[:, 0:1, :] = jnp.zeros((hh + 2, 1, cin_p), jnp.float32)
    o1p_ref[:, ww + 1:ww + 2, :] = jnp.zeros((hh + 2, 1, cin_p), jnp.float32)
    yp_ref[0:1, :, :] = jnp.zeros((1, ww + 2, cout_p), jnp.float32)
    yp_ref[hh + 1:hh + 2, :, :] = jnp.zeros((1, ww + 2, cout_p), jnp.float32)
    yp_ref[:, 0:1, :] = jnp.zeros((hh + 2, 1, cout_p), jnp.float32)
    yp_ref[:, ww + 1:ww + 2, :] = jnp.zeros((hh + 2, 1, cout_p), jnp.float32)

    # ---- pre-activation: folded BN1 affine + ReLU ------------------------------------
    a1 = jnp.maximum(x_ref[...] * s1_ref[...] + b1_ref[...], 0.0)     # (hh, ww, cin_p)
    o1p_ref[1:hh + 1, 1:ww + 1, :] = a1
    if has_ws:
        # o1 is also the 1x1-shortcut operand: pre-place it in the leading pack columns
        # so the projection rides along in conv2's single matmul.
        pack_ref[:, 0:cin_p] = a1.reshape(hh * ww, cin_p).astype(jnp.bfloat16)

    # ---- conv1: pack 9 taps along K, then ONE matmul (K = 9*cin_p) -------------------
    for dw in range(3):
        sdw = o1p_ref[:, dw:dw + ww, :]                    # one unaligned slice per dw
        for dh in range(3):
            t = dh * 3 + dw
            col = ws_off + t * cin_p
            pack_ref[:, col:col + cin_p] = (
                sdw[dh:dh + hh].reshape(hh * ww, cin_p).astype(jnp.bfloat16))
    acc = jnp.dot(pack_ref[:, ws_off:ws_off + 9 * cin_p], w1_ref[...],
                  preferred_element_type=jnp.float32)               # (hh*ww, cout_p)

    # ---- BN2 + ReLU into the second padded scratch -----------------------------------
    y = jnp.maximum(acc * s2_ref[...] + b2_ref[...], 0.0)
    yp_ref[1:hh + 1, 1:ww + 1, :] = y.reshape(hh, ww, cout_p)

    # ---- conv2: pack 9 taps along K (after the optional ws columns), ONE matmul ------
    for dw in range(3):
        sdw = yp_ref[:, dw:dw + ww, :]
        for dh in range(3):
            t = dh * 3 + dw
            col = ws_off + t * cout_p
            pack_ref[:, col:col + cout_p] = (
                sdw[dh:dh + hh].reshape(hh * ww, cout_p).astype(jnp.bfloat16))
    k2 = ws_off + 9 * cout_p
    out = jnp.dot(pack_ref[:, 0:k2], w2_ref[...],
                  preferred_element_type=jnp.float32)                # (hh*ww, cout_p)

    if not has_ws:
        # identity shortcut (c_in == c_out): plain VPU add of the raw input.
        out = out + x_ref[...].reshape(hh * ww, cin_p)

    o_ref[...] = out.astype(o_ref.dtype)


def _call_fused_block(x_nhwc, s1, b1, w1_packed, s2, b2, w2_packed, *, has_ws, out_dtype):
    n, hh, ww, cin_p = x_nhwc.shape
    cout_p = w1_packed.shape[-1]
    ws_off = cin_p if has_ws else 0
    pack_w = ws_off + 9 * max(cin_p, cout_p)

    kernel = functools.partial(_fused_block_kernel, hh=hh, ww=ww, has_ws=has_ws)

    in_specs = [
        pl.BlockSpec((None, hh, ww, cin_p), lambda b: (b, 0, 0, 0)),  # x: one image/step
        _const_spec((1, 1, cin_p), lambda b: (0, 0, 0)),              # BN1 scale
        _const_spec((1, 1, cin_p), lambda b: (0, 0, 0)),              # BN1 shift
        _const_spec(w1_packed.shape, lambda b: (0, 0)),               # conv1 K-packed (bf16)
        _const_spec((1, cout_p), lambda b: (0, 0)),                   # BN2 scale
        _const_spec((1, cout_p), lambda b: (0, 0)),                   # BN2 shift
        _const_spec(w2_packed.shape, lambda b: (0, 0)),               # conv2 [+ws] (bf16)
    ]

    rows = n * hh * ww
    flops = 2 * rows * cout_p * (9 * cin_p + 9 * cout_p + ws_off)
    out_bytes = rows * cout_p * jnp.dtype(out_dtype).itemsize
    bytes_accessed = (x_nhwc.size * 4 + out_bytes
                      + w1_packed.size * 2 + w2_packed.size * 2)

    return pl.pallas_call(
        kernel,
        out_shape=jax.ShapeDtypeStruct((n, hh * ww, cout_p), out_dtype),
        grid=(n,),
        in_specs=in_specs,
        out_specs=pl.BlockSpec((None, hh * ww, cout_p), lambda b: (b, 0, 0)),
        scratch_shapes=[
            pltpu.VMEM((hh + 2, ww + 2, cin_p), jnp.float32),    # padded relu(bn1(x))
            pltpu.VMEM((hh + 2, ww + 2, cout_p), jnp.float32),   # padded relu(bn2(conv1))
            pltpu.VMEM((hh * ww, pack_w), jnp.bfloat16),         # K-packed taps (+ ws cols)
        ],
        compiler_params=pltpu.CompilerParams(
            dimension_semantics=("parallel",),     # images shard across v7x's 2 TCs
            vmem_limit_bytes=_VMEM_LIMIT,
        ),
        cost_estimate=pl.CostEstimate(flops=int(flops), transcendentals=0,
                                      bytes_accessed=int(bytes_accessed)),
    )(x_nhwc, s1, b1, w1_packed, s2, b2, w2_packed)


# -------------------------------------------------------- fallback (strided) kernels

def _matmul_bn_relu_kernel(p_ref, w_ref, s_ref, b_ref, o_ref):
    # conv (im2col matmul, bf16 inputs) -> BN affine -> ReLU, f32 accumulation, bf16 out.
    acc = jnp.dot(p_ref[...], w_ref[...], preferred_element_type=jnp.float32)
    o_ref[...] = jnp.maximum(acc * s_ref[...] + b_ref[...], 0.0).astype(o_ref.dtype)


def _matmul_kernel(p_ref, w_ref, o_ref):
    # conv2 + 1x1-shortcut fused into a single matmul via K-concatenation in the wrapper.
    o_ref[...] = jnp.dot(p_ref[...], w_ref[...], preferred_element_type=jnp.float32)


def _matmul_add_kernel(p_ref, w_ref, s_ref, o_ref):
    # conv2 + identity shortcut: VPU add.
    o_ref[...] = (jnp.dot(p_ref[...], w_ref[...], preferred_element_type=jnp.float32)
                  + s_ref[...])


def _call_matmul_bn_relu(p_bf16, w_bf16, scale, shift):
    m, k = p_bf16.shape
    cout = w_bf16.shape[1]
    w_copies = 1 if _SINGLE_BUF is not None else 2
    tm = _pick_row_tile(m, bytes_per_row=k * 2 + cout * 2,
                        fixed_bytes=w_copies * k * cout * 2 + 4 * cout * 4)
    ce = pl.CostEstimate(flops=int(2 * m * k * cout), transcendentals=0,
                         bytes_accessed=int(p_bf16.size * 2 + w_bf16.size * 2
                                            + m * cout * 2))
    return pl.pallas_call(
        _matmul_bn_relu_kernel,
        out_shape=jax.ShapeDtypeStruct((m, cout), jnp.bfloat16),
        grid=(m // tm,),
        in_specs=[
            pl.BlockSpec((tm, k), lambda i: (i, 0)),
            _const_spec((k, cout), lambda i: (0, 0)),
            _const_spec((1, cout), lambda i: (0, 0)),
            _const_spec((1, cout), lambda i: (0, 0)),
        ],
        out_specs=pl.BlockSpec((tm, cout), lambda i: (i, 0)),
        compiler_params=pltpu.CompilerParams(
            dimension_semantics=("parallel",), vmem_limit_bytes=_VMEM_LIMIT),
        cost_estimate=ce,
    )(p_bf16, w_bf16, scale, shift)


def _call_matmul(p_bf16, w_bf16):
    m, k = p_bf16.shape
    cout = w_bf16.shape[1]
    w_copies = 1 if _SINGLE_BUF is not None else 2
    tm = _pick_row_tile(m, bytes_per_row=k * 2 + cout * 4,
                        fixed_bytes=w_copies * k * cout * 2)
    ce = pl.CostEstimate(flops=int(2 * m * k * cout), transcendentals=0,
                         bytes_accessed=int(p_bf16.size * 2 + w_bf16.size * 2
                                            + m * cout * 4))
    return pl.pallas_call(
        _matmul_kernel,
        out_shape=jax.ShapeDtypeStruct((m, cout), jnp.float32),
        grid=(m // tm,),
        in_specs=[pl.BlockSpec((tm, k), lambda i: (i, 0)),
                  _const_spec((k, cout), lambda i: (0, 0))],
        out_specs=pl.BlockSpec((tm, cout), lambda i: (i, 0)),
        compiler_params=pltpu.CompilerParams(
            dimension_semantics=("parallel",), vmem_limit_bytes=_VMEM_LIMIT),
        cost_estimate=ce,
    )(p_bf16, w_bf16)


def _call_matmul_add(p_bf16, w_bf16, shortcut_f32):
    m, k = p_bf16.shape
    cout = w_bf16.shape[1]
    w_copies = 1 if _SINGLE_BUF is not None else 2
    tm = _pick_row_tile(m, bytes_per_row=k * 2 + 2 * cout * 4,
                        fixed_bytes=w_copies * k * cout * 2)
    ce = pl.CostEstimate(flops=int(2 * m * k * cout), transcendentals=0,
                         bytes_accessed=int(p_bf16.size * 2 + w_bf16.size * 2
                                            + 2 * m * cout * 4))
    return pl.pallas_call(
        _matmul_add_kernel,
        out_shape=jax.ShapeDtypeStruct((m, cout), jnp.float32),
        grid=(m // tm,),
        in_specs=[pl.BlockSpec((tm, k), lambda i: (i, 0)),
                  _const_spec((k, cout), lambda i: (0, 0)),
                  pl.BlockSpec((tm, cout), lambda i: (i, 0))],
        out_specs=pl.BlockSpec((tm, cout), lambda i: (i, 0)),
        compiler_params=pltpu.CompilerParams(
            dimension_semantics=("parallel",), vmem_limit_bytes=_VMEM_LIMIT),
        cost_estimate=ce,
    )(p_bf16, w_bf16, shortcut_f32)


# ------------------------------------------------------- glue (layout / im2col / BN)

def _im2col_3x3(x_pad, stride):
    # x_pad: (N, H+2, W+2, C), zero-padded by 1 on H and W.  Keeps the input dtype (bf16).
    n, hp, wp, c = x_pad.shape
    ho = (hp - 3) // stride + 1
    wo = (wp - 3) // stride + 1
    taps = []
    for dh in range(3):
        for dw in range(3):
            taps.append(jax.lax.slice(
                x_pad,
                (0, dh, dw, 0),
                (n, dh + (ho - 1) * stride + 1, dw + (wo - 1) * stride + 1, c),
                (1, stride, stride, 1)))
    p = jnp.stack(taps, axis=3)                      # (N, Ho, Wo, 9, C), tap = dh*3+dw
    return p.reshape(n * ho * wo, 9 * c), ho, wo


def _fold_bn(gamma, beta, mean, var, eps=1e-5):
    scale = gamma / jnp.sqrt(var + eps)
    shift = beta - mean * scale
    return scale, shift


def basic_wide_block_forward(x_nchw, params, stride, *, out_layout="nchw",
                             out_dtype=jnp.float32):
    """Forward pass of BasicWideBlock (eval-mode BN, dropout=0).

    out_layout="nchw" (default): NCHW output, module-faithful.
    out_layout="nhwc_padded": lane-padded NHWC output (fused path only) so chained
    blocks can skip the transpose / channel-strip / f32 writeback passes.
    """
    n, c_in, h, w = x_nchw.shape
    c_out = params["w1"].shape[0]
    has_ws = "ws" in params
    if not has_ws:
        # identity shortcut is only shape-valid when the spatial size is preserved.
        assert stride == 1, "BasicWideBlock: identity shortcut requires stride == 1"

    x = jnp.transpose(x_nchw, (0, 2, 3, 1)).astype(jnp.float32)        # NHWC

    s1, b1 = _fold_bn(params["bn1_gamma"], params["bn1_beta"],
                      params["bn1_mean"], params["bn1_var"])
    s2, b2 = _fold_bn(params["bn2_gamma"], params["bn2_beta"],
                      params["bn2_mean"], params["bn2_var"])

    w1 = jnp.transpose(params["w1"], (2, 3, 1, 0))                     # (3,3,cin,cout)
    w2 = jnp.transpose(params["w2"], (2, 3, 1, 0))                     # (3,3,cout,cout)

    fused_ok = (stride == 1) and (h % 8 == 0) and (w % 8 == 0)
    if fused_ok:
        # ------- fully fused path: no HBM im2col, one matmul per conv ----------------
        cin_p, cout_p = _pad_lanes(c_in), _pad_lanes(c_out)
        x_p = jnp.pad(x, ((0, 0), (0, 0), (0, 0), (0, cin_p - c_in)))
        s1_p = jnp.pad(s1, (0, cin_p - c_in)).reshape(1, 1, cin_p)
        b1_p = jnp.pad(b1, (0, cin_p - c_in)).reshape(1, 1, cin_p)
        s2_p = jnp.pad(s2, (0, cout_p - c_out)).reshape(1, cout_p)
        b2_p = jnp.pad(b2, (0, cout_p - c_out)).reshape(1, cout_p)
        # conv weights K-packed to match the in-kernel pack layout (K = tap*C + c).
        w1_packed = jnp.pad(w1.reshape(9, c_in, c_out),
                            ((0, 0), (0, cin_p - c_in), (0, cout_p - c_out))
                            ).reshape(9 * cin_p, cout_p).astype(jnp.bfloat16)
        w2_packed = jnp.pad(w2.reshape(9, c_out, c_out),
                            ((0, 0), (0, cout_p - c_out), (0, cout_p - c_out))
                            ).reshape(9 * cout_p, cout_p).astype(jnp.bfloat16)
        if has_ws:
            ws_2d = jnp.transpose(params["ws"][:, :, 0, 0], (1, 0))    # (cin, cout)
            ws_p = jnp.pad(ws_2d, ((0, cin_p - c_in), (0, cout_p - c_out))
                           ).astype(jnp.bfloat16)
            # 1x1 shortcut folded into conv2's contraction (K-concat).
            w2_packed = jnp.concatenate([ws_p, w2_packed], axis=0)

        out3d = _call_fused_block(x_p, s1_p, b1_p, w1_packed, s2_p, b2_p, w2_packed,
                                  has_ws=has_ws, out_dtype=out_dtype)
        out = out3d.reshape(n, h, w, cout_p)
        if out_layout == "nhwc_padded":
            return out
        return jnp.transpose(out[:, :, :, :c_out], (0, 3, 1, 2))       # back to NCHW

    assert out_layout == "nchw", "nhwc_padded output only supported on the fused path"

    # ------- fallback path (strided conv): im2col matmuls in bf16 --------------------
    # Pre-activation is fused (by XLA) into the im2col producer; patches are
    # materialized directly in bf16 -- half the HBM write+read of the biggest tensor.
    o1 = jnp.maximum(x * s1.reshape(1, 1, 1, c_in) + b1.reshape(1, 1, 1, c_in), 0.0)
    o1_b = o1.astype(jnp.bfloat16)

    p1, ho, wo = _im2col_3x3(jnp.pad(o1_b, ((0, 0), (1, 1), (1, 1), (0, 0))), stride)
    w1_2d = w1.reshape(9 * c_in, c_out).astype(jnp.bfloat16)
    y = _call_matmul_bn_relu(p1, w1_2d, s2.reshape(1, c_out), b2.reshape(1, c_out))
    y = y.reshape(n, ho, wo, c_out)                                     # bf16

    # (dropout p = 0.0 -> Dropout layer absent in the torch module)

    p2, _, _ = _im2col_3x3(jnp.pad(y, ((0, 0), (1, 1), (1, 1), (0, 0))), 1)
    w2_2d = w2.reshape(9 * c_out, c_out).astype(jnp.bfloat16)
    if has_ws:
        # fuse the 1x1 shortcut into the same MXU pass: concatenate along K.
        sc_in = o1_b[:, ::stride, ::stride, :].reshape(n * ho * wo, c_in)
        ws_2d = jnp.transpose(params["ws"][:, :, 0, 0], (1, 0)).astype(jnp.bfloat16)
        out2d = _call_matmul(jnp.concatenate([p2, sc_in], axis=1),
                             jnp.concatenate([w2_2d, ws_2d], axis=0))
    else:
        out2d = _call_matmul_add(p2, w2_2d, x.reshape(n * h * w, c_in))
    out = out2d.reshape(n, ho, wo, c_out)
    return jnp.transpose(out, (0, 3, 1, 2))                            # back to NCHW


# ---------------------------------------------------------------- reference & demo

def _ref_forward(x, params, stride):
    eps = 1e-5

    def bn(v, g, b, m, var):
        s = g / jnp.sqrt(var + eps)
        return v * s[None, :, None, None] + (b - m * s)[None, :, None, None]

    dn = ("NCHW", "OIHW", "NCHW")
    o1 = jax.nn.relu(bn(x, params["bn1_gamma"], params["bn1_beta"],
                        params["bn1_mean"], params["bn1_var"]))
    o = jax.lax.conv_general_dilated(o1, params["w1"], (stride, stride),
                                     ((1, 1), (1, 1)), dimension_numbers=dn)
    o = jax.nn.relu(bn(o, params["bn2_gamma"], params["bn2_beta"],
                       params["bn2_mean"], params["bn2_var"]))
    o = jax.lax.conv_general_dilated(o, params["w2"], (1, 1),
                                     ((1, 1), (1, 1)), dimension_numbers=dn)
    if "ws" in params:
        sc = jax.lax.conv_general_dilated(o1, params["ws"], (stride, stride),
                                          ((0, 0), (0, 0)), dimension_numbers=dn)
    else:
        sc = x
    return o + sc


def _make_params(key, c_in, c_out):
    ks = jax.random.split(key, 11)
    p = {
        "bn1_gamma": 1.0 + 0.1 * jax.random.normal(ks[0], (c_in,), jnp.float32),
        "bn1_beta": 0.1 * jax.random.normal(ks[1], (c_in,), jnp.float32),
        "bn1_mean": 0.05 * jax.random.normal(ks[2], (c_in,), jnp.float32),
        "bn1_var": 0.5 + 0.5 * jnp.abs(jax.random.normal(ks[3], (c_in,), jnp.float32)),
        "w1": jax.random.normal(ks[4], (c_out, c_in, 3, 3), jnp.float32)
              * (2.0 / (9 * c_in)) ** 0.5,
        "bn2_gamma": 1.0 + 0.1 * jax.random.normal(ks[5], (c_out,), jnp.float32),
        "bn2_beta": 0.1 * jax.random.normal(ks[6], (c_out,), jnp.float32),
        "bn2_mean": 0.05 * jax.random.normal(ks[7], (c_out,), jnp.float32),
        "bn2_var": 0.5 + 0.5 * jnp.abs(jax.random.normal(ks[8], (c_out,), jnp.float32)),
        "w2": jax.random.normal(ks[9], (c_out, c_out, 3, 3), jnp.float32)
              * (2.0 / (9 * c_out)) ** 0.5,
    }
    if c_in != c_out:
        p["ws"] = (jax.random.normal(ks[10], (c_out, c_in, 1, 1), jnp.float32)
                   * (2.0 / c_in) ** 0.5)
    return p


if __name__ == "__main__":
    root = jax.random.PRNGKey(0)
    cases = [
        ("fused / 1x1 projection shortcut", 4, 8, 1),
        ("fused / identity shortcut",       8, 8, 1),
        ("strided fallback / 1x1 shortcut", 4, 8, 2),
    ]
    for idx, (name, c_in, c_out, stride) in enumerate(cases):
        kp, kx = jax.random.split(jax.random.fold_in(root, idx))
        params = _make_params(kp, c_in, c_out)
        x = jax.random.normal(kx, (2, c_in, 16, 16), jnp.float32)

        out = jax.block_until_ready(basic_wide_block_forward(x, params, stride))
        ref = _ref_forward(x, params, stride)

        ho = (16 - 1) // stride + 1
        assert out.shape == (2, c_out, ho, ho), (name, out.shape)
        assert bool(jnp.all(jnp.isfinite(out))), name
        rel = float(jnp.max(jnp.abs(out - ref)) / (jnp.max(jnp.abs(ref)) + 1e-6))
        assert rel < 0.08, (name, rel)   # bf16 matmul inputs -> loose tolerance

    # chained-block layout: padded-NHWC bf16 output (skips transpose/strip/f32 writeback)
    kp, kx = jax.random.split(jax.random.fold_in(root, 99))
    params = _make_params(kp, 8, 8)
    x = jax.random.normal(kx, (2, 8, 16, 16), jnp.float32)
    out_nhwc = jax.block_until_ready(
        basic_wide_block_forward(x, params, 1, out_layout="nhwc_padded",
                                 out_dtype=jnp.bfloat16))
    assert out_nhwc.shape == (2, 16, 16, 128), out_nhwc.shape
    ref = _ref_forward(x, params, 1)
    got = jnp.transpose(out_nhwc[:, :, :, :8].astype(jnp.float32), (0, 3, 1, 2))
    rel = float(jnp.max(jnp.abs(got - ref)) / (jnp.max(jnp.abs(ref)) + 1e-6))
    assert rel < 0.1, rel

    print("KERNEL_OK")
</pallas_src>

<mosaic_0001>
module attributes {stable_mosaic.version = 11 : i64} {
  func.func @_copy(%arg0: i32, %arg1: memref<8x128xf32, #tpu.memory_space<vmem>>, %arg2: memref<8x128xf32, #tpu.memory_space<vmem>>) attributes {dimension_semantics = [#tpu.dimension_semantics<arbitrary>], iteration_bounds = array<i64: 1>, scalar_prefetch = 0 : i64, scratch_operands = 0 : i64, tpu.core_type = #tpu.core_type<tc>, window_params = [{pipeline_mode = #tpu.pipeline_mode<synchronous>, transform_indices = @transform_0, window_bounds = array<i64: 8, 128>}, {pipeline_mode = #tpu.pipeline_mode<synchronous>, transform_indices = @transform_1, window_bounds = array<i64: 8, 128>}]} {
    %c0 = arith.constant 0 : index
    %c0_0 = arith.constant 0 : index
    %0 = vector.load %arg1[%c0, %c0_0] : memref<8x128xf32, #tpu.memory_space<vmem>>, vector<8x128xf32>
    %c0_1 = arith.constant 0 : index
    %c0_2 = arith.constant 0 : index
    %1 = vector.load %arg2[%c0_1, %c0_2] : memref<8x128xf32, #tpu.memory_space<vmem>>, vector<8x128xf32>
    tpu.vector_store %arg2[%c0_1, %c0_2], %0 {strides = array<i32>} : memref<8x128xf32, #tpu.memory_space<vmem>>, vector<8x128xf32>,
    return
  }
  func.func @transform_0(%arg0: i32) -> (i32, i32) {
    %c0_i32 = arith.constant 0 : i32
    %c0_i32_0 = arith.constant 0 : i32
    %c0_i32_1 = arith.constant 0 : i32
    return %c0_i32, %c0_i32_0 : i32, i32
  }
  func.func @transform_1(%arg0: i32) -> (i32, i32) {
    %c0_i32 = arith.constant 0 : i32
    %c0_i32_0 = arith.constant 0 : i32
    %c0_i32_1 = arith.constant 0 : i32
    return %c0_i32, %c0_i32_0 : i32, i32
  }
}

module attributes {stable_mosaic.version = 11 : i64} {
  func.func @_fused_block_kernel(%arg0: i32, %arg1: memref<1x16x16x128xf32, #tpu.memory_space<vmem>>, %arg2: memref<1x1x128xf32, #tpu.memory_space<vmem>>, %arg3: memref<1x1x128xf32, #tpu.memory_space<vmem>>, %arg4: memref<1152x128xbf16, #tpu.memory_space<vmem>>, %arg5: memref<1x128xf32, #tpu.memory_space<vmem>>, %arg6: memref<1x128xf32, #tpu.memory_space<vmem>>, %arg7: memref<1280x128xbf16, #tpu.memory_space<vmem>>, %arg8: memref<1x256x128xf32, #tpu.memory_space<vmem>>, %arg9: memref<18x18x128xf32, #tpu.memory_space<vmem>>, %arg10: memref<18x18x128xf32, #tpu.memory_space<vmem>>, %arg11: memref<256x1280xbf16, #tpu.memory_space<vmem>>) attributes {dimension_semantics = [#tpu.dimension_semantics<parallel>], iteration_bounds = array<i64: 2>, scalar_prefetch = 0 : i64, scratch_operands = 3 : i64, tpu.core_type = #tpu.core_type<tc>, window_params = [{transform_indices = @transform_0, window_bounds = array<i64: 1, 16, 16, 128>}, {pipeline_mode = #tpu.pipeline_mode<synchronous>, transform_indices = @transform_1, window_bounds = array<i64: 1, 1, 128>}, {pipeline_mode = #tpu.pipeline_mode<synchronous>, transform_indices = @transform_2, window_bounds = array<i64: 1, 1, 128>}, {pipeline_mode = #tpu.pipeline_mode<synchronous>, transform_indices = @transform_3, window_bounds = array<i64: 1152, 128>}, {pipeline_mode = #tpu.pipeline_mode<synchronous>, transform_indices = @transform_4, window_bounds = array<i64: 1, 128>}, {pipeline_mode = #tpu.pipeline_mode<synchronous>, transform_indices = @transform_5, window_bounds = array<i64: 1, 128>}, {pipeline_mode = #tpu.pipeline_mode<synchronous>, transform_indices = @transform_6, window_bounds = array<i64: 1280, 128>}, {transform_indices = @transform_7, window_bounds = array<i64: 1, 256, 128>}]} {
    %cst = arith.constant 0.000000e+00 : f32
    %0 = vector.broadcast %cst : f32 to vector<1x18x128xf32>
    %c0 = arith.constant 0 : index
    %c0_0 = arith.constant 0 : index
    %c0_1 = arith.constant 0 : index
    %1 = vector.load %arg9[%c0, %c0_0, %c0_1] : memref<18x18x128xf32, #tpu.memory_space<vmem>>, vector<1x18x128xf32>
    tpu.vector_store %arg9[%c0, %c0_0, %c0_1], %0 {strides = array<i32>} : memref<18x18x128xf32, #tpu.memory_space<vmem>>, vector<1x18x128xf32>,
    %cst_2 = arith.constant 0.000000e+00 : f32
    %2 = vector.broadcast %cst_2 : f32 to vector<1x18x128xf32>
    %c17 = arith.constant 17 : index
    %c0_3 = arith.constant 0 : index
    %c0_4 = arith.constant 0 : index
    %3 = vector.load %arg9[%c17, %c0_3, %c0_4] : memref<18x18x128xf32, #tpu.memory_space<vmem>>, vector<1x18x128xf32>
    tpu.vector_store %arg9[%c17, %c0_3, %c0_4], %2 {strides = array<i32>} : memref<18x18x128xf32, #tpu.memory_space<vmem>>, vector<1x18x128xf32>,
    %cst_5 = arith.constant 0.000000e+00 : f32
    %4 = vector.broadcast %cst_5 : f32 to vector<18x1x128xf32>
    %c0_6 = arith.constant 0 : index
    %c0_7 = arith.constant 0 : index
    %c0_8 = arith.constant 0 : index
    %5 = vector.load %arg9[%c0_6, %c0_7, %c0_8] : memref<18x18x128xf32, #tpu.memory_space<vmem>>, vector<18x1x128xf32>
    tpu.vector_store %arg9[%c0_6, %c0_7, %c0_8], %4 {strides = array<i32>} : memref<18x18x128xf32, #tpu.memory_space<vmem>>, vector<18x1x128xf32>,
    %cst_9 = arith.constant 0.000000e+00 : f32
    %6 = vector.broadcast %cst_9 : f32 to vector<18x1x128xf32>
    %c0_10 = arith.constant 0 : index
    %c17_11 = arith.constant 17 : index
    %c0_12 = arith.constant 0 : index
    %7 = vector.load %arg9[%c0_10, %c17_11, %c0_12] : memref<18x18x128xf32, #tpu.memory_space<vmem>>, vector<18x1x128xf32>
    tpu.vector_store %arg9[%c0_10, %c17_11, %c0_12], %6 {strides = array<i32>} : memref<18x18x128xf32, #tpu.memory_space<vmem>>, vector<18x1x128xf32>,
    %cst_13 = arith.constant 0.000000e+00 : f32
    %8 = vector.broadcast %cst_13 : f32 to vector<1x18x128xf32>
    %c0_14 = arith.constant 0 : index
    %c0_15 = arith.constant 0 : index
    %c0_16 = arith.constant 0 : index
    %9 = vector.load %arg10[%c0_14, %c0_15, %c0_16] : memref<18x18x128xf32, #tpu.memory_space<vmem>>, vector<1x18x128xf32>
    tpu.vector_store %arg10[%c0_14, %c0_15, %c0_16], %8 {strides = array<i32>} : memref<18x18x128xf32, #tpu.memory_space<vmem>>, vector<1x18x128xf32>,
    %cst_17 = arith.constant 0.000000e+00 : f32
    %10 = vector.broadcast %cst_17 : f32 to vector<1x18x128xf32>
    %c17_18 = arith.constant 17 : index
    %c0_19 = arith.constant 0 : index
    %c0_20 = arith.constant 0 : index
    %11 = vector.load %arg10[%c17_18, %c0_19, %c0_20] : memref<18x18x128xf32, #tpu.memory_space<vmem>>, vector<1x18x128xf32>
    tpu.vector_store %arg10[%c17_18, %c0_19, %c0_20], %10 {strides = array<i32>} : memref<18x18x128xf32, #tpu.memory_space<vmem>>, vector<1x18x128xf32>,
    %cst_21 = arith.constant 0.000000e+00 : f32
    %12 = vector.broadcast %cst_21 : f32 to vector<18x1x128xf32>
    %c0_22 = arith.constant 0 : index
    %c0_23 = arith.constant 0 : index
    %c0_24 = arith.constant 0 : index
    %13 = vector.load %arg10[%c0_22, %c0_23, %c0_24] : memref<18x18x128xf32, #tpu.memory_space<vmem>>, vector<18x1x128xf32>
    tpu.vector_store %arg10[%c0_22, %c0_23, %c0_24], %12 {strides = array<i32>} : memref<18x18x128xf32, #tpu.memory_space<vmem>>, vector<18x1x128xf32>,
    %cst_25 = arith.constant 0.000000e+00 : f32
    %14 = vector.broadcast %cst_25 : f32 to vector<18x1x128xf32>
    %c0_26 = arith.constant 0 : index
    %c17_27 = arith.constant 17 : index
    %c0_28 = arith.constant 0 : index
    %15 = vector.load %arg10[%c0_26, %c17_27, %c0_28] : memref<18x18x128xf32, #tpu.memory_space<vmem>>, vector<18x1x128xf32>
    tpu.vector_store %arg10[%c0_26, %c17_27, %c0_28], %14 {strides = array<i32>} : memref<18x18x128xf32, #tpu.memory_space<vmem>>, vector<18x1x128xf32>,
    %c0_29 = arith.constant 0 : index
    %c0_30 = arith.constant 0 : index
    %c0_31 = arith.constant 0 : index
    %c0_32 = arith.constant 0 : index
    %16 = vector.load %arg1[%c0_29, %c0_30, %c0_31, %c0_32] : memref<1x16x16x128xf32, #tpu.memory_space<vmem>>, vector<1x16x16x128xf32>
    %17 = vector.shape_cast %16 : vector<1x16x16x128xf32> to vector<16x16x128xf32>
    %c0_33 = arith.constant 0 : index
    %c0_34 = arith.constant 0 : index
    %c0_35 = arith.constant 0 : index
    %18 = vector.load %arg2[%c0_33, %c0_34, %c0_35] : memref<1x1x128xf32, #tpu.memory_space<vmem>>, vector<1x1x128xf32>
    %19 = vector.broadcast %18 : vector<1x1x128xf32> to vector<16x16x128xf32>
    %20 = arith.mulf %17, %19 : vector<16x16x128xf32>
    %c0_36 = arith.constant 0 : index
    %c0_37 = arith.constant 0 : index
    %c0_38 = arith.constant 0 : index
    %21 = vector.load %arg3[%c0_36, %c0_37, %c0_38] : memref<1x1x128xf32, #tpu.memory_space<vmem>>, vector<1x1x128xf32>
    %22 = vector.broadcast %21 : vector<1x1x128xf32> to vector<16x16x128xf32>
    %23 = arith.addf %20, %22 : vector<16x16x128xf32>
    %cst_39 = arith.constant 0.000000e+00 : f32
    %24 = vector.broadcast %cst_39 : f32 to vector<16x16x128xf32>
    %25 = arith.maximumf %23, %24 : vector<16x16x128xf32>
    %c1 = arith.constant 1 : index
    %c1_40 = arith.constant 1 : index
    %c0_41 = arith.constant 0 : index
    %26 = vector.load %arg9[%c1, %c1_40, %c0_41] : memref<18x18x128xf32, #tpu.memory_space<vmem>>, vector<16x16x128xf32>
    tpu.vector_store %arg9[%c1, %c1_40, %c0_41], %25 {strides = array<i32>} : memref<18x18x128xf32, #tpu.memory_space<vmem>>, vector<16x16x128xf32>,
    %27 = vector.shape_cast %25 : vector<16x16x128xf32> to vector<256x128xf32>
    %28 = arith.truncf %27 : vector<256x128xf32> to vector<256x128xbf16>
    %c0_42 = arith.constant 0 : index
    %c0_43 = arith.constant 0 : index
    %29 = vector.load %arg11[%c0_42, %c0_43] : memref<256x1280xbf16, #tpu.memory_space<vmem>>, vector<256x128xbf16>
    tpu.vector_store %arg11[%c0_42, %c0_43], %28 {strides = array<i32>} : memref<256x1280xbf16, #tpu.memory_space<vmem>>, vector<256x128xbf16>,
    %c0_44 = arith.constant 0 : index
    %c0_45 = arith.constant 0 : index
    %c0_46 = arith.constant 0 : index
    %30 = vector.load %arg9[%c0_44, %c0_45, %c0_46] : memref<18x18x128xf32, #tpu.memory_space<vmem>>, vector<18x16x128xf32>
    %31 = vector.extract_strided_slice %30 {offsets = [0, 0, 0], sizes = [16, 16, 128], strides = [1, 1, 1]} : vector<18x16x128xf32> to vector<16x16x128xf32>
    %32 = vector.shape_cast %31 : vector<16x16x128xf32> to vector<256x128xf32>
    %33 = arith.truncf %32 : vector<256x128xf32> to vector<256x128xbf16>
    %c0_47 = arith.constant 0 : index
    %c128 = arith.constant 128 : index
    %34 = vector.load %arg11[%c0_47, %c128] : memref<256x1280xbf16, #tpu.memory_space<vmem>>, vector<256x128xbf16>
    tpu.vector_store %arg11[%c0_47, %c128], %33 {strides = array<i32>} : memref<256x1280xbf16, #tpu.memory_space<vmem>>, vector<256x128xbf16>,
    %35 = vector.extract_strided_slice %30 {offsets = [1, 0, 0], sizes = [16, 16, 128], strides = [1, 1, 1]} : vector<18x16x128xf32> to vector<16x16x128xf32>
    %36 = vector.shape_cast %35 : vector<16x16x128xf32> to vector<256x128xf32>
    %37 = arith.truncf %36 : vector<256x128xf32> to vector<256x128xbf16>
    %c0_48 = arith.constant 0 : index
    %c512 = arith.constant 512 : index
    %38 = vector.load %arg11[%c0_48, %c512] : memref<256x1280xbf16, #tpu.memory_space<vmem>>, vector<256x128xbf16>
    tpu.vector_store %arg11[%c0_48, %c512], %37 {strides = array<i32>} : memref<256x1280xbf16, #tpu.memory_space<vmem>>, vector<256x128xbf16>,
    %39 = vector.extract_strided_slice %30 {offsets = [2, 0, 0], sizes = [16, 16, 128], strides = [1, 1, 1]} : vector<18x16x128xf32> to vector<16x16x128xf32>
    %40 = vector.shape_cast %39 : vector<16x16x128xf32> to vector<256x128xf32>
    %41 = arith.truncf %40 : vector<256x128xf32> to vector<256x128xbf16>
    %c0_49 = arith.constant 0 : index
    %c896 = arith.constant 896 : index
    %42 = vector.load %arg11[%c0_49, %c896] : memref<256x1280xbf16, #tpu.memory_space<vmem>>, vector<256x128xbf16>
    tpu.vector_store %arg11[%c0_49, %c896], %41 {strides = array<i32>} : memref<256x1280xbf16, #tpu.memory_space<vmem>>, vector<256x128xbf16>,
    %c0_50 = arith.constant 0 : index
    %c1_51 = arith.constant 1 : index
    %c0_52 = arith.constant 0 : index
    %43 = vector.load %arg9[%c0_50, %c1_51, %c0_52] : memref<18x18x128xf32, #tpu.memory_space<vmem>>, vector<18x16x128xf32>
    %44 = vector.extract_strided_slice %43 {offsets = [0, 0, 0], sizes = [16, 16, 128], strides = [1, 1, 1]} : vector<18x16x128xf32> to vector<16x16x128xf32>
    %45 = vector.shape_cast %44 : vector<16x16x128xf32> to vector<256x128xf32>
    %46 = arith.truncf %45 : vector<256x128xf32> to vector<256x128xbf16>
    %c0_53 = arith.constant 0 : index
    %c256 = arith.constant 256 : index
    %47 = vector.load %arg11[%c0_53, %c256] : memref<256x1280xbf16, #tpu.memory_space<vmem>>, vector<256x128xbf16>
    tpu.vector_store %arg11[%c0_53, %c256], %46 {strides = array<i32>} : memref<256x1280xbf16, #tpu.memory_space<vmem>>, vector<256x128xbf16>,
    %48 = vector.extract_strided_slice %43 {offsets = [1, 0, 0], sizes = [16, 16, 128], strides = [1, 1, 1]} : vector<18x16x128xf32> to vector<16x16x128xf32>
    %49 = vector.shape_cast %48 : vector<16x16x128xf32> to vector<256x128xf32>
    %50 = arith.truncf %49 : vector<256x128xf32> to vector<256x128xbf16>
    %c0_54 = arith.constant 0 : index
    %c640 = arith.constant 640 : index
    %51 = vector.load %arg11[%c0_54, %c640] : memref<256x1280xbf16, #tpu.memory_space<vmem>>, vector<256x128xbf16>
    tpu.vector_store %arg11[%c0_54, %c640], %50 {strides = array<i32>} : memref<256x1280xbf16, #tpu.memory_space<vmem>>, vector<256x128xbf16>,
    %52 = vector.extract_strided_slice %43 {offsets = [2, 0, 0], sizes = [16, 16, 128], strides = [1, 1, 1]} : vector<18x16x128xf32> to vector<16x16x128xf32>
    %53 = vector.shape_cast %52 : vector<16x16x128xf32> to vector<256x128xf32>
    %54 = arith.truncf %53 : vector<256x128xf32> to vector<256x128xbf16>
    %c0_55 = arith.constant 0 : index
    %c1024 = arith.constant 1024 : index
    %55 = vector.load %arg11[%c0_55, %c1024] : memref<256x1280xbf16, #tpu.memory_space<vmem>>, vector<256x128xbf16>
    tpu.vector_store %arg11[%c0_55, %c1024], %54 {strides = array<i32>} : memref<256x1280xbf16, #tpu.memory_space<vmem>>, vector<256x128xbf16>,
    %c0_56 = arith.constant 0 : index
    %c2 = arith.constant 2 : index
    %c0_57 = arith.constant 0 : index
    %56 = vector.load %arg9[%c0_56, %c2, %c0_57] : memref<18x18x128xf32, #tpu.memory_space<vmem>>, vector<18x16x128xf32>
    %57 = vector.extract_strided_slice %56 {offsets = [0, 0, 0], sizes = [16, 16, 128], strides = [1, 1, 1]} : vector<18x16x128xf32> to vector<16x16x128xf32>
    %58 = vector.shape_cast %57 : vector<16x16x128xf32> to vector<256x128xf32>
    %59 = arith.truncf %58 : vector<256x128xf32> to vector<256x128xbf16>
    %c0_58 = arith.constant 0 : index
    %c384 = arith.constant 384 : index
    %60 = vector.load %arg11[%c0_58, %c384] : memref<256x1280xbf16, #tpu.memory_space<vmem>>, vector<256x128xbf16>
    tpu.vector_store %arg11[%c0_58, %c384], %59 {strides = array<i32>} : memref<256x1280xbf16, #tpu.memory_space<vmem>>, vector<256x128xbf16>,
    %61 = vector.extract_strided_slice %56 {offsets = [1, 0, 0], sizes = [16, 16, 128], strides = [1, 1, 1]} : vector<18x16x128xf32> to vector<16x16x128xf32>
    %62 = vector.shape_cast %61 : vector<16x16x128xf32> to vector<256x128xf32>
    %63 = arith.truncf %62 : vector<256x128xf32> to vector<256x128xbf16>
    %c0_59 = arith.constant 0 : index
    %c768 = arith.constant 768 : index
    %64 = vector.load %arg11[%c0_59, %c768] : memref<256x1280xbf16, #tpu.memory_space<vmem>>, vector<256x128xbf16>
    tpu.vector_store %arg11[%c0_59, %c768], %63 {strides = array<i32>} : memref<256x1280xbf16, #tpu.memory_space<vmem>>, vector<256x128xbf16>,
    %65 = vector.extract_strided_slice %56 {offsets = [2, 0, 0], sizes = [16, 16, 128], strides = [1, 1, 1]} : vector<18x16x128xf32> to vector<16x16x128xf32>
    %66 = vector.shape_cast %65 : vector<16x16x128xf32> to vector<256x128xf32>
    %67 = arith.truncf %66 : vector<256x128xf32> to vector<256x128xbf16>
    %c0_60 = arith.constant 0 : index
    %c1152 = arith.constant 1152 : index
    %68 = vector.load %arg11[%c0_60, %c1152] : memref<256x1280xbf16, #tpu.memory_space<vmem>>, vector<256x128xbf16>
    tpu.vector_store %arg11[%c0_60, %c1152], %67 {strides = array<i32>} : memref<256x1280xbf16, #tpu.memory_space<vmem>>, vector<256x128xbf16>,
    %c0_61 = arith.constant 0 : index
    %c128_62 = arith.constant 128 : index
    %69 = vector.load %arg11[%c0_61, %c128_62] : memref<256x1280xbf16, #tpu.memory_space<vmem>>, vector<256x1152xbf16>
    %c0_63 = arith.constant 0 : index
    %c0_64 = arith.constant 0 : index
    %70 = vector.load %arg4[%c0_63, %c0_64] : memref<1152x128xbf16, #tpu.memory_space<vmem>>, vector<1152x128xbf16>
    %cst_65 = arith.constant dense<0.000000e+00> : vector<256x128xf32>
    %71 = tpu.matmul %69, %70, %cst_65 {dimension_numbers = #tpu.dot_dimension_numbers<[1], [0], [0], [1], [0, 0, 1, 1], [], []>} : vector<256x1152xbf16>, vector<1152x128xbf16>, vector<256x128xf32> -> vector<256x128xf32>
    %c0_66 = arith.constant 0 : index
    %c0_67 = arith.constant 0 : index
    %72 = vector.load %arg5[%c0_66, %c0_67] : memref<1x128xf32, #tpu.memory_space<vmem>>, vector<1x128xf32>
    %73 = vector.broadcast %72 : vector<1x128xf32> to vector<256x128xf32>
    %74 = arith.mulf %71, %73 : vector<256x128xf32>
    %c0_68 = arith.constant 0 : index
    %c0_69 = arith.constant 0 : index
    %75 = vector.load %arg6[%c0_68, %c0_69] : memref<1x128xf32, #tpu.memory_space<vmem>>, vector<1x128xf32>
    %76 = vector.broadcast %75 : vector<1x128xf32> to vector<256x128xf32>
    %77 = arith.addf %74, %76 : vector<256x128xf32>
    %cst_70 = arith.constant 0.000000e+00 : f32
    %78 = vector.broadcast %cst_70 : f32 to vector<256x128xf32>
    %79 = arith.maximumf %77, %78 : vector<256x128xf32>
    %80 = vector.shape_cast %79 : vector<256x128xf32> to vector<16x16x128xf32>
    %c1_71 = arith.constant 1 : index
    %c1_72 = arith.constant 1 : index
    %c0_73 = arith.constant 0 : index
    %81 = vector.load %arg10[%c1_71, %c1_72, %c0_73] : memref<18x18x128xf32, #tpu.memory_space<vmem>>, vector<16x16x128xf32>
    tpu.vector_store %arg10[%c1_71, %c1_72, %c0_73], %80 {strides = array<i32>} : memref<18x18x128xf32, #tpu.memory_space<vmem>>, vector<16x16x128xf32>,
    %c0_74 = arith.constant 0 : index
    %c0_75 = arith.constant 0 : index
    %c0_76 = arith.constant 0 : index
    %82 = vector.load %arg10[%c0_74, %c0_75, %c0_76] : memref<18x18x128xf32, #tpu.memory_space<vmem>>, vector<18x16x128xf32>
    %83 = vector.extract_strided_slice %82 {offsets = [0, 0, 0], sizes = [16, 16, 128], strides = [1, 1, 1]} : vector<18x16x128xf32> to vector<16x16x128xf32>
    %84 = vector.shape_cast %83 : vector<16x16x128xf32> to vector<256x128xf32>
    %85 = arith.truncf %84 : vector<256x128xf32> to vector<256x128xbf16>
    %c0_77 = arith.constant 0 : index
    %c128_78 = arith.constant 128 : index
    %86 = vector.load %arg11[%c0_77, %c128_78] : memref<256x1280xbf16, #tpu.memory_space<vmem>>, vector<256x128xbf16>
    tpu.vector_store %arg11[%c0_77, %c128_78], %85 {strides = array<i32>} : memref<256x1280xbf16, #tpu.memory_space<vmem>>, vector<256x128xbf16>,
    %87 = vector.extract_strided_slice %82 {offsets = [1, 0, 0], sizes = [16, 16, 128], strides = [1, 1, 1]} : vector<18x16x128xf32> to vector<16x16x128xf32>
    %88 = vector.shape_cast %87 : vector<16x16x128xf32> to vector<256x128xf32>
    %89 = arith.truncf %88 : vector<256x128xf32> to vector<256x128xbf16>
    %c0_79 = arith.constant 0 : index
    %c512_80 = arith.constant 512 : index
    %90 = vector.load %arg11[%c0_79, %c512_80] : memref<256x1280xbf16, #tpu.memory_space<vmem>>, vector<256x128xbf16>
    tpu.vector_store %arg11[%c0_79, %c512_80], %89 {strides = array<i32>} : memref<256x1280xbf16, #tpu.memory_space<vmem>>, vector<256x128xbf16>,
    %91 = vector.extract_strided_slice %82 {offsets = [2, 0, 0], sizes = [16, 16, 128], strides = [1, 1, 1]} : vector<18x16x128xf32> to vector<16x16x128xf32>
    %92 = vector.shape_cast %91 : vector<16x16x128xf32> to vector<256x128xf32>
    %93 = arith.truncf %92 : vector<256x128xf32> to vector<256x128xbf16>
    %c0_81 = arith.constant 0 : index
    %c896_82 = arith.constant 896 : index
    %94 = vector.load %arg11[%c0_81, %c896_82] : memref<256x1280xbf16, #tpu.memory_space<vmem>>, vector<256x128xbf16>
    tpu.vector_store %arg11[%c0_81, %c896_82], %93 {strides = array<i32>} : memref<256x1280xbf16, #tpu.memory_space<vmem>>, vector<256x128xbf16>,
    %c0_83 = arith.constant 0 : index
    %c1_84 = arith.constant 1 : index
    %c0_85 = arith.constant 0 : index
    %95 = vector.load %arg10[%c0_83, %c1_84, %c0_85] : memref<18x18x128xf32, #tpu.memory_space<vmem>>, vector<18x16x128xf32>
    %96 = vector.extract_strided_slice %95 {offsets = [0, 0, 0], sizes = [16, 16, 128], strides = [1, 1, 1]} : vector<18x16x128xf32> to vector<16x16x128xf32>
    %97 = vector.shape_cast %96 : vector<16x16x128xf32> to vector<256x128xf32>
    %98 = arith.truncf %97 : vector<256x128xf32> to vector<256x128xbf16>
    %c0_86 = arith.constant 0 : index
    %c256_87 = arith.constant 256 : index
    %99 = vector.load %arg11[%c0_86, %c256_87] : memref<256x1280xbf16, #tpu.memory_space<vmem>>, vector<256x128xbf16>
    tpu.vector_store %arg11[%c0_86, %c256_87], %98 {strides = array<i32>} : memref<256x1280xbf16, #tpu.memory_space<vmem>>, vector<256x128xbf16>,
    %100 = vector.extract_strided_slice %95 {offsets = [1, 0, 0], sizes = [16, 16, 128], strides = [1, 1, 1]} : vector<18x16x128xf32> to vector<16x16x128xf32>
    %101 = vector.shape_cast %100 : vector<16x16x128xf32> to vector<256x128xf32>
    %102 = arith.truncf %101 : vector<256x128xf32> to vector<256x128xbf16>
    %c0_88 = arith.constant 0 : index
    %c640_89 = arith.constant 640 : index
    %103 = vector.load %arg11[%c0_88, %c640_89] : memref<256x1280xbf16, #tpu.memory_space<vmem>>, vector<256x128xbf16>
    tpu.vector_store %arg11[%c0_88, %c640_89], %102 {strides = array<i32>} : memref<256x1280xbf16, #tpu.memory_space<vmem>>, vector<256x128xbf16>,
    %104 = vector.extract_strided_slice %95 {offsets = [2, 0, 0], sizes = [16, 16, 128], strides = [1, 1, 1]} : vector<18x16x128xf32> to vector<16x16x128xf32>
    %105 = vector.shape_cast %104 : vector<16x16x128xf32> to vector<256x128xf32>
    %106 = arith.truncf %105 : vector<256x128xf32> to vector<256x128xbf16>
    %c0_90 = arith.constant 0 : index
    %c1024_91 = arith.constant 1024 : index
    %107 = vector.load %arg11[%c0_90, %c1024_91] : memref<256x1280xbf16, #tpu.memory_space<vmem>>, vector<256x128xbf16>
    tpu.vector_store %arg11[%c0_90, %c1024_91], %106 {strides = array<i32>} : memref<256x1280xbf16, #tpu.memory_space<vmem>>, vector<256x128xbf16>,
    %c0_92 = arith.constant 0 : index
    %c2_93 = arith.constant 2 : index
    %c0_94 = arith.constant 0 : index
    %108 = vector.load %arg10[%c0_92, %c2_93, %c0_94] : memref<18x18x128xf32, #tpu.memory_space<vmem>>, vector<18x16x128xf32>
    %109 = vector.extract_strided_slice %108 {offsets = [0, 0, 0], sizes = [16, 16, 128], strides = [1, 1, 1]} : vector<18x16x128xf32> to vector<16x16x128xf32>
    %110 = vector.shape_cast %109 : vector<16x16x128xf32> to vector<256x128xf32>
    %111 = arith.truncf %110 : vector<256x128xf32> to vector<256x128xbf16>
    %c0_95 = arith.constant 0 : index
    %c384_96 = arith.constant 384 : index
    %112 = vector.load %arg11[%c0_95, %c384_96] : memref<256x1280xbf16, #tpu.memory_space<vmem>>, vector<256x128xbf16>
    tpu.vector_store %arg11[%c0_95, %c384_96], %111 {strides = array<i32>} : memref<256x1280xbf16, #tpu.memory_space<vmem>>, vector<256x128xbf16>,
    %113 = vector.extract_strided_slice %108 {offsets = [1, 0, 0], sizes = [16, 16, 128], strides = [1, 1, 1]} : vector<18x16x128xf32> to vector<16x16x128xf32>
    %114 = vector.shape_cast %113 : vector<16x16x128xf32> to vector<256x128xf32>
    %115 = arith.truncf %114 : vector<256x128xf32> to vector<256x128xbf16>
    %c0_97 = arith.constant 0 : index
    %c768_98 = arith.constant 768 : index
    %116 = vector.load %arg11[%c0_97, %c768_98] : memref<256x1280xbf16, #tpu.memory_space<vmem>>, vector<256x128xbf16>
    tpu.vector_store %arg11[%c0_97, %c768_98], %115 {strides = array<i32>} : memref<256x1280xbf16, #tpu.memory_space<vmem>>, vector<256x128xbf16>,
    %117 = vector.extract_strided_slice %108 {offsets = [2, 0, 0], sizes = [16, 16, 128], strides = [1, 1, 1]} : vector<18x16x128xf32> to vector<16x16x128xf32>
    %118 = vector.shape_cast %117 : vector<16x16x128xf32> to vector<256x128xf32>
    %119 = arith.truncf %118 : vector<256x128xf32> to vector<256x128xbf16>
    %c0_99 = arith.constant 0 : index
    %c1152_100 = arith.constant 1152 : index
    %120 = vector.load %arg11[%c0_99, %c1152_100] : memref<256x1280xbf16, #tpu.memory_space<vmem>>, vector<256x128xbf16>
    tpu.vector_store %arg11[%c0_99, %c1152_100], %119 {strides = array<i32>} : memref<256x1280xbf16, #tpu.memory_space<vmem>>, vector<256x128xbf16>,
    %c0_101 = arith.constant 0 : index
    %c0_102 = arith.constant 0 : index
    %121 = vector.load %arg11[%c0_101, %c0_102] : memref<256x1280xbf16, #tpu.memory_space<vmem>>, vector<256x1280xbf16>
    %c0_103 = arith.constant 0 : index
    %c0_104 = arith.constant 0 : index
    %122 = vector.load %arg7[%c0_103, %c0_104] : memref<1280x128xbf16, #tpu.memory_space<vmem>>, vector<1280x128xbf16>
    %cst_105 = arith.constant dense<0.000000e+00> : vector<256x128xf32>
    %123 = tpu.matmul %121, %122, %cst_105 {dimension_numbers = #tpu.dot_dimension_numbers<[1], [0], [0], [1], [0, 0, 1, 1], [], []>} : vector<256x1280xbf16>, vector<1280x128xbf16>, vector<256x128xf32> -> vector<256x128xf32>
    %c0_106 = arith.constant 0 : index
    %c0_107 = arith.constant 0 : index
    %c0_108 = arith.constant 0 : index
    %124 = vector.load %arg8[%c0_106, %c0_107, %c0_108] : memref<1x256x128xf32, #tpu.memory_space<vmem>>, vector<1x256x128xf32>
    %125 = vector.shape_cast %124 : vector<1x256x128xf32> to vector<256x128xf32>
    %126 = vector.shape_cast %123 : vector<256x128xf32> to vector<1x256x128xf32>
    tpu.vector_store %arg8[%c0_106, %c0_107, %c0_108], %126 {strides = array<i32>} : memref<1x256x128xf32, #tpu.memory_space<vmem>>, vector<1x256x128xf32>,
    return
  }
  func.func @transform_0(%arg0: i32) -> (i32, i32, i32, i32) {
    %c0_i32 = arith.constant 0 : i32
    %c0_i32_0 = arith.constant 0 : i32
    %c0_i32_1 = arith.constant 0 : i32
    %c0_i32_2 = arith.constant 0 : i32
    return %arg0, %c0_i32, %c0_i32_0, %c0_i32_1 : i32, i32, i32, i32
  }
  func.func @transform_1(%arg0: i32) -> (i32, i32, i32) {
    %c0_i32 = arith.constant 0 : i32
    %c0_i32_0 = arith.constant 0 : i32
    %c0_i32_1 = arith.constant 0 : i32
    %c0_i32_2 = arith.constant 0 : i32
    return %c0_i32, %c0_i32_0, %c0_i32_1 : i32, i32, i32
  }
  func.func @transform_2(%arg0: i32) -> (i32, i32, i32) {
    %c0_i32 = arith.constant 0 : i32
    %c0_i32_0 = arith.constant 0 : i32
    %c0_i32_1 = arith.constant 0 : i32
    %c0_i32_2 = arith.constant 0 : i32
    return %c0_i32, %c0_i32_0, %c0_i32_1 : i32, i32, i32
  }
  func.func @transform_3(%arg0: i32) -> (i32, i32) {
    %c0_i32 = arith.constant 0 : i32
    %c0_i32_0 = arith.constant 0 : i32
    %c0_i32_1 = arith.constant 0 : i32
    return %c0_i32, %c0_i32_0 : i32, i32
  }
  func.func @transform_4(%arg0: i32) -> (i32, i32) {
    %c0_i32 = arith.constant 0 : i32
    %c0_i32_0 = arith.constant 0 : i32
    %c0_i32_1 = arith.constant 0 : i32
    return %c0_i32, %c0_i32_0 : i32, i32
  }
  func.func @transform_5(%arg0: i32) -> (i32, i32) {
    %c0_i32 = arith.constant 0 : i32
    %c0_i32_0 = arith.constant 0 : i32
    %c0_i32_1 = arith.constant 0 : i32
    return %c0_i32, %c0_i32_0 : i32, i32
  }
  func.func @transform_6(%arg0: i32) -> (i32, i32) {
    %c0_i32 = arith.constant 0 : i32
    %c0_i32_0 = arith.constant 0 : i32
    %c0_i32_1 = arith.constant 0 : i32
    return %c0_i32, %c0_i32_0 : i32, i32
  }
  func.func @transform_7(%arg0: i32) -> (i32, i32, i32) {
    %c0_i32 = arith.constant 0 : i32
    %c0_i32_0 = arith.constant 0 : i32
    %c0_i32_1 = arith.constant 0 : i32
    return %arg0, %c0_i32, %c0_i32_0 : i32, i32, i32
  }
}

</mosaic_0001>

<llo_original>
// kernel: tpu_custom_call.1
$region0: #{tpu_custom_call.1}
  #allocation0 [shape = 'u32[]', space=smem, size = 0x4, offset = 0x4, fixed_abs, tag = 'smem constant byte address 0x4 - core index']
  #allocation1 [shape = 'u32[144,128]{1,0:T(1,128)}', space=vmem, size = 0x12000, scoped, tag = 'internal scratch']
  %s0 = inlined_call_operand.hbm [shape: f32[8,128], index: 0, kind: input, shape index: {}]
  %s1 = inlined_call_operand.hbm [shape: f32[8,128], index: 1, kind: output, shape index: {}]
  %s2 = sld [smem:[#allocation0]]
  $region18: #{tpu_custom_call.1} parent=0
    _
  %s4 = ssub.s32 1, %s2
  %s5 = scalar_select 0, %s4, %s2
  $region1: #{tpu_custom_call.1} parent=0
    #allocation2 [shape = 'u8[4096]{0}', space=vmem, size = 0x1000, scoped, tag = 'input window, operand 0, single buffered']
    #allocation3 [shape = 's32[1]{0}', space=sflag, size = 0x4, scoped, tag = 'scoped memory for tpu_custom_call.1']
    #allocation4 [shape = 's32[1]{0}', space=sflag, size = 0x4, scoped, tag = 'scoped memory for tpu_custom_call.1']
    #allocation5 [shape = 'u8[4096]{0}', space=vmem, size = 0x1000, scoped, tag = 'output window, operand 0, single buffered']
    %6 = vsyncpa [#allocation3], 0
    %7 = vsyncpa [#allocation4], 0
    // Predicated region
    $region2: #{tpu_custom_call.1} parent=1 // pred_check
      _
    $region3: #{tpu_custom_call.1} parent=1 // pred_check_branch
      %9 = sbr.rel (0) target = $region5
    $region4: #{tpu_custom_call.1} parent=1 // pred_region
      %s11 = ssub.s32 128, 128
      %12 = vsyncadd [#allocation3], %s11
      %s14 = sshll.u32 [#allocation2], 4
      %s15 = int_to_ptr.vmem [resolvable:$true] %s14
      %17 = dma.hbm_to_vmem [thread:$0]  %s0, 128, %s15, [#allocation3]
    $region5: #{tpu_custom_call.1} parent=1 // pred_fallthru
      _
    // Predicated region
    $region6: #{tpu_custom_call.1} parent=1 // pred_check
      _
    $region7: #{tpu_custom_call.1} parent=1 // pred_check_branch
      %19 = sbr.rel (0) target = $region9
    $region8: #{tpu_custom_call.1} parent=1 // pred_region
      %20 = dma.done [#allocation3], 128
    $region9: #{tpu_custom_call.1} parent=1 // pred_fallthru
      _
    %v21 = vld [vmem:[#allocation2] sm:$0xff]
    %22 = vst [vmem:[#allocation5] sm:$0xff] %v21
    // Predicated region
    $region10: #{tpu_custom_call.1} parent=1 // pred_check
      _
    $region11: #{tpu_custom_call.1} parent=1 // pred_check_branch
      %24 = sbr.rel (0) target = $region13
    $region12: #{tpu_custom_call.1} parent=1 // pred_region
      %s26 = ssub.s32 128, 128
      %27 = vsyncadd [#allocation4], %s26
      %s29 = sshll.u32 [#allocation5], 4
      %s30 = int_to_ptr.vmem [resolvable:$true] %s29
      %32 = dma.vmem_to_hbm [thread:$0]  %s30, 128, %s1, [#allocation4]
    $region13: #{tpu_custom_call.1} parent=1 // pred_fallthru
      _
    // Predicated region
    $region14: #{tpu_custom_call.1} parent=1 // pred_check
      _
    $region15: #{tpu_custom_call.1} parent=1 // pred_check_branch
      %34 = sbr.rel (0) target = $region17
    $region16: #{tpu_custom_call.1} parent=1 // pred_region
      %35 = dma.done [#allocation4], 128
    $region17: #{tpu_custom_call.1} parent=1 // pred_fallthru
      _
    %36 = vsyncpa [#allocation3], 1
    %37 = vsyncpa [#allocation4], 1

// kernel: tpu_custom_call.1
$region0: #{tpu_custom_call.1}
  #allocation0 [shape = 'u32[]', space=smem, size = 0x4, offset = 0x4, fixed_abs, tag = 'smem constant byte address 0x4 - core index']
  #allocation1 [shape = 'u32[144,128]{1,0:T(1,128)}', space=vmem, size = 0x12000, scoped, tag = 'internal scratch']
  #allocation2 [shape = 'f32[18,18,128]{2,1,0:T(8,128)}', space=vmem, size = 0x36000, scoped, tag = 'scratch operand']
  #allocation3 [shape = 'f32[18,18,128]{2,1,0:T(8,128)}', space=vmem, size = 0x36000, scoped, tag = 'scratch operand']
  #allocation4 [shape = 'bf16[256,1280]{1,0:T(8,128)(2,1)}', space=vmem, size = 0xa0000, scoped, tag = 'scratch operand']
  %s0 = inlined_call_operand.hbm [shape: f32[2,16,16,128], index: 0, kind: input, shape index: {}]
  %s1 = inlined_call_operand.vmem [shape: f32[1,1,128], index: 1, kind: input, shape index: {}]
  %s2 = inlined_call_operand.vmem [shape: f32[1,1,128], index: 2, kind: input, shape index: {}]
  %s3 = inlined_call_operand.hbm [shape: bf16[1152,128], index: 3, kind: input, shape index: {}]
  %s4 = inlined_call_operand.vmem [shape: f32[1,128], index: 4, kind: input, shape index: {}]
  %s5 = inlined_call_operand.vmem [shape: f32[1,128], index: 5, kind: input, shape index: {}]
  %s6 = inlined_call_operand.hbm [shape: bf16[1280,128], index: 6, kind: input, shape index: {}]
  %s7 = inlined_call_operand.hbm [shape: f32[2,256,128], index: 7, kind: output, shape index: {}]
  %s8 = sld [smem:[#allocation0]]
  $region73: #{tpu_custom_call.1} parent=0
    _
  %s10 = ssub.s32 1, %s8
  %s11 = scalar_select 0, %s10, %s8
  $region1: #{tpu_custom_call.1} parent=0
    #allocation5 [shape = 'u8[262144]{0}', space=vmem, size = 0x40000, scoped, tag = 'input window, operand 0']
    #allocation6 [shape = 's32[2]{0}', space=sflag, size = 0x8, scoped, tag = 'scoped memory for tpu_custom_call.1']
    #allocation7 [shape = 's32[2]{0}', space=sflag, size = 0x8, scoped, tag = 'scoped memory for tpu_custom_call.1']
    #allocation8 [shape = 'u8[294912]{0}', space=vmem, size = 0x48000, scoped, tag = 'input window, operand 3, single buffered']
    #allocation9 [shape = 's32[1]{0}', space=sflag, size = 0x4, scoped, tag = 'scoped memory for tpu_custom_call.1']
    #allocation10 [shape = 'u8[327680]{0}', space=vmem, size = 0x50000, scoped, tag = 'input window, operand 6, single buffered']
    #allocation11 [shape = 'u8[262144]{0}', space=vmem, size = 0x40000, scoped, tag = 'output window, operand 0']
    %12 = vsyncpa [#allocation6], 0
    %s13 = scalar_lea.sflag [#allocation6], 1
    %14 = vsyncpa %s13, 0
    %15 = vsyncpa [#allocation9], 0
    %16 = vsyncpa [#allocation7], 0
    %s17 = scalar_lea.sflag [#allocation7], 1
    %18 = vsyncpa %s17, 0
    loop: start=0, step=1, limit=4
    $region2: #{tpu_custom_call.1} parent=1 // loop_pre_header
      _
    $region3: #{tpu_custom_call.1} parent=1 // loop_header
      %s20 = sphi 0, %s24
      %p21 = scmp.ge.s32.totalorder %s20, 4
      %s30 = sphi 0, %s32
      %s33 = sphi 0, %s30
      %s34 = sphi 0, %s33
      %s50 = sphi 0, %s34
      %s54 = sphi 0, %s54
      %s56 = sphi 0, %s54
      %s57 = sphi 0, %s56
      %s71 = sphi 0, %s57
      %s75 = sphi 0, %s75
      %s77 = sphi 0, %s75
      %s78 = sphi 0, %s77
      %s92 = sphi 0, %s78
      %s96 = sphi 0, %s96
      %s98 = sphi 0, %s96
      %s99 = sphi 0, %s98
      %s113 = sphi 0, %s99
      %s117 = sphi 0, %s117
      %s119 = sphi 0, %s117
      %s120 = sphi 0, %s119
      %s134 = sphi 0, %s120
      %s138 = sphi 0, %s138
      %s140 = sphi 0, %s138
      %s141 = sphi 0, %s140
      %s155 = sphi 0, %s141
      %s159 = sphi 0, %s159
      %s161 = sphi 0, %s159
      %s162 = sphi 0, %s161
      %s176 = sphi 0, %s162
      %s182 = sphi 0, %s184
      %s185 = sphi 0, %s182
      %s186 = sphi 0, %s185
      %s202 = sphi 0, %s186
    $region4: #{tpu_custom_call.1} parent=1 // loop_header_branch
      %23 = sbr.rel (%p21) target = $region8
    $region5: #{tpu_custom_call.1} parent=1 // loop_body
      %s25 = ssub.s32 %s20, 1
      %s26 = ssub.s32 %s20, 2
      %s27 = sadd.s32 %s20, 1
      %s28 = ssub.s32 %s20, %s27
      %p29 = scmp.eq.s32.totalorder %s28, 0
      %s31 = sadd.s32 %s30, 1
      %s32 = scalar_select %p29, %s30, %s31
      %p35 = pneg %p29
      %p36 = scmp.eq.s32.totalorder %s20, 1
      %p37 = por %p35, %p36
      %p38 = scmp.ne.s32.totalorder %s30, %s33
      %p39 = scmp.eq.s32.totalorder %s20, 0
      %p40 = por %p38, %p39
      %p41 = scmp.ne.s32.totalorder %s30, %s33
      %p42 = scmp.eq.s32.totalorder %s25, 1
      %p43 = por %p41, %p42
      %p44 = scmp.ne.s32.totalorder %s33, %s34
      %p45 = scmp.eq.s32.totalorder %s25, 0
      %p46 = por %p44, %p45
      %p47 = scmp.ne.s32.totalorder %s33, %s34
      %p48 = scmp.eq.s32.totalorder %s26, 1
      %p49 = por %p47, %p48
      %p51 = scmp.ne.s32.totalorder %s34, %s50
      %p52 = scmp.eq.s32.totalorder %s26, 0
      %p53 = por %p51, %p52
      %s55 = sadd.s32 %s54, 1
      %p58 = scmp.eq.s32.totalorder %s20, 1
      %p59 = scmp.ne.s32.totalorder %s54, %s56
      %p60 = scmp.eq.s32.totalorder %s20, 0
      %p61 = por %p59, %p60
      %p62 = scmp.ne.s32.totalorder %s54, %s56
      %p63 = scmp.eq.s32.totalorder %s25, 1
      %p64 = por %p62, %p63
      %p65 = scmp.ne.s32.totalorder %s56, %s57
      %p66 = scmp.eq.s32.totalorder %s25, 0
      %p67 = por %p65, %p66
      %p68 = scmp.ne.s32.totalorder %s56, %s57
      %p69 = scmp.eq.s32.totalorder %s26, 1
      %p70 = por %p68, %p69
      %p72 = scmp.ne.s32.totalorder %s57, %s71
      %p73 = scmp.eq.s32.totalorder %s26, 0
      %p74 = por %p72, %p73
      %s76 = sadd.s32 %s75, 1
      %p79 = scmp.eq.s32.totalorder %s20, 1
      %p80 = scmp.ne.s32.totalorder %s75, %s77
      %p81 = scmp.eq.s32.totalorder %s20, 0
      %p82 = por %p80, %p81
      %p83 = scmp.ne.s32.totalorder %s75, %s77
      %p84 = scmp.eq.s32.totalorder %s25, 1
      %p85 = por %p83, %p84
      %p86 = scmp.ne.s32.totalorder %s77, %s78
      %p87 = scmp.eq.s32.totalorder %s25, 0
      %p88 = por %p86, %p87
      %p89 = scmp.ne.s32.totalorder %s77, %s78
      %p90 = scmp.eq.s32.totalorder %s26, 1
      %p91 = por %p89, %p90
      %p93 = scmp.ne.s32.totalorder %s78, %s92
      %p94 = scmp.eq.s32.totalorder %s26, 0
      %p95 = por %p93, %p94
      %s97 = sadd.s32 %s96, 1
      %p100 = scmp.eq.s32.totalorder %s20, 1
      %p101 = scmp.ne.s32.totalorder %s96, %s98
      %p102 = scmp.eq.s32.totalorder %s20, 0
      %p103 = por %p101, %p102
      %p104 = scmp.ne.s32.totalorder %s96, %s98
      %p105 = scmp.eq.s32.totalorder %s25, 1
      %p106 = por %p104, %p105
      %p107 = scmp.ne.s32.totalorder %s98, %s99
      %p108 = scmp.eq.s32.totalorder %s25, 0
      %p109 = por %p107, %p108
      %p110 = scmp.ne.s32.totalorder %s98, %s99
      %p111 = scmp.eq.s32.totalorder %s26, 1
      %p112 = por %p110, %p111
      %p114 = scmp.ne.s32.totalorder %s99, %s113
      %p115 = scmp.eq.s32.totalorder %s26, 0
      %p116 = por %p114, %p115
      %s118 = sadd.s32 %s117, 1
      %p121 = scmp.eq.s32.totalorder %s20, 1
      %p122 = scmp.ne.s32.totalorder %s117, %s119
      %p123 = scmp.eq.s32.totalorder %s20, 0
      %p124 = por %p122, %p123
      %p125 = scmp.ne.s32.totalorder %s117, %s119
      %p126 = scmp.eq.s32.totalorder %s25, 1
      %p127 = por %p125, %p126
      %p128 = scmp.ne.s32.totalorder %s119, %s120
      %p129 = scmp.eq.s32.totalorder %s25, 0
      %p130 = por %p128, %p129
      %p131 = scmp.ne.s32.totalorder %s119, %s120
      %p132 = scmp.eq.s32.totalorder %s26, 1
      %p133 = por %p131, %p132
      %p135 = scmp.ne.s32.totalorder %s120, %s134
      %p136 = scmp.eq.s32.totalorder %s26, 0
      %p137 = por %p135, %p136
      %s139 = sadd.s32 %s138, 1
      %p142 = scmp.eq.s32.totalorder %s20, 1
      %p143 = scmp.ne.s32.totalorder %s138, %s140
      %p144 = scmp.eq.s32.totalorder %s20, 0
      %p145 = por %p143, %p144
      %p146 = scmp.ne.s32.totalorder %s138, %s140
      %p147 = scmp.eq.s32.totalorder %s25, 1
      %p148 = por %p146, %p147
      %p149 = scmp.ne.s32.totalorder %s140, %s141
      %p150 = scmp.eq.s32.totalorder %s25, 0
      %p151 = por %p149, %p150
      %p152 = scmp.ne.s32.totalorder %s140, %s141
      %p153 = scmp.eq.s32.totalorder %s26, 1
      %p154 = por %p152, %p153
      %p156 = scmp.ne.s32.totalorder %s141, %s155
      %p157 = scmp.eq.s32.totalorder %s26, 0
      %p158 = por %p156, %p157
      %s160 = sadd.s32 %s159, 1
      %p163 = scmp.eq.s32.totalorder %s20, 1
      %p164 = scmp.ne.s32.totalorder %s159, %s161
      %p165 = scmp.eq.s32.totalorder %s20, 0
      %p166 = por %p164, %p165
      %p167 = scmp.ne.s32.totalorder %s159, %s161
      %p168 = scmp.eq.s32.totalorder %s25, 1
      %p169 = por %p167, %p168
      %p170 = scmp.ne.s32.totalorder %s161, %s162
      %p171 = scmp.eq.s32.totalorder %s25, 0
      %p172 = por %p170, %p171
      %p173 = scmp.ne.s32.totalorder %s161, %s162
      %p174 = scmp.eq.s32.totalorder %s26, 1
      %p175 = por %p173, %p174
      %p177 = scmp.ne.s32.totalorder %s162, %s176
      %p178 = scmp.eq.s32.totalorder %s26, 0
      %p179 = por %p177, %p178
      %s180 = ssub.s32 %s20, %s27
      %p181 = scmp.eq.s32.totalorder %s180, 0
      %s183 = sadd.s32 %s182, 1
      %s184 = scalar_select %p181, %s182, %s183
      %p187 = pneg %p181
      %p188 = scmp.eq.s32.totalorder %s20, 1
      %p189 = por %p187, %p188
      %p190 = scmp.ne.s32.totalorder %s182, %s185
      %p191 = scmp.eq.s32.totalorder %s20, 0
      %p192 = por %p190, %p191
      %p193 = scmp.ne.s32.totalorder %s182, %s185
      %p194 = scmp.eq.s32.totalorder %s25, 1
      %p195 = por %p193, %p194
      %p196 = scmp.ne.s32.totalorder %s185, %s186
      %p197 = scmp.eq.s32.totalorder %s25, 0
      %p198 = por %p196, %p197
      %p199 = scmp.ne.s32.totalorder %s185, %s186
      %p200 = scmp.eq.s32.totalorder %s26, 1
      %p201 = por %p199, %p200
      %p203 = scmp.ne.s32.totalorder %s186, %s202
      %p204 = scmp.eq.s32.totalorder %s26, 0
      %p205 = por %p203, %p204
      %p206 = scmp.le.s32.totalorder 1, %s20
      %p207 = scmp.lt.s32.totalorder %s20, 3
      %p208 = pnand %p206, %p207
      %p209 = pneg %p208
      // Predicated region
      $region9: #{tpu_custom_call.1} parent=5 // pred_check
        _
      $region10: #{tpu_custom_call.1} parent=5 // pred_check_branch
        %211 = sbr.rel (%p208) target = $region12
      $region11: #{tpu_custom_call.1} parent=5 // pred_region
        %s212 = ssub.s32 %s20, 1
        // Predicated region
        $region13: #{tpu_custom_call.1} parent=11 // pred_check
          %p213 = pneg %p67
        $region14: #{tpu_custom_call.1} parent=11 // pred_check_branch
          %215 = sbr.rel (%p213) target = $region16
        $region15: #{tpu_custom_call.1} parent=11 // pred_region
          _
        $region16: #{tpu_custom_call.1} parent=11 // pred_fallthru
          _
        // Predicated region
        $region17: #{tpu_custom_call.1} parent=11 // pred_check
          %p216 = pneg %p88
        $region18: #{tpu_custom_call.1} parent=11 // pred_check_branch
          %218 = sbr.rel (%p216) target = $region20
        $region19: #{tpu_custom_call.1} parent=11 // pred_region
          _
        $region20: #{tpu_custom_call.1} parent=11 // pred_fallthru
          _
        // Predicated region
        $region21: #{tpu_custom_call.1} parent=11 // pred_check
          %p219 = pneg %p109
        $region22: #{tpu_custom_call.1} parent=11 // pred_check_branch
          %221 = sbr.rel (%p219) target = $region24
        $region23: #{tpu_custom_call.1} parent=11 // pred_region
          %s223 = ssub.s32 9216, 9216
          %224 = vsyncadd [#allocation9], %s223
          %s225 = sshll.u32 [#allocation8], 4
          %s226 = int_to_ptr.vmem [resolvable:$true] %s225
          %231 = dma.hbm_to_vmem [thread:$0]  %s3, 9216, %s226, [#allocation9], 64, 64, 4
        $region24: #{tpu_custom_call.1} parent=11 // pred_fallthru
          _
        // Predicated region
        $region25: #{tpu_custom_call.1} parent=11 // pred_check
          %p232 = pneg %p130
        $region26: #{tpu_custom_call.1} parent=11 // pred_check_branch
          %234 = sbr.rel (%p232) target = $region28
        $region27: #{tpu_custom_call.1} parent=11 // pred_region
          _
        $region28: #{tpu_custom_call.1} parent=11 // pred_fallthru
          _
        // Predicated region
        $region29: #{tpu_custom_call.1} parent=11 // pred_check
          %p235 = pneg %p151
        $region30: #{tpu_custom_call.1} parent=11 // pred_check_branch
          %237 = sbr.rel (%p235) target = $region32
        $region31: #{tpu_custom_call.1} parent=11 // pred_region
          _
        $region32: #{tpu_custom_call.1} parent=11 // pred_fallthru
          _
        // Predicated region
        $region33: #{tpu_custom_call.1} parent=11 // pred_check
          %p238 = pneg %p172
        $region34: #{tpu_custom_call.1} parent=11 // pred_check_branch
          %240 = sbr.rel (%p238) target = $region36
        $region35: #{tpu_custom_call.1} parent=11 // pred_region
          %s242 = ssub.s32 10240, 10240
          %243 = vsyncadd [#allocation9], %s242
          %s244 = sshll.u32 [#allocation10], 4
          %s245 = int_to_ptr.vmem [resolvable:$true] %s244
          %250 = dma.hbm_to_vmem [thread:$0]  %s6, 10240, %s245, [#allocation9], 64, 64, 4
        $region36: #{tpu_custom_call.1} parent=11 // pred_fallthru
          _
      $region12: #{tpu_custom_call.1} parent=5 // pred_fallthru
        _
      %p251 = scmp.lt.s32.totalorder %s20, 2
      // Predicated region
      $region37: #{tpu_custom_call.1} parent=5 // pred_check
        %p252 = pneg %p251
      $region38: #{tpu_custom_call.1} parent=5 // pred_check_branch
        %254 = sbr.rel (%p252) target = $region40
      $region39: #{tpu_custom_call.1} parent=5 // pred_region
        // Predicated region
        $region41: #{tpu_custom_call.1} parent=39 // pred_check
          %p255 = pneg %p40
        $region42: #{tpu_custom_call.1} parent=39 // pred_check_branch
          %257 = sbr.rel (%p255) target = $region44
        $region43: #{tpu_custom_call.1} parent=39 // pred_region
          %s258 = sand.u32 %s30, 1
          %s259 = scalar_lea.sflag [#allocation6], %s258
          %s260 = sand.u32 %s30, 1
          %s261 = smul.addr %s260, 256
          %s262 = scalar_lea.vmem [#allocation5], %s261
          %s264 = ssub.s32 4096, 4096
          %265 = vsyncadd %s259, %s264
          %s266 = smul.addr %s20, 32
          %s267 = smul.addr %s266, 128
          %s268 = scalar_lea.hbm %s0, %s267
          %s269 = sshll.u32 %s262, 4
          %s270 = int_to_ptr.vmem [resolvable:$true] %s269
          %275 = dma.hbm_to_vmem [thread:$0]  %s268, 4096, %s270, %s259, 128, 128, 8
        $region44: #{tpu_custom_call.1} parent=39 // pred_fallthru
          _
      $region40: #{tpu_custom_call.1} parent=5 // pred_fallthru
        _
      %p276 = scmp.le.s32.totalorder 1, %s20
      %p277 = scmp.lt.s32.totalorder %s20, 3
      %p278 = pnand %p276, %p277
      %p279 = pneg %p278
      // Predicated region
      $region45: #{tpu_custom_call.1} parent=5 // pred_check
        _
      $region46: #{tpu_custom_call.1} parent=5 // pred_check_branch
        %281 = sbr.rel (%p278) target = $region48
      $region47: #{tpu_custom_call.1} parent=5 // pred_region
        %s282 = ssub.s32 %s20, 1
        %s283 = sand.u32 %s33, 1
        %s284 = scalar_lea.sflag [#allocation6], %s283
        %s285 = sand.u32 %s33, 1
        %s286 = smul.addr %s285, 256
        %s287 = scalar_lea.vmem [#allocation5], %s286
        // Predicated region
        $region49: #{tpu_custom_call.1} parent=47 // pred_check
          %p288 = pneg %p46
        $region50: #{tpu_custom_call.1} parent=47 // pred_check_branch
          %290 = sbr.rel (%p288) target = $region52
        $region51: #{tpu_custom_call.1} parent=47 // pred_region
          %291 = dma.done %s284, 4096
        $region52: #{tpu_custom_call.1} parent=47 // pred_fallthru
          _
        // Predicated region
        $region53: #{tpu_custom_call.1} parent=47 // pred_check
          %p292 = pneg %p109
        $region54: #{tpu_custom_call.1} parent=47 // pred_check_branch
          %294 = sbr.rel (%p292) target = $region56
        $region55: #{tpu_custom_call.1} parent=47 // pred_region
          %295 = dma.done [#allocation9], 9216
        $region56: #{tpu_custom_call.1} parent=47 // pred_fallthru
          _
        // Predicated region
        $region57: #{tpu_custom_call.1} parent=47 // pred_check
          %p296 = pneg %p172
        $region58: #{tpu_custom_call.1} parent=47 // pred_check_branch
          %298 = sbr.rel (%p296) target = $region60
        $region59: #{tpu_custom_call.1} parent=47 // pred_region
          %299 = dma.done [#allocation9], 10240
        $region60: #{tpu_custom_call.1} parent=47 // pred_fallthru
          _
        %s300 = sand.u32 %s33, 1
        %s301 = scalar_lea.sflag [#allocation6], %s300
        %s302 = sand.u32 %s33, 1
        %s303 = smul.addr %s302, 256
        %s304 = scalar_lea.vmem [#allocation5], %s303
        %p305 = pneg %p46
        %p306 = pneg %p43
        %p307 = pneg %p67
        %p308 = pneg %p64
        %p309 = pneg %p88
        %p310 = pneg %p85
        %p311 = pneg %p109
        %p312 = pneg %p106
        %p313 = pneg %p130
        %p314 = pneg %p127
        %p315 = pneg %p151
        %p316 = pneg %p148
        %p317 = pneg %p172
        %p318 = pneg %p169
        %p319 = pneg %p198
        %p320 = pneg %p195
        %s321 = sand.u32 %s185, 1
        %s322 = scalar_lea.sflag [#allocation7], %s321
        %s323 = sand.u32 %s185, 1
        %s324 = smul.addr %s323, 256
        %s325 = scalar_lea.vmem [#allocation11], %s324
        %327 = vst [vmem:[#allocation2] sm:$0xff] 0.0
        %328 = vst [vmem:[#allocation2 + $0x8] sm:$0xff] 0.0
        %329 = vst [vmem:[#allocation2 + $0x10] sm:$0x3] 0.0
        %s330 = scalar_lea.vmem [#allocation2], 408
        %331 = vst [vmem:[%s330] sm:$0xff] 0.0
        %332 = vst [vmem:[%s330 + $0x8] sm:$0xff] 0.0
        %333 = vst [vmem:[%s330 + $0x10] sm:$0x3] 0.0
        %334 = vst [vmem:[#allocation2] sm:$0x1] 0.0
        %335 = vst [vmem:[#allocation2 + $0x18] sm:$0x1] 0.0
        %336 = vst [vmem:[#allocation2 + $0x30] sm:$0x1] 0.0
        %337 = vst [vmem:[#allocation2 + $0x48] sm:$0x1] 0.0
        %338 = vst [vmem:[#allocation2 + $0x60] sm:$0x1] 0.0
        %339 = vst [vmem:[#allocation2 + $0x78] sm:$0x1] 0.0
        %340 = vst [vmem:[#allocation2 + $0x90] sm:$0x1] 0.0
        %341 = vst [vmem:[#allocation2 + $0xa8] sm:$0x1] 0.0
        %342 = vst [vmem:[#allocation2 + $0xc0] sm:$0x1] 0.0
        %343 = vst [vmem:[#allocation2 + $0xd8] sm:$0x1] 0.0
        %344 = vst [vmem:[#allocation2 + $0xf0] sm:$0x1] 0.0
        %345 = vst [vmem:[#allocation2 + $0x108] sm:$0x1] 0.0
        %346 = vst [vmem:[#allocation2 + $0x120] sm:$0x1] 0.0
        %347 = vst [vmem:[#allocation2 + $0x138] sm:$0x1] 0.0
        %348 = vst [vmem:[#allocation2 + $0x150] sm:$0x1] 0.0
        %349 = vst [vmem:[#allocation2 + $0x168] sm:$0x1] 0.0
        %350 = vst [vmem:[#allocation2 + $0x180] sm:$0x1] 0.0
        %351 = vst [vmem:[#allocation2 + $0x198] sm:$0x1] 0.0
        %352 = vst [vmem:[#allocation2 + $0x11] sm:$0x1] 0.0
        %353 = vst [vmem:[#allocation2 + $0x29] sm:$0x1] 0.0
        %354 = vst [vmem:[#allocation2 + $0x41] sm:$0x1] 0.0
        %355 = vst [vmem:[#allocation2 + $0x59] sm:$0x1] 0.0
        %356 = vst [vmem:[#allocation2 + $0x71] sm:$0x1] 0.0
        %357 = vst [vmem:[#allocation2 + $0x89] sm:$0x1] 0.0
        %358 = vst [vmem:[#allocation2 + $0xa1] sm:$0x1] 0.0
        %359 = vst [vmem:[#allocation2 + $0xb9] sm:$0x1] 0.0
        %360 = vst [vmem:[#allocation2 + $0xd1] sm:$0x1] 0.0
        %361 = vst [vmem:[#allocation2 + $0xe9] sm:$0x1] 0.0
        %362 = vst [vmem:[#allocation2 + $0x101] sm:$0x1] 0.0
        %363 = vst [vmem:[#allocation2 + $0x119] sm:$0x1] 0.0
        %364 = vst [vmem:[#allocation2 + $0x131] sm:$0x1] 0.0
        %365 = vst [vmem:[#allocation2 + $0x149] sm:$0x1] 0.0
        %366 = vst [vmem:[#allocation2 + $0x161] sm:$0x1] 0.0
        %367 = vst [vmem:[#allocation2 + $0x179] sm:$0x1] 0.0
        %368 = vst [vmem:[#allocation2 + $0x191] sm:$0x1] 0.0
        %369 = vst [vmem:[#allocation2 + $0x1a9] sm:$0x1] 0.0
        %370 = vst [vmem:[#allocation3] sm:$0xff] 0.0
        %371 = vst [vmem:[#allocation3 + $0x8] sm:$0xff] 0.0
        %372 = vst [vmem:[#allocation3 + $0x10] sm:$0x3] 0.0
        %s373 = scalar_lea.vmem [#allocation3], 408
        %374 = vst [vmem:[%s373] sm:$0xff] 0.0
        %375 = vst [vmem:[%s373 + $0x8] sm:$0xff] 0.0
        %376 = vst [vmem:[%s373 + $0x10] sm:$0x3] 0.0
        %377 = vst [vmem:[#allocation3] sm:$0x1] 0.0
        %378 = vst [vmem:[#allocation3 + $0x18] sm:$0x1] 0.0
        %379 = vst [vmem:[#allocation3 + $0x30] sm:$0x1] 0.0
        %380 = vst [vmem:[#allocation3 + $0x48] sm:$0x1] 0.0
        %381 = vst [vmem:[#allocation3 + $0x60] sm:$0x1] 0.0
        %382 = vst [vmem:[#allocation3 + $0x78] sm:$0x1] 0.0
        %383 = vst [vmem:[#allocation3 + $0x90] sm:$0x1] 0.0
        %384 = vst [vmem:[#allocation3 + $0xa8] sm:$0x1] 0.0
        %385 = vst [vmem:[#allocation3 + $0xc0] sm:$0x1] 0.0
        %386 = vst [vmem:[#allocation3 + $0xd8] sm:$0x1] 0.0
        %387 = vst [vmem:[#allocation3 + $0xf0] sm:$0x1] 0.0
        %388 = vst [vmem:[#allocation3 + $0x108] sm:$0x1] 0.0
        %389 = vst [vmem:[#allocation3 + $0x120] sm:$0x1] 0.0
        %390 = vst [vmem:[#allocation3 + $0x138] sm:$0x1] 0.0
        %391 = vst [vmem:[#allocation3 + $0x150] sm:$0x1] 0.0
        %392 = vst [vmem:[#allocation3 + $0x168] sm:$0x1] 0.0
        %393 = vst [vmem:[#allocation3 + $0x180] sm:$0x1] 0.0
        %394 = vst [vmem:[#allocation3 + $0x198] sm:$0x1] 0.0
        %395 = vst [vmem:[#allocation3 + $0x11] sm:$0x1] 0.0
        %396 = vst [vmem:[#allocation3 + $0x29] sm:$0x1] 0.0
        %397 = vst [vmem:[#allocation3 + $0x41] sm:$0x1] 0.0
        %398 = vst [vmem:[#allocation3 + $0x59] sm:$0x1] 0.0
        %399 = vst [vmem:[#allocation3 + $0x71] sm:$0x1] 0.0
        %400 = vst [vmem:[#allocation3 + $0x89] sm:$0x1] 0.0
        %401 = vst [vmem:[#allocation3 + $0xa1] sm:$0x1] 0.0
        %402 = vst [vmem:[#allocation3 + $0xb9] sm:$0x1] 0.0
        %403 = vst [vmem:[#allocation3 + $0xd1] sm:$0x1] 0.0
        %404 = vst [vmem:[#allocation3 + $0xe9] sm:$0x1] 0.0
        %405 = vst [vmem:[#allocation3 + $0x101] sm:$0x1] 0.0
        %406 = vst [vmem:[#allocation3 + $0x119] sm:$0x1] 0.0
        %407 = vst [vmem:[#allocation3 + $0x131] sm:$0x1] 0.0
        %408 = vst [vmem:[#allocation3 + $0x149] sm:$0x1] 0.0
        %409 = vst [vmem:[#allocation3 + $0x161] sm:$0x1] 0.0
        %410 = vst [vmem:[#allocation3 + $0x179] sm:$0x1] 0.0
        %411 = vst [vmem:[#allocation3 + $0x191] sm:$0x1] 0.0
        %412 = vst [vmem:[#allocation3 + $0x1a9] sm:$0x1] 0.0
        %v413 = vld [vmem:[%s287] sm:$0xff]
        %v414 = vld [vmem:[%s287 + $0x8] sm:$0xff]
        %v415 = vld [vmem:[%s287 + $0x10] sm:$0xff]
        %v416 = vld [vmem:[%s287 + $0x18] sm:$0xff]
        %v417 = vld [vmem:[%s287 + $0x20] sm:$0xff]
        %v418 = vld [vmem:[%s287 + $0x28] sm:$0xff]
        %v419 = vld [vmem:[%s287 + $0x30] sm:$0xff]
        %v420 = vld [vmem:[%s287 + $0x38] sm:$0xff]
        %v421 = vld [vmem:[%s287 + $0x40] sm:$0xff]
        %v422 = vld [vmem:[%s287 + $0x48] sm:$0xff]
        %v423 = vld [vmem:[%s287 + $0x50] sm:$0xff]
        %v424 = vld [vmem:[%s287 + $0x58] sm:$0xff]
        %v425 = vld [vmem:[%s287 + $0x60] sm:$0xff]
        %v426 = vld [vmem:[%s287 + $0x68] sm:$0xff]
        %v427 = vld [vmem:[%s287 + $0x70] sm:$0xff]
        %v428 = vld [vmem:[%s287 + $0x78] sm:$0xff]
        %v429 = vld [vmem:[%s287 + $0x80] sm:$0xff]
        %v430 = vld [vmem:[%s287 + $0x88] sm:$0xff]
        %v431 = vld [vmem:[%s287 + $0x90] sm:$0xff]
        %v432 = vld [vmem:[%s287 + $0x98] sm:$0xff]
        %v433 = vld [vmem:[%s287 + $0xa0] sm:$0xff]
        %v434 = vld [vmem:[%s287 + $0xa8] sm:$0xff]
        %v435 = vld [vmem:[%s287 + $0xb0] sm:$0xff]
        %v436 = vld [vmem:[%s287 + $0xb8] sm:$0xff]
        %v437 = vld [vmem:[%s287 + $0xc0] sm:$0xff]
        %v438 = vld [vmem:[%s287 + $0xc8] sm:$0xff]
        %v439 = vld [vmem:[%s287 + $0xd0] sm:$0xff]
        %v440 = vld [vmem:[%s287 + $0xd8] sm:$0xff]
        %v441 = vld [vmem:[%s287 + $0xe0] sm:$0xff]
        %v442 = vld [vmem:[%s287 + $0xe8] sm:$0xff]
        %v443 = vld [vmem:[%s287 + $0xf0] sm:$0xff]
        %v444 = vld [vmem:[%s287 + $0xf8] sm:$0xff]
        %v445 = vld [vmem:[%s1] sm:$0x1]
        %v447 = vlaneseq
        %v448 = vshrl.u32 %v447, 7
        %v449 = vsub.s32 0, %v448
        %v450 = vrot.slane %v445, %v449
        %v452 = vmul.f32 %v413, %v450
        %v453 = vmul.f32 %v414, %v450
        %v454 = vmul.f32 %v415, %v450
        %v455 = vmul.f32 %v416, %v450
        %v456 = vmul.f32 %v417, %v450
        %v457 = vmul.f32 %v418, %v450
        %v458 = vmul.f32 %v419, %v450
        %v459 = vmul.f32 %v420, %v450
        %v460 = vmul.f32 %v421, %v450
        %v461 = vmul.f32 %v422, %v450
        %v462 = vmul.f32 %v423, %v450
        %v463 = vmul.f32 %v424, %v450
        %v464 = vmul.f32 %v425, %v450
        %v465 = vmul.f32 %v426, %v450
        %v466 = vmul.f32 %v427, %v450
        %v467 = vmul.f32 %v428, %v450
        %v468 = vmul.f32 %v429, %v450
        %v469 = vmul.f32 %v430, %v450
        %v470 = vmul.f32 %v431, %v450
        %v471 = vmul.f32 %v432, %v450
        %v472 = vmul.f32 %v433, %v450
        %v473 = vmul.f32 %v434, %v450
        %v474 = vmul.f32 %v435, %v450
        %v475 = vmul.f32 %v436, %v450
        %v476 = vmul.f32 %v437, %v450
        %v477 = vmul.f32 %v438, %v450
        %v478 = vmul.f32 %v439, %v450
        %v479 = vmul.f32 %v440, %v450
        %v480 = vmul.f32 %v441, %v450
        %v481 = vmul.f32 %v442, %v450
        %v482 = vmul.f32 %v443, %v450
        %v483 = vmul.f32 %v444, %v450
        %v484 = vld [vmem:[%s2] sm:$0x1]
        %v486 = vlaneseq
        %v487 = vshrl.u32 %v486, 7
        %v488 = vsub.s32 0, %v487
        %v489 = vrot.slane %v484, %v488
        %v491 = vadd.f32 %v452, %v489
        %v492 = vadd.f32 %v453, %v489
        %v493 = vadd.f32 %v454, %v489
        %v494 = vadd.f32 %v455, %v489
        %v495 = vadd.f32 %v456, %v489
        %v496 = vadd.f32 %v457, %v489
        %v497 = vadd.f32 %v458, %v489
        %v498 = vadd.f32 %v459, %v489
        %v499 = vadd.f32 %v460, %v489
        %v500 = vadd.f32 %v461, %v489
        %v501 = vadd.f32 %v462, %v489
        %v502 = vadd.f32 %v463, %v489
        %v503 = vadd.f32 %v464, %v489
        %v504 = vadd.f32 %v465, %v489
        %v505 = vadd.f32 %v466, %v489
        %v506 = vadd.f32 %v467, %v489
        %v507 = vadd.f32 %v468, %v489
        %v508 = vadd.f32 %v469, %v489
        %v509 = vadd.f32 %v470, %v489
        %v510 = vadd.f32 %v471, %v489
        %v511 = vadd.f32 %v472, %v489
        %v512 = vadd.f32 %v473, %v489
        %v513 = vadd.f32 %v474, %v489
        %v514 = vadd.f32 %v475, %v489
        %v515 = vadd.f32 %v476, %v489
        %v516 = vadd.f32 %v477, %v489
        %v517 = vadd.f32 %v478, %v489
        %v518 = vadd.f32 %v479, %v489
        %v519 = vadd.f32 %v480, %v489
        %v520 = vadd.f32 %v481, %v489
        %v521 = vadd.f32 %v482, %v489
        %v522 = vadd.f32 %v483, %v489
        %v523 = vmax.f32 %v491, 0.0
        %v524 = vmax.f32 %v492, 0.0
        %v525 = vmax.f32 %v493, 0.0
        %v526 = vmax.f32 %v494, 0.0
        %v527 = vmax.f32 %v495, 0.0
        %v528 = vmax.f32 %v496, 0.0
        %v529 = vmax.f32 %v497, 0.0
        %v530 = vmax.f32 %v498, 0.0
        %v531 = vmax.f32 %v499, 0.0
        %v532 = vmax.f32 %v500, 0.0
        %v533 = vmax.f32 %v501, 0.0
        %v534 = vmax.f32 %v502, 0.0
        %v535 = vmax.f32 %v503, 0.0
        %v536 = vmax.f32 %v504, 0.0
        %v537 = vmax.f32 %v505, 0.0
        %v538 = vmax.f32 %v506, 0.0
        %v539 = vmax.f32 %v507, 0.0
        %v540 = vmax.f32 %v508, 0.0
        %v541 = vmax.f32 %v509, 0.0
        %v542 = vmax.f32 %v510, 0.0
        %v543 = vmax.f32 %v511, 0.0
        %v544 = vmax.f32 %v512, 0.0
        %v545 = vmax.f32 %v513, 0.0
        %v546 = vmax.f32 %v514, 0.0
        %v547 = vmax.f32 %v515, 0.0
        %v548 = vmax.f32 %v516, 0.0
        %v549 = vmax.f32 %v517, 0.0
        %v550 = vmax.f32 %v518, 0.0
        %v551 = vmax.f32 %v519, 0.0
        %v552 = vmax.f32 %v520, 0.0
        %v553 = vmax.f32 %v521, 0.0
        %v554 = vmax.f32 %v522, 0.0
        %s555 = scalar_lea.vmem [#allocation2], 24
        %556 = vst [vmem:[%s555 + $0x1] sm:$0xff] %v523
        %557 = vst [vmem:[%s555 + $0x9] sm:$0xff] %v524
        %558 = vst [vmem:[%s555 + $0x19] sm:$0xff] %v525
        %559 = vst [vmem:[%s555 + $0x21] sm:$0xff] %v526
        %560 = vst [vmem:[%s555 + $0x31] sm:$0xff] %v527
        %561 = vst [vmem:[%s555 + $0x39] sm:$0xff] %v528
        %562 = vst [vmem:[%s555 + $0x49] sm:$0xff] %v529
        %563 = vst [vmem:[%s555 + $0x51] sm:$0xff] %v530
        %564 = vst [vmem:[%s555 + $0x61] sm:$0xff] %v531
        %565 = vst [vmem:[%s555 + $0x69] sm:$0xff] %v532
        %566 = vst [vmem:[%s555 + $0x79] sm:$0xff] %v533
        %567 = vst [vmem:[%s555 + $0x81] sm:$0xff] %v534
        %568 = vst [vmem:[%s555 + $0x91] sm:$0xff] %v535
        %569 = vst [vmem:[%s555 + $0x99] sm:$0xff] %v536
        %570 = vst [vmem:[%s555 + $0xa9] sm:$0xff] %v537
        %571 = vst [vmem:[%s555 + $0xb1] sm:$0xff] %v538
        %572 = vst [vmem:[%s555 + $0xc1] sm:$0xff] %v539
        %573 = vst [vmem:[%s555 + $0xc9] sm:$0xff] %v540
        %574 = vst [vmem:[%s555 + $0xd9] sm:$0xff] %v541
        %575 = vst [vmem:[%s555 + $0xe1] sm:$0xff] %v542
        %576 = vst [vmem:[%s555 + $0xf1] sm:$0xff] %v543
        %577 = vst [vmem:[%s555 + $0xf9] sm:$0xff] %v544
        %578 = vst [vmem:[%s555 + $0x109] sm:$0xff] %v545
        %579 = vst [vmem:[%s555 + $0x111] sm:$0xff] %v546
        %580 = vst [vmem:[%s555 + $0x121] sm:$0xff] %v547
        %581 = vst [vmem:[%s555 + $0x129] sm:$0xff] %v548
        %582 = vst [vmem:[%s555 + $0x139] sm:$0xff] %v549
        %583 = vst [vmem:[%s555 + $0x141] sm:$0xff] %v550
        %584 = vst [vmem:[%s555 + $0x151] sm:$0xff] %v551
        %585 = vst [vmem:[%s555 + $0x159] sm:$0xff] %v552
        %586 = vst [vmem:[%s555 + $0x169] sm:$0xff] %v553
        %587 = vst [vmem:[%s555 + $0x171] sm:$0xff] %v554
        %v588 = vpack.c.bf16 %v524, %v523
        %v589 = vpack.c.bf16 %v526, %v525
        %v590 = vpack.c.bf16 %v528, %v527
        %v591 = vpack.c.bf16 %v530, %v529
        %v592 = vpack.c.bf16 %v532, %v531
        %v593 = vpack.c.bf16 %v534, %v533
        %v594 = vpack.c.bf16 %v536, %v535
        %v595 = vpack.c.bf16 %v538, %v537
        %v596 = vpack.c.bf16 %v540, %v539
        %v597 = vpack.c.bf16 %v542, %v541
        %v598 = vpack.c.bf16 %v544, %v543
        %v599 = vpack.c.bf16 %v546, %v545
        %v600 = vpack.c.bf16 %v548, %v547
        %v601 = vpack.c.bf16 %v550, %v549
        %v602 = vpack.c.bf16 %v552, %v551
        %v603 = vpack.c.bf16 %v554, %v553
        %v620 = vunpack.c.l.b16 %v588
        %v621 = vunpack.c.h.b16 %v588
        %v622 = vunpack.c.l.b16 %v589
        %v623 = vunpack.c.h.b16 %v589
        %v624 = vunpack.c.l.b16 %v590
        %v625 = vunpack.c.h.b16 %v590
        %v626 = vunpack.c.l.b16 %v591
        %v627 = vunpack.c.h.b16 %v591
        %v628 = vunpack.c.l.b16 %v592
        %v629 = vunpack.c.h.b16 %v592
        %v630 = vunpack.c.l.b16 %v593
        %v631 = vunpack.c.h.b16 %v593
        %v632 = vunpack.c.l.b16 %v594
        %v633 = vunpack.c.h.b16 %v594
        %v634 = vunpack.c.l.b16 %v595
        %v635 = vunpack.c.h.b16 %v595
        %v636 = vunpack.c.l.b16 %v596
        %v637 = vunpack.c.h.b16 %v596
        %v638 = vunpack.c.l.b16 %v597
        %v639 = vunpack.c.h.b16 %v597
        %v640 = vunpack.c.l.b16 %v598
        %v641 = vunpack.c.h.b16 %v598
        %v642 = vunpack.c.l.b16 %v599
        %v643 = vunpack.c.h.b16 %v599
        %v644 = vunpack.c.l.b16 %v600
        %v645 = vunpack.c.h.b16 %v600
        %v646 = vunpack.c.l.b16 %v601
        %v647 = vunpack.c.h.b16 %v601
        %v648 = vunpack.c.l.b16 %v602
        %v649 = vunpack.c.h.b16 %v602
        %v650 = vunpack.c.l.b16 %v603
        %v651 = vunpack.c.h.b16 %v603
        %v652 = vpack.c.b16 %v620, %v620
        %v653 = vpack.c.b16 %v621, %v621
        %v654 = vpack.c.b16 %v622, %v622
        %v655 = vpack.c.b16 %v623, %v623
        %v656 = vpack.c.b16 %v624, %v624
        %v657 = vpack.c.b16 %v625, %v625
        %v658 = vpack.c.b16 %v626, %v626
        %v659 = vpack.c.b16 %v627, %v627
        %v660 = vpack.c.b16 %v628, %v628
        %v661 = vpack.c.b16 %v629, %v629
        %v662 = vpack.c.b16 %v630, %v630
        %v663 = vpack.c.b16 %v631, %v631
        %v664 = vpack.c.b16 %v632, %v632
        %v665 = vpack.c.b16 %v633, %v633
        %v666 = vpack.c.b16 %v634, %v634
        %v667 = vpack.c.b16 %v635, %v635
        %v668 = vpack.c.b16 %v636, %v636
        %v669 = vpack.c.b16 %v637, %v637
        %v670 = vpack.c.b16 %v638, %v638
        %v671 = vpack.c.b16 %v639, %v639
        %v672 = vpack.c.b16 %v640, %v640
        %v673 = vpack.c.b16 %v641, %v641
        %v674 = vpack.c.b16 %v642, %v642
        %v675 = vpack.c.b16 %v643, %v643
        %v676 = vpack.c.b16 %v644, %v644
        %v677 = vpack.c.b16 %v645, %v645
        %v678 = vpack.c.b16 %v646, %v646
        %v679 = vpack.c.b16 %v647, %v647
        %v680 = vpack.c.b16 %v648, %v648
        %v681 = vpack.c.b16 %v649, %v649
        %v682 = vpack.c.b16 %v650, %v650
        %v683 = vpack.c.b16 %v651, %v651
        %716 = vst [vmem:[#allocation4] sm:$0xf] %v652
        %717 = vst [vmem:[#allocation4 + $0x28] sm:$0xf] %v653
        %718 = vst [vmem:[#allocation4 + $0x50] sm:$0xf] %v654
        %719 = vst [vmem:[#allocation4 + $0x78] sm:$0xf] %v655
        %720 = vst [vmem:[#allocation4 + $0xa0] sm:$0xf] %v656
        %721 = vst [vmem:[#allocation4 + $0xc8] sm:$0xf] %v657
        %722 = vst [vmem:[#allocation4 + $0xf0] sm:$0xf] %v658
        %723 = vst [vmem:[#allocation4 + $0x118] sm:$0xf] %v659
        %724 = vst [vmem:[#allocation4 + $0x140] sm:$0xf] %v660
        %725 = vst [vmem:[#allocation4 + $0x168] sm:$0xf] %v661
        %726 = vst [vmem:[#allocation4 + $0x190] sm:$0xf] %v662
        %727 = vst [vmem:[#allocation4 + $0x1b8] sm:$0xf] %v663
        %728 = vst [vmem:[#allocation4 + $0x1e0] sm:$0xf] %v664
        %729 = vst [vmem:[#allocation4 + $0x208] sm:$0xf] %v665
        %730 = vst [vmem:[#allocation4 + $0x230] sm:$0xf] %v666
        %731 = vst [vmem:[#allocation4 + $0x258] sm:$0xf] %v667
        %732 = vst [vmem:[#allocation4 + $0x280] sm:$0xf] %v668
        %733 = vst [vmem:[#allocation4 + $0x2a8] sm:$0xf] %v669
        %734 = vst [vmem:[#allocation4 + $0x2d0] sm:$0xf] %v670
        %735 = vst [vmem:[#allocation4 + $0x2f8] sm:$0xf] %v671
        %736 = vst [vmem:[#allocation4 + $0x320] sm:$0xf] %v672
        %737 = vst [vmem:[#allocation4 + $0x348] sm:$0xf] %v673
        %738 = vst [vmem:[#allocation4 + $0x370] sm:$0xf] %v674
        %739 = vst [vmem:[#allocation4 + $0x398] sm:$0xf] %v675
        %740 = vst [vmem:[#allocation4 + $0x3c0] sm:$0xf] %v676
        %741 = vst [vmem:[#allocation4 + $0x3e8] sm:$0xf] %v677
        %742 = vst [vmem:[#allocation4 + $0x410] sm:$0xf] %v678
        %743 = vst [vmem:[#allocation4 + $0x438] sm:$0xf] %v679
        %744 = vst [vmem:[#allocation4 + $0x460] sm:$0xf] %v680
        %745 = vst [vmem:[#allocation4 + $0x488] sm:$0xf] %v681
        %746 = vst [vmem:[#allocation4 + $0x4b0] sm:$0xf] %v682
        %747 = vst [vmem:[#allocation4 + $0x4d8] sm:$0xf] %v683
        %v748 = vld [vmem:[#allocation2] sm:$0xff]
        %v749 = vld [vmem:[#allocation2 + $0x8] sm:$0xff]
        %v750 = vld [vmem:[#allocation2 + $0x18] sm:$0xff]
        %v751 = vld [vmem:[#allocation2 + $0x20] sm:$0xff]
        %v752 = vld [vmem:[#allocation2 + $0x30] sm:$0xff]
        %v753 = vld [vmem:[#allocation2 + $0x38] sm:$0xff]
        %v754 = vld [vmem:[#allocation2 + $0x48] sm:$0xff]
        %v755 = vld [vmem:[#allocation2 + $0x50] sm:$0xff]
        %v756 = vld [vmem:[#allocation2 + $0x60] sm:$0xff]
        %v757 = vld [vmem:[#allocation2 + $0x68] sm:$0xff]
        %v758 = vld [vmem:[#allocation2 + $0x78] sm:$0xff]
        %v759 = vld [vmem:[#allocation2 + $0x80] sm:$0xff]
        %v760 = vld [vmem:[#allocation2 + $0x90] sm:$0xff]
        %v761 = vld [vmem:[#allocation2 + $0x98] sm:$0xff]
        %v762 = vld [vmem:[#allocation2 + $0xa8] sm:$0xff]
        %v763 = vld [vmem:[#allocation2 + $0xb0] sm:$0xff]
        %v764 = vld [vmem:[#allocation2 + $0xc0] sm:$0xff]
        %v765 = vld [vmem:[#allocation2 + $0xc8] sm:$0xff]
        %v766 = vld [vmem:[#allocation2 + $0xd8] sm:$0xff]
        %v767 = vld [vmem:[#allocation2 + $0xe0] sm:$0xff]
        %v768 = vld [vmem:[#allocation2 + $0xf0] sm:$0xff]
        %v769 = vld [vmem:[#allocation2 + $0xf8] sm:$0xff]
        %v770 = vld [vmem:[#allocation2 + $0x108] sm:$0xff]
        %v771 = vld [vmem:[#allocation2 + $0x110] sm:$0xff]
        %v772 = vld [vmem:[#allocation2 + $0x120] sm:$0xff]
        %v773 = vld [vmem:[#allocation2 + $0x128] sm:$0xff]
        %v774 = vld [vmem:[#allocation2 + $0x138] sm:$0xff]
        %v775 = vld [vmem:[#allocation2 + $0x140] sm:$0xff]
        %v776 = vld [vmem:[#allocation2 + $0x150] sm:$0xff]
        %v777 = vld [vmem:[#allocation2 + $0x158] sm:$0xff]
        %v778 = vld [vmem:[#allocation2 + $0x168] sm:$0xff]
        %v779 = vld [vmem:[#allocation2 + $0x170] sm:$0xff]
        %v780 = vld [vmem:[#allocation2 + $0x180] sm:$0xff]
        %v781 = vld [vmem:[#allocation2 + $0x188] sm:$0xff]
        %v782 = vld [vmem:[#allocation2 + $0x198] sm:$0xff]
        %v783 = vld [vmem:[#allocation2 + $0x1a0] sm:$0xff]
        %v784 = vpack.c.bf16 %v749, %v748
        %v785 = vpack.c.bf16 %v751, %v750
        %v786 = vpack.c.bf16 %v753, %v752
        %v787 = vpack.c.bf16 %v755, %v754
        %v788 = vpack.c.bf16 %v757, %v756
        %v789 = vpack.c.bf16 %v759, %v758
        %v790 = vpack.c.bf16 %v761, %v760
        %v791 = vpack.c.bf16 %v763, %v762
        %v792 = vpack.c.bf16 %v765, %v764
        %v793 = vpack.c.bf16 %v767, %v766
        %v794 = vpack.c.bf16 %v769, %v768
        %v795 = vpack.c.bf16 %v771, %v770
        %v796 = vpack.c.bf16 %v773, %v772
        %v797 = vpack.c.bf16 %v775, %v774
        %v798 = vpack.c.bf16 %v777, %v776
        %v799 = vpack.c.bf16 %v779, %v778
        %v816 = vunpack.c.l.b16 %v784
        %v817 = vunpack.c.h.b16 %v784
        %v818 = vunpack.c.l.b16 %v785
        %v819 = vunpack.c.h.b16 %v785
        %v820 = vunpack.c.l.b16 %v786
        %v821 = vunpack.c.h.b16 %v786
        %v822 = vunpack.c.l.b16 %v787
        %v823 = vunpack.c.h.b16 %v787
        %v824 = vunpack.c.l.b16 %v788
        %v825 = vunpack.c.h.b16 %v788
        %v826 = vunpack.c.l.b16 %v789
        %v827 = vunpack.c.h.b16 %v789
        %v828 = vunpack.c.l.b16 %v790
        %v829 = vunpack.c.h.b16 %v790
        %v830 = vunpack.c.l.b16 %v791
        %v831 = vunpack.c.h.b16 %v791
        %v832 = vunpack.c.l.b16 %v792
        %v833 = vunpack.c.h.b16 %v792
        %v834 = vunpack.c.l.b16 %v793
        %v835 = vunpack.c.h.b16 %v793
        %v836 = vunpack.c.l.b16 %v794
        %v837 = vunpack.c.h.b16 %v794
        %v838 = vunpack.c.l.b16 %v795
        %v839 = vunpack.c.h.b16 %v795
        %v840 = vunpack.c.l.b16 %v796
        %v841 = vunpack.c.h.b16 %v796
        %v842 = vunpack.c.l.b16 %v797
        %v843 = vunpack.c.h.b16 %v797
        %v844 = vunpack.c.l.b16 %v798
        %v845 = vunpack.c.h.b16 %v798
        %v846 = vunpack.c.l.b16 %v799
        %v847 = vunpack.c.h.b16 %v799
        %v848 = vpack.c.b16 %v816, %v816
        %v849 = vpack.c.b16 %v817, %v817
        %v850 = vpack.c.b16 %v818, %v818
        %v851 = vpack.c.b16 %v819, %v819
        %v852 = vpack.c.b16 %v820, %v820
        %v853 = vpack.c.b16 %v821, %v821
        %v854 = vpack.c.b16 %v822, %v822
        %v855 = vpack.c.b16 %v823, %v823
        %v856 = vpack.c.b16 %v824, %v824
        %v857 = vpack.c.b16 %v825, %v825
        %v858 = vpack.c.b16 %v826, %v826
        %v859 = vpack.c.b16 %v827, %v827
        %v860 = vpack.c.b16 %v828, %v828
        %v861 = vpack.c.b16 %v829, %v829
        %v862 = vpack.c.b16 %v830, %v830
        %v863 = vpack.c.b16 %v831, %v831
        %v864 = vpack.c.b16 %v832, %v832
        %v865 = vpack.c.b16 %v833, %v833
        %v866 = vpack.c.b16 %v834, %v834
        %v867 = vpack.c.b16 %v835, %v835
        %v868 = vpack.c.b16 %v836, %v836
        %v869 = vpack.c.b16 %v837, %v837
        %v870 = vpack.c.b16 %v838, %v838
        %v871 = vpack.c.b16 %v839, %v839
        %v872 = vpack.c.b16 %v840, %v840
        %v873 = vpack.c.b16 %v841, %v841
        %v874 = vpack.c.b16 %v842, %v842
        %v875 = vpack.c.b16 %v843, %v843
        %v876 = vpack.c.b16 %v844, %v844
        %v877 = vpack.c.b16 %v845, %v845
        %v878 = vpack.c.b16 %v846, %v846
        %v879 = vpack.c.b16 %v847, %v847
        %912 = vst [vmem:[#allocation4 + $0x4] sm:$0xf] %v848
        %913 = vst [vmem:[#allocation4 + $0x2c] sm:$0xf] %v849
        %914 = vst [vmem:[#allocation4 + $0x54] sm:$0xf] %v850
        %915 = vst [vmem:[#allocation4 + $0x7c] sm:$0xf] %v851
        %916 = vst [vmem:[#allocation4 + $0xa4] sm:$0xf] %v852
        %917 = vst [vmem:[#allocation4 + $0xcc] sm:$0xf] %v853
        %918 = vst [vmem:[#allocation4 + $0xf4] sm:$0xf] %v854
        %919 = vst [vmem:[#allocation4 + $0x11c] sm:$0xf] %v855
        %920 = vst [vmem:[#allocation4 + $0x144] sm:$0xf] %v856
        %921 = vst [vmem:[#allocation4 + $0x16c] sm:$0xf] %v857
        %922 = vst [vmem:[#allocation4 + $0x194] sm:$0xf] %v858
        %923 = vst [vmem:[#allocation4 + $0x1bc] sm:$0xf] %v859
        %924 = vst [vmem:[#allocation4 + $0x1e4] sm:$0xf] %v860
        %925 = vst [vmem:[#allocation4 + $0x20c] sm:$0xf] %v861
        %926 = vst [vmem:[#allocation4 + $0x234] sm:$0xf] %v862
        %927 = vst [vmem:[#allocation4 + $0x25c] sm:$0xf] %v863
        %928 = vst [vmem:[#allocation4 + $0x284] sm:$0xf] %v864
        %929 = vst [vmem:[#allocation4 + $0x2ac] sm:$0xf] %v865
        %930 = vst [vmem:[#allocation4 + $0x2d4] sm:$0xf] %v866
        %931 = vst [vmem:[#allocation4 + $0x2fc] sm:$0xf] %v867
        %932 = vst [vmem:[#allocation4 + $0x324] sm:$0xf] %v868
        %933 = vst [vmem:[#allocation4 + $0x34c] sm:$0xf] %v869
        %934 = vst [vmem:[#allocation4 + $0x374] sm:$0xf] %v870
        %935 = vst [vmem:[#allocation4 + $0x39c] sm:$0xf] %v871
        %936 = vst [vmem:[#allocation4 + $0x3c4] sm:$0xf] %v872
        %937 = vst [vmem:[#allocation4 + $0x3ec] sm:$0xf] %v873
        %938 = vst [vmem:[#allocation4 + $0x414] sm:$0xf] %v874
        %939 = vst [vmem:[#allocation4 + $0x43c] sm:$0xf] %v875
        %940 = vst [vmem:[#allocation4 + $0x464] sm:$0xf] %v876
        %941 = vst [vmem:[#allocation4 + $0x48c] sm:$0xf] %v877
        %942 = vst [vmem:[#allocation4 + $0x4b4] sm:$0xf] %v878
        %943 = vst [vmem:[#allocation4 + $0x4dc] sm:$0xf] %v879
        %v944 = vpack.c.bf16 %v781, %v780
        %v946 = vunpack.c.l.b16 %v944
        %v947 = vunpack.c.h.b16 %v944
        %v948 = vpack.c.b16 %v946, %v946
        %v949 = vpack.c.b16 %v947, %v947
        %952 = vst [vmem:[#allocation4 + $0x10] sm:$0xf] %v850
        %953 = vst [vmem:[#allocation4 + $0x38] sm:$0xf] %v851
        %954 = vst [vmem:[#allocation4 + $0x60] sm:$0xf] %v852
        %955 = vst [vmem:[#allocation4 + $0x88] sm:$0xf] %v853
        %956 = vst [vmem:[#allocation4 + $0xb0] sm:$0xf] %v854
        %957 = vst [vmem:[#allocation4 + $0xd8] sm:$0xf] %v855
        %958 = vst [vmem:[#allocation4 + $0x100] sm:$0xf] %v856
        %959 = vst [vmem:[#allocation4 + $0x128] sm:$0xf] %v857
        %960 = vst [vmem:[#allocation4 + $0x150] sm:$0xf] %v858
        %961 = vst [vmem:[#allocation4 + $0x178] sm:$0xf] %v859
        %962 = vst [vmem:[#allocation4 + $0x1a0] sm:$0xf] %v860
        %963 = vst [vmem:[#allocation4 + $0x1c8] sm:$0xf] %v861
        %964 = vst [vmem:[#allocation4 + $0x1f0] sm:$0xf] %v862
        %965 = vst [vmem:[#allocation4 + $0x218] sm:$0xf] %v863
        %966 = vst [vmem:[#allocation4 + $0x240] sm:$0xf] %v864
        %967 = vst [vmem:[#allocation4 + $0x268] sm:$0xf] %v865
        %968 = vst [vmem:[#allocation4 + $0x290] sm:$0xf] %v866
        %969 = vst [vmem:[#allocation4 + $0x2b8] sm:$0xf] %v867
        %970 = vst [vmem:[#allocation4 + $0x2e0] sm:$0xf] %v868
        %971 = vst [vmem:[#allocation4 + $0x308] sm:$0xf] %v869
        %972 = vst [vmem:[#allocation4 + $0x330] sm:$0xf] %v870
        %973 = vst [vmem:[#allocation4 + $0x358] sm:$0xf] %v871
        %974 = vst [vmem:[#allocation4 + $0x380] sm:$0xf] %v872
        %975 = vst [vmem:[#allocation4 + $0x3a8] sm:$0xf] %v873
        %976 = vst [vmem:[#allocation4 + $0x3d0] sm:$0xf] %v874
        %977 = vst [vmem:[#allocation4 + $0x3f8] sm:$0xf] %v875
        %978 = vst [vmem:[#allocation4 + $0x420] sm:$0xf] %v876
        %979 = vst [vmem:[#allocation4 + $0x448] sm:$0xf] %v877
        %980 = vst [vmem:[#allocation4 + $0x470] sm:$0xf] %v878
        %981 = vst [vmem:[#allocation4 + $0x498] sm:$0xf] %v879
        %982 = vst [vmem:[#allocation4 + $0x4c0] sm:$0xf] %v948
        %983 = vst [vmem:[#allocation4 + $0x4e8] sm:$0xf] %v949
        %v984 = vpack.c.bf16 %v783, %v782
        %v986 = vunpack.c.l.b16 %v984
        %v987 = vunpack.c.h.b16 %v984
        %v988 = vpack.c.b16 %v986, %v986
        %v989 = vpack.c.b16 %v987, %v987
        %992 = vst [vmem:[#allocation4 + $0x1c] sm:$0xf] %v852
        %993 = vst [vmem:[#allocation4 + $0x44] sm:$0xf] %v853
        %994 = vst [vmem:[#allocation4 + $0x6c] sm:$0xf] %v854
        %995 = vst [vmem:[#allocation4 + $0x94] sm:$0xf] %v855
        %996 = vst [vmem:[#allocation4 + $0xbc] sm:$0xf] %v856
        %997 = vst [vmem:[#allocation4 + $0xe4] sm:$0xf] %v857
        %998 = vst [vmem:[#allocation4 + $0x10c] sm:$0xf] %v858
        %999 = vst [vmem:[#allocation4 + $0x134] sm:$0xf] %v859
        %1000 = vst [vmem:[#allocation4 + $0x15c] sm:$0xf] %v860
        %1001 = vst [vmem:[#allocation4 + $0x184] sm:$0xf] %v861
        %1002 = vst [vmem:[#allocation4 + $0x1ac] sm:$0xf] %v862
        %1003 = vst [vmem:[#allocation4 + $0x1d4] sm:$0xf] %v863
        %1004 = vst [vmem:[#allocation4 + $0x1fc] sm:$0xf] %v864
        %1005 = vst [vmem:[#allocation4 + $0x224] sm:$0xf] %v865
        %1006 = vst [vmem:[#allocation4 + $0x24c] sm:$0xf] %v866
        %1007 = vst [vmem:[#allocation4 + $0x274] sm:$0xf] %v867
        %1008 = vst [vmem:[#allocation4 + $0x29c] sm:$0xf] %v868
        %1009 = vst [vmem:[#allocation4 + $0x2c4] sm:$0xf] %v869
        %1010 = vst [vmem:[#allocation4 + $0x2ec] sm:$0xf] %v870
        %1011 = vst [vmem:[#allocation4 + $0x314] sm:$0xf] %v871
        %1012 = vst [vmem:[#allocation4 + $0x33c] sm:$0xf] %v872
        %1013 = vst [vmem:[#allocation4 + $0x364] sm:$0xf] %v873
        %1014 = vst [vmem:[#allocation4 + $0x38c] sm:$0xf] %v874
        %1015 = vst [vmem:[#allocation4 + $0x3b4] sm:$0xf] %v875
        %1016 = vst [vmem:[#allocation4 + $0x3dc] sm:$0xf] %v876
        %1017 = vst [vmem:[#allocation4 + $0x404] sm:$0xf] %v877
        %1018 = vst [vmem:[#allocation4 + $0x42c] sm:$0xf] %v878
        %1019 = vst [vmem:[#allocation4 + $0x454] sm:$0xf] %v879
        %1020 = vst [vmem:[#allocation4 + $0x47c] sm:$0xf] %v948
        %1021 = vst [vmem:[#allocation4 + $0x4a4] sm:$0xf] %v949
        %1022 = vst [vmem:[#allocation4 + $0x4cc] sm:$0xf] %v988
        %1023 = vst [vmem:[#allocation4 + $0x4f4] sm:$0xf] %v989
        %v1024 = vld [vmem:[#allocation2 + $0x1] sm:$0xff]
        %v1025 = vld [vmem:[#allocation2 + $0x9] sm:$0xff]
        %v1026 = vld [vmem:[#allocation2 + $0x19] sm:$0xff]
        %v1027 = vld [vmem:[#allocation2 + $0x21] sm:$0xff]
        %v1028 = vld [vmem:[#allocation2 + $0x31] sm:$0xff]
        %v1029 = vld [vmem:[#allocation2 + $0x39] sm:$0xff]
        %v1030 = vld [vmem:[#allocation2 + $0x49] sm:$0xff]
        %v1031 = vld [vmem:[#allocation2 + $0x51] sm:$0xff]
        %v1032 = vld [vmem:[#allocation2 + $0x61] sm:$0xff]
        %v1033 = vld [vmem:[#allocation2 + $0x69] sm:$0xff]
        %v1034 = vld [vmem:[#allocation2 + $0x79] sm:$0xff]
        %v1035 = vld [vmem:[#allocation2 + $0x81] sm:$0xff]
        %v1036 = vld [vmem:[#allocation2 + $0x91] sm:$0xff]
        %v1037 = vld [vmem:[#allocation2 + $0x99] sm:$0xff]
        %v1038 = vld [vmem:[#allocation2 + $0xa9] sm:$0xff]
        %v1039 = vld [vmem:[#allocation2 + $0xb1] sm:$0xff]
        %v1040 = vld [vmem:[#allocation2 + $0xc1] sm:$0xff]
        %v1041 = vld [vmem:[#allocation2 + $0xc9] sm:$0xff]
        %v1042 = vld [vmem:[#allocation2 + $0xd9] sm:$0xff]
        %v1043 = vld [vmem:[#allocation2 + $0xe1] sm:$0xff]
        %v1044 = vld [vmem:[#allocation2 + $0xf1] sm:$0xff]
        %v1045 = vld [vmem:[#allocation2 + $0xf9] sm:$0xff]
        %v1046 = vld [vmem:[#allocation2 + $0x109] sm:$0xff]
        %v1047 = vld [vmem:[#allocation2 + $0x111] sm:$0xff]
        %v1048 = vld [vmem:[#allocation2 + $0x121] sm:$0xff]
        %v1049 = vld [vmem:[#allocation2 + $0x129] sm:$0xff]
        %v1050 = vld [vmem:[#allocation2 + $0x139] sm:$0xff]
        %v1051 = vld [vmem:[#allocation2 + $0x141] sm:$0xff]
        %v1052 = vld [vmem:[#allocation2 + $0x151] sm:$0xff]
        %v1053 = vld [vmem:[#allocation2 + $0x159] sm:$0xff]
        %v1054 = vld [vmem:[#allocation2 + $0x169] sm:$0xff]
        %v1055 = vld [vmem:[#allocation2 + $0x171] sm:$0xff]
        %v1056 = vld [vmem:[#allocation2 + $0x181] sm:$0xff]
        %v1057 = vld [vmem:[#allocation2 + $0x189] sm:$0xff]
        %v1058 = vld [vmem:[#allocation2 + $0x199] sm:$0xff]
        %v1059 = vld [vmem:[#allocation2 + $0x1a1] sm:$0xff]
        %v1060 = vpack.c.bf16 %v1025, %v1024
        %v1061 = vpack.c.bf16 %v1027, %v1026
        %v1062 = vpack.c.bf16 %v1029, %v1028
        %v1063 = vpack.c.bf16 %v1031, %v1030
        %v1064 = vpack.c.bf16 %v1033, %v1032
        %v1065 = vpack.c.bf16 %v1035, %v1034
        %v1066 = vpack.c.bf16 %v1037, %v1036
        %v1067 = vpack.c.bf16 %v1039, %v1038
        %v1068 = vpack.c.bf16 %v1041, %v1040
        %v1069 = vpack.c.bf16 %v1043, %v1042
        %v1070 = vpack.c.bf16 %v1045, %v1044
        %v1071 = vpack.c.bf16 %v1047, %v1046
        %v1072 = vpack.c.bf16 %v1049, %v1048
        %v1073 = vpack.c.bf16 %v1051, %v1050
        %v1074 = vpack.c.bf16 %v1053, %v1052
        %v1075 = vpack.c.bf16 %v1055, %v1054
        %v1092 = vunpack.c.l.b16 %v1060
        %v1093 = vunpack.c.h.b16 %v1060
        %v1094 = vunpack.c.l.b16 %v1061
        %v1095 = vunpack.c.h.b16 %v1061
        %v1096 = vunpack.c.l.b16 %v1062
        %v1097 = vunpack.c.h.b16 %v1062
        %v1098 = vunpack.c.l.b16 %v1063
        %v1099 = vunpack.c.h.b16 %v1063
        %v1100 = vunpack.c.l.b16 %v1064
        %v1101 = vunpack.c.h.b16 %v1064
        %v1102 = vunpack.c.l.b16 %v1065
        %v1103 = vunpack.c.h.b16 %v1065
        %v1104 = vunpack.c.l.b16 %v1066
        %v1105 = vunpack.c.h.b16 %v1066
        %v1106 = vunpack.c.l.b16 %v1067
        %v1107 = vunpack.c.h.b16 %v1067
        %v1108 = vunpack.c.l.b16 %v1068
        %v1109 = vunpack.c.h.b16 %v1068
        %v1110 = vunpack.c.l.b16 %v1069
        %v1111 = vunpack.c.h.b16 %v1069
        %v1112 = vunpack.c.l.b16 %v1070
        %v1113 = vunpack.c.h.b16 %v1070
        %v1114 = vunpack.c.l.b16 %v1071
        %v1115 = vunpack.c.h.b16 %v1071
        %v1116 = vunpack.c.l.b16 %v1072
        %v1117 = vunpack.c.h.b16 %v1072
        %v1118 = vunpack.c.l.b16 %v1073
        %v1119 = vunpack.c.h.b16 %v1073
        %v1120 = vunpack.c.l.b16 %v1074
        %v1121 = vunpack.c.h.b16 %v1074
        %v1122 = vunpack.c.l.b16 %v1075
        %v1123 = vunpack.c.h.b16 %v1075
        %v1124 = vpack.c.b16 %v1092, %v1092
        %v1125 = vpack.c.b16 %v1093, %v1093
        %v1126 = vpack.c.b16 %v1094, %v1094
        %v1127 = vpack.c.b16 %v1095, %v1095
        %v1128 = vpack.c.b16 %v1096, %v1096
        %v1129 = vpack.c.b16 %v1097, %v1097
        %v1130 = vpack.c.b16 %v1098, %v1098
        %v1131 = vpack.c.b16 %v1099, %v1099
        %v1132 = vpack.c.b16 %v1100, %v1100
        %v1133 = vpack.c.b16 %v1101, %v1101
        %v1134 = vpack.c.b16 %v1102, %v1102
        %v1135 = vpack.c.b16 %v1103, %v1103
        %v1136 = vpack.c.b16 %v1104, %v1104
        %v1137 = vpack.c.b16 %v1105, %v1105
        %v1138 = vpack.c.b16 %v1106, %v1106
        %v1139 = vpack.c.b16 %v1107, %v1107
        %v1140 = vpack.c.b16 %v1108, %v1108
        %v1141 = vpack.c.b16 %v1109, %v1109
        %v1142 = vpack.c.b16 %v1110, %v1110
        %v1143 = vpack.c.b16 %v1111, %v1111
        %v1144 = vpack.c.b16 %v1112, %v1112
        %v1145 = vpack.c.b16 %v1113, %v1113
        %v1146 = vpack.c.b16 %v1114, %v1114
        %v1147 = vpack.c.b16 %v1115, %v1115
        %v1148 = vpack.c.b16 %v1116, %v1116
        %v1149 = vpack.c.b16 %v1117, %v1117
        %v1150 = vpack.c.b16 %v1118, %v1118
        %v1151 = vpack.c.b16 %v1119, %v1119
        %v1152 = vpack.c.b16 %v1120, %v1120
        %v1153 = vpack.c.b16 %v1121, %v1121
        %v1154 = vpack.c.b16 %v1122, %v1122
        %v1155 = vpack.c.b16 %v1123, %v1123
        %1188 = vst [vmem:[#allocation4 + $0x8] sm:$0xf] %v1124
        %1189 = vst [vmem:[#allocation4 + $0x30] sm:$0xf] %v1125
        %1190 = vst [vmem:[#allocation4 + $0x58] sm:$0xf] %v1126
        %1191 = vst [vmem:[#allocation4 + $0x80] sm:$0xf] %v1127
        %1192 = vst [vmem:[#allocation4 + $0xa8] sm:$0xf] %v1128
        %1193 = vst [vmem:[#allocation4 + $0xd0] sm:$0xf] %v1129
        %1194 = vst [vmem:[#allocation4 + $0xf8] sm:$0xf] %v1130
        %1195 = vst [vmem:[#allocation4 + $0x120] sm:$0xf] %v1131
        %1196 = vst [vmem:[#allocation4 + $0x148] sm:$0xf] %v1132
        %1197 = vst [vmem:[#allocation4 + $0x170] sm:$0xf] %v1133
        %1198 = vst [vmem:[#allocation4 + $0x198] sm:$0xf] %v1134
        %1199 = vst [vmem:[#allocation4 + $0x1c0] sm:$0xf] %v1135
        %1200 = vst [vmem:[#allocation4 + $0x1e8] sm:$0xf] %v1136
        %1201 = vst [vmem:[#allocation4 + $0x210] sm:$0xf] %v1137
        %1202 = vst [vmem:[#allocation4 + $0x238] sm:$0xf] %v1138
        %1203 = vst [vmem:[#allocation4 + $0x260] sm:$0xf] %v1139
        %1204 = vst [vmem:[#allocation4 + $0x288] sm:$0xf] %v1140
        %1205 = vst [vmem:[#allocation4 + $0x2b0] sm:$0xf] %v1141
        %1206 = vst [vmem:[#allocation4 + $0x2d8] sm:$0xf] %v1142
        %1207 = vst [vmem:[#allocation4 + $0x300] sm:$0xf] %v1143
        %1208 = vst [vmem:[#allocation4 + $0x328] sm:$0xf] %v1144
        %1209 = vst [vmem:[#allocation4 + $0x350] sm:$0xf] %v1145
        %1210 = vst [vmem:[#allocation4 + $0x378] sm:$0xf] %v1146
        %1211 = vst [vmem:[#allocation4 + $0x3a0] sm:$0xf] %v1147
        %1212 = vst [vmem:[#allocation4 + $0x3c8] sm:$0xf] %v1148
        %1213 = vst [vmem:[#allocation4 + $0x3f0] sm:$0xf] %v1149
        %1214 = vst [vmem:[#allocation4 + $0x418] sm:$0xf] %v1150
        %1215 = vst [vmem:[#allocation4 + $0x440] sm:$0xf] %v1151
        %1216 = vst [vmem:[#allocation4 + $0x468] sm:$0xf] %v1152
        %1217 = vst [vmem:[#allocation4 + $0x490] sm:$0xf] %v1153
        %1218 = vst [vmem:[#allocation4 + $0x4b8] sm:$0xf] %v1154
        %1219 = vst [vmem:[#allocation4 + $0x4e0] sm:$0xf] %v1155
        %v1220 = vpack.c.bf16 %v1057, %v1056
        %v1222 = vunpack.c.l.b16 %v1220
        %v1223 = vunpack.c.h.b16 %v1220
        %v1224 = vpack.c.b16 %v1222, %v1222
        %v1225 = vpack.c.b16 %v1223, %v1223
        %1228 = vst [vmem:[#allocation4 + $0x14] sm:$0xf] %v1126
        %1229 = vst [vmem:[#allocation4 + $0x3c] sm:$0xf] %v1127
        %1230 = vst [vmem:[#allocation4 + $0x64] sm:$0xf] %v1128
        %1231 = vst [vmem:[#allocation4 + $0x8c] sm:$0xf] %v1129
        %1232 = vst [vmem:[#allocation4 + $0xb4] sm:$0xf] %v1130
        %1233 = vst [vmem:[#allocation4 + $0xdc] sm:$0xf] %v1131
        %1234 = vst [vmem:[#allocation4 + $0x104] sm:$0xf] %v1132
        %1235 = vst [vmem:[#allocation4 + $0x12c] sm:$0xf] %v1133
        %1236 = vst [vmem:[#allocation4 + $0x154] sm:$0xf] %v1134
        %1237 = vst [vmem:[#allocation4 + $0x17c] sm:$0xf] %v1135
        %1238 = vst [vmem:[#allocation4 + $0x1a4] sm:$0xf] %v1136
        %1239 = vst [vmem:[#allocation4 + $0x1cc] sm:$0xf] %v1137
        %1240 = vst [vmem:[#allocation4 + $0x1f4] sm:$0xf] %v1138
        %1241 = vst [vmem:[#allocation4 + $0x21c] sm:$0xf] %v1139
        %1242 = vst [vmem:[#allocation4 + $0x244] sm:$0xf] %v1140
        %1243 = vst [vmem:[#allocation4 + $0x26c] sm:$0xf] %v1141
        %1244 = vst [vmem:[#allocation4 + $0x294] sm:$0xf] %v1142
        %1245 = vst [vmem:[#allocation4 + $0x2bc] sm:$0xf] %v1143
        %1246 = vst [vmem:[#allocation4 + $0x2e4] sm:$0xf] %v1144
        %1247 = vst [vmem:[#allocation4 + $0x30c] sm:$0xf] %v1145
        %1248 = vst [vmem:[#allocation4 + $0x334] sm:$0xf] %v1146
        %1249 = vst [vmem:[#allocation4 + $0x35c] sm:$0xf] %v1147
        %1250 = vst [vmem:[#allocation4 + $0x384] sm:$0xf] %v1148
        %1251 = vst [vmem:[#allocation4 + $0x3ac] sm:$0xf] %v1149
        %1252 = vst [vmem:[#allocation4 + $0x3d4] sm:$0xf] %v1150
        %1253 = vst [vmem:[#allocation4 + $0x3fc] sm:$0xf] %v1151
        %1254 = vst [vmem:[#allocation4 + $0x424] sm:$0xf] %v1152
        %1255 = vst [vmem:[#allocation4 + $0x44c] sm:$0xf] %v1153
        %1256 = vst [vmem:[#allocation4 + $0x474] sm:$0xf] %v1154
        %1257 = vst [vmem:[#allocation4 + $0x49c] sm:$0xf] %v1155
        %1258 = vst [vmem:[#allocation4 + $0x4c4] sm:$0xf] %v1224
        %1259 = vst [vmem:[#allocation4 + $0x4ec] sm:$0xf] %v1225
        %v1260 = vpack.c.bf16 %v1059, %v1058
        %v1262 = vunpack.c.l.b16 %v1260
        %v1263 = vunpack.c.h.b16 %v1260
        %v1264 = vpack.c.b16 %v1262, %v1262
        %v1265 = vpack.c.b16 %v1263, %v1263
        %1268 = vst [vmem:[#allocation4 + $0x20] sm:$0xf] %v1128
        %1269 = vst [vmem:[#allocation4 + $0x48] sm:$0xf] %v1129
        %1270 = vst [vmem:[#allocation4 + $0x70] sm:$0xf] %v1130
        %1271 = vst [vmem:[#allocation4 + $0x98] sm:$0xf] %v1131
        %1272 = vst [vmem:[#allocation4 + $0xc0] sm:$0xf] %v1132
        %1273 = vst [vmem:[#allocation4 + $0xe8] sm:$0xf] %v1133
        %1274 = vst [vmem:[#allocation4 + $0x110] sm:$0xf] %v1134
        %1275 = vst [vmem:[#allocation4 + $0x138] sm:$0xf] %v1135
        %1276 = vst [vmem:[#allocation4 + $0x160] sm:$0xf] %v1136
        %1277 = vst [vmem:[#allocation4 + $0x188] sm:$0xf] %v1137
        %1278 = vst [vmem:[#allocation4 + $0x1b0] sm:$0xf] %v1138
        %1279 = vst [vmem:[#allocation4 + $0x1d8] sm:$0xf] %v1139
        %1280 = vst [vmem:[#allocation4 + $0x200] sm:$0xf] %v1140
        %1281 = vst [vmem:[#allocation4 + $0x228] sm:$0xf] %v1141
        %1282 = vst [vmem:[#allocation4 + $0x250] sm:$0xf] %v1142
        %1283 = vst [vmem:[#allocation4 + $0x278] sm:$0xf] %v1143
        %1284 = vst [vmem:[#allocation4 + $0x2a0] sm:$0xf] %v1144
        %1285 = vst [vmem:[#allocation4 + $0x2c8] sm:$0xf] %v1145
        %1286 = vst [vmem:[#allocation4 + $0x2f0] sm:$0xf] %v1146
        %1287 = vst [vmem:[#allocation4 + $0x318] sm:$0xf] %v1147
        %1288 = vst [vmem:[#allocation4 + $0x340] sm:$0xf] %v1148
        %1289 = vst [vmem:[#allocation4 + $0x368] sm:$0xf] %v1149
        %1290 = vst [vmem:[#allocation4 + $0x390] sm:$0xf] %v1150
        %1291 = vst [vmem:[#allocation4 + $0x3b8] sm:$0xf] %v1151
        %1292 = vst [vmem:[#allocation4 + $0x3e0] sm:$0xf] %v1152
        %1293 = vst [vmem:[#allocation4 + $0x408] sm:$0xf] %v1153
        %1294 = vst [vmem:[#allocation4 + $0x430] sm:$0xf] %v1154
        %1295 = vst [vmem:[#allocation4 + $0x458] sm:$0xf] %v1155
        %1296 = vst [vmem:[#allocation4 + $0x480] sm:$0xf] %v1224
        %1297 = vst [vmem:[#allocation4 + $0x4a8] sm:$0xf] %v1225
        %1298 = vst [vmem:[#allocation4 + $0x4d0] sm:$0xf] %v1264
        %1299 = vst [vmem:[#allocation4 + $0x4f8] sm:$0xf] %v1265
        %v1300 = vld [vmem:[#allocation2 + $0x2] sm:$0xff]
        %v1301 = vld [vmem:[#allocation2 + $0xa] sm:$0xff]
        %v1302 = vld [vmem:[#allocation2 + $0x1a] sm:$0xff]
        %v1303 = vld [vmem:[#allocation2 + $0x22] sm:$0xff]
        %v1304 = vld [vmem:[#allocation2 + $0x32] sm:$0xff]
        %v1305 = vld [vmem:[#allocation2 + $0x3a] sm:$0xff]
        %v1306 = vld [vmem:[#allocation2 + $0x4a] sm:$0xff]
        %v1307 = vld [vmem:[#allocation2 + $0x52] sm:$0xff]
        %v1308 = vld [vmem:[#allocation2 + $0x62] sm:$0xff]
        %v1309 = vld [vmem:[#allocation2 + $0x6a] sm:$0xff]
        %v1310 = vld [vmem:[#allocation2 + $0x7a] sm:$0xff]
        %v1311 = vld [vmem:[#allocation2 + $0x82] sm:$0xff]
        %v1312 = vld [vmem:[#allocation2 + $0x92] sm:$0xff]
        %v1313 = vld [vmem:[#allocation2 + $0x9a] sm:$0xff]
        %v1314 = vld [vmem:[#allocation2 + $0xaa] sm:$0xff]
        %v1315 = vld [vmem:[#allocation2 + $0xb2] sm:$0xff]
        %v1316 = vld [vmem:[#allocation2 + $0xc2] sm:$0xff]
        %v1317 = vld [vmem:[#allocation2 + $0xca] sm:$0xff]
        %v1318 = vld [vmem:[#allocation2 + $0xda] sm:$0xff]
        %v1319 = vld [vmem:[#allocation2 + $0xe2] sm:$0xff]
        %v1320 = vld [vmem:[#allocation2 + $0xf2] sm:$0xff]
        %v1321 = vld [vmem:[#allocation2 + $0xfa] sm:$0xff]
        %v1322 = vld [vmem:[#allocation2 + $0x10a] sm:$0xff]
        %v1323 = vld [vmem:[#allocation2 + $0x112] sm:$0xff]
        %v1324 = vld [vmem:[#allocation2 + $0x122] sm:$0xff]
        %v1325 = vld [vmem:[#allocation2 + $0x12a] sm:$0xff]
        %v1326 = vld [vmem:[#allocation2 + $0x13a] sm:$0xff]
        %v1327 = vld [vmem:[#allocation2 + $0x142] sm:$0xff]
        %v1328 = vld [vmem:[#allocation2 + $0x152] sm:$0xff]
        %v1329 = vld [vmem:[#allocation2 + $0x15a] sm:$0xff]
        %v1330 = vld [vmem:[#allocation2 + $0x16a] sm:$0xff]
        %v1331 = vld [vmem:[#allocation2 + $0x172] sm:$0xff]
        %v1332 = vld [vmem:[#allocation2 + $0x182] sm:$0xff]
        %v1333 = vld [vmem:[#allocation2 + $0x18a] sm:$0xff]
        %v1334 = vld [vmem:[#allocation2 + $0x19a] sm:$0xff]
        %v1335 = vld [vmem:[#allocation2 + $0x1a2] sm:$0xff]
        %v1336 = vpack.c.bf16 %v1301, %v1300
        %v1337 = vpack.c.bf16 %v1303, %v1302
        %v1338 = vpack.c.bf16 %v1305, %v1304
        %v1339 = vpack.c.bf16 %v1307, %v1306
        %v1340 = vpack.c.bf16 %v1309, %v1308
        %v1341 = vpack.c.bf16 %v1311, %v1310
        %v1342 = vpack.c.bf16 %v1313, %v1312
        %v1343 = vpack.c.bf16 %v1315, %v1314
        %v1344 = vpack.c.bf16 %v1317, %v1316
        %v1345 = vpack.c.bf16 %v1319, %v1318
        %v1346 = vpack.c.bf16 %v1321, %v1320
        %v1347 = vpack.c.bf16 %v1323, %v1322
        %v1348 = vpack.c.bf16 %v1325, %v1324
        %v1349 = vpack.c.bf16 %v1327, %v1326
        %v1350 = vpack.c.bf16 %v1329, %v1328
        %v1351 = vpack.c.bf16 %v1331, %v1330
        %v1368 = vunpack.c.l.b16 %v1336
        %v1369 = vunpack.c.h.b16 %v1336
        %v1370 = vunpack.c.l.b16 %v1337
        %v1371 = vunpack.c.h.b16 %v1337
        %v1372 = vunpack.c.l.b16 %v1338
        %v1373 = vunpack.c.h.b16 %v1338
        %v1374 = vunpack.c.l.b16 %v1339
        %v1375 = vunpack.c.h.b16 %v1339
        %v1376 = vunpack.c.l.b16 %v1340
        %v1377 = vunpack.c.h.b16 %v1340
        %v1378 = vunpack.c.l.b16 %v1341
        %v1379 = vunpack.c.h.b16 %v1341
        %v1380 = vunpack.c.l.b16 %v1342
        %v1381 = vunpack.c.h.b16 %v1342
        %v1382 = vunpack.c.l.b16 %v1343
        %v1383 = vunpack.c.h.b16 %v1343
        %v1384 = vunpack.c.l.b16 %v1344
        %v1385 = vunpack.c.h.b16 %v1344
        %v1386 = vunpack.c.l.b16 %v1345
        %v1387 = vunpack.c.h.b16 %v1345
        %v1388 = vunpack.c.l.b16 %v1346
        %v1389 = vunpack.c.h.b16 %v1346
        %v1390 = vunpack.c.l.b16 %v1347
        %v1391 = vunpack.c.h.b16 %v1347
        %v1392 = vunpack.c.l.b16 %v1348
        %v1393 = vunpack.c.h.b16 %v1348
        %v1394 = vunpack.c.l.b16 %v1349
        %v1395 = vunpack.c.h.b16 %v1349
        %v1396 = vunpack.c.l.b16 %v1350
        %v1397 = vunpack.c.h.b16 %v1350
        %v1398 = vunpack.c.l.b16 %v1351
        %v1399 = vunpack.c.h.b16 %v1351
        %v1400 = vpack.c.b16 %v1368, %v1368
        %v1401 = vpack.c.b16 %v1369, %v1369
        %v1402 = vpack.c.b16 %v1370, %v1370
        %v1403 = vpack.c.b16 %v1371, %v1371
        %v1404 = vpack.c.b16 %v1372, %v1372
        %v1405 = vpack.c.b16 %v1373, %v1373
        %v1406 = vpack.c.b16 %v1374, %v1374
        %v1407 = vpack.c.b16 %v1375, %v1375
        %v1408 = vpack.c.b16 %v1376, %v1376
        %v1409 = vpack.c.b16 %v1377, %v1377
        %v1410 = vpack.c.b16 %v1378, %v1378
        %v1411 = vpack.c.b16 %v1379, %v1379
        %v1412 = vpack.c.b16 %v1380, %v1380
        %v1413 = vpack.c.b16 %v1381, %v1381
        %v1414 = vpack.c.b16 %v1382, %v1382
        %v1415 = vpack.c.b16 %v1383, %v1383
        %v1416 = vpack.c.b16 %v1384, %v1384
        %v1417 = vpack.c.b16 %v1385, %v1385
        %v1418 = vpack.c.b16 %v1386, %v1386
        %v1419 = vpack.c.b16 %v1387, %v1387
        %v1420 = vpack.c.b16 %v1388, %v1388
        %v1421 = vpack.c.b16 %v1389, %v1389
        %v1422 = vpack.c.b16 %v1390, %v1390
        %v1423 = vpack.c.b16 %v1391, %v1391
        %v1424 = vpack.c.b16 %v1392, %v1392
        %v1425 = vpack.c.b16 %v1393, %v1393
        %v1426 = vpack.c.b16 %v1394, %v1394
        %v1427 = vpack.c.b16 %v1395, %v1395
        %v1428 = vpack.c.b16 %v1396, %v1396
        %v1429 = vpack.c.b16 %v1397, %v1397
        %v1430 = vpack.c.b16 %v1398, %v1398
        %v1431 = vpack.c.b16 %v1399, %v1399
        %1464 = vst [vmem:[#allocation4 + $0xc] sm:$0xf] %v1400
        %1465 = vst [vmem:[#allocation4 + $0x34] sm:$0xf] %v1401
        %1466 = vst [vmem:[#allocation4 + $0x5c] sm:$0xf] %v1402
        %1467 = vst [vmem:[#allocation4 + $0x84] sm:$0xf] %v1403
        %1468 = vst [vmem:[#allocation4 + $0xac] sm:$0xf] %v1404
        %1469 = vst [vmem:[#allocation4 + $0xd4] sm:$0xf] %v1405
        %1470 = vst [vmem:[#allocation4 + $0xfc] sm:$0xf] %v1406
        %1471 = vst [vmem:[#allocation4 + $0x124] sm:$0xf] %v1407
        %1472 = vst [vmem:[#allocation4 + $0x14c] sm:$0xf] %v1408
        %1473 = vst [vmem:[#allocation4 + $0x174] sm:$0xf] %v1409
        %1474 = vst [vmem:[#allocation4 + $0x19c] sm:$0xf] %v1410
        %1475 = vst [vmem:[#allocation4 + $0x1c4] sm:$0xf] %v1411
        %1476 = vst [vmem:[#allocation4 + $0x1ec] sm:$0xf] %v1412
        %1477 = vst [vmem:[#allocation4 + $0x214] sm:$0xf] %v1413
        %1478 = vst [vmem:[#allocation4 + $0x23c] sm:$0xf] %v1414
        %1479 = vst [vmem:[#allocation4 + $0x264] sm:$0xf] %v1415
        %1480 = vst [vmem:[#allocation4 + $0x28c] sm:$0xf] %v1416
        %1481 = vst [vmem:[#allocation4 + $0x2b4] sm:$0xf] %v1417
        %1482 = vst [vmem:[#allocation4 + $0x2dc] sm:$0xf] %v1418
        %1483 = vst [vmem:[#allocation4 + $0x304] sm:$0xf] %v1419
        %1484 = vst [vmem:[#allocation4 + $0x32c] sm:$0xf] %v1420
        %1485 = vst [vmem:[#allocation4 + $0x354] sm:$0xf] %v1421
        %1486 = vst [vmem:[#allocation4 + $0x37c] sm:$0xf] %v1422
        %1487 = vst [vmem:[#allocation4 + $0x3a4] sm:$0xf] %v1423
        %1488 = vst [vmem:[#allocation4 + $0x3cc] sm:$0xf] %v1424
        %1489 = vst [vmem:[#allocation4 + $0x3f4] sm:$0xf] %v1425
        %1490 = vst [vmem:[#allocation4 + $0x41c] sm:$0xf] %v1426
        %1491 = vst [vmem:[#allocation4 + $0x444] sm:$0xf] %v1427
        %1492 = vst [vmem:[#allocation4 + $0x46c] sm:$0xf] %v1428
        %1493 = vst [vmem:[#allocation4 + $0x494] sm:$0xf] %v1429
        %1494 = vst [vmem:[#allocation4 + $0x4bc] sm:$0xf] %v1430
        %1495 = vst [vmem:[#allocation4 + $0x4e4] sm:$0xf] %v1431
        %v1496 = vpack.c.bf16 %v1333, %v1332
        %v1498 = vunpack.c.l.b16 %v1496
        %v1499 = vunpack.c.h.b16 %v1496
        %v1500 = vpack.c.b16 %v1498, %v1498
        %v1501 = vpack.c.b16 %v1499, %v1499
        %1504 = vst [vmem:[#allocation4 + $0x18] sm:$0xf] %v1402
        %1505 = vst [vmem:[#allocation4 + $0x40] sm:$0xf] %v1403
        %1506 = vst [vmem:[#allocation4 + $0x68] sm:$0xf] %v1404
        %1507 = vst [vmem:[#allocation4 + $0x90] sm:$0xf] %v1405
        %1508 = vst [vmem:[#allocation4 + $0xb8] sm:$0xf] %v1406
        %1509 = vst [vmem:[#allocation4 + $0xe0] sm:$0xf] %v1407
        %1510 = vst [vmem:[#allocation4 + $0x108] sm:$0xf] %v1408
        %1511 = vst [vmem:[#allocation4 + $0x130] sm:$0xf] %v1409
        %1512 = vst [vmem:[#allocation4 + $0x158] sm:$0xf] %v1410
        %1513 = vst [vmem:[#allocation4 + $0x180] sm:$0xf] %v1411
        %1514 = vst [vmem:[#allocation4 + $0x1a8] sm:$0xf] %v1412
        %1515 = vst [vmem:[#allocation4 + $0x1d0] sm:$0xf] %v1413
        %1516 = vst [vmem:[#allocation4 + $0x1f8] sm:$0xf] %v1414
        %1517 = vst [vmem:[#allocation4 + $0x220] sm:$0xf] %v1415
        %1518 = vst [vmem:[#allocation4 + $0x248] sm:$0xf] %v1416
        %1519 = vst [vmem:[#allocation4 + $0x270] sm:$0xf] %v1417
        %1520 = vst [vmem:[#allocation4 + $0x298] sm:$0xf] %v1418
        %1521 = vst [vmem:[#allocation4 + $0x2c0] sm:$0xf] %v1419
        %1522 = vst [vmem:[#allocation4 + $0x2e8] sm:$0xf] %v1420
        %1523 = vst [vmem:[#allocation4 + $0x310] sm:$0xf] %v1421
        %1524 = vst [vmem:[#allocation4 + $0x338] sm:$0xf] %v1422
        %1525 = vst [vmem:[#allocation4 + $0x360] sm:$0xf] %v1423
        %1526 = vst [vmem:[#allocation4 + $0x388] sm:$0xf] %v1424
        %1527 = vst [vmem:[#allocation4 + $0x3b0] sm:$0xf] %v1425
        %1528 = vst [vmem:[#allocation4 + $0x3d8] sm:$0xf] %v1426
        %1529 = vst [vmem:[#allocation4 + $0x400] sm:$0xf] %v1427
        %1530 = vst [vmem:[#allocation4 + $0x428] sm:$0xf] %v1428
        %1531 = vst [vmem:[#allocation4 + $0x450] sm:$0xf] %v1429
        %1532 = vst [vmem:[#allocation4 + $0x478] sm:$0xf] %v1430
        %1533 = vst [vmem:[#allocation4 + $0x4a0] sm:$0xf] %v1431
        %1534 = vst [vmem:[#allocation4 + $0x4c8] sm:$0xf] %v1500
        %1535 = vst [vmem:[#allocation4 + $0x4f0] sm:$0xf] %v1501
        %v1536 = vpack.c.bf16 %v1335, %v1334
        %v1538 = vunpack.c.l.b16 %v1536
        %v1539 = vunpack.c.h.b16 %v1536
        %v1540 = vpack.c.b16 %v1538, %v1538
        %v1541 = vpack.c.b16 %v1539, %v1539
        %1544 = vst [vmem:[#allocation4 + $0x24] sm:$0xf] %v1404
        %1545 = vst [vmem:[#allocation4 + $0x4c] sm:$0xf] %v1405
        %1546 = vst [vmem:[#allocation4 + $0x74] sm:$0xf] %v1406
        %1547 = vst [vmem:[#allocation4 + $0x9c] sm:$0xf] %v1407
        %1548 = vst [vmem:[#allocation4 + $0xc4] sm:$0xf] %v1408
        %1549 = vst [vmem:[#allocation4 + $0xec] sm:$0xf] %v1409
        %1550 = vst [vmem:[#allocation4 + $0x114] sm:$0xf] %v1410
        %1551 = vst [vmem:[#allocation4 + $0x13c] sm:$0xf] %v1411
        %1552 = vst [vmem:[#allocation4 + $0x164] sm:$0xf] %v1412
        %1553 = vst [vmem:[#allocation4 + $0x18c] sm:$0xf] %v1413
        %1554 = vst [vmem:[#allocation4 + $0x1b4] sm:$0xf] %v1414
        %1555 = vst [vmem:[#allocation4 + $0x1dc] sm:$0xf] %v1415
        %1556 = vst [vmem:[#allocation4 + $0x204] sm:$0xf] %v1416
        %1557 = vst [vmem:[#allocation4 + $0x22c] sm:$0xf] %v1417
        %1558 = vst [vmem:[#allocation4 + $0x254] sm:$0xf] %v1418
        %1559 = vst [vmem:[#allocation4 + $0x27c] sm:$0xf] %v1419
        %1560 = vst [vmem:[#allocation4 + $0x2a4] sm:$0xf] %v1420
        %1561 = vst [vmem:[#allocation4 + $0x2cc] sm:$0xf] %v1421
        %1562 = vst [vmem:[#allocation4 + $0x2f4] sm:$0xf] %v1422
        %1563 = vst [vmem:[#allocation4 + $0x31c] sm:$0xf] %v1423
        %1564 = vst [vmem:[#allocation4 + $0x344] sm:$0xf] %v1424
        %1565 = vst [vmem:[#allocation4 + $0x36c] sm:$0xf] %v1425
        %1566 = vst [vmem:[#allocation4 + $0x394] sm:$0xf] %v1426
        %1567 = vst [vmem:[#allocation4 + $0x3bc] sm:$0xf] %v1427
        %1568 = vst [vmem:[#allocation4 + $0x3e4] sm:$0xf] %v1428
        %1569 = vst [vmem:[#allocation4 + $0x40c] sm:$0xf] %v1429
        %1570 = vst [vmem:[#allocation4 + $0x434] sm:$0xf] %v1430
        %1571 = vst [vmem:[#allocation4 + $0x45c] sm:$0xf] %v1431
        %1572 = vst [vmem:[#allocation4 + $0x484] sm:$0xf] %v1500
        %1573 = vst [vmem:[#allocation4 + $0x4ac] sm:$0xf] %v1501
        %1574 = vst [vmem:[#allocation4 + $0x4d4] sm:$0xf] %v1540
        %1575 = vst [vmem:[#allocation4 + $0x4fc] sm:$0xf] %v1541
        %v1576 = vld [vmem:[#allocation4 + $0x4] sm:$0xff]
        %v1577 = vld [vmem:[#allocation4 + $0xc] sm:$0xff]
        %v1578 = vld [vmem:[#allocation4 + $0x14] sm:$0xff]
        %v1579 = vld [vmem:[#allocation4 + $0x1c] sm:$0xff]
        %v1580 = vld [vmem:[#allocation4 + $0x24] sm:$0xf]
        %v1581 = vld [vmem:[#allocation4 + $0x2c] sm:$0xff]
        %v1582 = vld [vmem:[#allocation4 + $0x34] sm:$0xff]
        %v1583 = vld [vmem:[#allocation4 + $0x3c] sm:$0xff]
        %v1584 = vld [vmem:[#allocation4 + $0x44] sm:$0xff]
        %v1585 = vld [vmem:[#allocation4 + $0x4c] sm:$0xf]
        %v1586 = vld [vmem:[#allocation4 + $0x54] sm:$0xff]
        %v1587 = vld [vmem:[#allocation4 + $0x5c] sm:$0xff]
        %v1588 = vld [vmem:[#allocation4 + $0x64] sm:$0xff]
        %v1589 = vld [vmem:[#allocation4 + $0x6c] sm:$0xff]
        %v1590 = vld [vmem:[#allocation4 + $0x74] sm:$0xf]
        %v1591 = vld [vmem:[#allocation4 + $0x7c] sm:$0xff]
        %v1592 = vld [vmem:[#allocation4 + $0x84] sm:$0xff]
        %v1593 = vld [vmem:[#allocation4 + $0x8c] sm:$0xff]
        %v1594 = vld [vmem:[#allocation4 + $0x94] sm:$0xff]
        %v1595 = vld [vmem:[#allocation4 + $0x9c] sm:$0xf]
        %v1596 = vld [vmem:[#allocation4 + $0xa4] sm:$0xff]
        %v1597 = vld [vmem:[#allocation4 + $0xac] sm:$0xff]
        %v1598 = vld [vmem:[#allocation4 + $0xb4] sm:$0xff]
        %v1599 = vld [vmem:[#allocation4 + $0xbc] sm:$0xff]
        %v1600 = vld [vmem:[#allocation4 + $0xc4] sm:$0xf]
        %v1601 = vld [vmem:[#allocation4 + $0xcc] sm:$0xff]
        %v1602 = vld [vmem:[#allocation4 + $0xd4] sm:$0xff]
        %v1603 = vld [vmem:[#allocation4 + $0xdc] sm:$0xff]
        %v1604 = vld [vmem:[#allocation4 + $0xe4] sm:$0xff]
        %v1605 = vld [vmem:[#allocation4 + $0xec] sm:$0xf]
        %v1606 = vld [vmem:[#allocation4 + $0xf4] sm:$0xff]
        %v1607 = vld [vmem:[#allocation4 + $0xfc] sm:$0xff]
        %v1608 = vld [vmem:[#allocation4 + $0x104] sm:$0xff]
        %v1609 = vld [vmem:[#allocation4 + $0x10c] sm:$0xff]
        %v1610 = vld [vmem:[#allocation4 + $0x114] sm:$0xf]
        %v1611 = vld [vmem:[#allocation4 + $0x11c] sm:$0xff]
        %v1612 = vld [vmem:[#allocation4 + $0x124] sm:$0xff]
        %v1613 = vld [vmem:[#allocation4 + $0x12c] sm:$0xff]
        %v1614 = vld [vmem:[#allocation4 + $0x134] sm:$0xff]
        %v1615 = vld [vmem:[#allocation4 + $0x13c] sm:$0xf]
        %v1616 = vld [vmem:[#allocation4 + $0x144] sm:$0xff]
        %v1617 = vld [vmem:[#allocation4 + $0x14c] sm:$0xff]
        %v1618 = vld [vmem:[#allocation4 + $0x154] sm:$0xff]
        %v1619 = vld [vmem:[#allocation4 + $0x15c] sm:$0xff]
        %v1620 = vld [vmem:[#allocation4 + $0x164] sm:$0xf]
        %v1621 = vld [vmem:[#allocation4 + $0x16c] sm:$0xff]
        %v1622 = vld [vmem:[#allocation4 + $0x174] sm:$0xff]
        %v1623 = vld [vmem:[#allocation4 + $0x17c] sm:$0xff]
        %v1624 = vld [vmem:[#allocation4 + $0x184] sm:$0xff]
        %v1625 = vld [vmem:[#allocation4 + $0x18c] sm:$0xf]
        %v1626 = vld [vmem:[#allocation4 + $0x194] sm:$0xff]
        %v1627 = vld [vmem:[#allocation4 + $0x19c] sm:$0xff]
        %v1628 = vld [vmem:[#allocation4 + $0x1a4] sm:$0xff]
        %v1629 = vld [vmem:[#allocation4 + $0x1ac] sm:$0xff]
        %v1630 = vld [vmem:[#allocation4 + $0x1b4] sm:$0xf]
        %v1631 = vld [vmem:[#allocation4 + $0x1bc] sm:$0xff]
        %v1632 = vld [vmem:[#allocation4 + $0x1c4] sm:$0xff]
        %v1633 = vld [vmem:[#allocation4 + $0x1cc] sm:$0xff]
        %v1634 = vld [vmem:[#allocation4 + $0x1d4] sm:$0xff]
        %v1635 = vld [vmem:[#allocation4 + $0x1dc] sm:$0xf]
        %v1636 = vld [vmem:[#allocation4 + $0x1e4] sm:$0xff]
        %v1637 = vld [vmem:[#allocation4 + $0x1ec] sm:$0xff]
        %v1638 = vld [vmem:[#allocation4 + $0x1f4] sm:$0xff]
        %v1639 = vld [vmem:[#allocation4 + $0x1fc] sm:$0xff]
        %v1640 = vld [vmem:[#allocation4 + $0x204] sm:$0xf]
        %v1641 = vld [vmem:[#allocation4 + $0x20c] sm:$0xff]
        %v1642 = vld [vmem:[#allocation4 + $0x214] sm:$0xff]
        %v1643 = vld [vmem:[#allocation4 + $0x21c] sm:$0xff]
        %v1644 = vld [vmem:[#allocation4 + $0x224] sm:$0xff]
        %v1645 = vld [vmem:[#allocation4 + $0x22c] sm:$0xf]
        %v1646 = vld [vmem:[#allocation4 + $0x234] sm:$0xff]
        %v1647 = vld [vmem:[#allocation4 + $0x23c] sm:$0xff]
        %v1648 = vld [vmem:[#allocation4 + $0x244] sm:$0xff]
        %v1649 = vld [vmem:[#allocation4 + $0x24c] sm:$0xff]
        %v1650 = vld [vmem:[#allocation4 + $0x254] sm:$0xf]
        %v1651 = vld [vmem:[#allocation4 + $0x25c] sm:$0xff]
        %v1652 = vld [vmem:[#allocation4 + $0x264] sm:$0xff]
        %v1653 = vld [vmem:[#allocation4 + $0x26c] sm:$0xff]
        %v1654 = vld [vmem:[#allocation4 + $0x274] sm:$0xff]
        %v1655 = vld [vmem:[#allocation4 + $0x27c] sm:$0xf]
        %v1656 = vld [vmem:[#allocation4 + $0x284] sm:$0xff]
        %v1657 = vld [vmem:[#allocation4 + $0x28c] sm:$0xff]
        %v1658 = vld [vmem:[#allocation4 + $0x294] sm:$0xff]
        %v1659 = vld [vmem:[#allocation4 + $0x29c] sm:$0xff]
        %v1660 = vld [vmem:[#allocation4 + $0x2a4] sm:$0xf]
        %v1661 = vld [vmem:[#allocation4 + $0x2ac] sm:$0xff]
        %v1662 = vld [vmem:[#allocation4 + $0x2b4] sm:$0xff]
        %v1663 = vld [vmem:[#allocation4 + $0x2bc] sm:$0xff]
        %v1664 = vld [vmem:[#allocation4 + $0x2c4] sm:$0xff]
        %v1665 = vld [vmem:[#allocation4 + $0x2cc] sm:$0xf]
        %v1666 = vld [vmem:[#allocation4 + $0x2d4] sm:$0xff]
        %v1667 = vld [vmem:[#allocation4 + $0x2dc] sm:$0xff]
        %v1668 = vld [vmem:[#allocation4 + $0x2e4] sm:$0xff]
        %v1669 = vld [vmem:[#allocation4 + $0x2ec] sm:$0xff]
        %v1670 = vld [vmem:[#allocation4 + $0x2f4] sm:$0xf]
        %v1671 = vld [vmem:[#allocation4 + $0x2fc] sm:$0xff]
        %v1672 = vld [vmem:[#allocation4 + $0x304] sm:$0xff]
        %v1673 = vld [vmem:[#allocation4 + $0x30c] sm:$0xff]
        %v1674 = vld [vmem:[#allocation4 + $0x314] sm:$0xff]
        %v1675 = vld [vmem:[#allocation4 + $0x31c] sm:$0xf]
        %v1676 = vld [vmem:[#allocation4 + $0x324] sm:$0xff]
        %v1677 = vld [vmem:[#allocation4 + $0x32c] sm:$0xff]
        %v1678 = vld [vmem:[#allocation4 + $0x334] sm:$0xff]
        %v1679 = vld [vmem:[#allocation4 + $0x33c] sm:$0xff]
        %v1680 = vld [vmem:[#allocation4 + $0x344] sm:$0xf]
        %v1681 = vld [vmem:[#allocation4 + $0x34c] sm:$0xff]
        %v1682 = vld [vmem:[#allocation4 + $0x354] sm:$0xff]
        %v1683 = vld [vmem:[#allocation4 + $0x35c] sm:$0xff]
        %v1684 = vld [vmem:[#allocation4 + $0x364] sm:$0xff]
        %v1685 = vld [vmem:[#allocation4 + $0x36c] sm:$0xf]
        %v1686 = vld [vmem:[#allocation4 + $0x374] sm:$0xff]
        %v1687 = vld [vmem:[#allocation4 + $0x37c] sm:$0xff]
        %v1688 = vld [vmem:[#allocation4 + $0x384] sm:$0xff]
        %v1689 = vld [vmem:[#allocation4 + $0x38c] sm:$0xff]
        %v1690 = vld [vmem:[#allocation4 + $0x394] sm:$0xf]
        %v1691 = vld [vmem:[#allocation4 + $0x39c] sm:$0xff]
        %v1692 = vld [vmem:[#allocation4 + $0x3a4] sm:$0xff]
        %v1693 = vld [vmem:[#allocation4 + $0x3ac] sm:$0xff]
        %v1694 = vld [vmem:[#allocation4 + $0x3b4] sm:$0xff]
        %v1695 = vld [vmem:[#allocation4 + $0x3bc] sm:$0xf]
        %v1696 = vld [vmem:[#allocation4 + $0x3c4] sm:$0xff]
        %v1697 = vld [vmem:[#allocation4 + $0x3cc] sm:$0xff]
        %v1698 = vld [vmem:[#allocation4 + $0x3d4] sm:$0xff]
        %v1699 = vld [vmem:[#allocation4 + $0x3dc] sm:$0xff]
        %v1700 = vld [vmem:[#allocation4 + $0x3e4] sm:$0xf]
        %v1701 = vld [vmem:[#allocation4 + $0x3ec] sm:$0xff]
        %v1702 = vld [vmem:[#allocation4 + $0x3f4] sm:$0xff]
        %v1703 = vld [vmem:[#allocation4 + $0x3fc] sm:$0xff]
        %v1704 = vld [vmem:[#allocation4 + $0x404] sm:$0xff]
        %v1705 = vld [vmem:[#allocation4 + $0x40c] sm:$0xf]
        %v1706 = vld [vmem:[#allocation4 + $0x414] sm:$0xff]
        %v1707 = vld [vmem:[#allocation4 + $0x41c] sm:$0xff]
        %v1708 = vld [vmem:[#allocation4 + $0x424] sm:$0xff]
        %v1709 = vld [vmem:[#allocation4 + $0x42c] sm:$0xff]
        %v1710 = vld [vmem:[#allocation4 + $0x434] sm:$0xf]
        %v1711 = vld [vmem:[#allocation4 + $0x43c] sm:$0xff]
        %v1712 = vld [vmem:[#allocation4 + $0x444] sm:$0xff]
        %v1713 = vld [vmem:[#allocation4 + $0x44c] sm:$0xff]
        %v1714 = vld [vmem:[#allocation4 + $0x454] sm:$0xff]
        %v1715 = vld [vmem:[#allocation4 + $0x45c] sm:$0xf]
        %v1716 = vld [vmem:[#allocation4 + $0x464] sm:$0xff]
        %v1717 = vld [vmem:[#allocation4 + $0x46c] sm:$0xff]
        %v1718 = vld [vmem:[#allocation4 + $0x474] sm:$0xff]
        %v1719 = vld [vmem:[#allocation4 + $0x47c] sm:$0xff]
        %v1720 = vld [vmem:[#allocation4 + $0x484] sm:$0xf]
        %v1721 = vld [vmem:[#allocation4 + $0x48c] sm:$0xff]
        %v1722 = vld [vmem:[#allocation4 + $0x494] sm:$0xff]
        %v1723 = vld [vmem:[#allocation4 + $0x49c] sm:$0xff]
        %v1724 = vld [vmem:[#allocation4 + $0x4a4] sm:$0xff]
        %v1725 = vld [vmem:[#allocation4 + $0x4ac] sm:$0xf]
        %v1726 = vld [vmem:[#allocation4 + $0x4b4] sm:$0xff]
        %v1727 = vld [vmem:[#allocation4 + $0x4bc] sm:$0xff]
        %v1728 = vld [vmem:[#allocation4 + $0x4c4] sm:$0xff]
        %v1729 = vld [vmem:[#allocation4 + $0x4cc] sm:$0xff]
        %v1730 = vld [vmem:[#allocation4 + $0x4d4] sm:$0xf]
        %v1731 = vld [vmem:[#allocation4 + $0x4dc] sm:$0xff]
        %v1732 = vld [vmem:[#allocation4 + $0x4e4] sm:$0xff]
        %v1733 = vld [vmem:[#allocation4 + $0x4ec] sm:$0xff]
        %v1734 = vld [vmem:[#allocation4 + $0x4f4] sm:$0xff]
        %v1735 = vld [vmem:[#allocation4 + $0x4fc] sm:$0xf]
        %v1736 = vld [vmem:[#allocation8] sm:$0xf]
        %v1737 = vld [vmem:[#allocation8 + $0x4] sm:$0xf]
        %v1738 = vld [vmem:[#allocation8 + $0x8] sm:$0xf]
        %v1739 = vld [vmem:[#allocation8 + $0xc] sm:$0xf]
        %v1740 = vld [vmem:[#allocation8 + $0x10] sm:$0xf]
        %v1741 = vld [vmem:[#allocation8 + $0x14] sm:$0xf]
        %v1742 = vld [vmem:[#allocation8 + $0x18] sm:$0xf]
        %v1743 = vld [vmem:[#allocation8 + $0x1c] sm:$0xf]
        %v1744 = vld [vmem:[#allocation8 + $0x20] sm:$0xf]
        %v1745 = vld [vmem:[#allocation8 + $0x24] sm:$0xf]
        %v1746 = vld [vmem:[#allocation8 + $0x28] sm:$0xf]
        %v1747 = vld [vmem:[#allocation8 + $0x2c] sm:$0xf]
        %v1748 = vld [vmem:[#allocation8 + $0x30] sm:$0xf]
        %v1749 = vld [vmem:[#allocation8 + $0x34] sm:$0xf]
        %v1750 = vld [vmem:[#allocation8 + $0x38] sm:$0xf]
        %v1751 = vld [vmem:[#allocation8 + $0x3c] sm:$0xf]
        %v1752 = vld [vmem:[#allocation8 + $0x40] sm:$0xf]
        %v1753 = vld [vmem:[#allocation8 + $0x44] sm:$0xf]
        %v1754 = vld [vmem:[#allocation8 + $0x48] sm:$0xf]
        %v1755 = vld [vmem:[#allocation8 + $0x4c] sm:$0xf]
        %v1756 = vld [vmem:[#allocation8 + $0x50] sm:$0xf]
        %v1757 = vld [vmem:[#allocation8 + $0x54] sm:$0xf]
        %v1758 = vld [vmem:[#allocation8 + $0x58] sm:$0xf]
        %v1759 = vld [vmem:[#allocation8 + $0x5c] sm:$0xf]
        %v1760 = vld [vmem:[#allocation8 + $0x60] sm:$0xf]
        %v1761 = vld [vmem:[#allocation8 + $0x64] sm:$0xf]
        %v1762 = vld [vmem:[#allocation8 + $0x68] sm:$0xf]
        %v1763 = vld [vmem:[#allocation8 + $0x6c] sm:$0xf]
        %v1764 = vld [vmem:[#allocation8 + $0x70] sm:$0xf]
        %v1765 = vld [vmem:[#allocation8 + $0x74] sm:$0xf]
        %v1766 = vld [vmem:[#allocation8 + $0x78] sm:$0xf]
        %v1767 = vld [vmem:[#allocation8 + $0x7c] sm:$0xf]
        %v1768 = vld [vmem:[#allocation8 + $0x80] sm:$0xf]
        %v1769 = vld [vmem:[#allocation8 + $0x84] sm:$0xf]
        %v1770 = vld [vmem:[#allocation8 + $0x88] sm:$0xf]
        %v1771 = vld [vmem:[#allocation8 + $0x8c] sm:$0xf]
        %v1772 = vld [vmem:[#allocation8 + $0x90] sm:$0xf]
        %v1773 = vld [vmem:[#allocation8 + $0x94] sm:$0xf]
        %v1774 = vld [vmem:[#allocation8 + $0x98] sm:$0xf]
        %v1775 = vld [vmem:[#allocation8 + $0x9c] sm:$0xf]
        %v1776 = vld [vmem:[#allocation8 + $0xa0] sm:$0xf]
        %v1777 = vld [vmem:[#allocation8 + $0xa4] sm:$0xf]
        %v1778 = vld [vmem:[#allocation8 + $0xa8] sm:$0xf]
        %v1779 = vld [vmem:[#allocation8 + $0xac] sm:$0xf]
        %v1780 = vld [vmem:[#allocation8 + $0xb0] sm:$0xf]
        %v1781 = vld [vmem:[#allocation8 + $0xb4] sm:$0xf]
        %v1782 = vld [vmem:[#allocation8 + $0xb8] sm:$0xf]
        %v1783 = vld [vmem:[#allocation8 + $0xbc] sm:$0xf]
        %v1784 = vld [vmem:[#allocation8 + $0xc0] sm:$0xf]
        %v1785 = vld [vmem:[#allocation8 + $0xc4] sm:$0xf]
        %v1786 = vld [vmem:[#allocation8 + $0xc8] sm:$0xf]
        %v1787 = vld [vmem:[#allocation8 + $0xcc] sm:$0xf]
        %v1788 = vld [vmem:[#allocation8 + $0xd0] sm:$0xf]
        %v1789 = vld [vmem:[#allocation8 + $0xd4] sm:$0xf]
        %v1790 = vld [vmem:[#allocation8 + $0xd8] sm:$0xf]
        %v1791 = vld [vmem:[#allocation8 + $0xdc] sm:$0xf]
        %v1792 = vld [vmem:[#allocation8 + $0xe0] sm:$0xf]
        %v1793 = vld [vmem:[#allocation8 + $0xe4] sm:$0xf]
        %v1794 = vld [vmem:[#allocation8 + $0xe8] sm:$0xf]
        %v1795 = vld [vmem:[#allocation8 + $0xec] sm:$0xf]
        %v1796 = vld [vmem:[#allocation8 + $0xf0] sm:$0xf]
        %v1797 = vld [vmem:[#allocation8 + $0xf4] sm:$0xf]
        %v1798 = vld [vmem:[#allocation8 + $0xf8] sm:$0xf]
        %v1799 = vld [vmem:[#allocation8 + $0xfc] sm:$0xf]
        %v1800 = vld [vmem:[#allocation8 + $0x100] sm:$0xf]
        %v1801 = vld [vmem:[#allocation8 + $0x104] sm:$0xf]
        %v1802 = vld [vmem:[#allocation8 + $0x108] sm:$0xf]
        %v1803 = vld [vmem:[#allocation8 + $0x10c] sm:$0xf]
        %v1804 = vld [vmem:[#allocation8 + $0x110] sm:$0xf]
        %v1805 = vld [vmem:[#allocation8 + $0x114] sm:$0xf]
        %v1806 = vld [vmem:[#allocation8 + $0x118] sm:$0xf]
        %v1807 = vld [vmem:[#allocation8 + $0x11c] sm:$0xf]
        %v1808 = vld [vmem:[#allocation8 + $0x120] sm:$0xf]
        %v1809 = vld [vmem:[#allocation8 + $0x124] sm:$0xf]
        %v1810 = vld [vmem:[#allocation8 + $0x128] sm:$0xf]
        %v1811 = vld [vmem:[#allocation8 + $0x12c] sm:$0xf]
        %v1812 = vld [vmem:[#allocation8 + $0x130] sm:$0xf]
        %v1813 = vld [vmem:[#allocation8 + $0x134] sm:$0xf]
        %v1814 = vld [vmem:[#allocation8 + $0x138] sm:$0xf]
        %v1815 = vld [vmem:[#allocation8 + $0x13c] sm:$0xf]
        %v1816 = vld [vmem:[#allocation8 + $0x140] sm:$0xf]
        %v1817 = vld [vmem:[#allocation8 + $0x144] sm:$0xf]
        %v1818 = vld [vmem:[#allocation8 + $0x148] sm:$0xf]
        %v1819 = vld [vmem:[#allocation8 + $0x14c] sm:$0xf]
        %v1820 = vld [vmem:[#allocation8 + $0x150] sm:$0xf]
        %v1821 = vld [vmem:[#allocation8 + $0x154] sm:$0xf]
        %v1822 = vld [vmem:[#allocation8 + $0x158] sm:$0xf]
        %v1823 = vld [vmem:[#allocation8 + $0x15c] sm:$0xf]
        %v1824 = vld [vmem:[#allocation8 + $0x160] sm:$0xf]
        %v1825 = vld [vmem:[#allocation8 + $0x164] sm:$0xf]
        %v1826 = vld [vmem:[#allocation8 + $0x168] sm:$0xf]
        %v1827 = vld [vmem:[#allocation8 + $0x16c] sm:$0xf]
        %v1828 = vld [vmem:[#allocation8 + $0x170] sm:$0xf]
        %v1829 = vld [vmem:[#allocation8 + $0x174] sm:$0xf]
        %v1830 = vld [vmem:[#allocation8 + $0x178] sm:$0xf]
        %v1831 = vld [vmem:[#allocation8 + $0x17c] sm:$0xf]
        %v1832 = vld [vmem:[#allocation8 + $0x180] sm:$0xf]
        %v1833 = vld [vmem:[#allocation8 + $0x184] sm:$0xf]
        %v1834 = vld [vmem:[#allocation8 + $0x188] sm:$0xf]
        %v1835 = vld [vmem:[#allocation8 + $0x18c] sm:$0xf]
        %v1836 = vld [vmem:[#allocation8 + $0x190] sm:$0xf]
        %v1837 = vld [vmem:[#allocation8 + $0x194] sm:$0xf]
        %v1838 = vld [vmem:[#allocation8 + $0x198] sm:$0xf]
        %v1839 = vld [vmem:[#allocation8 + $0x19c] sm:$0xf]
        %v1840 = vld [vmem:[#allocation8 + $0x1a0] sm:$0xf]
        %v1841 = vld [vmem:[#allocation8 + $0x1a4] sm:$0xf]
        %v1842 = vld [vmem:[#allocation8 + $0x1a8] sm:$0xf]
        %v1843 = vld [vmem:[#allocation8 + $0x1ac] sm:$0xf]
        %v1844 = vld [vmem:[#allocation8 + $0x1b0] sm:$0xf]
        %v1845 = vld [vmem:[#allocation8 + $0x1b4] sm:$0xf]
        %v1846 = vld [vmem:[#allocation8 + $0x1b8] sm:$0xf]
        %v1847 = vld [vmem:[#allocation8 + $0x1bc] sm:$0xf]
        %v1848 = vld [vmem:[#allocation8 + $0x1c0] sm:$0xf]
        %v1849 = vld [vmem:[#allocation8 + $0x1c4] sm:$0xf]
        %v1850 = vld [vmem:[#allocation8 + $0x1c8] sm:$0xf]
        %v1851 = vld [vmem:[#allocation8 + $0x1cc] sm:$0xf]
        %v1852 = vld [vmem:[#allocation8 + $0x1d0] sm:$0xf]
        %v1853 = vld [vmem:[#allocation8 + $0x1d4] sm:$0xf]
        %v1854 = vld [vmem:[#allocation8 + $0x1d8] sm:$0xf]
        %v1855 = vld [vmem:[#allocation8 + $0x1dc] sm:$0xf]
        %v1856 = vld [vmem:[#allocation8 + $0x1e0] sm:$0xf]
        %v1857 = vld [vmem:[#allocation8 + $0x1e4] sm:$0xf]
        %v1858 = vld [vmem:[#allocation8 + $0x1e8] sm:$0xf]
        %v1859 = vld [vmem:[#allocation8 + $0x1ec] sm:$0xf]
        %v1860 = vld [vmem:[#allocation8 + $0x1f0] sm:$0xf]
        %v1861 = vld [vmem:[#allocation8 + $0x1f4] sm:$0xf]
        %v1862 = vld [vmem:[#allocation8 + $0x1f8] sm:$0xf]
        %v1863 = vld [vmem:[#allocation8 + $0x1fc] sm:$0xf]
        %v1864 = vld [vmem:[#allocation8 + $0x200] sm:$0xf]
        %v1865 = vld [vmem:[#allocation8 + $0x204] sm:$0xf]
        %v1866 = vld [vmem:[#allocation8 + $0x208] sm:$0xf]
        %v1867 = vld [vmem:[#allocation8 + $0x20c] sm:$0xf]
        %v1868 = vld [vmem:[#allocation8 + $0x210] sm:$0xf]
        %v1869 = vld [vmem:[#allocation8 + $0x214] sm:$0xf]
        %v1870 = vld [vmem:[#allocation8 + $0x218] sm:$0xf]
        %v1871 = vld [vmem:[#allocation8 + $0x21c] sm:$0xf]
        %v1872 = vld [vmem:[#allocation8 + $0x220] sm:$0xf]
        %v1873 = vld [vmem:[#allocation8 + $0x224] sm:$0xf]
        %v1874 = vld [vmem:[#allocation8 + $0x228] sm:$0xf]
        %v1875 = vld [vmem:[#allocation8 + $0x22c] sm:$0xf]
        %v1876 = vld [vmem:[#allocation8 + $0x230] sm:$0xf]
        %v1877 = vld [vmem:[#allocation8 + $0x234] sm:$0xf]
        %v1878 = vld [vmem:[#allocation8 + $0x238] sm:$0xf]
        %v1879 = vld [vmem:[#allocation8 + $0x23c] sm:$0xf]
        %v2040 = vunpack.c.l.b16 %v1576
        %v2041 = vunpack.c.h.b16 %v1576
        %v2042 = vunpack.c.l.b16 %v1577
        %v2043 = vunpack.c.h.b16 %v1577
        %v2044 = vunpack.c.l.b16 %v1578
        %v2045 = vunpack.c.h.b16 %v1578
        %v2046 = vunpack.c.l.b16 %v1579
        %v2047 = vunpack.c.h.b16 %v1579
        %v2048 = vunpack.c.l.b16 %v1580
        %v2049 = vunpack.c.l.b16 %v1581
        %v2050 = vunpack.c.h.b16 %v1581
        %v2051 = vunpack.c.l.b16 %v1582
        %v2052 = vunpack.c.h.b16 %v1582
        %v2053 = vunpack.c.l.b16 %v1583
        %v2054 = vunpack.c.h.b16 %v1583
        %v2055 = vunpack.c.l.b16 %v1584
        %v2056 = vunpack.c.h.b16 %v1584
        %v2057 = vunpack.c.l.b16 %v1585
        %v2058 = vunpack.c.l.b16 %v1586
        %v2059 = vunpack.c.h.b16 %v1586
        %v2060 = vunpack.c.l.b16 %v1587
        %v2061 = vunpack.c.h.b16 %v1587
        %v2062 = vunpack.c.l.b16 %v1588
        %v2063 = vunpack.c.h.b16 %v1588
        %v2064 = vunpack.c.l.b16 %v1589
        %v2065 = vunpack.c.h.b16 %v1589
        %v2066 = vunpack.c.l.b16 %v1590
        %v2067 = vunpack.c.l.b16 %v1591
        %v2068 = vunpack.c.h.b16 %v1591
        %v2069 = vunpack.c.l.b16 %v1592
        %v2070 = vunpack.c.h.b16 %v1592
        %v2071 = vunpack.c.l.b16 %v1593
        %v2072 = vunpack.c.h.b16 %v1593
        %v2073 = vunpack.c.l.b16 %v1594
        %v2074 = vunpack.c.h.b16 %v1594
        %v2075 = vunpack.c.l.b16 %v1595
        %v2076 = vunpack.c.l.b16 %v1596
        %v2077 = vunpack.c.h.b16 %v1596
        %v2078 = vunpack.c.l.b16 %v1597
        %v2079 = vunpack.c.h.b16 %v1597
        %v2080 = vunpack.c.l.b16 %v1598
        %v2081 = vunpack.c.h.b16 %v1598
        %v2082 = vunpack.c.l.b16 %v1599
        %v2083 = vunpack.c.h.b16 %v1599
        %v2084 = vunpack.c.l.b16 %v1600
        %v2085 = vunpack.c.l.b16 %v1601
        %v2086 = vunpack.c.h.b16 %v1601
        %v2087 = vunpack.c.l.b16 %v1602
        %v2088 = vunpack.c.h.b16 %v1602
        %v2089 = vunpack.c.l.b16 %v1603
        %v2090 = vunpack.c.h.b16 %v1603
        %v2091 = vunpack.c.l.b16 %v1604
        %v2092 = vunpack.c.h.b16 %v1604
        %v2093 = vunpack.c.l.b16 %v1605
        %v2094 = vunpack.c.l.b16 %v1606
        %v2095 = vunpack.c.h.b16 %v1606
        %v2096 = vunpack.c.l.b16 %v1607
        %v2097 = vunpack.c.h.b16 %v1607
        %v2098 = vunpack.c.l.b16 %v1608
        %v2099 = vunpack.c.h.b16 %v1608
        %v2100 = vunpack.c.l.b16 %v1609
        %v2101 = vunpack.c.h.b16 %v1609
        %v2102 = vunpack.c.l.b16 %v1610
        %v2103 = vunpack.c.l.b16 %v1611
        %v2104 = vunpack.c.h.b16 %v1611
        %v2105 = vunpack.c.l.b16 %v1612
        %v2106 = vunpack.c.h.b16 %v1612
        %v2107 = vunpack.c.l.b16 %v1613
        %v2108 = vunpack.c.h.b16 %v1613
        %v2109 = vunpack.c.l.b16 %v1614
        %v2110 = vunpack.c.h.b16 %v1614
        %v2111 = vunpack.c.l.b16 %v1615
        %v2112 = vunpack.c.l.b16 %v1616
        %v2113 = vunpack.c.h.b16 %v1616
        %v2114 = vunpack.c.l.b16 %v1617
        %v2115 = vunpack.c.h.b16 %v1617
        %v2116 = vunpack.c.l.b16 %v1618
        %v2117 = vunpack.c.h.b16 %v1618
        %v2118 = vunpack.c.l.b16 %v1619
        %v2119 = vunpack.c.h.b16 %v1619
        %v2120 = vunpack.c.l.b16 %v1620
        %v2121 = vunpack.c.l.b16 %v1621
        %v2122 = vunpack.c.h.b16 %v1621
        %v2123 = vunpack.c.l.b16 %v1622
        %v2124 = vunpack.c.h.b16 %v1622
        %v2125 = vunpack.c.l.b16 %v1623
        %v2126 = vunpack.c.h.b16 %v1623
        %v2127 = vunpack.c.l.b16 %v1624
        %v2128 = vunpack.c.h.b16 %v1624
        %v2129 = vunpack.c.l.b16 %v1625
        %v2130 = vunpack.c.l.b16 %v1626
        %v2131 = vunpack.c.h.b16 %v1626
        %v2132 = vunpack.c.l.b16 %v1627
        %v2133 = vunpack.c.h.b16 %v1627
        %v2134 = vunpack.c.l.b16 %v1628
        %v2135 = vunpack.c.h.b16 %v1628
        %v2136 = vunpack.c.l.b16 %v1629
        %v2137 = vunpack.c.h.b16 %v1629
        %v2138 = vunpack.c.l.b16 %v1630
        %v2139 = vunpack.c.l.b16 %v1631
        %v2140 = vunpack.c.h.b16 %v1631
        %v2141 = vunpack.c.l.b16 %v1632
        %v2142 = vunpack.c.h.b16 %v1632
        %v2143 = vunpack.c.l.b16 %v1633
        %v2144 = vunpack.c.h.b16 %v1633
        %v2145 = vunpack.c.l.b16 %v1634
        %v2146 = vunpack.c.h.b16 %v1634
        %v2147 = vunpack.c.l.b16 %v1635
        %v2148 = vunpack.c.l.b16 %v1636
        %v2149 = vunpack.c.h.b16 %v1636
        %v2150 = vunpack.c.l.b16 %v1637
        %v2151 = vunpack.c.h.b16 %v1637
        %v2152 = vunpack.c.l.b16 %v1638
        %v2153 = vunpack.c.h.b16 %v1638
        %v2154 = vunpack.c.l.b16 %v1639
        %v2155 = vunpack.c.h.b16 %v1639
        %v2156 = vunpack.c.l.b16 %v1640
        %v2157 = vunpack.c.l.b16 %v1641
        %v2158 = vunpack.c.h.b16 %v1641
        %v2159 = vunpack.c.l.b16 %v1642
        %v2160 = vunpack.c.h.b16 %v1642
        %v2161 = vunpack.c.l.b16 %v1643
        %v2162 = vunpack.c.h.b16 %v1643
        %v2163 = vunpack.c.l.b16 %v1644
        %v2164 = vunpack.c.h.b16 %v1644
        %v2165 = vunpack.c.l.b16 %v1645
        %v2166 = vunpack.c.l.b16 %v1646
        %v2167 = vunpack.c.h.b16 %v1646
        %v2168 = vunpack.c.l.b16 %v1647
        %v2169 = vunpack.c.h.b16 %v1647
        %v2170 = vunpack.c.l.b16 %v1648
        %v2171 = vunpack.c.h.b16 %v1648
        %v2172 = vunpack.c.l.b16 %v1649
        %v2173 = vunpack.c.h.b16 %v1649
        %v2174 = vunpack.c.l.b16 %v1650
        %v2175 = vunpack.c.l.b16 %v1651
        %v2176 = vunpack.c.h.b16 %v1651
        %v2177 = vunpack.c.l.b16 %v1652
        %v2178 = vunpack.c.h.b16 %v1652
        %v2179 = vunpack.c.l.b16 %v1653
        %v2180 = vunpack.c.h.b16 %v1653
        %v2181 = vunpack.c.l.b16 %v1654
        %v2182 = vunpack.c.h.b16 %v1654
        %v2183 = vunpack.c.l.b16 %v1655
        %v2184 = vunpack.c.l.b16 %v1656
        %v2185 = vunpack.c.h.b16 %v1656
        %v2186 = vunpack.c.l.b16 %v1657
        %v2187 = vunpack.c.h.b16 %v1657
        %v2188 = vunpack.c.l.b16 %v1658
        %v2189 = vunpack.c.h.b16 %v1658
        %v2190 = vunpack.c.l.b16 %v1659
        %v2191 = vunpack.c.h.b16 %v1659
        %v2192 = vunpack.c.l.b16 %v1660
        %v2193 = vunpack.c.l.b16 %v1661
        %v2194 = vunpack.c.h.b16 %v1661
        %v2195 = vunpack.c.l.b16 %v1662
        %v2196 = vunpack.c.h.b16 %v1662
        %v2197 = vunpack.c.l.b16 %v1663
        %v2198 = vunpack.c.h.b16 %v1663
        %v2199 = vunpack.c.l.b16 %v1664
        %v2200 = vunpack.c.h.b16 %v1664
        %v2201 = vunpack.c.l.b16 %v1665
        %v2202 = vunpack.c.l.b16 %v1666
        %v2203 = vunpack.c.h.b16 %v1666
        %v2204 = vunpack.c.l.b16 %v1667
        %v2205 = vunpack.c.h.b16 %v1667
        %v2206 = vunpack.c.l.b16 %v1668
        %v2207 = vunpack.c.h.b16 %v1668
        %v2208 = vunpack.c.l.b16 %v1669
        %v2209 = vunpack.c.h.b16 %v1669
        %v2210 = vunpack.c.l.b16 %v1670
        %v2211 = vunpack.c.l.b16 %v1671
        %v2212 = vunpack.c.h.b16 %v1671
        %v2213 = vunpack.c.l.b16 %v1672
        %v2214 = vunpack.c.h.b16 %v1672
        %v2215 = vunpack.c.l.b16 %v1673
        %v2216 = vunpack.c.h.b16 %v1673
        %v2217 = vunpack.c.l.b16 %v1674
        %v2218 = vunpack.c.h.b16 %v1674
        %v2219 = vunpack.c.l.b16 %v1675
        %v2220 = vunpack.c.l.b16 %v1676
        %v2221 = vunpack.c.h.b16 %v1676
        %v2222 = vunpack.c.l.b16 %v1677
        %v2223 = vunpack.c.h.b16 %v1677
        %v2224 = vunpack.c.l.b16 %v1678
        %v2225 = vunpack.c.h.b16 %v1678
        %v2226 = vunpack.c.l.b16 %v1679
        %v2227 = vunpack.c.h.b16 %v1679
        %v2228 = vunpack.c.l.b16 %v1680
        %v2229 = vunpack.c.l.b16 %v1681
        %v2230 = vunpack.c.h.b16 %v1681
        %v2231 = vunpack.c.l.b16 %v1682
        %v2232 = vunpack.c.h.b16 %v1682
        %v2233 = vunpack.c.l.b16 %v1683
        %v2234 = vunpack.c.h.b16 %v1683
        %v2235 = vunpack.c.l.b16 %v1684
        %v2236 = vunpack.c.h.b16 %v1684
        %v2237 = vunpack.c.l.b16 %v1685
        %v2238 = vunpack.c.l.b16 %v1686
        %v2239 = vunpack.c.h.b16 %v1686
        %v2240 = vunpack.c.l.b16 %v1687
        %v2241 = vunpack.c.h.b16 %v1687
        %v2242 = vunpack.c.l.b16 %v1688
        %v2243 = vunpack.c.h.b16 %v1688
        %v2244 = vunpack.c.l.b16 %v1689
        %v2245 = vunpack.c.h.b16 %v1689
        %v2246 = vunpack.c.l.b16 %v1690
        %v2247 = vunpack.c.l.b16 %v1691
        %v2248 = vunpack.c.h.b16 %v1691
        %v2249 = vunpack.c.l.b16 %v1692
        %v2250 = vunpack.c.h.b16 %v1692
        %v2251 = vunpack.c.l.b16 %v1693
        %v2252 = vunpack.c.h.b16 %v1693
        %v2253 = vunpack.c.l.b16 %v1694
        %v2254 = vunpack.c.h.b16 %v1694
        %v2255 = vunpack.c.l.b16 %v1695
        %v2256 = vunpack.c.l.b16 %v1696
        %v2257 = vunpack.c.h.b16 %v1696
        %v2258 = vunpack.c.l.b16 %v1697
        %v2259 = vunpack.c.h.b16 %v1697
        %v2260 = vunpack.c.l.b16 %v1698
        %v2261 = vunpack.c.h.b16 %v1698
        %v2262 = vunpack.c.l.b16 %v1699
        %v2263 = vunpack.c.h.b16 %v1699
        %v2264 = vunpack.c.l.b16 %v1700
        %v2265 = vunpack.c.l.b16 %v1701
        %v2266 = vunpack.c.h.b16 %v1701
        %v2267 = vunpack.c.l.b16 %v1702
        %v2268 = vunpack.c.h.b16 %v1702
        %v2269 = vunpack.c.l.b16 %v1703
        %v2270 = vunpack.c.h.b16 %v1703
        %v2271 = vunpack.c.l.b16 %v1704
        %v2272 = vunpack.c.h.b16 %v1704
        %v2273 = vunpack.c.l.b16 %v1705
        %v2274 = vunpack.c.l.b16 %v1706
        %v2275 = vunpack.c.h.b16 %v1706
        %v2276 = vunpack.c.l.b16 %v1707
        %v2277 = vunpack.c.h.b16 %v1707
        %v2278 = vunpack.c.l.b16 %v1708
        %v2279 = vunpack.c.h.b16 %v1708
        %v2280 = vunpack.c.l.b16 %v1709
        %v2281 = vunpack.c.h.b16 %v1709
        %v2282 = vunpack.c.l.b16 %v1710
        %v2283 = vunpack.c.l.b16 %v1711
        %v2284 = vunpack.c.h.b16 %v1711
        %v2285 = vunpack.c.l.b16 %v1712
        %v2286 = vunpack.c.h.b16 %v1712
        %v2287 = vunpack.c.l.b16 %v1713
        %v2288 = vunpack.c.h.b16 %v1713
        %v2289 = vunpack.c.l.b16 %v1714
        %v2290 = vunpack.c.h.b16 %v1714
        %v2291 = vunpack.c.l.b16 %v1715
        %v2292 = vunpack.c.l.b16 %v1716
        %v2293 = vunpack.c.h.b16 %v1716
        %v2294 = vunpack.c.l.b16 %v1717
        %v2295 = vunpack.c.h.b16 %v1717
        %v2296 = vunpack.c.l.b16 %v1718
        %v2297 = vunpack.c.h.b16 %v1718
        %v2298 = vunpack.c.l.b16 %v1719
        %v2299 = vunpack.c.h.b16 %v1719
        %v2300 = vunpack.c.l.b16 %v1720
        %v2301 = vunpack.c.l.b16 %v1721
        %v2302 = vunpack.c.h.b16 %v1721
        %v2303 = vunpack.c.l.b16 %v1722
        %v2304 = vunpack.c.h.b16 %v1722
        %v2305 = vunpack.c.l.b16 %v1723
        %v2306 = vunpack.c.h.b16 %v1723
        %v2307 = vunpack.c.l.b16 %v1724
        %v2308 = vunpack.c.h.b16 %v1724
        %v2309 = vunpack.c.l.b16 %v1725
        %v2310 = vunpack.c.l.b16 %v1726
        %v2311 = vunpack.c.h.b16 %v1726
        %v2312 = vunpack.c.l.b16 %v1727
        %v2313 = vunpack.c.h.b16 %v1727
        %v2314 = vunpack.c.l.b16 %v1728
        %v2315 = vunpack.c.h.b16 %v1728
        %v2316 = vunpack.c.l.b16 %v1729
        %v2317 = vunpack.c.h.b16 %v1729
        %v2318 = vunpack.c.l.b16 %v1730
        %v2319 = vunpack.c.l.b16 %v1731
        %v2320 = vunpack.c.h.b16 %v1731
        %v2321 = vunpack.c.l.b16 %v1732
        %v2322 = vunpack.c.h.b16 %v1732
        %v2323 = vunpack.c.l.b16 %v1733
        %v2324 = vunpack.c.h.b16 %v1733
        %v2325 = vunpack.c.l.b16 %v1734
        %v2326 = vunpack.c.h.b16 %v1734
        %v2327 = vunpack.c.l.b16 %v1735
        %v2328 = vpack.c.b16 %v2049, %v2040
        %v2329 = vpack.c.b16 %v2050, %v2041
        %v2330 = vpack.c.b16 %v2051, %v2042
        %v2331 = vpack.c.b16 %v2052, %v2043
        %v2332 = vpack.c.b16 %v2053, %v2044
        %v2333 = vpack.c.b16 %v2054, %v2045
        %v2334 = vpack.c.b16 %v2055, %v2046
        %v2335 = vpack.c.b16 %v2056, %v2047
        %v2336 = vpack.c.b16 %v2057, %v2048
        %v2337 = vpack.c.b16 %v2067, %v2058
        %v2338 = vpack.c.b16 %v2068, %v2059
        %v2339 = vpack.c.b16 %v2069, %v2060
        %v2340 = vpack.c.b16 %v2070, %v2061
        %v2341 = vpack.c.b16 %v2071, %v2062
        %v2342 = vpack.c.b16 %v2072, %v2063
        %v2343 = vpack.c.b16 %v2073, %v2064
        %v2344 = vpack.c.b16 %v2074, %v2065
        %v2345 = vpack.c.b16 %v2075, %v2066
        %v2346 = vpack.c.b16 %v2085, %v2076
        %v2347 = vpack.c.b16 %v2086, %v2077
        %v2348 = vpack.c.b16 %v2087, %v2078
        %v2349 = vpack.c.b16 %v2088, %v2079
        %v2350 = vpack.c.b16 %v2089, %v2080
        %v2351 = vpack.c.b16 %v2090, %v2081
        %v2352 = vpack.c.b16 %v2091, %v2082
        %v2353 = vpack.c.b16 %v2092, %v2083
        %v2354 = vpack.c.b16 %v2093, %v2084
        %v2355 = vpack.c.b16 %v2103, %v2094
        %v2356 = vpack.c.b16 %v2104, %v2095
        %v2357 = vpack.c.b16 %v2105, %v2096
        %v2358 = vpack.c.b16 %v2106, %v2097
        %v2359 = vpack.c.b16 %v2107, %v2098
        %v2360 = vpack.c.b16 %v2108, %v2099
        %v2361 = vpack.c.b16 %v2109, %v2100
        %v2362 = vpack.c.b16 %v2110, %v2101
        %v2363 = vpack.c.b16 %v2111, %v2102
        %v2364 = vpack.c.b16 %v2121, %v2112
        %v2365 = vpack.c.b16 %v2122, %v2113
        %v2366 = vpack.c.b16 %v2123, %v2114
        %v2367 = vpack.c.b16 %v2124, %v2115
        %v2368 = vpack.c.b16 %v2125, %v2116
        %v2369 = vpack.c.b16 %v2126, %v2117
        %v2370 = vpack.c.b16 %v2127, %v2118
        %v2371 = vpack.c.b16 %v2128, %v2119
        %v2372 = vpack.c.b16 %v2129, %v2120
        %v2373 = vpack.c.b16 %v2139, %v2130
        %v2374 = vpack.c.b16 %v2140, %v2131
        %v2375 = vpack.c.b16 %v2141, %v2132
        %v2376 = vpack.c.b16 %v2142, %v2133
        %v2377 = vpack.c.b16 %v2143, %v2134
        %v2378 = vpack.c.b16 %v2144, %v2135
        %v2379 = vpack.c.b16 %v2145, %v2136
        %v2380 = vpack.c.b16 %v2146, %v2137
        %v2381 = vpack.c.b16 %v2147, %v2138
        %v2382 = vpack.c.b16 %v2157, %v2148
        %v2383 = vpack.c.b16 %v2158, %v2149
        %v2384 = vpack.c.b16 %v2159, %v2150
        %v2385 = vpack.c.b16 %v2160, %v2151
        %v2386 = vpack.c.b16 %v2161, %v2152
        %v2387 = vpack.c.b16 %v2162, %v2153
        %v2388 = vpack.c.b16 %v2163, %v2154
        %v2389 = vpack.c.b16 %v2164, %v2155
        %v2390 = vpack.c.b16 %v2165, %v2156
        %v2391 = vpack.c.b16 %v2175, %v2166
        %v2392 = vpack.c.b16 %v2176, %v2167
        %v2393 = vpack.c.b16 %v2177, %v2168
        %v2394 = vpack.c.b16 %v2178, %v2169
        %v2395 = vpack.c.b16 %v2179, %v2170
        %v2396 = vpack.c.b16 %v2180, %v2171
        %v2397 = vpack.c.b16 %v2181, %v2172
        %v2398 = vpack.c.b16 %v2182, %v2173
        %v2399 = vpack.c.b16 %v2183, %v2174
        %v2400 = vpack.c.b16 %v2193, %v2184
        %v2401 = vpack.c.b16 %v2194, %v2185
        %v2402 = vpack.c.b16 %v2195, %v2186
        %v2403 = vpack.c.b16 %v2196, %v2187
        %v2404 = vpack.c.b16 %v2197, %v2188
        %v2405 = vpack.c.b16 %v2198, %v2189
        %v2406 = vpack.c.b16 %v2199, %v2190
        %v2407 = vpack.c.b16 %v2200, %v2191
        %v2408 = vpack.c.b16 %v2201, %v2192
        %v2409 = vpack.c.b16 %v2211, %v2202
        %v2410 = vpack.c.b16 %v2212, %v2203
        %v2411 = vpack.c.b16 %v2213, %v2204
        %v2412 = vpack.c.b16 %v2214, %v2205
        %v2413 = vpack.c.b16 %v2215, %v2206
        %v2414 = vpack.c.b16 %v2216, %v2207
        %v2415 = vpack.c.b16 %v2217, %v2208
        %v2416 = vpack.c.b16 %v2218, %v2209
        %v2417 = vpack.c.b16 %v2219, %v2210
        %v2418 = vpack.c.b16 %v2229, %v2220
        %v2419 = vpack.c.b16 %v2230, %v2221
        %v2420 = vpack.c.b16 %v2231, %v2222
        %v2421 = vpack.c.b16 %v2232, %v2223
        %v2422 = vpack.c.b16 %v2233, %v2224
        %v2423 = vpack.c.b16 %v2234, %v2225
        %v2424 = vpack.c.b16 %v2235, %v2226
        %v2425 = vpack.c.b16 %v2236, %v2227
        %v2426 = vpack.c.b16 %v2237, %v2228
        %v2427 = vpack.c.b16 %v2247, %v2238
        %v2428 = vpack.c.b16 %v2248, %v2239
        %v2429 = vpack.c.b16 %v2249, %v2240
        %v2430 = vpack.c.b16 %v2250, %v2241
        %v2431 = vpack.c.b16 %v2251, %v2242
        %v2432 = vpack.c.b16 %v2252, %v2243
        %v2433 = vpack.c.b16 %v2253, %v2244
        %v2434 = vpack.c.b16 %v2254, %v2245
        %v2435 = vpack.c.b16 %v2255, %v2246
        %v2436 = vpack.c.b16 %v2265, %v2256
        %v2437 = vpack.c.b16 %v2266, %v2257
        %v2438 = vpack.c.b16 %v2267, %v2258
        %v2439 = vpack.c.b16 %v2268, %v2259
        %v2440 = vpack.c.b16 %v2269, %v2260
        %v2441 = vpack.c.b16 %v2270, %v2261
        %v2442 = vpack.c.b16 %v2271, %v2262
        %v2443 = vpack.c.b16 %v2272, %v2263
        %v2444 = vpack.c.b16 %v2273, %v2264
        %v2445 = vpack.c.b16 %v2283, %v2274
        %v2446 = vpack.c.b16 %v2284, %v2275
        %v2447 = vpack.c.b16 %v2285, %v2276
        %v2448 = vpack.c.b16 %v2286, %v2277
        %v2449 = vpack.c.b16 %v2287, %v2278
        %v2450 = vpack.c.b16 %v2288, %v2279
        %v2451 = vpack.c.b16 %v2289, %v2280
        %v2452 = vpack.c.b16 %v2290, %v2281
        %v2453 = vpack.c.b16 %v2291, %v2282
        %v2454 = vpack.c.b16 %v2301, %v2292
        %v2455 = vpack.c.b16 %v2302, %v2293
        %v2456 = vpack.c.b16 %v2303, %v2294
        %v2457 = vpack.c.b16 %v2304, %v2295
        %v2458 = vpack.c.b16 %v2305, %v2296
        %v2459 = vpack.c.b16 %v2306, %v2297
        %v2460 = vpack.c.b16 %v2307, %v2298
        %v2461 = vpack.c.b16 %v2308, %v2299
        %v2462 = vpack.c.b16 %v2309, %v2300
        %v2463 = vpack.c.b16 %v2319, %v2310
        %v2464 = vpack.c.b16 %v2320, %v2311
        %v2465 = vpack.c.b16 %v2321, %v2312
        %v2466 = vpack.c.b16 %v2322, %v2313
        %v2467 = vpack.c.b16 %v2323, %v2314
        %v2468 = vpack.c.b16 %v2324, %v2315
        %v2469 = vpack.c.b16 %v2325, %v2316
        %v2470 = vpack.c.b16 %v2326, %v2317
        %v2471 = vpack.c.b16 %v2327, %v2318
        %v2760 = vunpack.c.l.b16 %v1736
        %v2761 = vunpack.c.l.b16 %v1737
        %v2762 = vunpack.c.l.b16 %v1738
        %v2763 = vunpack.c.l.b16 %v1739
        %v2764 = vunpack.c.l.b16 %v1740
        %v2765 = vunpack.c.l.b16 %v1741
        %v2766 = vunpack.c.l.b16 %v1742
        %v2767 = vunpack.c.l.b16 %v1743
        %v2768 = vunpack.c.l.b16 %v1744
        %v2769 = vunpack.c.l.b16 %v1745
        %v2770 = vunpack.c.l.b16 %v1746
        %v2771 = vunpack.c.l.b16 %v1747
        %v2772 = vunpack.c.l.b16 %v1748
        %v2773 = vunpack.c.l.b16 %v1749
        %v2774 = vunpack.c.l.b16 %v1750
        %v2775 = vunpack.c.l.b16 %v1751
        %v2776 = vunpack.c.l.b16 %v1752
        %v2777 = vunpack.c.l.b16 %v1753
        %v2778 = vunpack.c.l.b16 %v1754
        %v2779 = vunpack.c.l.b16 %v1755
        %v2780 = vunpack.c.l.b16 %v1756
        %v2781 = vunpack.c.l.b16 %v1757
        %v2782 = vunpack.c.l.b16 %v1758
        %v2783 = vunpack.c.l.b16 %v1759
        %v2784 = vunpack.c.l.b16 %v1760
        %v2785 = vunpack.c.l.b16 %v1761
        %v2786 = vunpack.c.l.b16 %v1762
        %v2787 = vunpack.c.l.b16 %v1763
        %v2788 = vunpack.c.l.b16 %v1764
        %v2789 = vunpack.c.l.b16 %v1765
        %v2790 = vunpack.c.l.b16 %v1766
        %v2791 = vunpack.c.l.b16 %v1767
        %v2792 = vunpack.c.l.b16 %v1768
        %v2793 = vunpack.c.l.b16 %v1769
        %v2794 = vunpack.c.l.b16 %v1770
        %v2795 = vunpack.c.l.b16 %v1771
        %v2796 = vunpack.c.l.b16 %v1772
        %v2797 = vunpack.c.l.b16 %v1773
        %v2798 = vunpack.c.l.b16 %v1774
        %v2799 = vunpack.c.l.b16 %v1775
        %v2800 = vunpack.c.l.b16 %v1776
        %v2801 = vunpack.c.l.b16 %v1777
        %v2802 = vunpack.c.l.b16 %v1778
        %v2803 = vunpack.c.l.b16 %v1779
        %v2804 = vunpack.c.l.b16 %v1780
        %v2805 = vunpack.c.l.b16 %v1781
        %v2806 = vunpack.c.l.b16 %v1782
        %v2807 = vunpack.c.l.b16 %v1783
        %v2808 = vunpack.c.l.b16 %v1784
        %v2809 = vunpack.c.l.b16 %v1785
        %v2810 = vunpack.c.l.b16 %v1786
        %v2811 = vunpack.c.l.b16 %v1787
        %v2812 = vunpack.c.l.b16 %v1788
        %v2813 = vunpack.c.l.b16 %v1789
        %v2814 = vunpack.c.l.b16 %v1790
        %v2815 = vunpack.c.l.b16 %v1791
        %v2816 = vunpack.c.l.b16 %v1792
        %v2817 = vunpack.c.l.b16 %v1793
        %v2818 = vunpack.c.l.b16 %v1794
        %v2819 = vunpack.c.l.b16 %v1795
        %v2820 = vunpack.c.l.b16 %v1796
        %v2821 = vunpack.c.l.b16 %v1797
        %v2822 = vunpack.c.l.b16 %v1798
        %v2823 = vunpack.c.l.b16 %v1799
        %v2824 = vunpack.c.l.b16 %v1800
        %v2825 = vunpack.c.l.b16 %v1801
        %v2826 = vunpack.c.l.b16 %v1802
        %v2827 = vunpack.c.l.b16 %v1803
        %v2828 = vunpack.c.l.b16 %v1804
        %v2829 = vunpack.c.l.b16 %v1805
        %v2830 = vunpack.c.l.b16 %v1806
        %v2831 = vunpack.c.l.b16 %v1807
        %v2832 = vunpack.c.l.b16 %v1808
        %v2833 = vunpack.c.l.b16 %v1809
        %v2834 = vunpack.c.l.b16 %v1810
        %v2835 = vunpack.c.l.b16 %v1811
        %v2836 = vunpack.c.l.b16 %v1812
        %v2837 = vunpack.c.l.b16 %v1813
        %v2838 = vunpack.c.l.b16 %v1814
        %v2839 = vunpack.c.l.b16 %v1815
        %v2840 = vunpack.c.l.b16 %v1816
        %v2841 = vunpack.c.l.b16 %v1817
        %v2842 = vunpack.c.l.b16 %v1818
        %v2843 = vunpack.c.l.b16 %v1819
        %v2844 = vunpack.c.l.b16 %v1820
        %v2845 = vunpack.c.l.b16 %v1821
        %v2846 = vunpack.c.l.b16 %v1822
        %v2847 = vunpack.c.l.b16 %v1823
        %v2848 = vunpack.c.l.b16 %v1824
        %v2849 = vunpack.c.l.b16 %v1825
        %v2850 = vunpack.c.l.b16 %v1826
        %v2851 = vunpack.c.l.b16 %v1827
        %v2852 = vunpack.c.l.b16 %v1828
        %v2853 = vunpack.c.l.b16 %v1829
        %v2854 = vunpack.c.l.b16 %v1830
        %v2855 = vunpack.c.l.b16 %v1831
        %v2856 = vunpack.c.l.b16 %v1832
        %v2857 = vunpack.c.l.b16 %v1833
        %v2858 = vunpack.c.l.b16 %v1834
        %v2859 = vunpack.c.l.b16 %v1835
        %v2860 = vunpack.c.l.b16 %v1836
        %v2861 = vunpack.c.l.b16 %v1837
        %v2862 = vunpack.c.l.b16 %v1838
        %v2863 = vunpack.c.l.b16 %v1839
        %v2864 = vunpack.c.l.b16 %v1840
        %v2865 = vunpack.c.l.b16 %v1841
        %v2866 = vunpack.c.l.b16 %v1842
        %v2867 = vunpack.c.l.b16 %v1843
        %v2868 = vunpack.c.l.b16 %v1844
        %v2869 = vunpack.c.l.b16 %v1845
        %v2870 = vunpack.c.l.b16 %v1846
        %v2871 = vunpack.c.l.b16 %v1847
        %v2872 = vunpack.c.l.b16 %v1848
        %v2873 = vunpack.c.l.b16 %v1849
        %v2874 = vunpack.c.l.b16 %v1850
        %v2875 = vunpack.c.l.b16 %v1851
        %v2876 = vunpack.c.l.b16 %v1852
        %v2877 = vunpack.c.l.b16 %v1853
        %v2878 = vunpack.c.l.b16 %v1854
        %v2879 = vunpack.c.l.b16 %v1855
        %v2880 = vunpack.c.l.b16 %v1856
        %v2881 = vunpack.c.l.b16 %v1857
        %v2882 = vunpack.c.l.b16 %v1858
        %v2883 = vunpack.c.l.b16 %v1859
        %v2884 = vunpack.c.l.b16 %v1860
        %v2885 = vunpack.c.l.b16 %v1861
        %v2886 = vunpack.c.l.b16 %v1862
        %v2887 = vunpack.c.l.b16 %v1863
        %v2888 = vunpack.c.l.b16 %v1864
        %v2889 = vunpack.c.l.b16 %v1865
        %v2890 = vunpack.c.l.b16 %v1866
        %v2891 = vunpack.c.l.b16 %v1867
        %v2892 = vunpack.c.l.b16 %v1868
        %v2893 = vunpack.c.l.b16 %v1869
        %v2894 = vunpack.c.l.b16 %v1870
        %v2895 = vunpack.c.l.b16 %v1871
        %v2896 = vunpack.c.l.b16 %v1872
        %v2897 = vunpack.c.l.b16 %v1873
        %v2898 = vunpack.c.l.b16 %v1874
        %v2899 = vunpack.c.l.b16 %v1875
        %v2900 = vunpack.c.l.b16 %v1876
        %v2901 = vunpack.c.l.b16 %v1877
        %v2902 = vunpack.c.l.b16 %v1878
        %v2903 = vunpack.c.l.b16 %v1879
        %v2904 = vpack.c.b16 %v2761, %v2760
        %v2905 = vpack.c.b16 %v2763, %v2762
        %v2906 = vpack.c.b16 %v2765, %v2764
        %v2907 = vpack.c.b16 %v2767, %v2766
        %v2908 = vpack.c.b16 %v2769, %v2768
        %v2909 = vpack.c.b16 %v2771, %v2770
        %v2910 = vpack.c.b16 %v2773, %v2772
        %v2911 = vpack.c.b16 %v2775, %v2774
        %v2912 = vpack.c.b16 %v2777, %v2776
        %v2913 = vpack.c.b16 %v2779, %v2778
        %v2914 = vpack.c.b16 %v2781, %v2780
        %v2915 = vpack.c.b16 %v2783, %v2782
        %v2916 = vpack.c.b16 %v2785, %v2784
        %v2917 = vpack.c.b16 %v2787, %v2786
        %v2918 = vpack.c.b16 %v2789, %v2788
        %v2919 = vpack.c.b16 %v2791, %v2790
        %v2920 = vpack.c.b16 %v2793, %v2792
        %v2921 = vpack.c.b16 %v2795, %v2794
        %v2922 = vpack.c.b16 %v2797, %v2796
        %v2923 = vpack.c.b16 %v2799, %v2798
        %v2924 = vpack.c.b16 %v2801, %v2800
        %v2925 = vpack.c.b16 %v2803, %v2802
        %v2926 = vpack.c.b16 %v2805, %v2804
        %v2927 = vpack.c.b16 %v2807, %v2806
        %v2928 = vpack.c.b16 %v2809, %v2808
        %v2929 = vpack.c.b16 %v2811, %v2810
        %v2930 = vpack.c.b16 %v2813, %v2812
        %v2931 = vpack.c.b16 %v2815, %v2814
        %v2932 = vpack.c.b16 %v2817, %v2816
        %v2933 = vpack.c.b16 %v2819, %v2818
        %v2934 = vpack.c.b16 %v2821, %v2820
        %v2935 = vpack.c.b16 %v2823, %v2822
        %v2936 = vpack.c.b16 %v2825, %v2824
        %v2937 = vpack.c.b16 %v2827, %v2826
        %v2938 = vpack.c.b16 %v2829, %v2828
        %v2939 = vpack.c.b16 %v2831, %v2830
        %v2940 = vpack.c.b16 %v2833, %v2832
        %v2941 = vpack.c.b16 %v2835, %v2834
        %v2942 = vpack.c.b16 %v2837, %v2836
        %v2943 = vpack.c.b16 %v2839, %v2838
        %v2944 = vpack.c.b16 %v2841, %v2840
        %v2945 = vpack.c.b16 %v2843, %v2842
        %v2946 = vpack.c.b16 %v2845, %v2844
        %v2947 = vpack.c.b16 %v2847, %v2846
        %v2948 = vpack.c.b16 %v2849, %v2848
        %v2949 = vpack.c.b16 %v2851, %v2850
        %v2950 = vpack.c.b16 %v2853, %v2852
        %v2951 = vpack.c.b16 %v2855, %v2854
        %v2952 = vpack.c.b16 %v2857, %v2856
        %v2953 = vpack.c.b16 %v2859, %v2858
        %v2954 = vpack.c.b16 %v2861, %v2860
        %v2955 = vpack.c.b16 %v2863, %v2862
        %v2956 = vpack.c.b16 %v2865, %v2864
        %v2957 = vpack.c.b16 %v2867, %v2866
        %v2958 = vpack.c.b16 %v2869, %v2868
        %v2959 = vpack.c.b16 %v2871, %v2870
        %v2960 = vpack.c.b16 %v2873, %v2872
        %v2961 = vpack.c.b16 %v2875, %v2874
        %v2962 = vpack.c.b16 %v2877, %v2876
        %v2963 = vpack.c.b16 %v2879, %v2878
        %v2964 = vpack.c.b16 %v2881, %v2880
        %v2965 = vpack.c.b16 %v2883, %v2882
        %v2966 = vpack.c.b16 %v2885, %v2884
        %v2967 = vpack.c.b16 %v2887, %v2886
        %v2968 = vpack.c.b16 %v2889, %v2888
        %v2969 = vpack.c.b16 %v2891, %v2890
        %v2970 = vpack.c.b16 %v2893, %v2892
        %v2971 = vpack.c.b16 %v2895, %v2894
        %v2972 = vpack.c.b16 %v2897, %v2896
        %v2973 = vpack.c.b16 %v2899, %v2898
        %v2974 = vpack.c.b16 %v2901, %v2900
        %v2975 = vpack.c.b16 %v2903, %v2902
        %3048 = vmatprep.subr.bf16.mxu0 0
        %3049 = vmatpush1.bf16.msra.mxu0 %v2911
        %3050 = vmatprep.subr.bf16.mxu0 0
        %3051 = vmatpush1.bf16.msra.mxu0 %v2910
        %3052 = vmatprep.subr.bf16.mxu0 0
        %3053 = vmatpush1.bf16.msra.mxu0 %v2909
        %3054 = vmatprep.subr.bf16.mxu0 0
        %3055 = vmatpush1.bf16.msra.mxu0 %v2908
        %3056 = vmatprep.subr.bf16.mxu0 0
        %3057 = vmatpush1.bf16.msra.mxu0 %v2907
        %3058 = vmatprep.subr.bf16.mxu0 0
        %3059 = vmatpush1.bf16.msra.mxu0 %v2906
        %3060 = vmatprep.subr.bf16.mxu0 0
        %3061 = vmatpush1.bf16.msra.mxu0 %v2905
        %3062 = vmatprep.subr.bf16.mxu0 0
        %3063 = vmatpush1.bf16.msra.mxu0 %v2904
        %3064 = vmatprep.subr.bf16.mxu0 0
        %3065 = vmatpush2.bf16.msra.mxu0 %v2919
        %3066 = vmatprep.subr.bf16.mxu0 0
        %3067 = vmatpush2.bf16.msra.mxu0 %v2918
        %3068 = vmatprep.subr.bf16.mxu0 0
        %3069 = vmatpush2.bf16.msra.mxu0 %v2917
        %3070 = vmatprep.subr.bf16.mxu0 0
        %3071 = vmatpush2.bf16.msra.mxu0 %v2916
        %3072 = vmatprep.subr.bf16.mxu0 0
        %3073 = vmatpush2.bf16.msra.mxu0 %v2915
        %3074 = vmatprep.subr.bf16.mxu0 0
        %3075 = vmatpush2.bf16.msra.mxu0 %v2914
        %3076 = vmatprep.subr.bf16.mxu0 0
        %3077 = vmatpush2.bf16.msra.mxu0 %v2913
        %3078 = vmatprep.subr.bf16.mxu0 0
        %3079 = vmatpush2.bf16.msra.mxu0 %v2912
        %3080 = vmatprep.mubr.bf16.mxu0 %v2329
        %3081 = vmatmul.mubr.bf16.gmra.mxu0 %v2328
        %v3082 = vpop.f32.mrf.mxu0
        %v3083 = vadd.f32 0.0, %v3082
        %v3084 = vpop.f32.mrf.mxu0
        %v3085 = vpop.f32.mrf.mxu0
        %v3086 = vadd.f32 0.0, %v3085
        %v3087 = vpop.f32.mrf.mxu0
        %3088 = vmatprep.mubr.bf16.mxu0 %v2338
        %3089 = vmatmul.mubr.bf16.gmra.mxu0 %v2337
        %v3090 = vpop.f32.mrf.mxu0
        %v3091 = vadd.f32 0.0, %v3090
        %v3092 = vpop.f32.mrf.mxu0
        %v3093 = vpop.f32.mrf.mxu0
        %v3094 = vadd.f32 0.0, %v3093
        %v3095 = vpop.f32.mrf.mxu0
        %3096 = vmatprep.mubr.bf16.mxu0 %v2347
        %3097 = vmatmul.mubr.bf16.gmra.mxu0 %v2346
        %v3098 = vpop.f32.mrf.mxu0
        %v3099 = vadd.f32 0.0, %v3098
        %v3100 = vpop.f32.mrf.mxu0
        %v3101 = vpop.f32.mrf.mxu0
        %v3102 = vadd.f32 0.0, %v3101
        %v3103 = vpop.f32.mrf.mxu0
        %3104 = vmatprep.mubr.bf16.mxu0 %v2356
        %3105 = vmatmul.mubr.bf16.gmra.mxu0 %v2355
        %v3106 = vpop.f32.mrf.mxu0
        %v3107 = vadd.f32 0.0, %v3106
        %v3108 = vpop.f32.mrf.mxu0
        %v3109 = vpop.f32.mrf.mxu0
        %v3110 = vadd.f32 0.0, %v3109
        %v3111 = vpop.f32.mrf.mxu0
        %3112 = vmatprep.mubr.bf16.mxu0 %v2365
        %3113 = vmatmul.mubr.bf16.gmra.mxu0 %v2364
        %v3114 = vpop.f32.mrf.mxu0
        %v3115 = vadd.f32 0.0, %v3114
        %v3116 = vpop.f32.mrf.mxu0
        %v3117 = vpop.f32.mrf.mxu0
        %v3118 = vadd.f32 0.0, %v3117
        %v3119 = vpop.f32.mrf.mxu0
        %3120 = vmatprep.mubr.bf16.mxu0 %v2374
        %3121 = vmatmul.mubr.bf16.gmra.mxu0 %v2373
        %v3122 = vpop.f32.mrf.mxu0
        %v3123 = vadd.f32 0.0, %v3122
        %v3124 = vpop.f32.mrf.mxu0
        %v3125 = vpop.f32.mrf.mxu0
        %v3126 = vadd.f32 0.0, %v3125
        %v3127 = vpop.f32.mrf.mxu0
        %3128 = vmatprep.mubr.bf16.mxu0 %v2383
        %3129 = vmatmul.mubr.bf16.gmra.mxu0 %v2382
        %v3130 = vpop.f32.mrf.mxu0
        %v3131 = vadd.f32 0.0, %v3130
        %v3132 = vpop.f32.mrf.mxu0
        %v3133 = vpop.f32.mrf.mxu0
        %v3134 = vadd.f32 0.0, %v3133
        %v3135 = vpop.f32.mrf.mxu0
        %3136 = vmatprep.mubr.bf16.mxu0 %v2392
        %3137 = vmatmul.mubr.bf16.gmra.mxu0 %v2391
        %v3138 = vpop.f32.mrf.mxu0
        %v3139 = vadd.f32 0.0, %v3138
        %v3140 = vpop.f32.mrf.mxu0
        %v3141 = vpop.f32.mrf.mxu0
        %v3142 = vadd.f32 0.0, %v3141
        %v3143 = vpop.f32.mrf.mxu0
        %3144 = vmatprep.mubr.bf16.mxu0 %v2401
        %3145 = vmatmul.mubr.bf16.gmra.mxu0 %v2400
        %v3146 = vpop.f32.mrf.mxu0
        %v3147 = vadd.f32 0.0, %v3146
        %v3148 = vpop.f32.mrf.mxu0
        %v3149 = vpop.f32.mrf.mxu0
        %v3150 = vadd.f32 0.0, %v3149
        %v3151 = vpop.f32.mrf.mxu0
        %3152 = vmatprep.mubr.bf16.mxu0 %v2410
        %3153 = vmatmul.mubr.bf16.gmra.mxu0 %v2409
        %v3154 = vpop.f32.mrf.mxu0
        %v3155 = vadd.f32 0.0, %v3154
        %v3156 = vpop.f32.mrf.mxu0
        %v3157 = vpop.f32.mrf.mxu0
        %v3158 = vadd.f32 0.0, %v3157
        %v3159 = vpop.f32.mrf.mxu0
        %3160 = vmatprep.mubr.bf16.mxu0 %v2419
        %3161 = vmatmul.mubr.bf16.gmra.mxu0 %v2418
        %v3162 = vpop.f32.mrf.mxu0
        %v3163 = vadd.f32 0.0, %v3162
        %v3164 = vpop.f32.mrf.mxu0
        %v3165 = vpop.f32.mrf.mxu0
        %v3166 = vadd.f32 0.0, %v3165
        %v3167 = vpop.f32.mrf.mxu0
        %3168 = vmatprep.mubr.bf16.mxu0 %v2428
        %3169 = vmatmul.mubr.bf16.gmra.mxu0 %v2427
        %v3170 = vpop.f32.mrf.mxu0
        %v3171 = vadd.f32 0.0, %v3170
        %v3172 = vpop.f32.mrf.mxu0
        %v3173 = vpop.f32.mrf.mxu0
        %v3174 = vadd.f32 0.0, %v3173
        %v3175 = vpop.f32.mrf.mxu0
        %3176 = vmatprep.mubr.bf16.mxu0 %v2437
        %3177 = vmatmul.mubr.bf16.gmra.mxu0 %v2436
        %v3178 = vpop.f32.mrf.mxu0
        %v3179 = vadd.f32 0.0, %v3178
        %v3180 = vpop.f32.mrf.mxu0
        %v3181 = vpop.f32.mrf.mxu0
        %v3182 = vadd.f32 0.0, %v3181
        %v3183 = vpop.f32.mrf.mxu0
        %3184 = vmatprep.mubr.bf16.mxu0 %v2446
        %3185 = vmatmul.mubr.bf16.gmra.mxu0 %v2445
        %v3186 = vpop.f32.mrf.mxu0
        %v3187 = vadd.f32 0.0, %v3186
        %v3188 = vpop.f32.mrf.mxu0
        %v3189 = vpop.f32.mrf.mxu0
        %v3190 = vadd.f32 0.0, %v3189
        %v3191 = vpop.f32.mrf.mxu0
        %3192 = vmatprep.mubr.bf16.mxu0 %v2455
        %3193 = vmatmul.mubr.bf16.gmra.mxu0 %v2454
        %v3194 = vpop.f32.mrf.mxu0
        %v3195 = vadd.f32 0.0, %v3194
        %v3196 = vpop.f32.mrf.mxu0
        %v3197 = vpop.f32.mrf.mxu0
        %v3198 = vadd.f32 0.0, %v3197
        %v3199 = vpop.f32.mrf.mxu0
        %3200 = vmatprep.mubr.bf16.mxu0 %v2464
        %3201 = vmatmul.mubr.bf16.gmra.mxu0 %v2463
        %v3202 = vpop.f32.mrf.mxu0
        %v3203 = vadd.f32 0.0, %v3202
        %v3204 = vpop.f32.mrf.mxu0
        %v3205 = vpop.f32.mrf.mxu0
        %v3206 = vadd.f32 0.0, %v3205
        %v3207 = vpop.f32.mrf.mxu0
        %3208 = vdwg.mxu0
        %3209 = vmatprep.subr.bf16.mxu0 0
        %3210 = vmatpush1.bf16.msra.mxu0 %v2927
        %3211 = vmatprep.subr.bf16.mxu0 0
        %3212 = vmatpush1.bf16.msra.mxu0 %v2926
        %3213 = vmatprep.subr.bf16.mxu0 0
        %3214 = vmatpush1.bf16.msra.mxu0 %v2925
        %3215 = vmatprep.subr.bf16.mxu0 0
        %3216 = vmatpush1.bf16.msra.mxu0 %v2924
        %3217 = vmatprep.subr.bf16.mxu0 0
        %3218 = vmatpush1.bf16.msra.mxu0 %v2923
        %3219 = vmatprep.subr.bf16.mxu0 0
        %3220 = vmatpush1.bf16.msra.mxu0 %v2922
        %3221 = vmatprep.subr.bf16.mxu0 0
        %3222 = vmatpush1.bf16.msra.mxu0 %v2921
        %3223 = vmatprep.subr.bf16.mxu0 0
        %3224 = vmatpush1.bf16.msra.mxu0 %v2920
        %3225 = vmatprep.subr.bf16.mxu0 0
        %3226 = vmatpush2.bf16.msra.mxu0 %v2935
        %3227 = vmatprep.subr.bf16.mxu0 0
        %3228 = vmatpush2.bf16.msra.mxu0 %v2934
        %3229 = vmatprep.subr.bf16.mxu0 0
        %3230 = vmatpush2.bf16.msra.mxu0 %v2933
        %3231 = vmatprep.subr.bf16.mxu0 0
        %3232 = vmatpush2.bf16.msra.mxu0 %v2932
        %3233 = vmatprep.subr.bf16.mxu0 0
        %3234 = vmatpush2.bf16.msra.mxu0 %v2931
        %3235 = vmatprep.subr.bf16.mxu0 0
        %3236 = vmatpush2.bf16.msra.mxu0 %v2930
        %3237 = vmatprep.subr.bf16.mxu0 0
        %3238 = vmatpush2.bf16.msra.mxu0 %v2929
        %3239 = vmatprep.subr.bf16.mxu0 0
        %3240 = vmatpush2.bf16.msra.mxu0 %v2928
        %3241 = vmatprep.mubr.bf16.mxu0 %v2331
        %3242 = vmatmul.mubr.bf16.gmra.mxu0 %v2330
        %v3243 = vpop.f32.mrf.mxu0
        %v3244 = vadd.f32 %v3083, %v3243
        %v3245 = vpop.f32.mrf.mxu0
        %v3246 = vpop.f32.mrf.mxu0
        %v3247 = vadd.f32 %v3086, %v3246
        %v3248 = vpop.f32.mrf.mxu0
        %3249 = vmatprep.mubr.bf16.mxu0 %v2340
        %3250 = vmatmul.mubr.bf16.gmra.mxu0 %v2339
        %v3251 = vpop.f32.mrf.mxu0
        %v3252 = vadd.f32 %v3091, %v3251
        %v3253 = vpop.f32.mrf.mxu0
        %v3254 = vpop.f32.mrf.mxu0
        %v3255 = vadd.f32 %v3094, %v3254
        %v3256 = vpop.f32.mrf.mxu0
        %3257 = vmatprep.mubr.bf16.mxu0 %v2349
        %3258 = vmatmul.mubr.bf16.gmra.mxu0 %v2348
        %v3259 = vpop.f32.mrf.mxu0
        %v3260 = vadd.f32 %v3099, %v3259
        %v3261 = vpop.f32.mrf.mxu0
        %v3262 = vpop.f32.mrf.mxu0
        %v3263 = vadd.f32 %v3102, %v3262
        %v3264 = vpop.f32.mrf.mxu0
        %3265 = vmatprep.mubr.bf16.mxu0 %v2358
        %3266 = vmatmul.mubr.bf16.gmra.mxu0 %v2357
        %v3267 = vpop.f32.mrf.mxu0
        %v3268 = vadd.f32 %v3107, %v3267
        %v3269 = vpop.f32.mrf.mxu0
        %v3270 = vpop.f32.mrf.mxu0
        %v3271 = vadd.f32 %v3110, %v3270
        %v3272 = vpop.f32.mrf.mxu0
        %3273 = vmatprep.mubr.bf16.mxu0 %v2367
        %3274 = vmatmul.mubr.bf16.gmra.mxu0 %v2366
        %v3275 = vpop.f32.mrf.mxu0
        %v3276 = vadd.f32 %v3115, %v3275
        %v3277 = vpop.f32.mrf.mxu0
        %v3278 = vpop.f32.mrf.mxu0
        %v3279 = vadd.f32 %v3118, %v3278
        %v3280 = vpop.f32.mrf.mxu0
        %3281 = vmatprep.mubr.bf16.mxu0 %v2376
        %3282 = vmatmul.mubr.bf16.gmra.mxu0 %v2375
        %v3283 = vpop.f32.mrf.mxu0
        %v3284 = vadd.f32 %v3123, %v3283
        %v3285 = vpop.f32.mrf.mxu0
        %v3286 = vpop.f32.mrf.mxu0
        %v3287 = vadd.f32 %v3126, %v3286
        %v3288 = vpop.f32.mrf.mxu0
        %3289 = vmatprep.mubr.bf16.mxu0 %v2385
        %3290 = vmatmul.mubr.bf16.gmra.mxu0 %v2384
        %v3291 = vpop.f32.mrf.mxu0
        %v3292 = vadd.f32 %v3131, %v3291
        %v3293 = vpop.f32.mrf.mxu0
        %v3294 = vpop.f32.mrf.mxu0
        %v3295 = vadd.f32 %v3134, %v3294
        %v3296 = vpop.f32.mrf.mxu0
        %3297 = vmatprep.mubr.bf16.mxu0 %v2394
        %3298 = vmatmul.mubr.bf16.gmra.mxu0 %v2393
        %v3299 = vpop.f32.mrf.mxu0
        %v3300 = vadd.f32 %v3139, %v3299
        %v3301 = vpop.f32.mrf.mxu0
        %v3302 = vpop.f32.mrf.mxu0
        %v3303 = vadd.f32 %v3142, %v3302
        %v3304 = vpop.f32.mrf.mxu0
        %3305 = vmatprep.mubr.bf16.mxu0 %v2403
        %3306 = vmatmul.mubr.bf16.gmra.mxu0 %v2402
        %v3307 = vpop.f32.mrf.mxu0
        %v3308 = vadd.f32 %v3147, %v3307
        %v3309 = vpop.f32.mrf.mxu0
        %v3310 = vpop.f32.mrf.mxu0
        %v3311 = vadd.f32 %v3150, %v3310
        %v3312 = vpop.f32.mrf.mxu0
        %3313 = vmatprep.mubr.bf16.mxu0 %v2412
        %3314 = vmatmul.mubr.bf16.gmra.mxu0 %v2411
        %v3315 = vpop.f32.mrf.mxu0
        %v3316 = vadd.f32 %v3155, %v3315
        %v3317 = vpop.f32.mrf.mxu0
        %v3318 = vpop.f32.mrf.mxu0
        %v3319 = vadd.f32 %v3158, %v3318
        %v3320 = vpop.f32.mrf.mxu0
        %3321 = vmatprep.mubr.bf16.mxu0 %v2421
        %3322 = vmatmul.mubr.bf16.gmra.mxu0 %v2420
        %v3323 = vpop.f32.mrf.mxu0
        %v3324 = vadd.f32 %v3163, %v3323
        %v3325 = vpop.f32.mrf.mxu0
        %v3326 = vpop.f32.mrf.mxu0
        %v3327 = vadd.f32 %v3166, %v3326
        %v3328 = vpop.f32.mrf.mxu0
        %3329 = vmatprep.mubr.bf16.mxu0 %v2430
        %3330 = vmatmul.mubr.bf16.gmra.mxu0 %v2429
        %v3331 = vpop.f32.mrf.mxu0
        %v3332 = vadd.f32 %v3171, %v3331
        %v3333 = vpop.f32.mrf.mxu0
        %v3334 = vpop.f32.mrf.mxu0
        %v3335 = vadd.f32 %v3174, %v3334
        %v3336 = vpop.f32.mrf.mxu0
        %3337 = vmatprep.mubr.bf16.mxu0 %v2439
        %3338 = vmatmul.mubr.bf16.gmra.mxu0 %v2438
        %v3339 = vpop.f32.mrf.mxu0
        %v3340 = vadd.f32 %v3179, %v3339
        %v3341 = vpop.f32.mrf.mxu0
        %v3342 = vpop.f32.mrf.mxu0
        %v3343 = vadd.f32 %v3182, %v3342
        %v3344 = vpop.f32.mrf.mxu0
        %3345 = vmatprep.mubr.bf16.mxu0 %v2448
        %3346 = vmatmul.mubr.bf16.gmra.mxu0 %v2447
        %v3347 = vpop.f32.mrf.mxu0
        %v3348 = vadd.f32 %v3187, %v3347
        %v3349 = vpop.f32.mrf.mxu0
        %v3350 = vpop.f32.mrf.mxu0
        %v3351 = vadd.f32 %v3190, %v3350
        %v3352 = vpop.f32.mrf.mxu0
        %3353 = vmatprep.mubr.bf16.mxu0 %v2457
        %3354 = vmatmul.mubr.bf16.gmra.mxu0 %v2456
        %v3355 = vpop.f32.mrf.mxu0
        %v3356 = vadd.f32 %v3195, %v3355
        %v3357 = vpop.f32.mrf.mxu0
        %v3358 = vpop.f32.mrf.mxu0
        %v3359 = vadd.f32 %v3198, %v3358
        %v3360 = vpop.f32.mrf.mxu0
        %3361 = vmatprep.mubr.bf16.mxu0 %v2466
        %3362 = vmatmul.mubr.bf16.gmra.mxu0 %v2465
        %v3363 = vpop.f32.mrf.mxu0
        %v3364 = vadd.f32 %v3203, %v3363
        %v3365 = vpop.f32.mrf.mxu0
        %v3366 = vpop.f32.mrf.mxu0
        %v3367 = vadd.f32 %v3206, %v3366
        %v3368 = vpop.f32.mrf.mxu0
        %3369 = vdwg.mxu0
        %3370 = vmatprep.subr.bf16.mxu0 0
        %3371 = vmatpush1.bf16.msra.mxu0 %v2943
        %3372 = vmatprep.subr.bf16.mxu0 0
        %3373 = vmatpush1.bf16.msra.mxu0 %v2942
        %3374 = vmatprep.subr.bf16.mxu0 0
        %3375 = vmatpush1.bf16.msra.mxu0 %v2941
        %3376 = vmatprep.subr.bf16.mxu0 0
        %3377 = vmatpush1.bf16.msra.mxu0 %v2940
        %3378 = vmatprep.subr.bf16.mxu0 0
        %3379 = vmatpush1.bf16.msra.mxu0 %v2939
        %3380 = vmatprep.subr.bf16.mxu0 0
        %3381 = vmatpush1.bf16.msra.mxu0 %v2938
        %3382 = vmatprep.subr.bf16.mxu0 0
        %3383 = vmatpush1.bf16.msra.mxu0 %v2937
        %3384 = vmatprep.subr.bf16.mxu0 0
        %3385 = vmatpush1.bf16.msra.mxu0 %v2936
        %3386 = vmatprep.subr.bf16.mxu0 0
        %3387 = vmatpush2.bf16.msra.mxu0 %v2951
        %3388 = vmatprep.subr.bf16.mxu0 0
        %3389 = vmatpush2.bf16.msra.mxu0 %v2950
        %3390 = vmatprep.subr.bf16.mxu0 0
        %3391 = vmatpush2.bf16.msra.mxu0 %v2949
        %3392 = vmatprep.subr.bf16.mxu0 0
        %3393 = vmatpush2.bf16.msra.mxu0 %v2948
        %3394 = vmatprep.subr.bf16.mxu0 0
        %3395 = vmatpush2.bf16.msra.mxu0 %v2947
        %3396 = vmatprep.subr.bf16.mxu0 0
        %3397 = vmatpush2.bf16.msra.mxu0 %v2946
        %3398 = vmatprep.subr.bf16.mxu0 0
        %3399 = vmatpush2.bf16.msra.mxu0 %v2945
        %3400 = vmatprep.subr.bf16.mxu0 0
        %3401 = vmatpush2.bf16.msra.mxu0 %v2944
        %3402 = vmatprep.mubr.bf16.mxu0 %v2333
        %3403 = vmatmul.mubr.bf16.gmra.mxu0 %v2332
        %v3404 = vpop.f32.mrf.mxu0
        %v3405 = vadd.f32 %v3244, %v3404
        %v3406 = vpop.f32.mrf.mxu0
        %v3407 = vpop.f32.mrf.mxu0
        %v3408 = vadd.f32 %v3247, %v3407
        %v3409 = vpop.f32.mrf.mxu0
        %3410 = vmatprep.mubr.bf16.mxu0 %v2342
        %3411 = vmatmul.mubr.bf16.gmra.mxu0 %v2341
        %v3412 = vpop.f32.mrf.mxu0
        %v3413 = vadd.f32 %v3252, %v3412
        %v3414 = vpop.f32.mrf.mxu0
        %v3415 = vpop.f32.mrf.mxu0
        %v3416 = vadd.f32 %v3255, %v3415
        %v3417 = vpop.f32.mrf.mxu0
        %3418 = vmatprep.mubr.bf16.mxu0 %v2351
        %3419 = vmatmul.mubr.bf16.gmra.mxu0 %v2350
        %v3420 = vpop.f32.mrf.mxu0
        %v3421 = vadd.f32 %v3260, %v3420
        %v3422 = vpop.f32.mrf.mxu0
        %v3423 = vpop.f32.mrf.mxu0
        %v3424 = vadd.f32 %v3263, %v3423
        %v3425 = vpop.f32.mrf.mxu0
        %3426 = vmatprep.mubr.bf16.mxu0 %v2360
        %3427 = vmatmul.mubr.bf16.gmra.mxu0 %v2359
        %v3428 = vpop.f32.mrf.mxu0
        %v3429 = vadd.f32 %v3268, %v3428
        %v3430 = vpop.f32.mrf.mxu0
        %v3431 = vpop.f32.mrf.mxu0
        %v3432 = vadd.f32 %v3271, %v3431
        %v3433 = vpop.f32.mrf.mxu0
        %3434 = vmatprep.mubr.bf16.mxu0 %v2369
        %3435 = vmatmul.mubr.bf16.gmra.mxu0 %v2368
        %v3436 = vpop.f32.mrf.mxu0
        %v3437 = vadd.f32 %v3276, %v3436
        %v3438 = vpop.f32.mrf.mxu0
        %v3439 = vpop.f32.mrf.mxu0
        %v3440 = vadd.f32 %v3279, %v3439
        %v3441 = vpop.f32.mrf.mxu0
        %3442 = vmatprep.mubr.bf16.mxu0 %v2378
        %3443 = vmatmul.mubr.bf16.gmra.mxu0 %v2377
        %v3444 = vpop.f32.mrf.mxu0
        %v3445 = vadd.f32 %v3284, %v3444
        %v3446 = vpop.f32.mrf.mxu0
        %v3447 = vpop.f32.mrf.mxu0
        %v3448 = vadd.f32 %v3287, %v3447
        %v3449 = vpop.f32.mrf.mxu0
        %3450 = vmatprep.mubr.bf16.mxu0 %v2387
        %3451 = vmatmul.mubr.bf16.gmra.mxu0 %v2386
        %v3452 = vpop.f32.mrf.mxu0
        %v3453 = vadd.f32 %v3292, %v3452
        %v3454 = vpop.f32.mrf.mxu0
        %v3455 = vpop.f32.mrf.mxu0
        %v3456 = vadd.f32 %v3295, %v3455
        %v3457 = vpop.f32.mrf.mxu0
        %3458 = vmatprep.mubr.bf16.mxu0 %v2396
        %3459 = vmatmul.mubr.bf16.gmra.mxu0 %v2395
        %v3460 = vpop.f32.mrf.mxu0
        %v3461 = vadd.f32 %v3300, %v3460
        %v3462 = vpop.f32.mrf.mxu0
        %v3463 = vpop.f32.mrf.mxu0
        %v3464 = vadd.f32 %v3303, %v3463
        %v3465 = vpop.f32.mrf.mxu0
        %3466 = vmatprep.mubr.bf16.mxu0 %v2405
        %3467 = vmatmul.mubr.bf16.gmra.mxu0 %v2404
        %v3468 = vpop.f32.mrf.mxu0
        %v3469 = vadd.f32 %v3308, %v3468
        %v3470 = vpop.f32.mrf.mxu0
        %v3471 = vpop.f32.mrf.mxu0
        %v3472 = vadd.f32 %v3311, %v3471
        %v3473 = vpop.f32.mrf.mxu0
        %3474 = vmatprep.mubr.bf16.mxu0 %v2414
        %3475 = vmatmul.mubr.bf16.gmra.mxu0 %v2413
        %v3476 = vpop.f32.mrf.mxu0
        %v3477 = vadd.f32 %v3316, %v3476
        %v3478 = vpop.f32.mrf.mxu0
        %v3479 = vpop.f32.mrf.mxu0
        %v3480 = vadd.f32 %v3319, %v3479
        %v3481 = vpop.f32.mrf.mxu0
        %3482 = vmatprep.mubr.bf16.mxu0 %v2423
        %3483 = vmatmul.mubr.bf16.gmra.mxu0 %v2422
        %v3484 = vpop.f32.mrf.mxu0
        %v3485 = vadd.f32 %v3324, %v3484
        %v3486 = vpop.f32.mrf.mxu0
        %v3487 = vpop.f32.mrf.mxu0
        %v3488 = vadd.f32 %v3327, %v3487
        %v3489 = vpop.f32.mrf.mxu0
        %3490 = vmatprep.mubr.bf16.mxu0 %v2432
        %3491 = vmatmul.mubr.bf16.gmra.mxu0 %v2431
        %v3492 = vpop.f32.mrf.mxu0
        %v3493 = vadd.f32 %v3332, %v3492
        %v3494 = vpop.f32.mrf.mxu0
        %v3495 = vpop.f32.mrf.mxu0
        %v3496 = vadd.f32 %v3335, %v3495
        %v3497 = vpop.f32.mrf.mxu0
        %3498 = vmatprep.mubr.bf16.mxu0 %v2441
        %3499 = vmatmul.mubr.bf16.gmra.mxu0 %v2440
        %v3500 = vpop.f32.mrf.mxu0
        %v3501 = vadd.f32 %v3340, %v3500
        %v3502 = vpop.f32.mrf.mxu0
        %v3503 = vpop.f32.mrf.mxu0
        %v3504 = vadd.f32 %v3343, %v3503
        %v3505 = vpop.f32.mrf.mxu0
        %3506 = vmatprep.mubr.bf16.mxu0 %v2450
        %3507 = vmatmul.mubr.bf16.gmra.mxu0 %v2449
        %v3508 = vpop.f32.mrf.mxu0
        %v3509 = vadd.f32 %v3348, %v3508
        %v3510 = vpop.f32.mrf.mxu0
        %v3511 = vpop.f32.mrf.mxu0
        %v3512 = vadd.f32 %v3351, %v3511
        %v3513 = vpop.f32.mrf.mxu0
        %3514 = vmatprep.mubr.bf16.mxu0 %v2459
        %3515 = vmatmul.mubr.bf16.gmra.mxu0 %v2458
        %v3516 = vpop.f32.mrf.mxu0
        %v3517 = vadd.f32 %v3356, %v3516
        %v3518 = vpop.f32.mrf.mxu0
        %v3519 = vpop.f32.mrf.mxu0
        %v3520 = vadd.f32 %v3359, %v3519
        %v3521 = vpop.f32.mrf.mxu0
        %3522 = vmatprep.mubr.bf16.mxu0 %v2468
        %3523 = vmatmul.mubr.bf16.gmra.mxu0 %v2467
        %v3524 = vpop.f32.mrf.mxu0
        %v3525 = vadd.f32 %v3364, %v3524
        %v3526 = vpop.f32.mrf.mxu0
        %v3527 = vpop.f32.mrf.mxu0
        %v3528 = vadd.f32 %v3367, %v3527
        %v3529 = vpop.f32.mrf.mxu0
        %3530 = vdwg.mxu0
        %3531 = vmatprep.subr.bf16.mxu0 0
        %3532 = vmatpush1.bf16.msra.mxu0 %v2959
        %3533 = vmatprep.subr.bf16.mxu0 0
        %3534 = vmatpush1.bf16.msra.mxu0 %v2958
        %3535 = vmatprep.subr.bf16.mxu0 0
        %3536 = vmatpush1.bf16.msra.mxu0 %v2957
        %3537 = vmatprep.subr.bf16.mxu0 0
        %3538 = vmatpush1.bf16.msra.mxu0 %v2956
        %3539 = vmatprep.subr.bf16.mxu0 0
        %3540 = vmatpush1.bf16.msra.mxu0 %v2955
        %3541 = vmatprep.subr.bf16.mxu0 0
        %3542 = vmatpush1.bf16.msra.mxu0 %v2954
        %3543 = vmatprep.subr.bf16.mxu0 0
        %3544 = vmatpush1.bf16.msra.mxu0 %v2953
        %3545 = vmatprep.subr.bf16.mxu0 0
        %3546 = vmatpush1.bf16.msra.mxu0 %v2952
        %3547 = vmatprep.subr.bf16.mxu0 0
        %3548 = vmatpush2.bf16.msra.mxu0 %v2967
        %3549 = vmatprep.subr.bf16.mxu0 0
        %3550 = vmatpush2.bf16.msra.mxu0 %v2966
        %3551 = vmatprep.subr.bf16.mxu0 0
        %3552 = vmatpush2.bf16.msra.mxu0 %v2965
        %3553 = vmatprep.subr.bf16.mxu0 0
        %3554 = vmatpush2.bf16.msra.mxu0 %v2964
        %3555 = vmatprep.subr.bf16.mxu0 0
        %3556 = vmatpush2.bf16.msra.mxu0 %v2963
        %3557 = vmatprep.subr.bf16.mxu0 0
        %3558 = vmatpush2.bf16.msra.mxu0 %v2962
        %3559 = vmatprep.subr.bf16.mxu0 0
        %3560 = vmatpush2.bf16.msra.mxu0 %v2961
        %3561 = vmatprep.subr.bf16.mxu0 0
        %3562 = vmatpush2.bf16.msra.mxu0 %v2960
        %3563 = vmatprep.mubr.bf16.mxu0 %v2335
        %3564 = vmatmul.mubr.bf16.gmra.mxu0 %v2334
        %v3565 = vpop.f32.mrf.mxu0
        %v3566 = vadd.f32 %v3405, %v3565
        %v3567 = vpop.f32.mrf.mxu0
        %v3568 = vpop.f32.mrf.mxu0
        %v3569 = vadd.f32 %v3408, %v3568
        %v3570 = vpop.f32.mrf.mxu0
        %3571 = vmatprep.mubr.bf16.mxu0 %v2344
        %3572 = vmatmul.mubr.bf16.gmra.mxu0 %v2343
        %v3573 = vpop.f32.mrf.mxu0
        %v3574 = vadd.f32 %v3413, %v3573
        %v3575 = vpop.f32.mrf.mxu0
        %v3576 = vpop.f32.mrf.mxu0
        %v3577 = vadd.f32 %v3416, %v3576
        %v3578 = vpop.f32.mrf.mxu0
        %3579 = vmatprep.mubr.bf16.mxu0 %v2353
        %3580 = vmatmul.mubr.bf16.gmra.mxu0 %v2352
        %v3581 = vpop.f32.mrf.mxu0
        %v3582 = vadd.f32 %v3421, %v3581
        %v3583 = vpop.f32.mrf.mxu0
        %v3584 = vpop.f32.mrf.mxu0
        %v3585 = vadd.f32 %v3424, %v3584
        %v3586 = vpop.f32.mrf.mxu0
        %3587 = vmatprep.mubr.bf16.mxu0 %v2362
        %3588 = vmatmul.mubr.bf16.gmra.mxu0 %v2361
        %v3589 = vpop.f32.mrf.mxu0
        %v3590 = vadd.f32 %v3429, %v3589
        %v3591 = vpop.f32.mrf.mxu0
        %v3592 = vpop.f32.mrf.mxu0
        %v3593 = vadd.f32 %v3432, %v3592
        %v3594 = vpop.f32.mrf.mxu0
        %3595 = vmatprep.mubr.bf16.mxu0 %v2371
        %3596 = vmatmul.mubr.bf16.gmra.mxu0 %v2370
        %v3597 = vpop.f32.mrf.mxu0
        %v3598 = vadd.f32 %v3437, %v3597
        %v3599 = vpop.f32.mrf.mxu0
        %v3600 = vpop.f32.mrf.mxu0
        %v3601 = vadd.f32 %v3440, %v3600
        %v3602 = vpop.f32.mrf.mxu0
        %3603 = vmatprep.mubr.bf16.mxu0 %v2380
        %3604 = vmatmul.mubr.bf16.gmra.mxu0 %v2379
        %v3605 = vpop.f32.mrf.mxu0
        %v3606 = vadd.f32 %v3445, %v3605
        %v3607 = vpop.f32.mrf.mxu0
        %v3608 = vpop.f32.mrf.mxu0
        %v3609 = vadd.f32 %v3448, %v3608
        %v3610 = vpop.f32.mrf.mxu0
        %3611 = vmatprep.mubr.bf16.mxu0 %v2389
        %3612 = vmatmul.mubr.bf16.gmra.mxu0 %v2388
        %v3613 = vpop.f32.mrf.mxu0
        %v3614 = vadd.f32 %v3453, %v3613
        %v3615 = vpop.f32.mrf.mxu0
        %v3616 = vpop.f32.mrf.mxu0
        %v3617 = vadd.f32 %v3456, %v3616
        %v3618 = vpop.f32.mrf.mxu0
        %3619 = vmatprep.mubr.bf16.mxu0 %v2398
        %3620 = vmatmul.mubr.bf16.gmra.mxu0 %v2397
        %v3621 = vpop.f32.mrf.mxu0
        %v3622 = vadd.f32 %v3461, %v3621
        %v3623 = vpop.f32.mrf.mxu0
        %v3624 = vpop.f32.mrf.mxu0
        %v3625 = vadd.f32 %v3464, %v3624
        %v3626 = vpop.f32.mrf.mxu0
        %3627 = vmatprep.mubr.bf16.mxu0 %v2407
        %3628 = vmatmul.mubr.bf16.gmra.mxu0 %v2406
        %v3629 = vpop.f32.mrf.mxu0
        %v3630 = vadd.f32 %v3469, %v3629
        %v3631 = vpop.f32.mrf.mxu0
        %v3632 = vpop.f32.mrf.mxu0
        %v3633 = vadd.f32 %v3472, %v3632
        %v3634 = vpop.f32.mrf.mxu0
        %3635 = vmatprep.mubr.bf16.mxu0 %v2416
        %3636 = vmatmul.mubr.bf16.gmra.mxu0 %v2415
        %v3637 = vpop.f32.mrf.mxu0
        %v3638 = vadd.f32 %v3477, %v3637
        %v3639 = vpop.f32.mrf.mxu0
        %v3640 = vpop.f32.mrf.mxu0
        %v3641 = vadd.f32 %v3480, %v3640
        %v3642 = vpop.f32.mrf.mxu0
        %3643 = vmatprep.mubr.bf16.mxu0 %v2425
        %3644 = vmatmul.mubr.bf16.gmra.mxu0 %v2424
        %v3645 = vpop.f32.mrf.mxu0
        %v3646 = vadd.f32 %v3485, %v3645
        %v3647 = vpop.f32.mrf.mxu0
        %v3648 = vpop.f32.mrf.mxu0
        %v3649 = vadd.f32 %v3488, %v3648
        %v3650 = vpop.f32.mrf.mxu0
        %3651 = vmatprep.mubr.bf16.mxu0 %v2434
        %3652 = vmatmul.mubr.bf16.gmra.mxu0 %v2433
        %v3653 = vpop.f32.mrf.mxu0
        %v3654 = vadd.f32 %v3493, %v3653
        %v3655 = vpop.f32.mrf.mxu0
        %v3656 = vpop.f32.mrf.mxu0
        %v3657 = vadd.f32 %v3496, %v3656
        %v3658 = vpop.f32.mrf.mxu0
        %3659 = vmatprep.mubr.bf16.mxu0 %v2443
        %3660 = vmatmul.mubr.bf16.gmra.mxu0 %v2442
        %v3661 = vpop.f32.mrf.mxu0
        %v3662 = vadd.f32 %v3501, %v3661
        %v3663 = vpop.f32.mrf.mxu0
        %v3664 = vpop.f32.mrf.mxu0
        %v3665 = vadd.f32 %v3504, %v3664
        %v3666 = vpop.f32.mrf.mxu0
        %3667 = vmatprep.mubr.bf16.mxu0 %v2452
        %3668 = vmatmul.mubr.bf16.gmra.mxu0 %v2451
        %v3669 = vpop.f32.mrf.mxu0
        %v3670 = vadd.f32 %v3509, %v3669
        %v3671 = vpop.f32.mrf.mxu0
        %v3672 = vpop.f32.mrf.mxu0
        %v3673 = vadd.f32 %v3512, %v3672
        %v3674 = vpop.f32.mrf.mxu0
        %3675 = vmatprep.mubr.bf16.mxu0 %v2461
        %3676 = vmatmul.mubr.bf16.gmra.mxu0 %v2460
        %v3677 = vpop.f32.mrf.mxu0
        %v3678 = vadd.f32 %v3517, %v3677
        %v3679 = vpop.f32.mrf.mxu0
        %v3680 = vpop.f32.mrf.mxu0
        %v3681 = vadd.f32 %v3520, %v3680
        %v3682 = vpop.f32.mrf.mxu0
        %3683 = vmatprep.mubr.bf16.mxu0 %v2470
        %3684 = vmatmul.mubr.bf16.gmra.mxu0 %v2469
        %v3685 = vpop.f32.mrf.mxu0
        %v3686 = vadd.f32 %v3525, %v3685
        %v3687 = vpop.f32.mrf.mxu0
        %v3688 = vpop.f32.mrf.mxu0
        %v3689 = vadd.f32 %v3528, %v3688
        %v3690 = vpop.f32.mrf.mxu0
        %3691 = vdwg.mxu0
        %3692 = vmatprep.subr.bf16.mxu0 0
        %3693 = vmatpush1.bf16.msra.mxu0 %v2975
        %3694 = vmatprep.subr.bf16.mxu0 0
        %3695 = vmatpush1.bf16.msra.mxu0 %v2974
        %3696 = vmatprep.subr.bf16.mxu0 0
        %3697 = vmatpush1.bf16.msra.mxu0 %v2973
        %3698 = vmatprep.subr.bf16.mxu0 0
        %3699 = vmatpush1.bf16.msra.mxu0 %v2972
        %3700 = vmatprep.subr.bf16.mxu0 0
        %3701 = vmatpush1.bf16.msra.mxu0 %v2971
        %3702 = vmatprep.subr.bf16.mxu0 0
        %3703 = vmatpush1.bf16.msra.mxu0 %v2970
        %3704 = vmatprep.subr.bf16.mxu0 0
        %3705 = vmatpush1.bf16.msra.mxu0 %v2969
        %3706 = vmatprep.subr.bf16.mxu0 0
        %3707 = vmatpush1.bf16.msra.mxu0 %v2968
        %3708 = vmatprep.subr.bf16.mxu0 0
        %3709 = vmatpush2.bf16.msra.mxu0 0
        %3710 = vmatprep.subr.bf16.mxu0 0
        %3711 = vmatpush2.bf16.msra.mxu0 0
        %3712 = vmatprep.subr.bf16.mxu0 0
        %3713 = vmatpush2.bf16.msra.mxu0 0
        %3714 = vmatprep.subr.bf16.mxu0 0
        %3715 = vmatpush2.bf16.msra.mxu0 0
        %3716 = vmatprep.subr.bf16.mxu0 0
        %3717 = vmatpush2.bf16.msra.mxu0 0
        %3718 = vmatprep.subr.bf16.mxu0 0
        %3719 = vmatpush2.bf16.msra.mxu0 0
        %3720 = vmatprep.subr.bf16.mxu0 0
        %3721 = vmatpush2.bf16.msra.mxu0 0
        %3722 = vmatprep.subr.bf16.mxu0 0
        %3723 = vmatpush2.bf16.msra.mxu0 0
        %3724 = vmatprep.mubr.bf16.mxu0 0
        %3725 = vmatmul.mubr.bf16.gmra.mxu0 %v2336
        %v3726 = vpop.f32.mrf.mxu0
        %v3727 = vadd.f32 %v3566, %v3726
        %v3728 = vpop.f32.mrf.mxu0
        %v3729 = vpop.f32.mrf.mxu0
        %v3730 = vadd.f32 %v3569, %v3729
        %v3731 = vpop.f32.mrf.mxu0
        %3732 = vmatprep.mubr.bf16.mxu0 0
        %3733 = vmatmul.mubr.bf16.gmra.mxu0 %v2345
        %v3734 = vpop.f32.mrf.mxu0
        %v3735 = vadd.f32 %v3574, %v3734
        %v3736 = vpop.f32.mrf.mxu0
        %v3737 = vpop.f32.mrf.mxu0
        %v3738 = vadd.f32 %v3577, %v3737
        %v3739 = vpop.f32.mrf.mxu0
        %3740 = vmatprep.mubr.bf16.mxu0 0
        %3741 = vmatmul.mubr.bf16.gmra.mxu0 %v2354
        %v3742 = vpop.f32.mrf.mxu0
        %v3743 = vadd.f32 %v3582, %v3742
        %v3744 = vpop.f32.mrf.mxu0
        %v3745 = vpop.f32.mrf.mxu0
        %v3746 = vadd.f32 %v3585, %v3745
        %v3747 = vpop.f32.mrf.mxu0
        %3748 = vmatprep.mubr.bf16.mxu0 0
        %3749 = vmatmul.mubr.bf16.gmra.mxu0 %v2363
        %v3750 = vpop.f32.mrf.mxu0
        %v3751 = vadd.f32 %v3590, %v3750
        %v3752 = vpop.f32.mrf.mxu0
        %v3753 = vpop.f32.mrf.mxu0
        %v3754 = vadd.f32 %v3593, %v3753
        %v3755 = vpop.f32.mrf.mxu0
        %3756 = vmatprep.mubr.bf16.mxu0 0
        %3757 = vmatmul.mubr.bf16.gmra.mxu0 %v2372
        %v3758 = vpop.f32.mrf.mxu0
        %v3759 = vadd.f32 %v3598, %v3758
        %v3760 = vpop.f32.mrf.mxu0
        %v3761 = vpop.f32.mrf.mxu0
        %v3762 = vadd.f32 %v3601, %v3761
        %v3763 = vpop.f32.mrf.mxu0
        %3764 = vmatprep.mubr.bf16.mxu0 0
        %3765 = vmatmul.mubr.bf16.gmra.mxu0 %v2381
        %v3766 = vpop.f32.mrf.mxu0
        %v3767 = vadd.f32 %v3606, %v3766
        %v3768 = vpop.f32.mrf.mxu0
        %v3769 = vpop.f32.mrf.mxu0
        %v3770 = vadd.f32 %v3609, %v3769
        %v3771 = vpop.f32.mrf.mxu0
        %3772 = vmatprep.mubr.bf16.mxu0 0
        %3773 = vmatmul.mubr.bf16.gmra.mxu0 %v2390
        %v3774 = vpop.f32.mrf.mxu0
        %v3775 = vadd.f32 %v3614, %v3774
        %v3776 = vpop.f32.mrf.mxu0
        %v3777 = vpop.f32.mrf.mxu0
        %v3778 = vadd.f32 %v3617, %v3777
        %v3779 = vpop.f32.mrf.mxu0
        %3780 = vmatprep.mubr.bf16.mxu0 0
        %3781 = vmatmul.mubr.bf16.gmra.mxu0 %v2399
        %v3782 = vpop.f32.mrf.mxu0
        %v3783 = vadd.f32 %v3622, %v3782
        %v3784 = vpop.f32.mrf.mxu0
        %v3785 = vpop.f32.mrf.mxu0
        %v3786 = vadd.f32 %v3625, %v3785
        %v3787 = vpop.f32.mrf.mxu0
        %3788 = vmatprep.mubr.bf16.mxu0 0
        %3789 = vmatmul.mubr.bf16.gmra.mxu0 %v2408
        %v3790 = vpop.f32.mrf.mxu0
        %v3791 = vadd.f32 %v3630, %v3790
        %v3792 = vpop.f32.mrf.mxu0
        %v3793 = vpop.f32.mrf.mxu0
        %v3794 = vadd.f32 %v3633, %v3793
        %v3795 = vpop.f32.mrf.mxu0
        %3796 = vmatprep.mubr.bf16.mxu0 0
        %3797 = vmatmul.mubr.bf16.gmra.mxu0 %v2417
        %v3798 = vpop.f32.mrf.mxu0
        %v3799 = vadd.f32 %v3638, %v3798
        %v3800 = vpop.f32.mrf.mxu0
        %v3801 = vpop.f32.mrf.mxu0
        %v3802 = vadd.f32 %v3641, %v3801
        %v3803 = vpop.f32.mrf.mxu0
        %3804 = vmatprep.mubr.bf16.mxu0 0
        %3805 = vmatmul.mubr.bf16.gmra.mxu0 %v2426
        %v3806 = vpop.f32.mrf.mxu0
        %v3807 = vadd.f32 %v3646, %v3806
        %v3808 = vpop.f32.mrf.mxu0
        %v3809 = vpop.f32.mrf.mxu0
        %v3810 = vadd.f32 %v3649, %v3809
        %v3811 = vpop.f32.mrf.mxu0
        %3812 = vmatprep.mubr.bf16.mxu0 0
        %3813 = vmatmul.mubr.bf16.gmra.mxu0 %v2435
        %v3814 = vpop.f32.mrf.mxu0
        %v3815 = vadd.f32 %v3654, %v3814
        %v3816 = vpop.f32.mrf.mxu0
        %v3817 = vpop.f32.mrf.mxu0
        %v3818 = vadd.f32 %v3657, %v3817
        %v3819 = vpop.f32.mrf.mxu0
        %3820 = vmatprep.mubr.bf16.mxu0 0
        %3821 = vmatmul.mubr.bf16.gmra.mxu0 %v2444
        %v3822 = vpop.f32.mrf.mxu0
        %v3823 = vadd.f32 %v3662, %v3822
        %v3824 = vpop.f32.mrf.mxu0
        %v3825 = vpop.f32.mrf.mxu0
        %v3826 = vadd.f32 %v3665, %v3825
        %v3827 = vpop.f32.mrf.mxu0
        %3828 = vmatprep.mubr.bf16.mxu0 0
        %3829 = vmatmul.mubr.bf16.gmra.mxu0 %v2453
        %v3830 = vpop.f32.mrf.mxu0
        %v3831 = vadd.f32 %v3670, %v3830
        %v3832 = vpop.f32.mrf.mxu0
        %v3833 = vpop.f32.mrf.mxu0
        %v3834 = vadd.f32 %v3673, %v3833
        %v3835 = vpop.f32.mrf.mxu0
        %3836 = vmatprep.mubr.bf16.mxu0 0
        %3837 = vmatmul.mubr.bf16.gmra.mxu0 %v2462
        %v3838 = vpop.f32.mrf.mxu0
        %v3839 = vadd.f32 %v3678, %v3838
        %v3840 = vpop.f32.mrf.mxu0
        %v3841 = vpop.f32.mrf.mxu0
        %v3842 = vadd.f32 %v3681, %v3841
        %v3843 = vpop.f32.mrf.mxu0
        %3844 = vmatprep.mubr.bf16.mxu0 0
        %3845 = vmatmul.mubr.bf16.gmra.mxu0 %v2471
        %v3846 = vpop.f32.mrf.mxu0
        %v3847 = vadd.f32 %v3686, %v3846
        %v3848 = vpop.f32.mrf.mxu0
        %v3849 = vpop.f32.mrf.mxu0
        %v3850 = vadd.f32 %v3689, %v3849
        %v3851 = vpop.f32.mrf.mxu0
        %3852 = vdwg.mxu0
        %v3853 = vld [vmem:[%s4] sm:$0x1]
        %v3855 = vlaneseq
        %v3856 = vshrl.u32 %v3855, 7
        %v3857 = vsub.s32 0, %v3856
        %v3858 = vrot.slane %v3853, %v3857
        %v3860 = vmul.f32 %v3727, %v3858
        %v3861 = vmul.f32 %v3730, %v3858
        %v3862 = vmul.f32 %v3735, %v3858
        %v3863 = vmul.f32 %v3738, %v3858
        %v3864 = vmul.f32 %v3743, %v3858
        %v3865 = vmul.f32 %v3746, %v3858
        %v3866 = vmul.f32 %v3751, %v3858
        %v3867 = vmul.f32 %v3754, %v3858
        %v3868 = vmul.f32 %v3759, %v3858
        %v3869 = vmul.f32 %v3762, %v3858
        %v3870 = vmul.f32 %v3767, %v3858
        %v3871 = vmul.f32 %v3770, %v3858
        %v3872 = vmul.f32 %v3775, %v3858
        %v3873 = vmul.f32 %v3778, %v3858
        %v3874 = vmul.f32 %v3783, %v3858
        %v3875 = vmul.f32 %v3786, %v3858
        %v3876 = vmul.f32 %v3791, %v3858
        %v3877 = vmul.f32 %v3794, %v3858
        %v3878 = vmul.f32 %v3799, %v3858
        %v3879 = vmul.f32 %v3802, %v3858
        %v3880 = vmul.f32 %v3807, %v3858
        %v3881 = vmul.f32 %v3810, %v3858
        %v3882 = vmul.f32 %v3815, %v3858
        %v3883 = vmul.f32 %v3818, %v3858
        %v3884 = vmul.f32 %v3823, %v3858
        %v3885 = vmul.f32 %v3826, %v3858
        %v3886 = vmul.f32 %v3831, %v3858
        %v3887 = vmul.f32 %v3834, %v3858
        %v3888 = vmul.f32 %v3839, %v3858
        %v3889 = vmul.f32 %v3842, %v3858
        %v3890 = vmul.f32 %v3847, %v3858
        %v3891 = vmul.f32 %v3850, %v3858
        %v3892 = vld [vmem:[%s5] sm:$0x1]
        %v3894 = vlaneseq
        %v3895 = vshrl.u32 %v3894, 7
        %v3896 = vsub.s32 0, %v3895
        %v3897 = vrot.slane %v3892, %v3896
        %v3899 = vadd.f32 %v3860, %v3897
        %v3900 = vadd.f32 %v3861, %v3897
        %v3901 = vadd.f32 %v3862, %v3897
        %v3902 = vadd.f32 %v3863, %v3897
        %v3903 = vadd.f32 %v3864, %v3897
        %v3904 = vadd.f32 %v3865, %v3897
        %v3905 = vadd.f32 %v3866, %v3897
        %v3906 = vadd.f32 %v3867, %v3897
        %v3907 = vadd.f32 %v3868, %v3897
        %v3908 = vadd.f32 %v3869, %v3897
        %v3909 = vadd.f32 %v3870, %v3897
        %v3910 = vadd.f32 %v3871, %v3897
        %v3911 = vadd.f32 %v3872, %v3897
        %v3912 = vadd.f32 %v3873, %v3897
        %v3913 = vadd.f32 %v3874, %v3897
        %v3914 = vadd.f32 %v3875, %v3897
        %v3915 = vadd.f32 %v3876, %v3897
        %v3916 = vadd.f32 %v3877, %v3897
        %v3917 = vadd.f32 %v3878, %v3897
        %v3918 = vadd.f32 %v3879, %v3897
        %v3919 = vadd.f32 %v3880, %v3897
        %v3920 = vadd.f32 %v3881, %v3897
        %v3921 = vadd.f32 %v3882, %v3897
        %v3922 = vadd.f32 %v3883, %v3897
        %v3923 = vadd.f32 %v3884, %v3897
        %v3924 = vadd.f32 %v3885, %v3897
        %v3925 = vadd.f32 %v3886, %v3897
        %v3926 = vadd.f32 %v3887, %v3897
        %v3927 = vadd.f32 %v3888, %v3897
        %v3928 = vadd.f32 %v3889, %v3897
        %v3929 = vadd.f32 %v3890, %v3897
        %v3930 = vadd.f32 %v3891, %v3897
        %v3931 = vmax.f32 %v3899, 0.0
        %v3932 = vmax.f32 %v3900, 0.0
        %v3933 = vmax.f32 %v3901, 0.0
        %v3934 = vmax.f32 %v3902, 0.0
        %v3935 = vmax.f32 %v3903, 0.0
        %v3936 = vmax.f32 %v3904, 0.0
        %v3937 = vmax.f32 %v3905, 0.0
        %v3938 = vmax.f32 %v3906, 0.0
        %v3939 = vmax.f32 %v3907, 0.0
        %v3940 = vmax.f32 %v3908, 0.0
        %v3941 = vmax.f32 %v3909, 0.0
        %v3942 = vmax.f32 %v3910, 0.0
        %v3943 = vmax.f32 %v3911, 0.0
        %v3944 = vmax.f32 %v3912, 0.0
        %v3945 = vmax.f32 %v3913, 0.0
        %v3946 = vmax.f32 %v3914, 0.0
        %v3947 = vmax.f32 %v3915, 0.0
        %v3948 = vmax.f32 %v3916, 0.0
        %v3949 = vmax.f32 %v3917, 0.0
        %v3950 = vmax.f32 %v3918, 0.0
        %v3951 = vmax.f32 %v3919, 0.0
        %v3952 = vmax.f32 %v3920, 0.0
        %v3953 = vmax.f32 %v3921, 0.0
        %v3954 = vmax.f32 %v3922, 0.0
        %v3955 = vmax.f32 %v3923, 0.0
        %v3956 = vmax.f32 %v3924, 0.0
        %v3957 = vmax.f32 %v3925, 0.0
        %v3958 = vmax.f32 %v3926, 0.0
        %v3959 = vmax.f32 %v3927, 0.0
        %v3960 = vmax.f32 %v3928, 0.0
        %v3961 = vmax.f32 %v3929, 0.0
        %v3962 = vmax.f32 %v3930, 0.0
        %s3963 = scalar_lea.vmem [#allocation3], 24
        %3964 = vst [vmem:[%s3963 + $0x1] sm:$0xff] %v3931
        %3965 = vst [vmem:[%s3963 + $0x9] sm:$0xff] %v3932
        %3966 = vst [vmem:[%s3963 + $0x19] sm:$0xff] %v3933
        %3967 = vst [vmem:[%s3963 + $0x21] sm:$0xff] %v3934
        %3968 = vst [vmem:[%s3963 + $0x31] sm:$0xff] %v3935
        %3969 = vst [vmem:[%s3963 + $0x39] sm:$0xff] %v3936
        %3970 = vst [vmem:[%s3963 + $0x49] sm:$0xff] %v3937
        %3971 = vst [vmem:[%s3963 + $0x51] sm:$0xff] %v3938
        %3972 = vst [vmem:[%s3963 + $0x61] sm:$0xff] %v3939
        %3973 = vst [vmem:[%s3963 + $0x69] sm:$0xff] %v3940
        %3974 = vst [vmem:[%s3963 + $0x79] sm:$0xff] %v3941
        %3975 = vst [vmem:[%s3963 + $0x81] sm:$0xff] %v3942
        %3976 = vst [vmem:[%s3963 + $0x91] sm:$0xff] %v3943
        %3977 = vst [vmem:[%s3963 + $0x99] sm:$0xff] %v3944
        %3978 = vst [vmem:[%s3963 + $0xa9] sm:$0xff] %v3945
        %3979 = vst [vmem:[%s3963 + $0xb1] sm:$0xff] %v3946
        %3980 = vst [vmem:[%s3963 + $0xc1] sm:$0xff] %v3947
        %3981 = vst [vmem:[%s3963 + $0xc9] sm:$0xff] %v3948
        %3982 = vst [vmem:[%s3963 + $0xd9] sm:$0xff] %v3949
        %3983 = vst [vmem:[%s3963 + $0xe1] sm:$0xff] %v3950
        %3984 = vst [vmem:[%s3963 + $0xf1] sm:$0xff] %v3951
        %3985 = vst [vmem:[%s3963 + $0xf9] sm:$0xff] %v3952
        %3986 = vst [vmem:[%s3963 + $0x109] sm:$0xff] %v3953
        %3987 = vst [vmem:[%s3963 + $0x111] sm:$0xff] %v3954
        %3988 = vst [vmem:[%s3963 + $0x121] sm:$0xff] %v3955
        %3989 = vst [vmem:[%s3963 + $0x129] sm:$0xff] %v3956
        %3990 = vst [vmem:[%s3963 + $0x139] sm:$0xff] %v3957
        %3991 = vst [vmem:[%s3963 + $0x141] sm:$0xff] %v3958
        %3992 = vst [vmem:[%s3963 + $0x151] sm:$0xff] %v3959
        %3993 = vst [vmem:[%s3963 + $0x159] sm:$0xff] %v3960
        %3994 = vst [vmem:[%s3963 + $0x169] sm:$0xff] %v3961
        %3995 = vst [vmem:[%s3963 + $0x171] sm:$0xff] %v3962
        %v3996 = vld [vmem:[#allocation3] sm:$0xff]
        %v3997 = vld [vmem:[#allocation3 + $0x8] sm:$0xff]
        %v3998 = vld [vmem:[#allocation3 + $0x18] sm:$0xff]
        %v3999 = vld [vmem:[#allocation3 + $0x20] sm:$0xff]
        %v4000 = vld [vmem:[#allocation3 + $0x30] sm:$0xff]
        %v4001 = vld [vmem:[#allocation3 + $0x38] sm:$0xff]
        %v4002 = vld [vmem:[#allocation3 + $0x48] sm:$0xff]
        %v4003 = vld [vmem:[#allocation3 + $0x50] sm:$0xff]
        %v4004 = vld [vmem:[#allocation3 + $0x60] sm:$0xff]
        %v4005 = vld [vmem:[#allocation3 + $0x68] sm:$0xff]
        %v4006 = vld [vmem:[#allocation3 + $0x78] sm:$0xff]
        %v4007 = vld [vmem:[#allocation3 + $0x80] sm:$0xff]
        %v4008 = vld [vmem:[#allocation3 + $0x90] sm:$0xff]
        %v4009 = vld [vmem:[#allocation3 + $0x98] sm:$0xff]
        %v4010 = vld [vmem:[#allocation3 + $0xa8] sm:$0xff]
        %v4011 = vld [vmem:[#allocation3 + $0xb0] sm:$0xff]
        %v4012 = vld [vmem:[#allocation3 + $0xc0] sm:$0xff]
        %v4013 = vld [vmem:[#allocation3 + $0xc8] sm:$0xff]
        %v4014 = vld [vmem:[#allocation3 + $0xd8] sm:$0xff]
        %v4015 = vld [vmem:[#allocation3 + $0xe0] sm:$0xff]
        %v4016 = vld [vmem:[#allocation3 + $0xf0] sm:$0xff]
        %v4017 = vld [vmem:[#allocation3 + $0xf8] sm:$0xff]
        %v4018 = vld [vmem:[#allocation3 + $0x108] sm:$0xff]
        %v4019 = vld [vmem:[#allocation3 + $0x110] sm:$0xff]
        %v4020 = vld [vmem:[#allocation3 + $0x120] sm:$0xff]
        %v4021 = vld [vmem:[#allocation3 + $0x128] sm:$0xff]
        %v4022 = vld [vmem:[#allocation3 + $0x138] sm:$0xff]
        %v4023 = vld [vmem:[#allocation3 + $0x140] sm:$0xff]
        %v4024 = vld [vmem:[#allocation3 + $0x150] sm:$0xff]
        %v4025 = vld [vmem:[#allocation3 + $0x158] sm:$0xff]
        %v4026 = vld [vmem:[#allocation3 + $0x168] sm:$0xff]
        %v4027 = vld [vmem:[#allocation3 + $0x170] sm:$0xff]
        %v4028 = vld [vmem:[#allocation3 + $0x180] sm:$0xff]
        %v4029 = vld [vmem:[#allocation3 + $0x188] sm:$0xff]
        %v4030 = vld [vmem:[#allocation3 + $0x198] sm:$0xff]
        %v4031 = vld [vmem:[#allocation3 + $0x1a0] sm:$0xff]
        %v4032 = vpack.c.bf16 %v3997, %v3996
        %v4033 = vpack.c.bf16 %v3999, %v3998
        %v4034 = vpack.c.bf16 %v4001, %v4000
        %v4035 = vpack.c.bf16 %v4003, %v4002
        %v4036 = vpack.c.bf16 %v4005, %v4004
        %v4037 = vpack.c.bf16 %v4007, %v4006
        %v4038 = vpack.c.bf16 %v4009, %v4008
        %v4039 = vpack.c.bf16 %v4011, %v4010
        %v4040 = vpack.c.bf16 %v4013, %v4012
        %v4041 = vpack.c.bf16 %v4015, %v4014
        %v4042 = vpack.c.bf16 %v4017, %v4016
        %v4043 = vpack.c.bf16 %v4019, %v4018
        %v4044 = vpack.c.bf16 %v4021, %v4020
        %v4045 = vpack.c.bf16 %v4023, %v4022
        %v4046 = vpack.c.bf16 %v4025, %v4024
        %v4047 = vpack.c.bf16 %v4027, %v4026
        %v4064 = vunpack.c.l.b16 %v4032
        %v4065 = vunpack.c.h.b16 %v4032
        %v4066 = vunpack.c.l.b16 %v4033
        %v4067 = vunpack.c.h.b16 %v4033
        %v4068 = vunpack.c.l.b16 %v4034
        %v4069 = vunpack.c.h.b16 %v4034
        %v4070 = vunpack.c.l.b16 %v4035
        %v4071 = vunpack.c.h.b16 %v4035
        %v4072 = vunpack.c.l.b16 %v4036
        %v4073 = vunpack.c.h.b16 %v4036
        %v4074 = vunpack.c.l.b16 %v4037
        %v4075 = vunpack.c.h.b16 %v4037
        %v4076 = vunpack.c.l.b16 %v4038
        %v4077 = vunpack.c.h.b16 %v4038
        %v4078 = vunpack.c.l.b16 %v4039
        %v4079 = vunpack.c.h.b16 %v4039
        %v4080 = vunpack.c.l.b16 %v4040
        %v4081 = vunpack.c.h.b16 %v4040
        %v4082 = vunpack.c.l.b16 %v4041
        %v4083 = vunpack.c.h.b16 %v4041
        %v4084 = vunpack.c.l.b16 %v4042
        %v4085 = vunpack.c.h.b16 %v4042
        %v4086 = vunpack.c.l.b16 %v4043
        %v4087 = vunpack.c.h.b16 %v4043
        %v4088 = vunpack.c.l.b16 %v4044
        %v4089 = vunpack.c.h.b16 %v4044
        %v4090 = vunpack.c.l.b16 %v4045
        %v4091 = vunpack.c.h.b16 %v4045
        %v4092 = vunpack.c.l.b16 %v4046
        %v4093 = vunpack.c.h.b16 %v4046
        %v4094 = vunpack.c.l.b16 %v4047
        %v4095 = vunpack.c.h.b16 %v4047
        %v4096 = vpack.c.b16 %v4064, %v4064
        %v4097 = vpack.c.b16 %v4065, %v4065
        %v4098 = vpack.c.b16 %v4066, %v4066
        %v4099 = vpack.c.b16 %v4067, %v4067
        %v4100 = vpack.c.b16 %v4068, %v4068
        %v4101 = vpack.c.b16 %v4069, %v4069
        %v4102 = vpack.c.b16 %v4070, %v4070
        %v4103 = vpack.c.b16 %v4071, %v4071
        %v4104 = vpack.c.b16 %v4072, %v4072
        %v4105 = vpack.c.b16 %v4073, %v4073
        %v4106 = vpack.c.b16 %v4074, %v4074
        %v4107 = vpack.c.b16 %v4075, %v4075
        %v4108 = vpack.c.b16 %v4076, %v4076
        %v4109 = vpack.c.b16 %v4077, %v4077
        %v4110 = vpack.c.b16 %v4078, %v4078
        %v4111 = vpack.c.b16 %v4079, %v4079
        %v4112 = vpack.c.b16 %v4080, %v4080
        %v4113 = vpack.c.b16 %v4081, %v4081
        %v4114 = vpack.c.b16 %v4082, %v4082
        %v4115 = vpack.c.b16 %v4083, %v4083
        %v4116 = vpack.c.b16 %v4084, %v4084
        %v4117 = vpack.c.b16 %v4085, %v4085
        %v4118 = vpack.c.b16 %v4086, %v4086
        %v4119 = vpack.c.b16 %v4087, %v4087
        %v4120 = vpack.c.b16 %v4088, %v4088
        %v4121 = vpack.c.b16 %v4089, %v4089
        %v4122 = vpack.c.b16 %v4090, %v4090
        %v4123 = vpack.c.b16 %v4091, %v4091
        %v4124 = vpack.c.b16 %v4092, %v4092
        %v4125 = vpack.c.b16 %v4093, %v4093
        %v4126 = vpack.c.b16 %v4094, %v4094
        %v4127 = vpack.c.b16 %v4095, %v4095
        %4160 = vst [vmem:[#allocation4 + $0x4] sm:$0xf] %v4096
        %4161 = vst [vmem:[#allocation4 + $0x2c] sm:$0xf] %v4097
        %4162 = vst [vmem:[#allocation4 + $0x54] sm:$0xf] %v4098
        %4163 = vst [vmem:[#allocation4 + $0x7c] sm:$0xf] %v4099
        %4164 = vst [vmem:[#allocation4 + $0xa4] sm:$0xf] %v4100
        %4165 = vst [vmem:[#allocation4 + $0xcc] sm:$0xf] %v4101
        %4166 = vst [vmem:[#allocation4 + $0xf4] sm:$0xf] %v4102
        %4167 = vst [vmem:[#allocation4 + $0x11c] sm:$0xf] %v4103
        %4168 = vst [vmem:[#allocation4 + $0x144] sm:$0xf] %v4104
        %4169 = vst [vmem:[#allocation4 + $0x16c] sm:$0xf] %v4105
        %4170 = vst [vmem:[#allocation4 + $0x194] sm:$0xf] %v4106
        %4171 = vst [vmem:[#allocation4 + $0x1bc] sm:$0xf] %v4107
        %4172 = vst [vmem:[#allocation4 + $0x1e4] sm:$0xf] %v4108
        %4173 = vst [vmem:[#allocation4 + $0x20c] sm:$0xf] %v4109
        %4174 = vst [vmem:[#allocation4 + $0x234] sm:$0xf] %v4110
        %4175 = vst [vmem:[#allocation4 + $0x25c] sm:$0xf] %v4111
        %4176 = vst [vmem:[#allocation4 + $0x284] sm:$0xf] %v4112
        %4177 = vst [vmem:[#allocation4 + $0x2ac] sm:$0xf] %v4113
        %4178 = vst [vmem:[#allocation4 + $0x2d4] sm:$0xf] %v4114
        %4179 = vst [vmem:[#allocation4 + $0x2fc] sm:$0xf] %v4115
        %4180 = vst [vmem:[#allocation4 + $0x324] sm:$0xf] %v4116
        %4181 = vst [vmem:[#allocation4 + $0x34c] sm:$0xf] %v4117
        %4182 = vst [vmem:[#allocation4 + $0x374] sm:$0xf] %v4118
        %4183 = vst [vmem:[#allocation4 + $0x39c] sm:$0xf] %v4119
        %4184 = vst [vmem:[#allocation4 + $0x3c4] sm:$0xf] %v4120
        %4185 = vst [vmem:[#allocation4 + $0x3ec] sm:$0xf] %v4121
        %4186 = vst [vmem:[#allocation4 + $0x414] sm:$0xf] %v4122
        %4187 = vst [vmem:[#allocation4 + $0x43c] sm:$0xf] %v4123
        %4188 = vst [vmem:[#allocation4 + $0x464] sm:$0xf] %v4124
        %4189 = vst [vmem:[#allocation4 + $0x48c] sm:$0xf] %v4125
        %4190 = vst [vmem:[#allocation4 + $0x4b4] sm:$0xf] %v4126
        %4191 = vst [vmem:[#allocation4 + $0x4dc] sm:$0xf] %v4127
        %v4192 = vpack.c.bf16 %v4029, %v4028
        %v4194 = vunpack.c.l.b16 %v4192
        %v4195 = vunpack.c.h.b16 %v4192
        %v4196 = vpack.c.b16 %v4194, %v4194
        %v4197 = vpack.c.b16 %v4195, %v4195
        %4200 = vst [vmem:[#allocation4 + $0x10] sm:$0xf] %v4098
        %4201 = vst [vmem:[#allocation4 + $0x38] sm:$0xf] %v4099
        %4202 = vst [vmem:[#allocation4 + $0x60] sm:$0xf] %v4100
        %4203 = vst [vmem:[#allocation4 + $0x88] sm:$0xf] %v4101
        %4204 = vst [vmem:[#allocation4 + $0xb0] sm:$0xf] %v4102
        %4205 = vst [vmem:[#allocation4 + $0xd8] sm:$0xf] %v4103
        %4206 = vst [vmem:[#allocation4 + $0x100] sm:$0xf] %v4104
        %4207 = vst [vmem:[#allocation4 + $0x128] sm:$0xf] %v4105
        %4208 = vst [vmem:[#allocation4 + $0x150] sm:$0xf] %v4106
        %4209 = vst [vmem:[#allocation4 + $0x178] sm:$0xf] %v4107
        %4210 = vst [vmem:[#allocation4 + $0x1a0] sm:$0xf] %v4108
        %4211 = vst [vmem:[#allocation4 + $0x1c8] sm:$0xf] %v4109
        %4212 = vst [vmem:[#allocation4 + $0x1f0] sm:$0xf] %v4110
        %4213 = vst [vmem:[#allocation4 + $0x218] sm:$0xf] %v4111
        %4214 = vst [vmem:[#allocation4 + $0x240] sm:$0xf] %v4112
        %4215 = vst [vmem:[#allocation4 + $0x268] sm:$0xf] %v4113
        %4216 = vst [vmem:[#allocation4 + $0x290] sm:$0xf] %v4114
        %4217 = vst [vmem:[#allocation4 + $0x2b8] sm:$0xf] %v4115
        %4218 = vst [vmem:[#allocation4 + $0x2e0] sm:$0xf] %v4116
        %4219 = vst [vmem:[#allocation4 + $0x308] sm:$0xf] %v4117
        %4220 = vst [vmem:[#allocation4 + $0x330] sm:$0xf] %v4118
        %4221 = vst [vmem:[#allocation4 + $0x358] sm:$0xf] %v4119
        %4222 = vst [vmem:[#allocation4 + $0x380] sm:$0xf] %v4120
        %4223 = vst [vmem:[#allocation4 + $0x3a8] sm:$0xf] %v4121
        %4224 = vst [vmem:[#allocation4 + $0x3d0] sm:$0xf] %v4122
        %4225 = vst [vmem:[#allocation4 + $0x3f8] sm:$0xf] %v4123
        %4226 = vst [vmem:[#allocation4 + $0x420] sm:$0xf] %v4124
        %4227 = vst [vmem:[#allocation4 + $0x448] sm:$0xf] %v4125
        %4228 = vst [vmem:[#allocation4 + $0x470] sm:$0xf] %v4126
        %4229 = vst [vmem:[#allocation4 + $0x498] sm:$0xf] %v4127
        %4230 = vst [vmem:[#allocation4 + $0x4c0] sm:$0xf] %v4196
        %4231 = vst [vmem:[#allocation4 + $0x4e8] sm:$0xf] %v4197
        %v4232 = vpack.c.bf16 %v4031, %v4030
        %v4234 = vunpack.c.l.b16 %v4232
        %v4235 = vunpack.c.h.b16 %v4232
        %v4236 = vpack.c.b16 %v4234, %v4234
        %v4237 = vpack.c.b16 %v4235, %v4235
        %4240 = vst [vmem:[#allocation4 + $0x1c] sm:$0xf] %v4100
        %4241 = vst [vmem:[#allocation4 + $0x44] sm:$0xf] %v4101
        %4242 = vst [vmem:[#allocation4 + $0x6c] sm:$0xf] %v4102
        %4243 = vst [vmem:[#allocation4 + $0x94] sm:$0xf] %v4103
        %4244 = vst [vmem:[#allocation4 + $0xbc] sm:$0xf] %v4104
        %4245 = vst [vmem:[#allocation4 + $0xe4] sm:$0xf] %v4105
        %4246 = vst [vmem:[#allocation4 + $0x10c] sm:$0xf] %v4106
        %4247 = vst [vmem:[#allocation4 + $0x134] sm:$0xf] %v4107
        %4248 = vst [vmem:[#allocation4 + $0x15c] sm:$0xf] %v4108
        %4249 = vst [vmem:[#allocation4 + $0x184] sm:$0xf] %v4109
        %4250 = vst [vmem:[#allocation4 + $0x1ac] sm:$0xf] %v4110
        %4251 = vst [vmem:[#allocation4 + $0x1d4] sm:$0xf] %v4111
        %4252 = vst [vmem:[#allocation4 + $0x1fc] sm:$0xf] %v4112
        %4253 = vst [vmem:[#allocation4 + $0x224] sm:$0xf] %v4113
        %4254 = vst [vmem:[#allocation4 + $0x24c] sm:$0xf] %v4114
        %4255 = vst [vmem:[#allocation4 + $0x274] sm:$0xf] %v4115
        %4256 = vst [vmem:[#allocation4 + $0x29c] sm:$0xf] %v4116
        %4257 = vst [vmem:[#allocation4 + $0x2c4] sm:$0xf] %v4117
        %4258 = vst [vmem:[#allocation4 + $0x2ec] sm:$0xf] %v4118
        %4259 = vst [vmem:[#allocation4 + $0x314] sm:$0xf] %v4119
        %4260 = vst [vmem:[#allocation4 + $0x33c] sm:$0xf] %v4120
        %4261 = vst [vmem:[#allocation4 + $0x364] sm:$0xf] %v4121
        %4262 = vst [vmem:[#allocation4 + $0x38c] sm:$0xf] %v4122
        %4263 = vst [vmem:[#allocation4 + $0x3b4] sm:$0xf] %v4123
        %4264 = vst [vmem:[#allocation4 + $0x3dc] sm:$0xf] %v4124
        %4265 = vst [vmem:[#allocation4 + $0x404] sm:$0xf] %v4125
        %4266 = vst [vmem:[#allocation4 + $0x42c] sm:$0xf] %v4126
        %4267 = vst [vmem:[#allocation4 + $0x454] sm:$0xf] %v4127
        %4268 = vst [vmem:[#allocation4 + $0x47c] sm:$0xf] %v4196
        %4269 = vst [vmem:[#allocation4 + $0x4a4] sm:$0xf] %v4197
        %4270 = vst [vmem:[#allocation4 + $0x4cc] sm:$0xf] %v4236
        %4271 = vst [vmem:[#allocation4 + $0x4f4] sm:$0xf] %v4237
        %v4272 = vld [vmem:[#allocation3 + $0x1] sm:$0xff]
        %v4273 = vld [vmem:[#allocation3 + $0x9] sm:$0xff]
        %v4274 = vld [vmem:[#allocation3 + $0x19] sm:$0xff]
        %v4275 = vld [vmem:[#allocation3 + $0x21] sm:$0xff]
        %v4276 = vld [vmem:[#allocation3 + $0x31] sm:$0xff]
        %v4277 = vld [vmem:[#allocation3 + $0x39] sm:$0xff]
        %v4278 = vld [vmem:[#allocation3 + $0x49] sm:$0xff]
        %v4279 = vld [vmem:[#allocation3 + $0x51] sm:$0xff]
        %v4280 = vld [vmem:[#allocation3 + $0x61] sm:$0xff]
        %v4281 = vld [vmem:[#allocation3 + $0x69] sm:$0xff]
        %v4282 = vld [vmem:[#allocation3 + $0x79] sm:$0xff]
        %v4283 = vld [vmem:[#allocation3 + $0x81] sm:$0xff]
        %v4284 = vld [vmem:[#allocation3 + $0x91] sm:$0xff]
        %v4285 = vld [vmem:[#allocation3 + $0x99] sm:$0xff]
        %v4286 = vld [vmem:[#allocation3 + $0xa9] sm:$0xff]
        %v4287 = vld [vmem:[#allocation3 + $0xb1] sm:$0xff]
        %v4288 = vld [vmem:[#allocation3 + $0xc1] sm:$0xff]
        %v4289 = vld [vmem:[#allocation3 + $0xc9] sm:$0xff]
        %v4290 = vld [vmem:[#allocation3 + $0xd9] sm:$0xff]
        %v4291 = vld [vmem:[#allocation3 + $0xe1] sm:$0xff]
        %v4292 = vld [vmem:[#allocation3 + $0xf1] sm:$0xff]
        %v4293 = vld [vmem:[#allocation3 + $0xf9] sm:$0xff]
        %v4294 = vld [vmem:[#allocation3 + $0x109] sm:$0xff]
        %v4295 = vld [vmem:[#allocation3 + $0x111] sm:$0xff]
        %v4296 = vld [vmem:[#allocation3 + $0x121] sm:$0xff]
        %v4297 = vld [vmem:[#allocation3 + $0x129] sm:$0xff]
        %v4298 = vld [vmem:[#allocation3 + $0x139] sm:$0xff]
        %v4299 = vld [vmem:[#allocation3 + $0x141] sm:$0xff]
        %v4300 = vld [vmem:[#allocation3 + $0x151] sm:$0xff]
        %v4301 = vld [vmem:[#allocation3 + $0x159] sm:$0xff]
        %v4302 = vld [vmem:[#allocation3 + $0x169] sm:$0xff]
        %v4303 = vld [vmem:[#allocation3 + $0x171] sm:$0xff]
        %v4304 = vld [vmem:[#allocation3 + $0x181] sm:$0xff]
        %v4305 = vld [vmem:[#allocation3 + $0x189] sm:$0xff]
        %v4306 = vld [vmem:[#allocation3 + $0x199] sm:$0xff]
        %v4307 = vld [vmem:[#allocation3 + $0x1a1] sm:$0xff]
        %v4308 = vpack.c.bf16 %v4273, %v4272
        %v4309 = vpack.c.bf16 %v4275, %v4274
        %v4310 = vpack.c.bf16 %v4277, %v4276
        %v4311 = vpack.c.bf16 %v4279, %v4278
        %v4312 = vpack.c.bf16 %v4281, %v4280
        %v4313 = vpack.c.bf16 %v4283, %v4282
        %v4314 = vpack.c.bf16 %v4285, %v4284
        %v4315 = vpack.c.bf16 %v4287, %v4286
        %v4316 = vpack.c.bf16 %v4289, %v4288
        %v4317 = vpack.c.bf16 %v4291, %v4290
        %v4318 = vpack.c.bf16 %v4293, %v4292
        %v4319 = vpack.c.bf16 %v4295, %v4294
        %v4320 = vpack.c.bf16 %v4297, %v4296
        %v4321 = vpack.c.bf16 %v4299, %v4298
        %v4322 = vpack.c.bf16 %v4301, %v4300
        %v4323 = vpack.c.bf16 %v4303, %v4302
        %v4340 = vunpack.c.l.b16 %v4308
        %v4341 = vunpack.c.h.b16 %v4308
        %v4342 = vunpack.c.l.b16 %v4309
        %v4343 = vunpack.c.h.b16 %v4309
        %v4344 = vunpack.c.l.b16 %v4310
        %v4345 = vunpack.c.h.b16 %v4310
        %v4346 = vunpack.c.l.b16 %v4311
        %v4347 = vunpack.c.h.b16 %v4311
        %v4348 = vunpack.c.l.b16 %v4312
        %v4349 = vunpack.c.h.b16 %v4312
        %v4350 = vunpack.c.l.b16 %v4313
        %v4351 = vunpack.c.h.b16 %v4313
        %v4352 = vunpack.c.l.b16 %v4314
        %v4353 = vunpack.c.h.b16 %v4314
        %v4354 = vunpack.c.l.b16 %v4315
        %v4355 = vunpack.c.h.b16 %v4315
        %v4356 = vunpack.c.l.b16 %v4316
        %v4357 = vunpack.c.h.b16 %v4316
        %v4358 = vunpack.c.l.b16 %v4317
        %v4359 = vunpack.c.h.b16 %v4317
        %v4360 = vunpack.c.l.b16 %v4318
        %v4361 = vunpack.c.h.b16 %v4318
        %v4362 = vunpack.c.l.b16 %v4319
        %v4363 = vunpack.c.h.b16 %v4319
        %v4364 = vunpack.c.l.b16 %v4320
        %v4365 = vunpack.c.h.b16 %v4320
        %v4366 = vunpack.c.l.b16 %v4321
        %v4367 = vunpack.c.h.b16 %v4321
        %v4368 = vunpack.c.l.b16 %v4322
        %v4369 = vunpack.c.h.b16 %v4322
        %v4370 = vunpack.c.l.b16 %v4323
        %v4371 = vunpack.c.h.b16 %v4323
        %v4372 = vpack.c.b16 %v4340, %v4340
        %v4373 = vpack.c.b16 %v4341, %v4341
        %v4374 = vpack.c.b16 %v4342, %v4342
        %v4375 = vpack.c.b16 %v4343, %v4343
        %v4376 = vpack.c.b16 %v4344, %v4344
        %v4377 = vpack.c.b16 %v4345, %v4345
        %v4378 = vpack.c.b16 %v4346, %v4346
        %v4379 = vpack.c.b16 %v4347, %v4347
        %v4380 = vpack.c.b16 %v4348, %v4348
        %v4381 = vpack.c.b16 %v4349, %v4349
        %v4382 = vpack.c.b16 %v4350, %v4350
        %v4383 = vpack.c.b16 %v4351, %v4351
        %v4384 = vpack.c.b16 %v4352, %v4352
        %v4385 = vpack.c.b16 %v4353, %v4353
        %v4386 = vpack.c.b16 %v4354, %v4354
        %v4387 = vpack.c.b16 %v4355, %v4355
        %v4388 = vpack.c.b16 %v4356, %v4356
        %v4389 = vpack.c.b16 %v4357, %v4357
        %v4390 = vpack.c.b16 %v4358, %v4358
        %v4391 = vpack.c.b16 %v4359, %v4359
        %v4392 = vpack.c.b16 %v4360, %v4360
        %v4393 = vpack.c.b16 %v4361, %v4361
        %v4394 = vpack.c.b16 %v4362, %v4362
        %v4395 = vpack.c.b16 %v4363, %v4363
        %v4396 = vpack.c.b16 %v4364, %v4364
        %v4397 = vpack.c.b16 %v4365, %v4365
        %v4398 = vpack.c.b16 %v4366, %v4366
        %v4399 = vpack.c.b16 %v4367, %v4367
        %v4400 = vpack.c.b16 %v4368, %v4368
        %v4401 = vpack.c.b16 %v4369, %v4369
        %v4402 = vpack.c.b16 %v4370, %v4370
        %v4403 = vpack.c.b16 %v4371, %v4371
        %4436 = vst [vmem:[#allocation4 + $0x8] sm:$0xf] %v4372
        %4437 = vst [vmem:[#allocation4 + $0x30] sm:$0xf] %v4373
        %4438 = vst [vmem:[#allocation4 + $0x58] sm:$0xf] %v4374
        %4439 = vst [vmem:[#allocation4 + $0x80] sm:$0xf] %v4375
        %4440 = vst [vmem:[#allocation4 + $0xa8] sm:$0xf] %v4376
        %4441 = vst [vmem:[#allocation4 + $0xd0] sm:$0xf] %v4377
        %4442 = vst [vmem:[#allocation4 + $0xf8] sm:$0xf] %v4378
        %4443 = vst [vmem:[#allocation4 + $0x120] sm:$0xf] %v4379
        %4444 = vst [vmem:[#allocation4 + $0x148] sm:$0xf] %v4380
        %4445 = vst [vmem:[#allocation4 + $0x170] sm:$0xf] %v4381
        %4446 = vst [vmem:[#allocation4 + $0x198] sm:$0xf] %v4382
        %4447 = vst [vmem:[#allocation4 + $0x1c0] sm:$0xf] %v4383
        %4448 = vst [vmem:[#allocation4 + $0x1e8] sm:$0xf] %v4384
        %4449 = vst [vmem:[#allocation4 + $0x210] sm:$0xf] %v4385
        %4450 = vst [vmem:[#allocation4 + $0x238] sm:$0xf] %v4386
        %4451 = vst [vmem:[#allocation4 + $0x260] sm:$0xf] %v4387
        %4452 = vst [vmem:[#allocation4 + $0x288] sm:$0xf] %v4388
        %4453 = vst [vmem:[#allocation4 + $0x2b0] sm:$0xf] %v4389
        %4454 = vst [vmem:[#allocation4 + $0x2d8] sm:$0xf] %v4390
        %4455 = vst [vmem:[#allocation4 + $0x300] sm:$0xf] %v4391
        %4456 = vst [vmem:[#allocation4 + $0x328] sm:$0xf] %v4392
        %4457 = vst [vmem:[#allocation4 + $0x350] sm:$0xf] %v4393
        %4458 = vst [vmem:[#allocation4 + $0x378] sm:$0xf] %v4394
        %4459 = vst [vmem:[#allocation4 + $0x3a0] sm:$0xf] %v4395
        %4460 = vst [vmem:[#allocation4 + $0x3c8] sm:$0xf] %v4396
        %4461 = vst [vmem:[#allocation4 + $0x3f0] sm:$0xf] %v4397
        %4462 = vst [vmem:[#allocation4 + $0x418] sm:$0xf] %v4398
        %4463 = vst [vmem:[#allocation4 + $0x440] sm:$0xf] %v4399
        %4464 = vst [vmem:[#allocation4 + $0x468] sm:$0xf] %v4400
        %4465 = vst [vmem:[#allocation4 + $0x490] sm:$0xf] %v4401
        %4466 = vst [vmem:[#allocation4 + $0x4b8] sm:$0xf] %v4402
        %4467 = vst [vmem:[#allocation4 + $0x4e0] sm:$0xf] %v4403
        %v4468 = vpack.c.bf16 %v4305, %v4304
        %v4470 = vunpack.c.l.b16 %v4468
        %v4471 = vunpack.c.h.b16 %v4468
        %v4472 = vpack.c.b16 %v4470, %v4470
        %v4473 = vpack.c.b16 %v4471, %v4471
        %4476 = vst [vmem:[#allocation4 + $0x14] sm:$0xf] %v4374
        %4477 = vst [vmem:[#allocation4 + $0x3c] sm:$0xf] %v4375
        %4478 = vst [vmem:[#allocation4 + $0x64] sm:$0xf] %v4376
        %4479 = vst [vmem:[#allocation4 + $0x8c] sm:$0xf] %v4377
        %4480 = vst [vmem:[#allocation4 + $0xb4] sm:$0xf] %v4378
        %4481 = vst [vmem:[#allocation4 + $0xdc] sm:$0xf] %v4379
        %4482 = vst [vmem:[#allocation4 + $0x104] sm:$0xf] %v4380
        %4483 = vst [vmem:[#allocation4 + $0x12c] sm:$0xf] %v4381
        %4484 = vst [vmem:[#allocation4 + $0x154] sm:$0xf] %v4382
        %4485 = vst [vmem:[#allocation4 + $0x17c] sm:$0xf] %v4383
        %4486 = vst [vmem:[#allocation4 + $0x1a4] sm:$0xf] %v4384
        %4487 = vst [vmem:[#allocation4 + $0x1cc] sm:$0xf] %v4385
        %4488 = vst [vmem:[#allocation4 + $0x1f4] sm:$0xf] %v4386
        %4489 = vst [vmem:[#allocation4 + $0x21c] sm:$0xf] %v4387
        %4490 = vst [vmem:[#allocation4 + $0x244] sm:$0xf] %v4388
        %4491 = vst [vmem:[#allocation4 + $0x26c] sm:$0xf] %v4389
        %4492 = vst [vmem:[#allocation4 + $0x294] sm:$0xf] %v4390
        %4493 = vst [vmem:[#allocation4 + $0x2bc] sm:$0xf] %v4391
        %4494 = vst [vmem:[#allocation4 + $0x2e4] sm:$0xf] %v4392
        %4495 = vst [vmem:[#allocation4 + $0x30c] sm:$0xf] %v4393
        %4496 = vst [vmem:[#allocation4 + $0x334] sm:$0xf] %v4394
        %4497 = vst [vmem:[#allocation4 + $0x35c] sm:$0xf] %v4395
        %4498 = vst [vmem:[#allocation4 + $0x384] sm:$0xf] %v4396
        %4499 = vst [vmem:[#allocation4 + $0x3ac] sm:$0xf] %v4397
        %4500 = vst [vmem:[#allocation4 + $0x3d4] sm:$0xf] %v4398
        %4501 = vst [vmem:[#allocation4 + $0x3fc] sm:$0xf] %v4399
        %4502 = vst [vmem:[#allocation4 + $0x424] sm:$0xf] %v4400
        %4503 = vst [vmem:[#allocation4 + $0x44c] sm:$0xf] %v4401
        %4504 = vst [vmem:[#allocation4 + $0x474] sm:$0xf] %v4402
        %4505 = vst [vmem:[#allocation4 + $0x49c] sm:$0xf] %v4403
        %4506 = vst [vmem:[#allocation4 + $0x4c4] sm:$0xf] %v4472
        %4507 = vst [vmem:[#allocation4 + $0x4ec] sm:$0xf] %v4473
        %v4508 = vpack.c.bf16 %v4307, %v4306
        %v4510 = vunpack.c.l.b16 %v4508
        %v4511 = vunpack.c.h.b16 %v4508
        %v4512 = vpack.c.b16 %v4510, %v4510
        %v4513 = vpack.c.b16 %v4511, %v4511
        %4516 = vst [vmem:[#allocation4 + $0x20] sm:$0xf] %v4376
        %4517 = vst [vmem:[#allocation4 + $0x48] sm:$0xf] %v4377
        %4518 = vst [vmem:[#allocation4 + $0x70] sm:$0xf] %v4378
        %4519 = vst [vmem:[#allocation4 + $0x98] sm:$0xf] %v4379
        %4520 = vst [vmem:[#allocation4 + $0xc0] sm:$0xf] %v4380
        %4521 = vst [vmem:[#allocation4 + $0xe8] sm:$0xf] %v4381
        %4522 = vst [vmem:[#allocation4 + $0x110] sm:$0xf] %v4382
        %4523 = vst [vmem:[#allocation4 + $0x138] sm:$0xf] %v4383
        %4524 = vst [vmem:[#allocation4 + $0x160] sm:$0xf] %v4384
        %4525 = vst [vmem:[#allocation4 + $0x188] sm:$0xf] %v4385
        %4526 = vst [vmem:[#allocation4 + $0x1b0] sm:$0xf] %v4386
        %4527 = vst [vmem:[#allocation4 + $0x1d8] sm:$0xf] %v4387
        %4528 = vst [vmem:[#allocation4 + $0x200] sm:$0xf] %v4388
        %4529 = vst [vmem:[#allocation4 + $0x228] sm:$0xf] %v4389
        %4530 = vst [vmem:[#allocation4 + $0x250] sm:$0xf] %v4390
        %4531 = vst [vmem:[#allocation4 + $0x278] sm:$0xf] %v4391
        %4532 = vst [vmem:[#allocation4 + $0x2a0] sm:$0xf] %v4392
        %4533 = vst [vmem:[#allocation4 + $0x2c8] sm:$0xf] %v4393
        %4534 = vst [vmem:[#allocation4 + $0x2f0] sm:$0xf] %v4394
        %4535 = vst [vmem:[#allocation4 + $0x318] sm:$0xf] %v4395
        %4536 = vst [vmem:[#allocation4 + $0x340] sm:$0xf] %v4396
        %4537 = vst [vmem:[#allocation4 + $0x368] sm:$0xf] %v4397
        %4538 = vst [vmem:[#allocation4 + $0x390] sm:$0xf] %v4398
        %4539 = vst [vmem:[#allocation4 + $0x3b8] sm:$0xf] %v4399
        %4540 = vst [vmem:[#allocation4 + $0x3e0] sm:$0xf] %v4400
        %4541 = vst [vmem:[#allocation4 + $0x408] sm:$0xf] %v4401
        %4542 = vst [vmem:[#allocation4 + $0x430] sm:$0xf] %v4402
        %4543 = vst [vmem:[#allocation4 + $0x458] sm:$0xf] %v4403
        %4544 = vst [vmem:[#allocation4 + $0x480] sm:$0xf] %v4472
        %4545 = vst [vmem:[#allocation4 + $0x4a8] sm:$0xf] %v4473
        %4546 = vst [vmem:[#allocation4 + $0x4d0] sm:$0xf] %v4512
        %4547 = vst [vmem:[#allocation4 + $0x4f8] sm:$0xf] %v4513
        %v4548 = vld [vmem:[#allocation3 + $0x2] sm:$0xff]
        %v4549 = vld [vmem:[#allocation3 + $0xa] sm:$0xff]
        %v4550 = vld [vmem:[#allocation3 + $0x1a] sm:$0xff]
        %v4551 = vld [vmem:[#allocation3 + $0x22] sm:$0xff]
        %v4552 = vld [vmem:[#allocation3 + $0x32] sm:$0xff]
        %v4553 = vld [vmem:[#allocation3 + $0x3a] sm:$0xff]
        %v4554 = vld [vmem:[#allocation3 + $0x4a] sm:$0xff]
        %v4555 = vld [vmem:[#allocation3 + $0x52] sm:$0xff]
        %v4556 = vld [vmem:[#allocation3 + $0x62] sm:$0xff]
        %v4557 = vld [vmem:[#allocation3 + $0x6a] sm:$0xff]
        %v4558 = vld [vmem:[#allocation3 + $0x7a] sm:$0xff]
        %v4559 = vld [vmem:[#allocation3 + $0x82] sm:$0xff]
        %v4560 = vld [vmem:[#allocation3 + $0x92] sm:$0xff]
        %v4561 = vld [vmem:[#allocation3 + $0x9a] sm:$0xff]
        %v4562 = vld [vmem:[#allocation3 + $0xaa] sm:$0xff]
        %v4563 = vld [vmem:[#allocation3 + $0xb2] sm:$0xff]
        %v4564 = vld [vmem:[#allocation3 + $0xc2] sm:$0xff]
        %v4565 = vld [vmem:[#allocation3 + $0xca] sm:$0xff]
        %v4566 = vld [vmem:[#allocation3 + $0xda] sm:$0xff]
        %v4567 = vld [vmem:[#allocation3 + $0xe2] sm:$0xff]
        %v4568 = vld [vmem:[#allocation3 + $0xf2] sm:$0xff]
        %v4569 = vld [vmem:[#allocation3 + $0xfa] sm:$0xff]
        %v4570 = vld [vmem:[#allocation3 + $0x10a] sm:$0xff]
        %v4571 = vld [vmem:[#allocation3 + $0x112] sm:$0xff]
        %v4572 = vld [vmem:[#allocation3 + $0x122] sm:$0xff]
        %v4573 = vld [vmem:[#allocation3 + $0x12a] sm:$0xff]
        %v4574 = vld [vmem:[#allocation3 + $0x13a] sm:$0xff]
        %v4575 = vld [vmem:[#allocation3 + $0x142] sm:$0xff]
        %v4576 = vld [vmem:[#allocation3 + $0x152] sm:$0xff]
        %v4577 = vld [vmem:[#allocation3 + $0x15a] sm:$0xff]
        %v4578 = vld [vmem:[#allocation3 + $0x16a] sm:$0xff]
        %v4579 = vld [vmem:[#allocation3 + $0x172] sm:$0xff]
        %v4580 = vld [vmem:[#allocation3 + $0x182] sm:$0xff]
        %v4581 = vld [vmem:[#allocation3 + $0x18a] sm:$0xff]
        %v4582 = vld [vmem:[#allocation3 + $0x19a] sm:$0xff]
        %v4583 = vld [vmem:[#allocation3 + $0x1a2] sm:$0xff]
        %v4584 = vpack.c.bf16 %v4549, %v4548
        %v4585 = vpack.c.bf16 %v4551, %v4550
        %v4586 = vpack.c.bf16 %v4553, %v4552
        %v4587 = vpack.c.bf16 %v4555, %v4554
        %v4588 = vpack.c.bf16 %v4557, %v4556
        %v4589 = vpack.c.bf16 %v4559, %v4558
        %v4590 = vpack.c.bf16 %v4561, %v4560
        %v4591 = vpack.c.bf16 %v4563, %v4562
        %v4592 = vpack.c.bf16 %v4565, %v4564
        %v4593 = vpack.c.bf16 %v4567, %v4566
        %v4594 = vpack.c.bf16 %v4569, %v4568
        %v4595 = vpack.c.bf16 %v4571, %v4570
        %v4596 = vpack.c.bf16 %v4573, %v4572
        %v4597 = vpack.c.bf16 %v4575, %v4574
        %v4598 = vpack.c.bf16 %v4577, %v4576
        %v4599 = vpack.c.bf16 %v4579, %v4578
        %v4616 = vunpack.c.l.b16 %v4584
        %v4617 = vunpack.c.h.b16 %v4584
        %v4618 = vunpack.c.l.b16 %v4585
        %v4619 = vunpack.c.h.b16 %v4585
        %v4620 = vunpack.c.l.b16 %v4586
        %v4621 = vunpack.c.h.b16 %v4586
        %v4622 = vunpack.c.l.b16 %v4587
        %v4623 = vunpack.c.h.b16 %v4587
        %v4624 = vunpack.c.l.b16 %v4588
        %v4625 = vunpack.c.h.b16 %v4588
        %v4626 = vunpack.c.l.b16 %v4589
        %v4627 = vunpack.c.h.b16 %v4589
        %v4628 = vunpack.c.l.b16 %v4590
        %v4629 = vunpack.c.h.b16 %v4590
        %v4630 = vunpack.c.l.b16 %v4591
        %v4631 = vunpack.c.h.b16 %v4591
        %v4632 = vunpack.c.l.b16 %v4592
        %v4633 = vunpack.c.h.b16 %v4592
        %v4634 = vunpack.c.l.b16 %v4593
        %v4635 = vunpack.c.h.b16 %v4593
        %v4636 = vunpack.c.l.b16 %v4594
        %v4637 = vunpack.c.h.b16 %v4594
        %v4638 = vunpack.c.l.b16 %v4595
        %v4639 = vunpack.c.h.b16 %v4595
        %v4640 = vunpack.c.l.b16 %v4596
        %v4641 = vunpack.c.h.b16 %v4596
        %v4642 = vunpack.c.l.b16 %v4597
        %v4643 = vunpack.c.h.b16 %v4597
        %v4644 = vunpack.c.l.b16 %v4598
        %v4645 = vunpack.c.h.b16 %v4598
        %v4646 = vunpack.c.l.b16 %v4599
        %v4647 = vunpack.c.h.b16 %v4599
        %v4648 = vpack.c.b16 %v4616, %v4616
        %v4649 = vpack.c.b16 %v4617, %v4617
        %v4650 = vpack.c.b16 %v4618, %v4618
        %v4651 = vpack.c.b16 %v4619, %v4619
        %v4652 = vpack.c.b16 %v4620, %v4620
        %v4653 = vpack.c.b16 %v4621, %v4621
        %v4654 = vpack.c.b16 %v4622, %v4622
        %v4655 = vpack.c.b16 %v4623, %v4623
        %v4656 = vpack.c.b16 %v4624, %v4624
        %v4657 = vpack.c.b16 %v4625, %v4625
        %v4658 = vpack.c.b16 %v4626, %v4626
        %v4659 = vpack.c.b16 %v4627, %v4627
        %v4660 = vpack.c.b16 %v4628, %v4628
        %v4661 = vpack.c.b16 %v4629, %v4629
        %v4662 = vpack.c.b16 %v4630, %v4630
        %v4663 = vpack.c.b16 %v4631, %v4631
        %v4664 = vpack.c.b16 %v4632, %v4632
        %v4665 = vpack.c.b16 %v4633, %v4633
        %v4666 = vpack.c.b16 %v4634, %v4634
        %v4667 = vpack.c.b16 %v4635, %v4635
        %v4668 = vpack.c.b16 %v4636, %v4636
        %v4669 = vpack.c.b16 %v4637, %v4637
        %v4670 = vpack.c.b16 %v4638, %v4638
        %v4671 = vpack.c.b16 %v4639, %v4639
        %v4672 = vpack.c.b16 %v4640, %v4640
        %v4673 = vpack.c.b16 %v4641, %v4641
        %v4674 = vpack.c.b16 %v4642, %v4642
        %v4675 = vpack.c.b16 %v4643, %v4643
        %v4676 = vpack.c.b16 %v4644, %v4644
        %v4677 = vpack.c.b16 %v4645, %v4645
        %v4678 = vpack.c.b16 %v4646, %v4646
        %v4679 = vpack.c.b16 %v4647, %v4647
        %4712 = vst [vmem:[#allocation4 + $0xc] sm:$0xf] %v4648
        %4713 = vst [vmem:[#allocation4 + $0x34] sm:$0xf] %v4649
        %4714 = vst [vmem:[#allocation4 + $0x5c] sm:$0xf] %v4650
        %4715 = vst [vmem:[#allocation4 + $0x84] sm:$0xf] %v4651
        %4716 = vst [vmem:[#allocation4 + $0xac] sm:$0xf] %v4652
        %4717 = vst [vmem:[#allocation4 + $0xd4] sm:$0xf] %v4653
        %4718 = vst [vmem:[#allocation4 + $0xfc] sm:$0xf] %v4654
        %4719 = vst [vmem:[#allocation4 + $0x124] sm:$0xf] %v4655
        %4720 = vst [vmem:[#allocation4 + $0x14c] sm:$0xf] %v4656
        %4721 = vst [vmem:[#allocation4 + $0x174] sm:$0xf] %v4657
        %4722 = vst [vmem:[#allocation4 + $0x19c] sm:$0xf] %v4658
        %4723 = vst [vmem:[#allocation4 + $0x1c4] sm:$0xf] %v4659
        %4724 = vst [vmem:[#allocation4 + $0x1ec] sm:$0xf] %v4660
        %4725 = vst [vmem:[#allocation4 + $0x214] sm:$0xf] %v4661
        %4726 = vst [vmem:[#allocation4 + $0x23c] sm:$0xf] %v4662
        %4727 = vst [vmem:[#allocation4 + $0x264] sm:$0xf] %v4663
        %4728 = vst [vmem:[#allocation4 + $0x28c] sm:$0xf] %v4664
        %4729 = vst [vmem:[#allocation4 + $0x2b4] sm:$0xf] %v4665
        %4730 = vst [vmem:[#allocation4 + $0x2dc] sm:$0xf] %v4666
        %4731 = vst [vmem:[#allocation4 + $0x304] sm:$0xf] %v4667
        %4732 = vst [vmem:[#allocation4 + $0x32c] sm:$0xf] %v4668
        %4733 = vst [vmem:[#allocation4 + $0x354] sm:$0xf] %v4669
        %4734 = vst [vmem:[#allocation4 + $0x37c] sm:$0xf] %v4670
        %4735 = vst [vmem:[#allocation4 + $0x3a4] sm:$0xf] %v4671
        %4736 = vst [vmem:[#allocation4 + $0x3cc] sm:$0xf] %v4672
        %4737 = vst [vmem:[#allocation4 + $0x3f4] sm:$0xf] %v4673
        %4738 = vst [vmem:[#allocation4 + $0x41c] sm:$0xf] %v4674
        %4739 = vst [vmem:[#allocation4 + $0x444] sm:$0xf] %v4675
        %4740 = vst [vmem:[#allocation4 + $0x46c] sm:$0xf] %v4676
        %4741 = vst [vmem:[#allocation4 + $0x494] sm:$0xf] %v4677
        %4742 = vst [vmem:[#allocation4 + $0x4bc] sm:$0xf] %v4678
        %4743 = vst [vmem:[#allocation4 + $0x4e4] sm:$0xf] %v4679
        %v4744 = vpack.c.bf16 %v4581, %v4580
        %v4746 = vunpack.c.l.b16 %v4744
        %v4747 = vunpack.c.h.b16 %v4744
        %v4748 = vpack.c.b16 %v4746, %v4746
        %v4749 = vpack.c.b16 %v4747, %v4747
        %4752 = vst [vmem:[#allocation4 + $0x18] sm:$0xf] %v4650
        %4753 = vst [vmem:[#allocation4 + $0x40] sm:$0xf] %v4651
        %4754 = vst [vmem:[#allocation4 + $0x68] sm:$0xf] %v4652
        %4755 = vst [vmem:[#allocation4 + $0x90] sm:$0xf] %v4653
        %4756 = vst [vmem:[#allocation4 + $0xb8] sm:$0xf] %v4654
        %4757 = vst [vmem:[#allocation4 + $0xe0] sm:$0xf] %v4655
        %4758 = vst [vmem:[#allocation4 + $0x108] sm:$0xf] %v4656
        %4759 = vst [vmem:[#allocation4 + $0x130] sm:$0xf] %v4657
        %4760 = vst [vmem:[#allocation4 + $0x158] sm:$0xf] %v4658
        %4761 = vst [vmem:[#allocation4 + $0x180] sm:$0xf] %v4659
        %4762 = vst [vmem:[#allocation4 + $0x1a8] sm:$0xf] %v4660
        %4763 = vst [vmem:[#allocation4 + $0x1d0] sm:$0xf] %v4661
        %4764 = vst [vmem:[#allocation4 + $0x1f8] sm:$0xf] %v4662
        %4765 = vst [vmem:[#allocation4 + $0x220] sm:$0xf] %v4663
        %4766 = vst [vmem:[#allocation4 + $0x248] sm:$0xf] %v4664
        %4767 = vst [vmem:[#allocation4 + $0x270] sm:$0xf] %v4665
        %4768 = vst [vmem:[#allocation4 + $0x298] sm:$0xf] %v4666
        %4769 = vst [vmem:[#allocation4 + $0x2c0] sm:$0xf] %v4667
        %4770 = vst [vmem:[#allocation4 + $0x2e8] sm:$0xf] %v4668
        %4771 = vst [vmem:[#allocation4 + $0x310] sm:$0xf] %v4669
        %4772 = vst [vmem:[#allocation4 + $0x338] sm:$0xf] %v4670
        %4773 = vst [vmem:[#allocation4 + $0x360] sm:$0xf] %v4671
        %4774 = vst [vmem:[#allocation4 + $0x388] sm:$0xf] %v4672
        %4775 = vst [vmem:[#allocation4 + $0x3b0] sm:$0xf] %v4673
        %4776 = vst [vmem:[#allocation4 + $0x3d8] sm:$0xf] %v4674
        %4777 = vst [vmem:[#allocation4 + $0x400] sm:$0xf] %v4675
        %4778 = vst [vmem:[#allocation4 + $0x428] sm:$0xf] %v4676
        %4779 = vst [vmem:[#allocation4 + $0x450] sm:$0xf] %v4677
        %4780 = vst [vmem:[#allocation4 + $0x478] sm:$0xf] %v4678
        %4781 = vst [vmem:[#allocation4 + $0x4a0] sm:$0xf] %v4679
        %4782 = vst [vmem:[#allocation4 + $0x4c8] sm:$0xf] %v4748
        %4783 = vst [vmem:[#allocation4 + $0x4f0] sm:$0xf] %v4749
        %v4784 = vpack.c.bf16 %v4583, %v4582
        %v4786 = vunpack.c.l.b16 %v4784
        %v4787 = vunpack.c.h.b16 %v4784
        %v4788 = vpack.c.b16 %v4786, %v4786
        %v4789 = vpack.c.b16 %v4787, %v4787
        %4792 = vst [vmem:[#allocation4 + $0x24] sm:$0xf] %v4652
        %4793 = vst [vmem:[#allocation4 + $0x4c] sm:$0xf] %v4653
        %4794 = vst [vmem:[#allocation4 + $0x74] sm:$0xf] %v4654
        %4795 = vst [vmem:[#allocation4 + $0x9c] sm:$0xf] %v4655
        %4796 = vst [vmem:[#allocation4 + $0xc4] sm:$0xf] %v4656
        %4797 = vst [vmem:[#allocation4 + $0xec] sm:$0xf] %v4657
        %4798 = vst [vmem:[#allocation4 + $0x114] sm:$0xf] %v4658
        %4799 = vst [vmem:[#allocation4 + $0x13c] sm:$0xf] %v4659
        %4800 = vst [vmem:[#allocation4 + $0x164] sm:$0xf] %v4660
        %4801 = vst [vmem:[#allocation4 + $0x18c] sm:$0xf] %v4661
        %4802 = vst [vmem:[#allocation4 + $0x1b4] sm:$0xf] %v4662
        %4803 = vst [vmem:[#allocation4 + $0x1dc] sm:$0xf] %v4663
        %4804 = vst [vmem:[#allocation4 + $0x204] sm:$0xf] %v4664
        %4805 = vst [vmem:[#allocation4 + $0x22c] sm:$0xf] %v4665
        %4806 = vst [vmem:[#allocation4 + $0x254] sm:$0xf] %v4666
        %4807 = vst [vmem:[#allocation4 + $0x27c] sm:$0xf] %v4667
        %4808 = vst [vmem:[#allocation4 + $0x2a4] sm:$0xf] %v4668
        %4809 = vst [vmem:[#allocation4 + $0x2cc] sm:$0xf] %v4669
        %4810 = vst [vmem:[#allocation4 + $0x2f4] sm:$0xf] %v4670
        %4811 = vst [vmem:[#allocation4 + $0x31c] sm:$0xf] %v4671
        %4812 = vst [vmem:[#allocation4 + $0x344] sm:$0xf] %v4672
        %4813 = vst [vmem:[#allocation4 + $0x36c] sm:$0xf] %v4673
        %4814 = vst [vmem:[#allocation4 + $0x394] sm:$0xf] %v4674
        %4815 = vst [vmem:[#allocation4 + $0x3bc] sm:$0xf] %v4675
        %4816 = vst [vmem:[#allocation4 + $0x3e4] sm:$0xf] %v4676
        %4817 = vst [vmem:[#allocation4 + $0x40c] sm:$0xf] %v4677
        %4818 = vst [vmem:[#allocation4 + $0x434] sm:$0xf] %v4678
        %4819 = vst [vmem:[#allocation4 + $0x45c] sm:$0xf] %v4679
        %4820 = vst [vmem:[#allocation4 + $0x484] sm:$0xf] %v4748
        %4821 = vst [vmem:[#allocation4 + $0x4ac] sm:$0xf] %v4749
        %4822 = vst [vmem:[#allocation4 + $0x4d4] sm:$0xf] %v4788
        %4823 = vst [vmem:[#allocation4 + $0x4fc] sm:$0xf] %v4789
        %v4824 = vld [vmem:[#allocation4] sm:$0xff]
        %v4825 = vld [vmem:[#allocation4 + $0x8] sm:$0xff]
        %v4826 = vld [vmem:[#allocation4 + $0x10] sm:$0xff]
        %v4827 = vld [vmem:[#allocation4 + $0x18] sm:$0xff]
        %v4828 = vld [vmem:[#allocation4 + $0x20] sm:$0xff]
        %v4829 = vld [vmem:[#allocation4 + $0x28] sm:$0xff]
        %v4830 = vld [vmem:[#allocation4 + $0x30] sm:$0xff]
        %v4831 = vld [vmem:[#allocation4 + $0x38] sm:$0xff]
        %v4832 = vld [vmem:[#allocation4 + $0x40] sm:$0xff]
        %v4833 = vld [vmem:[#allocation4 + $0x48] sm:$0xff]
        %v4834 = vld [vmem:[#allocation4 + $0x50] sm:$0xff]
        %v4835 = vld [vmem:[#allocation4 + $0x58] sm:$0xff]
        %v4836 = vld [vmem:[#allocation4 + $0x60] sm:$0xff]
        %v4837 = vld [vmem:[#allocation4 + $0x68] sm:$0xff]
        %v4838 = vld [vmem:[#allocation4 + $0x70] sm:$0xff]
        %v4839 = vld [vmem:[#allocation4 + $0x78] sm:$0xff]
        %v4840 = vld [vmem:[#allocation4 + $0x80] sm:$0xff]
        %v4841 = vld [vmem:[#allocation4 + $0x88] sm:$0xff]
        %v4842 = vld [vmem:[#allocation4 + $0x90] sm:$0xff]
        %v4843 = vld [vmem:[#allocation4 + $0x98] sm:$0xff]
        %v4844 = vld [vmem:[#allocation4 + $0xa0] sm:$0xff]
        %v4845 = vld [vmem:[#allocation4 + $0xa8] sm:$0xff]
        %v4846 = vld [vmem:[#allocation4 + $0xb0] sm:$0xff]
        %v4847 = vld [vmem:[#allocation4 + $0xb8] sm:$0xff]
        %v4848 = vld [vmem:[#allocation4 + $0xc0] sm:$0xff]
        %v4849 = vld [vmem:[#allocation4 + $0xc8] sm:$0xff]
        %v4850 = vld [vmem:[#allocation4 + $0xd0] sm:$0xff]
        %v4851 = vld [vmem:[#allocation4 + $0xd8] sm:$0xff]
        %v4852 = vld [vmem:[#allocation4 + $0xe0] sm:$0xff]
        %v4853 = vld [vmem:[#allocation4 + $0xe8] sm:$0xff]
        %v4854 = vld [vmem:[#allocation4 + $0xf0] sm:$0xff]
        %v4855 = vld [vmem:[#allocation4 + $0xf8] sm:$0xff]
        %v4856 = vld [vmem:[#allocation4 + $0x100] sm:$0xff]
        %v4857 = vld [vmem:[#allocation4 + $0x108] sm:$0xff]
        %v4858 = vld [vmem:[#allocation4 + $0x110] sm:$0xff]
        %v4859 = vld [vmem:[#allocation4 + $0x118] sm:$0xff]
        %v4860 = vld [vmem:[#allocation4 + $0x120] sm:$0xff]
        %v4861 = vld [vmem:[#allocation4 + $0x128] sm:$0xff]
        %v4862 = vld [vmem:[#allocation4 + $0x130] sm:$0xff]
        %v4863 = vld [vmem:[#allocation4 + $0x138] sm:$0xff]
        %v4864 = vld [vmem:[#allocation4 + $0x140] sm:$0xff]
        %v4865 = vld [vmem:[#allocation4 + $0x148] sm:$0xff]
        %v4866 = vld [vmem:[#allocation4 + $0x150] sm:$0xff]
        %v4867 = vld [vmem:[#allocation4 + $0x158] sm:$0xff]
        %v4868 = vld [vmem:[#allocation4 + $0x160] sm:$0xff]
        %v4869 = vld [vmem:[#allocation4 + $0x168] sm:$0xff]
        %v4870 = vld [vmem:[#allocation4 + $0x170] sm:$0xff]
        %v4871 = vld [vmem:[#allocation4 + $0x178] sm:$0xff]
        %v4872 = vld [vmem:[#allocation4 + $0x180] sm:$0xff]
        %v4873 = vld [vmem:[#allocation4 + $0x188] sm:$0xff]
        %v4874 = vld [vmem:[#allocation4 + $0x190] sm:$0xff]
        %v4875 = vld [vmem:[#allocation4 + $0x198] sm:$0xff]
        %v4876 = vld [vmem:[#allocation4 + $0x1a0] sm:$0xff]
        %v4877 = vld [vmem:[#allocation4 + $0x1a8] sm:$0xff]
        %v4878 = vld [vmem:[#allocation4 + $0x1b0] sm:$0xff]
        %v4879 = vld [vmem:[#allocation4 + $0x1b8] sm:$0xff]
        %v4880 = vld [vmem:[#allocation4 + $0x1c0] sm:$0xff]
        %v4881 = vld [vmem:[#allocation4 + $0x1c8] sm:$0xff]
        %v4882 = vld [vmem:[#allocation4 + $0x1d0] sm:$0xff]
        %v4883 = vld [vmem:[#allocation4 + $0x1d8] sm:$0xff]
        %v4884 = vld [vmem:[#allocation4 + $0x1e0] sm:$0xff]
        %v4885 = vld [vmem:[#allocation4 + $0x1e8] sm:$0xff]
        %v4886 = vld [vmem:[#allocation4 + $0x1f0] sm:$0xff]
        %v4887 = vld [vmem:[#allocation4 + $0x1f8] sm:$0xff]
        %v4888 = vld [vmem:[#allocation4 + $0x200] sm:$0xff]
        %v4889 = vld [vmem:[#allocation4 + $0x208] sm:$0xff]
        %v4890 = vld [vmem:[#allocation4 + $0x210] sm:$0xff]
        %v4891 = vld [vmem:[#allocation4 + $0x218] sm:$0xff]
        %v4892 = vld [vmem:[#allocation4 + $0x220] sm:$0xff]
        %v4893 = vld [vmem:[#allocation4 + $0x228] sm:$0xff]
        %v4894 = vld [vmem:[#allocation4 + $0x230] sm:$0xff]
        %v4895 = vld [vmem:[#allocation4 + $0x238] sm:$0xff]
        %v4896 = vld [vmem:[#allocation4 + $0x240] sm:$0xff]
        %v4897 = vld [vmem:[#allocation4 + $0x248] sm:$0xff]
        %v4898 = vld [vmem:[#allocation4 + $0x250] sm:$0xff]
        %v4899 = vld [vmem:[#allocation4 + $0x258] sm:$0xff]
        %v4900 = vld [vmem:[#allocation4 + $0x260] sm:$0xff]
        %v4901 = vld [vmem:[#allocation4 + $0x268] sm:$0xff]
        %v4902 = vld [vmem:[#allocation4 + $0x270] sm:$0xff]
        %v4903 = vld [vmem:[#allocation4 + $0x278] sm:$0xff]
        %v4904 = vld [vmem:[#allocation4 + $0x280] sm:$0xff]
        %v4905 = vld [vmem:[#allocation4 + $0x288] sm:$0xff]
        %v4906 = vld [vmem:[#allocation4 + $0x290] sm:$0xff]
        %v4907 = vld [vmem:[#allocation4 + $0x298] sm:$0xff]
        %v4908 = vld [vmem:[#allocation4 + $0x2a0] sm:$0xff]
        %v4909 = vld [vmem:[#allocation4 + $0x2a8] sm:$0xff]
        %v4910 = vld [vmem:[#allocation4 + $0x2b0] sm:$0xff]
        %v4911 = vld [vmem:[#allocation4 + $0x2b8] sm:$0xff]
        %v4912 = vld [vmem:[#allocation4 + $0x2c0] sm:$0xff]
        %v4913 = vld [vmem:[#allocation4 + $0x2c8] sm:$0xff]
        %v4914 = vld [vmem:[#allocation4 + $0x2d0] sm:$0xff]
        %v4915 = vld [vmem:[#allocation4 + $0x2d8] sm:$0xff]
        %v4916 = vld [vmem:[#allocation4 + $0x2e0] sm:$0xff]
        %v4917 = vld [vmem:[#allocation4 + $0x2e8] sm:$0xff]
        %v4918 = vld [vmem:[#allocation4 + $0x2f0] sm:$0xff]
        %v4919 = vld [vmem:[#allocation4 + $0x2f8] sm:$0xff]
        %v4920 = vld [vmem:[#allocation4 + $0x300] sm:$0xff]
        %v4921 = vld [vmem:[#allocation4 + $0x308] sm:$0xff]
        %v4922 = vld [vmem:[#allocation4 + $0x310] sm:$0xff]
        %v4923 = vld [vmem:[#allocation4 + $0x318] sm:$0xff]
        %v4924 = vld [vmem:[#allocation4 + $0x320] sm:$0xff]
        %v4925 = vld [vmem:[#allocation4 + $0x328] sm:$0xff]
        %v4926 = vld [vmem:[#allocation4 + $0x330] sm:$0xff]
        %v4927 = vld [vmem:[#allocation4 + $0x338] sm:$0xff]
        %v4928 = vld [vmem:[#allocation4 + $0x340] sm:$0xff]
        %v4929 = vld [vmem:[#allocation4 + $0x348] sm:$0xff]
        %v4930 = vld [vmem:[#allocation4 + $0x350] sm:$0xff]
        %v4931 = vld [vmem:[#allocation4 + $0x358] sm:$0xff]
        %v4932 = vld [vmem:[#allocation4 + $0x360] sm:$0xff]
        %v4933 = vld [vmem:[#allocation4 + $0x368] sm:$0xff]
        %v4934 = vld [vmem:[#allocation4 + $0x370] sm:$0xff]
        %v4935 = vld [vmem:[#allocation4 + $0x378] sm:$0xff]
        %v4936 = vld [vmem:[#allocation4 + $0x380] sm:$0xff]
        %v4937 = vld [vmem:[#allocation4 + $0x388] sm:$0xff]
        %v4938 = vld [vmem:[#allocation4 + $0x390] sm:$0xff]
        %v4939 = vld [vmem:[#allocation4 + $0x398] sm:$0xff]
        %v4940 = vld [vmem:[#allocation4 + $0x3a0] sm:$0xff]
        %v4941 = vld [vmem:[#allocation4 + $0x3a8] sm:$0xff]
        %v4942 = vld [vmem:[#allocation4 + $0x3b0] sm:$0xff]
        %v4943 = vld [vmem:[#allocation4 + $0x3b8] sm:$0xff]
        %v4944 = vld [vmem:[#allocation4 + $0x3c0] sm:$0xff]
        %v4945 = vld [vmem:[#allocation4 + $0x3c8] sm:$0xff]
        %v4946 = vld [vmem:[#allocation4 + $0x3d0] sm:$0xff]
        %v4947 = vld [vmem:[#allocation4 + $0x3d8] sm:$0xff]
        %v4948 = vld [vmem:[#allocation4 + $0x3e0] sm:$0xff]
        %v4949 = vld [vmem:[#allocation4 + $0x3e8] sm:$0xff]
        %v4950 = vld [vmem:[#allocation4 + $0x3f0] sm:$0xff]
        %v4951 = vld [vmem:[#allocation4 + $0x3f8] sm:$0xff]
        %v4952 = vld [vmem:[#allocation4 + $0x400] sm:$0xff]
        %v4953 = vld [vmem:[#allocation4 + $0x408] sm:$0xff]
        %v4954 = vld [vmem:[#allocation4 + $0x410] sm:$0xff]
        %v4955 = vld [vmem:[#allocation4 + $0x418] sm:$0xff]
        %v4956 = vld [vmem:[#allocation4 + $0x420] sm:$0xff]
        %v4957 = vld [vmem:[#allocation4 + $0x428] sm:$0xff]
        %v4958 = vld [vmem:[#allocation4 + $0x430] sm:$0xff]
        %v4959 = vld [vmem:[#allocation4 + $0x438] sm:$0xff]
        %v4960 = vld [vmem:[#allocation4 + $0x440] sm:$0xff]
        %v4961 = vld [vmem:[#allocation4 + $0x448] sm:$0xff]
        %v4962 = vld [vmem:[#allocation4 + $0x450] sm:$0xff]
        %v4963 = vld [vmem:[#allocation4 + $0x458] sm:$0xff]
        %v4964 = vld [vmem:[#allocation4 + $0x460] sm:$0xff]
        %v4965 = vld [vmem:[#allocation4 + $0x468] sm:$0xff]
        %v4966 = vld [vmem:[#allocation4 + $0x470] sm:$0xff]
        %v4967 = vld [vmem:[#allocation4 + $0x478] sm:$0xff]
        %v4968 = vld [vmem:[#allocation4 + $0x480] sm:$0xff]
        %v4969 = vld [vmem:[#allocation4 + $0x488] sm:$0xff]
        %v4970 = vld [vmem:[#allocation4 + $0x490] sm:$0xff]
        %v4971 = vld [vmem:[#allocation4 + $0x498] sm:$0xff]
        %v4972 = vld [vmem:[#allocation4 + $0x4a0] sm:$0xff]
        %v4973 = vld [vmem:[#allocation4 + $0x4a8] sm:$0xff]
        %v4974 = vld [vmem:[#allocation4 + $0x4b0] sm:$0xff]
        %v4975 = vld [vmem:[#allocation4 + $0x4b8] sm:$0xff]
        %v4976 = vld [vmem:[#allocation4 + $0x4c0] sm:$0xff]
        %v4977 = vld [vmem:[#allocation4 + $0x4c8] sm:$0xff]
        %v4978 = vld [vmem:[#allocation4 + $0x4d0] sm:$0xff]
        %v4979 = vld [vmem:[#allocation4 + $0x4d8] sm:$0xff]
        %v4980 = vld [vmem:[#allocation4 + $0x4e0] sm:$0xff]
        %v4981 = vld [vmem:[#allocation4 + $0x4e8] sm:$0xff]
        %v4982 = vld [vmem:[#allocation4 + $0x4f0] sm:$0xff]
        %v4983 = vld [vmem:[#allocation4 + $0x4f8] sm:$0xff]
        %v4984 = vld [vmem:[#allocation10] sm:$0xf]
        %v4985 = vld [vmem:[#allocation10 + $0x4] sm:$0xf]
        %v4986 = vld [vmem:[#allocation10 + $0x8] sm:$0xf]
        %v4987 = vld [vmem:[#allocation10 + $0xc] sm:$0xf]
        %v4988 = vld [vmem:[#allocation10 + $0x10] sm:$0xf]
        %v4989 = vld [vmem:[#allocation10 + $0x14] sm:$0xf]
        %v4990 = vld [vmem:[#allocation10 + $0x18] sm:$0xf]
        %v4991 = vld [vmem:[#allocation10 + $0x1c] sm:$0xf]
        %v4992 = vld [vmem:[#allocation10 + $0x20] sm:$0xf]
        %v4993 = vld [vmem:[#allocation10 + $0x24] sm:$0xf]
        %v4994 = vld [vmem:[#allocation10 + $0x28] sm:$0xf]
        %v4995 = vld [vmem:[#allocation10 + $0x2c] sm:$0xf]
        %v4996 = vld [vmem:[#allocation10 + $0x30] sm:$0xf]
        %v4997 = vld [vmem:[#allocation10 + $0x34] sm:$0xf]
        %v4998 = vld [vmem:[#allocation10 + $0x38] sm:$0xf]
        %v4999 = vld [vmem:[#allocation10 + $0x3c] sm:$0xf]
        %v5000 = vld [vmem:[#allocation10 + $0x40] sm:$0xf]
        %v5001 = vld [vmem:[#allocation10 + $0x44] sm:$0xf]
        %v5002 = vld [vmem:[#allocation10 + $0x48] sm:$0xf]
        %v5003 = vld [vmem:[#allocation10 + $0x4c] sm:$0xf]
        %v5004 = vld [vmem:[#allocation10 + $0x50] sm:$0xf]
        %v5005 = vld [vmem:[#allocation10 + $0x54] sm:$0xf]
        %v5006 = vld [vmem:[#allocation10 + $0x58] sm:$0xf]
        %v5007 = vld [vmem:[#allocation10 + $0x5c] sm:$0xf]
        %v5008 = vld [vmem:[#allocation10 + $0x60] sm:$0xf]
        %v5009 = vld [vmem:[#allocation10 + $0x64] sm:$0xf]
        %v5010 = vld [vmem:[#allocation10 + $0x68] sm:$0xf]
        %v5011 = vld [vmem:[#allocation10 + $0x6c] sm:$0xf]
        %v5012 = vld [vmem:[#allocation10 + $0x70] sm:$0xf]
        %v5013 = vld [vmem:[#allocation10 + $0x74] sm:$0xf]
        %v5014 = vld [vmem:[#allocation10 + $0x78] sm:$0xf]
        %v5015 = vld [vmem:[#allocation10 + $0x7c] sm:$0xf]
        %v5016 = vld [vmem:[#allocation10 + $0x80] sm:$0xf]
        %v5017 = vld [vmem:[#allocation10 + $0x84] sm:$0xf]
        %v5018 = vld [vmem:[#allocation10 + $0x88] sm:$0xf]
        %v5019 = vld [vmem:[#allocation10 + $0x8c] sm:$0xf]
        %v5020 = vld [vmem:[#allocation10 + $0x90] sm:$0xf]
        %v5021 = vld [vmem:[#allocation10 + $0x94] sm:$0xf]
        %v5022 = vld [vmem:[#allocation10 + $0x98] sm:$0xf]
        %v5023 = vld [vmem:[#allocation10 + $0x9c] sm:$0xf]
        %v5024 = vld [vmem:[#allocation10 + $0xa0] sm:$0xf]
        %v5025 = vld [vmem:[#allocation10 + $0xa4] sm:$0xf]
        %v5026 = vld [vmem:[#allocation10 + $0xa8] sm:$0xf]
        %v5027 = vld [vmem:[#allocation10 + $0xac] sm:$0xf]
        %v5028 = vld [vmem:[#allocation10 + $0xb0] sm:$0xf]
        %v5029 = vld [vmem:[#allocation10 + $0xb4] sm:$0xf]
        %v5030 = vld [vmem:[#allocation10 + $0xb8] sm:$0xf]
        %v5031 = vld [vmem:[#allocation10 + $0xbc] sm:$0xf]
        %v5032 = vld [vmem:[#allocation10 + $0xc0] sm:$0xf]
        %v5033 = vld [vmem:[#allocation10 + $0xc4] sm:$0xf]
        %v5034 = vld [vmem:[#allocation10 + $0xc8] sm:$0xf]
        %v5035 = vld [vmem:[#allocation10 + $0xcc] sm:$0xf]
        %v5036 = vld [vmem:[#allocation10 + $0xd0] sm:$0xf]
        %v5037 = vld [vmem:[#allocation10 + $0xd4] sm:$0xf]
        %v5038 = vld [vmem:[#allocation10 + $0xd8] sm:$0xf]
        %v5039 = vld [vmem:[#allocation10 + $0xdc] sm:$0xf]
        %v5040 = vld [vmem:[#allocation10 + $0xe0] sm:$0xf]
        %v5041 = vld [vmem:[#allocation10 + $0xe4] sm:$0xf]
        %v5042 = vld [vmem:[#allocation10 + $0xe8] sm:$0xf]
        %v5043 = vld [vmem:[#allocation10 + $0xec] sm:$0xf]
        %v5044 = vld [vmem:[#allocation10 + $0xf0] sm:$0xf]
        %v5045 = vld [vmem:[#allocation10 + $0xf4] sm:$0xf]
        %v5046 = vld [vmem:[#allocation10 + $0xf8] sm:$0xf]
        %v5047 = vld [vmem:[#allocation10 + $0xfc] sm:$0xf]
        %v5048 = vld [vmem:[#allocation10 + $0x100] sm:$0xf]
        %v5049 = vld [vmem:[#allocation10 + $0x104] sm:$0xf]
        %v5050 = vld [vmem:[#allocation10 + $0x108] sm:$0xf]
        %v5051 = vld [vmem:[#allocation10 + $0x10c] sm:$0xf]
        %v5052 = vld [vmem:[#allocation10 + $0x110] sm:$0xf]
        %v5053 = vld [vmem:[#allocation10 + $0x114] sm:$0xf]
        %v5054 = vld [vmem:[#allocation10 + $0x118] sm:$0xf]
        %v5055 = vld [vmem:[#allocation10 + $0x11c] sm:$0xf]
        %v5056 = vld [vmem:[#allocation10 + $0x120] sm:$0xf]
        %v5057 = vld [vmem:[#allocation10 + $0x124] sm:$0xf]
        %v5058 = vld [vmem:[#allocation10 + $0x128] sm:$0xf]
        %v5059 = vld [vmem:[#allocation10 + $0x12c] sm:$0xf]
        %v5060 = vld [vmem:[#allocation10 + $0x130] sm:$0xf]
        %v5061 = vld [vmem:[#allocation10 + $0x134] sm:$0xf]
        %v5062 = vld [vmem:[#allocation10 + $0x138] sm:$0xf]
        %v5063 = vld [vmem:[#allocation10 + $0x13c] sm:$0xf]
        %v5064 = vld [vmem:[#allocation10 + $0x140] sm:$0xf]
        %v5065 = vld [vmem:[#allocation10 + $0x144] sm:$0xf]
        %v5066 = vld [vmem:[#allocation10 + $0x148] sm:$0xf]
        %v5067 = vld [vmem:[#allocation10 + $0x14c] sm:$0xf]
        %v5068 = vld [vmem:[#allocation10 + $0x150] sm:$0xf]
        %v5069 = vld [vmem:[#allocation10 + $0x154] sm:$0xf]
        %v5070 = vld [vmem:[#allocation10 + $0x158] sm:$0xf]
        %v5071 = vld [vmem:[#allocation10 + $0x15c] sm:$0xf]
        %v5072 = vld [vmem:[#allocation10 + $0x160] sm:$0xf]
        %v5073 = vld [vmem:[#allocation10 + $0x164] sm:$0xf]
        %v5074 = vld [vmem:[#allocation10 + $0x168] sm:$0xf]
        %v5075 = vld [vmem:[#allocation10 + $0x16c] sm:$0xf]
        %v5076 = vld [vmem:[#allocation10 + $0x170] sm:$0xf]
        %v5077 = vld [vmem:[#allocation10 + $0x174] sm:$0xf]
        %v5078 = vld [vmem:[#allocation10 + $0x178] sm:$0xf]
        %v5079 = vld [vmem:[#allocation10 + $0x17c] sm:$0xf]
        %v5080 = vld [vmem:[#allocation10 + $0x180] sm:$0xf]
        %v5081 = vld [vmem:[#allocation10 + $0x184] sm:$0xf]
        %v5082 = vld [vmem:[#allocation10 + $0x188] sm:$0xf]
        %v5083 = vld [vmem:[#allocation10 + $0x18c] sm:$0xf]
        %v5084 = vld [vmem:[#allocation10 + $0x190] sm:$0xf]
        %v5085 = vld [vmem:[#allocation10 + $0x194] sm:$0xf]
        %v5086 = vld [vmem:[#allocation10 + $0x198] sm:$0xf]
        %v5087 = vld [vmem:[#allocation10 + $0x19c] sm:$0xf]
        %v5088 = vld [vmem:[#allocation10 + $0x1a0] sm:$0xf]
        %v5089 = vld [vmem:[#allocation10 + $0x1a4] sm:$0xf]
        %v5090 = vld [vmem:[#allocation10 + $0x1a8] sm:$0xf]
        %v5091 = vld [vmem:[#allocation10 + $0x1ac] sm:$0xf]
        %v5092 = vld [vmem:[#allocation10 + $0x1b0] sm:$0xf]
        %v5093 = vld [vmem:[#allocation10 + $0x1b4] sm:$0xf]
        %v5094 = vld [vmem:[#allocation10 + $0x1b8] sm:$0xf]
        %v5095 = vld [vmem:[#allocation10 + $0x1bc] sm:$0xf]
        %v5096 = vld [vmem:[#allocation10 + $0x1c0] sm:$0xf]
        %v5097 = vld [vmem:[#allocation10 + $0x1c4] sm:$0xf]
        %v5098 = vld [vmem:[#allocation10 + $0x1c8] sm:$0xf]
        %v5099 = vld [vmem:[#allocation10 + $0x1cc] sm:$0xf]
        %v5100 = vld [vmem:[#allocation10 + $0x1d0] sm:$0xf]
        %v5101 = vld [vmem:[#allocation10 + $0x1d4] sm:$0xf]
        %v5102 = vld [vmem:[#allocation10 + $0x1d8] sm:$0xf]
        %v5103 = vld [vmem:[#allocation10 + $0x1dc] sm:$0xf]
        %v5104 = vld [vmem:[#allocation10 + $0x1e0] sm:$0xf]
        %v5105 = vld [vmem:[#allocation10 + $0x1e4] sm:$0xf]
        %v5106 = vld [vmem:[#allocation10 + $0x1e8] sm:$0xf]
        %v5107 = vld [vmem:[#allocation10 + $0x1ec] sm:$0xf]
        %v5108 = vld [vmem:[#allocation10 + $0x1f0] sm:$0xf]
        %v5109 = vld [vmem:[#allocation10 + $0x1f4] sm:$0xf]
        %v5110 = vld [vmem:[#allocation10 + $0x1f8] sm:$0xf]
        %v5111 = vld [vmem:[#allocation10 + $0x1fc] sm:$0xf]
        %v5112 = vld [vmem:[#allocation10 + $0x200] sm:$0xf]
        %v5113 = vld [vmem:[#allocation10 + $0x204] sm:$0xf]
        %v5114 = vld [vmem:[#allocation10 + $0x208] sm:$0xf]
        %v5115 = vld [vmem:[#allocation10 + $0x20c] sm:$0xf]
        %v5116 = vld [vmem:[#allocation10 + $0x210] sm:$0xf]
        %v5117 = vld [vmem:[#allocation10 + $0x214] sm:$0xf]
        %v5118 = vld [vmem:[#allocation10 + $0x218] sm:$0xf]
        %v5119 = vld [vmem:[#allocation10 + $0x21c] sm:$0xf]
        %v5120 = vld [vmem:[#allocation10 + $0x220] sm:$0xf]
        %v5121 = vld [vmem:[#allocation10 + $0x224] sm:$0xf]
        %v5122 = vld [vmem:[#allocation10 + $0x228] sm:$0xf]
        %v5123 = vld [vmem:[#allocation10 + $0x22c] sm:$0xf]
        %v5124 = vld [vmem:[#allocation10 + $0x230] sm:$0xf]
        %v5125 = vld [vmem:[#allocation10 + $0x234] sm:$0xf]
        %v5126 = vld [vmem:[#allocation10 + $0x238] sm:$0xf]
        %v5127 = vld [vmem:[#allocation10 + $0x23c] sm:$0xf]
        %v5128 = vld [vmem:[#allocation10 + $0x240] sm:$0xf]
        %v5129 = vld [vmem:[#allocation10 + $0x244] sm:$0xf]
        %v5130 = vld [vmem:[#allocation10 + $0x248] sm:$0xf]
        %v5131 = vld [vmem:[#allocation10 + $0x24c] sm:$0xf]
        %v5132 = vld [vmem:[#allocation10 + $0x250] sm:$0xf]
        %v5133 = vld [vmem:[#allocation10 + $0x254] sm:$0xf]
        %v5134 = vld [vmem:[#allocation10 + $0x258] sm:$0xf]
        %v5135 = vld [vmem:[#allocation10 + $0x25c] sm:$0xf]
        %v5136 = vld [vmem:[#allocation10 + $0x260] sm:$0xf]
        %v5137 = vld [vmem:[#allocation10 + $0x264] sm:$0xf]
        %v5138 = vld [vmem:[#allocation10 + $0x268] sm:$0xf]
        %v5139 = vld [vmem:[#allocation10 + $0x26c] sm:$0xf]
        %v5140 = vld [vmem:[#allocation10 + $0x270] sm:$0xf]
        %v5141 = vld [vmem:[#allocation10 + $0x274] sm:$0xf]
        %v5142 = vld [vmem:[#allocation10 + $0x278] sm:$0xf]
        %v5143 = vld [vmem:[#allocation10 + $0x27c] sm:$0xf]
        %v5304 = vunpack.c.l.b16 %v4824
        %v5305 = vunpack.c.h.b16 %v4824
        %v5306 = vunpack.c.l.b16 %v4825
        %v5307 = vunpack.c.h.b16 %v4825
        %v5308 = vunpack.c.l.b16 %v4826
        %v5309 = vunpack.c.h.b16 %v4826
        %v5310 = vunpack.c.l.b16 %v4827
        %v5311 = vunpack.c.h.b16 %v4827
        %v5312 = vunpack.c.l.b16 %v4828
        %v5313 = vunpack.c.h.b16 %v4828
        %v5314 = vunpack.c.l.b16 %v4829
        %v5315 = vunpack.c.h.b16 %v4829
        %v5316 = vunpack.c.l.b16 %v4830
        %v5317 = vunpack.c.h.b16 %v4830
        %v5318 = vunpack.c.l.b16 %v4831
        %v5319 = vunpack.c.h.b16 %v4831
        %v5320 = vunpack.c.l.b16 %v4832
        %v5321 = vunpack.c.h.b16 %v4832
        %v5322 = vunpack.c.l.b16 %v4833
        %v5323 = vunpack.c.h.b16 %v4833
        %v5324 = vunpack.c.l.b16 %v4834
        %v5325 = vunpack.c.h.b16 %v4834
        %v5326 = vunpack.c.l.b16 %v4835
        %v5327 = vunpack.c.h.b16 %v4835
        %v5328 = vunpack.c.l.b16 %v4836
        %v5329 = vunpack.c.h.b16 %v4836
        %v5330 = vunpack.c.l.b16 %v4837
        %v5331 = vunpack.c.h.b16 %v4837
        %v5332 = vunpack.c.l.b16 %v4838
        %v5333 = vunpack.c.h.b16 %v4838
        %v5334 = vunpack.c.l.b16 %v4839
        %v5335 = vunpack.c.h.b16 %v4839
        %v5336 = vunpack.c.l.b16 %v4840
        %v5337 = vunpack.c.h.b16 %v4840
        %v5338 = vunpack.c.l.b16 %v4841
        %v5339 = vunpack.c.h.b16 %v4841
        %v5340 = vunpack.c.l.b16 %v4842
        %v5341 = vunpack.c.h.b16 %v4842
        %v5342 = vunpack.c.l.b16 %v4843
        %v5343 = vunpack.c.h.b16 %v4843
        %v5344 = vunpack.c.l.b16 %v4844
        %v5345 = vunpack.c.h.b16 %v4844
        %v5346 = vunpack.c.l.b16 %v4845
        %v5347 = vunpack.c.h.b16 %v4845
        %v5348 = vunpack.c.l.b16 %v4846
        %v5349 = vunpack.c.h.b16 %v4846
        %v5350 = vunpack.c.l.b16 %v4847
        %v5351 = vunpack.c.h.b16 %v4847
        %v5352 = vunpack.c.l.b16 %v4848
        %v5353 = vunpack.c.h.b16 %v4848
        %v5354 = vunpack.c.l.b16 %v4849
        %v5355 = vunpack.c.h.b16 %v4849
        %v5356 = vunpack.c.l.b16 %v4850
        %v5357 = vunpack.c.h.b16 %v4850
        %v5358 = vunpack.c.l.b16 %v4851
        %v5359 = vunpack.c.h.b16 %v4851
        %v5360 = vunpack.c.l.b16 %v4852
        %v5361 = vunpack.c.h.b16 %v4852
        %v5362 = vunpack.c.l.b16 %v4853
        %v5363 = vunpack.c.h.b16 %v4853
        %v5364 = vunpack.c.l.b16 %v4854
        %v5365 = vunpack.c.h.b16 %v4854
        %v5366 = vunpack.c.l.b16 %v4855
        %v5367 = vunpack.c.h.b16 %v4855
        %v5368 = vunpack.c.l.b16 %v4856
        %v5369 = vunpack.c.h.b16 %v4856
        %v5370 = vunpack.c.l.b16 %v4857
        %v5371 = vunpack.c.h.b16 %v4857
        %v5372 = vunpack.c.l.b16 %v4858
        %v5373 = vunpack.c.h.b16 %v4858
        %v5374 = vunpack.c.l.b16 %v4859
        %v5375 = vunpack.c.h.b16 %v4859
        %v5376 = vunpack.c.l.b16 %v4860
        %v5377 = vunpack.c.h.b16 %v4860
        %v5378 = vunpack.c.l.b16 %v4861
        %v5379 = vunpack.c.h.b16 %v4861
        %v5380 = vunpack.c.l.b16 %v4862
        %v5381 = vunpack.c.h.b16 %v4862
        %v5382 = vunpack.c.l.b16 %v4863
        %v5383 = vunpack.c.h.b16 %v4863
        %v5384 = vunpack.c.l.b16 %v4864
        %v5385 = vunpack.c.h.b16 %v4864
        %v5386 = vunpack.c.l.b16 %v4865
        %v5387 = vunpack.c.h.b16 %v4865
        %v5388 = vunpack.c.l.b16 %v4866
        %v5389 = vunpack.c.h.b16 %v4866
        %v5390 = vunpack.c.l.b16 %v4867
        %v5391 = vunpack.c.h.b16 %v4867
        %v5392 = vunpack.c.l.b16 %v4868
        %v5393 = vunpack.c.h.b16 %v4868
        %v5394 = vunpack.c.l.b16 %v4869
        %v5395 = vunpack.c.h.b16 %v4869
        %v5396 = vunpack.c.l.b16 %v4870
        %v5397 = vunpack.c.h.b16 %v4870
        %v5398 = vunpack.c.l.b16 %v4871
        %v5399 = vunpack.c.h.b16 %v4871
        %v5400 = vunpack.c.l.b16 %v4872
        %v5401 = vunpack.c.h.b16 %v4872
        %v5402 = vunpack.c.l.b16 %v4873
        %v5403 = vunpack.c.h.b16 %v4873
        %v5404 = vunpack.c.l.b16 %v4874
        %v5405 = vunpack.c.h.b16 %v4874
        %v5406 = vunpack.c.l.b16 %v4875
        %v5407 = vunpack.c.h.b16 %v4875
        %v5408 = vunpack.c.l.b16 %v4876
        %v5409 = vunpack.c.h.b16 %v4876
        %v5410 = vunpack.c.l.b16 %v4877
        %v5411 = vunpack.c.h.b16 %v4877
        %v5412 = vunpack.c.l.b16 %v4878
        %v5413 = vunpack.c.h.b16 %v4878
        %v5414 = vunpack.c.l.b16 %v4879
        %v5415 = vunpack.c.h.b16 %v4879
        %v5416 = vunpack.c.l.b16 %v4880
        %v5417 = vunpack.c.h.b16 %v4880
        %v5418 = vunpack.c.l.b16 %v4881
        %v5419 = vunpack.c.h.b16 %v4881
        %v5420 = vunpack.c.l.b16 %v4882
        %v5421 = vunpack.c.h.b16 %v4882
        %v5422 = vunpack.c.l.b16 %v4883
        %v5423 = vunpack.c.h.b16 %v4883
        %v5424 = vunpack.c.l.b16 %v4884
        %v5425 = vunpack.c.h.b16 %v4884
        %v5426 = vunpack.c.l.b16 %v4885
        %v5427 = vunpack.c.h.b16 %v4885
        %v5428 = vunpack.c.l.b16 %v4886
        %v5429 = vunpack.c.h.b16 %v4886
        %v5430 = vunpack.c.l.b16 %v4887
        %v5431 = vunpack.c.h.b16 %v4887
        %v5432 = vunpack.c.l.b16 %v4888
        %v5433 = vunpack.c.h.b16 %v4888
        %v5434 = vunpack.c.l.b16 %v4889
        %v5435 = vunpack.c.h.b16 %v4889
        %v5436 = vunpack.c.l.b16 %v4890
        %v5437 = vunpack.c.h.b16 %v4890
        %v5438 = vunpack.c.l.b16 %v4891
        %v5439 = vunpack.c.h.b16 %v4891
        %v5440 = vunpack.c.l.b16 %v4892
        %v5441 = vunpack.c.h.b16 %v4892
        %v5442 = vunpack.c.l.b16 %v4893
        %v5443 = vunpack.c.h.b16 %v4893
        %v5444 = vunpack.c.l.b16 %v4894
        %v5445 = vunpack.c.h.b16 %v4894
        %v5446 = vunpack.c.l.b16 %v4895
        %v5447 = vunpack.c.h.b16 %v4895
        %v5448 = vunpack.c.l.b16 %v4896
        %v5449 = vunpack.c.h.b16 %v4896
        %v5450 = vunpack.c.l.b16 %v4897
        %v5451 = vunpack.c.h.b16 %v4897
        %v5452 = vunpack.c.l.b16 %v4898
        %v5453 = vunpack.c.h.b16 %v4898
        %v5454 = vunpack.c.l.b16 %v4899
        %v5455 = vunpack.c.h.b16 %v4899
        %v5456 = vunpack.c.l.b16 %v4900
        %v5457 = vunpack.c.h.b16 %v4900
        %v5458 = vunpack.c.l.b16 %v4901
        %v5459 = vunpack.c.h.b16 %v4901
        %v5460 = vunpack.c.l.b16 %v4902
        %v5461 = vunpack.c.h.b16 %v4902
        %v5462 = vunpack.c.l.b16 %v4903
        %v5463 = vunpack.c.h.b16 %v4903
        %v5464 = vunpack.c.l.b16 %v4904
        %v5465 = vunpack.c.h.b16 %v4904
        %v5466 = vunpack.c.l.b16 %v4905
        %v5467 = vunpack.c.h.b16 %v4905
        %v5468 = vunpack.c.l.b16 %v4906
        %v5469 = vunpack.c.h.b16 %v4906
        %v5470 = vunpack.c.l.b16 %v4907
        %v5471 = vunpack.c.h.b16 %v4907
        %v5472 = vunpack.c.l.b16 %v4908
        %v5473 = vunpack.c.h.b16 %v4908
        %v5474 = vunpack.c.l.b16 %v4909
        %v5475 = vunpack.c.h.b16 %v4909
        %v5476 = vunpack.c.l.b16 %v4910
        %v5477 = vunpack.c.h.b16 %v4910
        %v5478 = vunpack.c.l.b16 %v4911
        %v5479 = vunpack.c.h.b16 %v4911
        %v5480 = vunpack.c.l.b16 %v4912
        %v5481 = vunpack.c.h.b16 %v4912
        %v5482 = vunpack.c.l.b16 %v4913
        %v5483 = vunpack.c.h.b16 %v4913
        %v5484 = vunpack.c.l.b16 %v4914
        %v5485 = vunpack.c.h.b16 %v4914
        %v5486 = vunpack.c.l.b16 %v4915
        %v5487 = vunpack.c.h.b16 %v4915
        %v5488 = vunpack.c.l.b16 %v4916
        %v5489 = vunpack.c.h.b16 %v4916
        %v5490 = vunpack.c.l.b16 %v4917
        %v5491 = vunpack.c.h.b16 %v4917
        %v5492 = vunpack.c.l.b16 %v4918
        %v5493 = vunpack.c.h.b16 %v4918
        %v5494 = vunpack.c.l.b16 %v4919
        %v5495 = vunpack.c.h.b16 %v4919
        %v5496 = vunpack.c.l.b16 %v4920
        %v5497 = vunpack.c.h.b16 %v4920
        %v5498 = vunpack.c.l.b16 %v4921
        %v5499 = vunpack.c.h.b16 %v4921
        %v5500 = vunpack.c.l.b16 %v4922
        %v5501 = vunpack.c.h.b16 %v4922
        %v5502 = vunpack.c.l.b16 %v4923
        %v5503 = vunpack.c.h.b16 %v4923
        %v5504 = vunpack.c.l.b16 %v4924
        %v5505 = vunpack.c.h.b16 %v4924
        %v5506 = vunpack.c.l.b16 %v4925
        %v5507 = vunpack.c.h.b16 %v4925
        %v5508 = vunpack.c.l.b16 %v4926
        %v5509 = vunpack.c.h.b16 %v4926
        %v5510 = vunpack.c.l.b16 %v4927
        %v5511 = vunpack.c.h.b16 %v4927
        %v5512 = vunpack.c.l.b16 %v4928
        %v5513 = vunpack.c.h.b16 %v4928
        %v5514 = vunpack.c.l.b16 %v4929
        %v5515 = vunpack.c.h.b16 %v4929
        %v5516 = vunpack.c.l.b16 %v4930
        %v5517 = vunpack.c.h.b16 %v4930
        %v5518 = vunpack.c.l.b16 %v4931
        %v5519 = vunpack.c.h.b16 %v4931
        %v5520 = vunpack.c.l.b16 %v4932
        %v5521 = vunpack.c.h.b16 %v4932
        %v5522 = vunpack.c.l.b16 %v4933
        %v5523 = vunpack.c.h.b16 %v4933
        %v5524 = vunpack.c.l.b16 %v4934
        %v5525 = vunpack.c.h.b16 %v4934
        %v5526 = vunpack.c.l.b16 %v4935
        %v5527 = vunpack.c.h.b16 %v4935
        %v5528 = vunpack.c.l.b16 %v4936
        %v5529 = vunpack.c.h.b16 %v4936
        %v5530 = vunpack.c.l.b16 %v4937
        %v5531 = vunpack.c.h.b16 %v4937
        %v5532 = vunpack.c.l.b16 %v4938
        %v5533 = vunpack.c.h.b16 %v4938
        %v5534 = vunpack.c.l.b16 %v4939
        %v5535 = vunpack.c.h.b16 %v4939
        %v5536 = vunpack.c.l.b16 %v4940
        %v5537 = vunpack.c.h.b16 %v4940
        %v5538 = vunpack.c.l.b16 %v4941
        %v5539 = vunpack.c.h.b16 %v4941
        %v5540 = vunpack.c.l.b16 %v4942
        %v5541 = vunpack.c.h.b16 %v4942
        %v5542 = vunpack.c.l.b16 %v4943
        %v5543 = vunpack.c.h.b16 %v4943
        %v5544 = vunpack.c.l.b16 %v4944
        %v5545 = vunpack.c.h.b16 %v4944
        %v5546 = vunpack.c.l.b16 %v4945
        %v5547 = vunpack.c.h.b16 %v4945
        %v5548 = vunpack.c.l.b16 %v4946
        %v5549 = vunpack.c.h.b16 %v4946
        %v5550 = vunpack.c.l.b16 %v4947
        %v5551 = vunpack.c.h.b16 %v4947
        %v5552 = vunpack.c.l.b16 %v4948
        %v5553 = vunpack.c.h.b16 %v4948
        %v5554 = vunpack.c.l.b16 %v4949
        %v5555 = vunpack.c.h.b16 %v4949
        %v5556 = vunpack.c.l.b16 %v4950
        %v5557 = vunpack.c.h.b16 %v4950
        %v5558 = vunpack.c.l.b16 %v4951
        %v5559 = vunpack.c.h.b16 %v4951
        %v5560 = vunpack.c.l.b16 %v4952
        %v5561 = vunpack.c.h.b16 %v4952
        %v5562 = vunpack.c.l.b16 %v4953
        %v5563 = vunpack.c.h.b16 %v4953
        %v5564 = vunpack.c.l.b16 %v4954
        %v5565 = vunpack.c.h.b16 %v4954
        %v5566 = vunpack.c.l.b16 %v4955
        %v5567 = vunpack.c.h.b16 %v4955
        %v5568 = vunpack.c.l.b16 %v4956
        %v5569 = vunpack.c.h.b16 %v4956
        %v5570 = vunpack.c.l.b16 %v4957
        %v5571 = vunpack.c.h.b16 %v4957
        %v5572 = vunpack.c.l.b16 %v4958
        %v5573 = vunpack.c.h.b16 %v4958
        %v5574 = vunpack.c.l.b16 %v4959
        %v5575 = vunpack.c.h.b16 %v4959
        %v5576 = vunpack.c.l.b16 %v4960
        %v5577 = vunpack.c.h.b16 %v4960
        %v5578 = vunpack.c.l.b16 %v4961
        %v5579 = vunpack.c.h.b16 %v4961
        %v5580 = vunpack.c.l.b16 %v4962
        %v5581 = vunpack.c.h.b16 %v4962
        %v5582 = vunpack.c.l.b16 %v4963
        %v5583 = vunpack.c.h.b16 %v4963
        %v5584 = vunpack.c.l.b16 %v4964
        %v5585 = vunpack.c.h.b16 %v4964
        %v5586 = vunpack.c.l.b16 %v4965
        %v5587 = vunpack.c.h.b16 %v4965
        %v5588 = vunpack.c.l.b16 %v4966
        %v5589 = vunpack.c.h.b16 %v4966
        %v5590 = vunpack.c.l.b16 %v4967
        %v5591 = vunpack.c.h.b16 %v4967
        %v5592 = vunpack.c.l.b16 %v4968
        %v5593 = vunpack.c.h.b16 %v4968
        %v5594 = vunpack.c.l.b16 %v4969
        %v5595 = vunpack.c.h.b16 %v4969
        %v5596 = vunpack.c.l.b16 %v4970
        %v5597 = vunpack.c.h.b16 %v4970
        %v5598 = vunpack.c.l.b16 %v4971
        %v5599 = vunpack.c.h.b16 %v4971
        %v5600 = vunpack.c.l.b16 %v4972
        %v5601 = vunpack.c.h.b16 %v4972
        %v5602 = vunpack.c.l.b16 %v4973
        %v5603 = vunpack.c.h.b16 %v4973
        %v5604 = vunpack.c.l.b16 %v4974
        %v5605 = vunpack.c.h.b16 %v4974
        %v5606 = vunpack.c.l.b16 %v4975
        %v5607 = vunpack.c.h.b16 %v4975
        %v5608 = vunpack.c.l.b16 %v4976
        %v5609 = vunpack.c.h.b16 %v4976
        %v5610 = vunpack.c.l.b16 %v4977
        %v5611 = vunpack.c.h.b16 %v4977
        %v5612 = vunpack.c.l.b16 %v4978
        %v5613 = vunpack.c.h.b16 %v4978
        %v5614 = vunpack.c.l.b16 %v4979
        %v5615 = vunpack.c.h.b16 %v4979
        %v5616 = vunpack.c.l.b16 %v4980
        %v5617 = vunpack.c.h.b16 %v4980
        %v5618 = vunpack.c.l.b16 %v4981
        %v5619 = vunpack.c.h.b16 %v4981
        %v5620 = vunpack.c.l.b16 %v4982
        %v5621 = vunpack.c.h.b16 %v4982
        %v5622 = vunpack.c.l.b16 %v4983
        %v5623 = vunpack.c.h.b16 %v4983
        %v5624 = vpack.c.b16 %v5314, %v5304
        %v5625 = vpack.c.b16 %v5315, %v5305
        %v5626 = vpack.c.b16 %v5316, %v5306
        %v5627 = vpack.c.b16 %v5317, %v5307
        %v5628 = vpack.c.b16 %v5318, %v5308
        %v5629 = vpack.c.b16 %v5319, %v5309
        %v5630 = vpack.c.b16 %v5320, %v5310
        %v5631 = vpack.c.b16 %v5321, %v5311
        %v5632 = vpack.c.b16 %v5322, %v5312
        %v5633 = vpack.c.b16 %v5323, %v5313
        %v5634 = vpack.c.b16 %v5334, %v5324
        %v5635 = vpack.c.b16 %v5335, %v5325
        %v5636 = vpack.c.b16 %v5336, %v5326
        %v5637 = vpack.c.b16 %v5337, %v5327
        %v5638 = vpack.c.b16 %v5338, %v5328
        %v5639 = vpack.c.b16 %v5339, %v5329
        %v5640 = vpack.c.b16 %v5340, %v5330
        %v5641 = vpack.c.b16 %v5341, %v5331
        %v5642 = vpack.c.b16 %v5342, %v5332
        %v5643 = vpack.c.b16 %v5343, %v5333
        %v5644 = vpack.c.b16 %v5354, %v5344
        %v5645 = vpack.c.b16 %v5355, %v5345
        %v5646 = vpack.c.b16 %v5356, %v5346
        %v5647 = vpack.c.b16 %v5357, %v5347
        %v5648 = vpack.c.b16 %v5358, %v5348
        %v5649 = vpack.c.b16 %v5359, %v5349
        %v5650 = vpack.c.b16 %v5360, %v5350
        %v5651 = vpack.c.b16 %v5361, %v5351
        %v5652 = vpack.c.b16 %v5362, %v5352
        %v5653 = vpack.c.b16 %v5363, %v5353
        %v5654 = vpack.c.b16 %v5374, %v5364
        %v5655 = vpack.c.b16 %v5375, %v5365
        %v5656 = vpack.c.b16 %v5376, %v5366
        %v5657 = vpack.c.b16 %v5377, %v5367
        %v5658 = vpack.c.b16 %v5378, %v5368
        %v5659 = vpack.c.b16 %v5379, %v5369
        %v5660 = vpack.c.b16 %v5380, %v5370
        %v5661 = vpack.c.b16 %v5381, %v5371
        %v5662 = vpack.c.b16 %v5382, %v5372
        %v5663 = vpack.c.b16 %v5383, %v5373
        %v5664 = vpack.c.b16 %v5394, %v5384
        %v5665 = vpack.c.b16 %v5395, %v5385
        %v5666 = vpack.c.b16 %v5396, %v5386
        %v5667 = vpack.c.b16 %v5397, %v5387
        %v5668 = vpack.c.b16 %v5398, %v5388
        %v5669 = vpack.c.b16 %v5399, %v5389
        %v5670 = vpack.c.b16 %v5400, %v5390
        %v5671 = vpack.c.b16 %v5401, %v5391
        %v5672 = vpack.c.b16 %v5402, %v5392
        %v5673 = vpack.c.b16 %v5403, %v5393
        %v5674 = vpack.c.b16 %v5414, %v5404
        %v5675 = vpack.c.b16 %v5415, %v5405
        %v5676 = vpack.c.b16 %v5416, %v5406
        %v5677 = vpack.c.b16 %v5417, %v5407
        %v5678 = vpack.c.b16 %v5418, %v5408
        %v5679 = vpack.c.b16 %v5419, %v5409
        %v5680 = vpack.c.b16 %v5420, %v5410
        %v5681 = vpack.c.b16 %v5421, %v5411
        %v5682 = vpack.c.b16 %v5422, %v5412
        %v5683 = vpack.c.b16 %v5423, %v5413
        %v5684 = vpack.c.b16 %v5434, %v5424
        %v5685 = vpack.c.b16 %v5435, %v5425
        %v5686 = vpack.c.b16 %v5436, %v5426
        %v5687 = vpack.c.b16 %v5437, %v5427
        %v5688 = vpack.c.b16 %v5438, %v5428
        %v5689 = vpack.c.b16 %v5439, %v5429
        %v5690 = vpack.c.b16 %v5440, %v5430
        %v5691 = vpack.c.b16 %v5441, %v5431
        %v5692 = vpack.c.b16 %v5442, %v5432
        %v5693 = vpack.c.b16 %v5443, %v5433
        %v5694 = vpack.c.b16 %v5454, %v5444
        %v5695 = vpack.c.b16 %v5455, %v5445
        %v5696 = vpack.c.b16 %v5456, %v5446
        %v5697 = vpack.c.b16 %v5457, %v5447
        %v5698 = vpack.c.b16 %v5458, %v5448
        %v5699 = vpack.c.b16 %v5459, %v5449
        %v5700 = vpack.c.b16 %v5460, %v5450
        %v5701 = vpack.c.b16 %v5461, %v5451
        %v5702 = vpack.c.b16 %v5462, %v5452
        %v5703 = vpack.c.b16 %v5463, %v5453
        %v5704 = vpack.c.b16 %v5474, %v5464
        %v5705 = vpack.c.b16 %v5475, %v5465
        %v5706 = vpack.c.b16 %v5476, %v5466
        %v5707 = vpack.c.b16 %v5477, %v5467
        %v5708 = vpack.c.b16 %v5478, %v5468
        %v5709 = vpack.c.b16 %v5479, %v5469
        %v5710 = vpack.c.b16 %v5480, %v5470
        %v5711 = vpack.c.b16 %v5481, %v5471
        %v5712 = vpack.c.b16 %v5482, %v5472
        %v5713 = vpack.c.b16 %v5483, %v5473
        %v5714 = vpack.c.b16 %v5494, %v5484
        %v5715 = vpack.c.b16 %v5495, %v5485
        %v5716 = vpack.c.b16 %v5496, %v5486
        %v5717 = vpack.c.b16 %v5497, %v5487
        %v5718 = vpack.c.b16 %v5498, %v5488
        %v5719 = vpack.c.b16 %v5499, %v5489
        %v5720 = vpack.c.b16 %v5500, %v5490
        %v5721 = vpack.c.b16 %v5501, %v5491
        %v5722 = vpack.c.b16 %v5502, %v5492
        %v5723 = vpack.c.b16 %v5503, %v5493
        %v5724 = vpack.c.b16 %v5514, %v5504
        %v5725 = vpack.c.b16 %v5515, %v5505
        %v5726 = vpack.c.b16 %v5516, %v5506
        %v5727 = vpack.c.b16 %v5517, %v5507
        %v5728 = vpack.c.b16 %v5518, %v5508
        %v5729 = vpack.c.b16 %v5519, %v5509
        %v5730 = vpack.c.b16 %v5520, %v5510
        %v5731 = vpack.c.b16 %v5521, %v5511
        %v5732 = vpack.c.b16 %v5522, %v5512
        %v5733 = vpack.c.b16 %v5523, %v5513
        %v5734 = vpack.c.b16 %v5534, %v5524
        %v5735 = vpack.c.b16 %v5535, %v5525
        %v5736 = vpack.c.b16 %v5536, %v5526
        %v5737 = vpack.c.b16 %v5537, %v5527
        %v5738 = vpack.c.b16 %v5538, %v5528
        %v5739 = vpack.c.b16 %v5539, %v5529
        %v5740 = vpack.c.b16 %v5540, %v5530
        %v5741 = vpack.c.b16 %v5541, %v5531
        %v5742 = vpack.c.b16 %v5542, %v5532
        %v5743 = vpack.c.b16 %v5543, %v5533
        %v5744 = vpack.c.b16 %v5554, %v5544
        %v5745 = vpack.c.b16 %v5555, %v5545
        %v5746 = vpack.c.b16 %v5556, %v5546
        %v5747 = vpack.c.b16 %v5557, %v5547
        %v5748 = vpack.c.b16 %v5558, %v5548
        %v5749 = vpack.c.b16 %v5559, %v5549
        %v5750 = vpack.c.b16 %v5560, %v5550
        %v5751 = vpack.c.b16 %v5561, %v5551
        %v5752 = vpack.c.b16 %v5562, %v5552
        %v5753 = vpack.c.b16 %v5563, %v5553
        %v5754 = vpack.c.b16 %v5574, %v5564
        %v5755 = vpack.c.b16 %v5575, %v5565
        %v5756 = vpack.c.b16 %v5576, %v5566
        %v5757 = vpack.c.b16 %v5577, %v5567
        %v5758 = vpack.c.b16 %v5578, %v5568
        %v5759 = vpack.c.b16 %v5579, %v5569
        %v5760 = vpack.c.b16 %v5580, %v5570
        %v5761 = vpack.c.b16 %v5581, %v5571
        %v5762 = vpack.c.b16 %v5582, %v5572
        %v5763 = vpack.c.b16 %v5583, %v5573
        %v5764 = vpack.c.b16 %v5594, %v5584
        %v5765 = vpack.c.b16 %v5595, %v5585
        %v5766 = vpack.c.b16 %v5596, %v5586
        %v5767 = vpack.c.b16 %v5597, %v5587
        %v5768 = vpack.c.b16 %v5598, %v5588
        %v5769 = vpack.c.b16 %v5599, %v5589
        %v5770 = vpack.c.b16 %v5600, %v5590
        %v5771 = vpack.c.b16 %v5601, %v5591
        %v5772 = vpack.c.b16 %v5602, %v5592
        %v5773 = vpack.c.b16 %v5603, %v5593
        %v5774 = vpack.c.b16 %v5614, %v5604
        %v5775 = vpack.c.b16 %v5615, %v5605
        %v5776 = vpack.c.b16 %v5616, %v5606
        %v5777 = vpack.c.b16 %v5617, %v5607
        %v5778 = vpack.c.b16 %v5618, %v5608
        %v5779 = vpack.c.b16 %v5619, %v5609
        %v5780 = vpack.c.b16 %v5620, %v5610
        %v5781 = vpack.c.b16 %v5621, %v5611
        %v5782 = vpack.c.b16 %v5622, %v5612
        %v5783 = vpack.c.b16 %v5623, %v5613
        %v6104 = vunpack.c.l.b16 %v4984
        %v6105 = vunpack.c.l.b16 %v4985
        %v6106 = vunpack.c.l.b16 %v4986
        %v6107 = vunpack.c.l.b16 %v4987
        %v6108 = vunpack.c.l.b16 %v4988
        %v6109 = vunpack.c.l.b16 %v4989
        %v6110 = vunpack.c.l.b16 %v4990
        %v6111 = vunpack.c.l.b16 %v4991
        %v6112 = vunpack.c.l.b16 %v4992
        %v6113 = vunpack.c.l.b16 %v4993
        %v6114 = vunpack.c.l.b16 %v4994
        %v6115 = vunpack.c.l.b16 %v4995
        %v6116 = vunpack.c.l.b16 %v4996
        %v6117 = vunpack.c.l.b16 %v4997
        %v6118 = vunpack.c.l.b16 %v4998
        %v6119 = vunpack.c.l.b16 %v4999
        %v6120 = vunpack.c.l.b16 %v5000
        %v6121 = vunpack.c.l.b16 %v5001
        %v6122 = vunpack.c.l.b16 %v5002
        %v6123 = vunpack.c.l.b16 %v5003
        %v6124 = vunpack.c.l.b16 %v5004
        %v6125 = vunpack.c.l.b16 %v5005
        %v6126 = vunpack.c.l.b16 %v5006
        %v6127 = vunpack.c.l.b16 %v5007
        %v6128 = vunpack.c.l.b16 %v5008
        %v6129 = vunpack.c.l.b16 %v5009
        %v6130 = vunpack.c.l.b16 %v5010
        %v6131 = vunpack.c.l.b16 %v5011
        %v6132 = vunpack.c.l.b16 %v5012
        %v6133 = vunpack.c.l.b16 %v5013
        %v6134 = vunpack.c.l.b16 %v5014
        %v6135 = vunpack.c.l.b16 %v5015
        %v6136 = vunpack.c.l.b16 %v5016
        %v6137 = vunpack.c.l.b16 %v5017
        %v6138 = vunpack.c.l.b16 %v5018
        %v6139 = vunpack.c.l.b16 %v5019
        %v6140 = vunpack.c.l.b16 %v5020
        %v6141 = vunpack.c.l.b16 %v5021
        %v6142 = vunpack.c.l.b16 %v5022
        %v6143 = vunpack.c.l.b16 %v5023
        %v6144 = vunpack.c.l.b16 %v5024
        %v6145 = vunpack.c.l.b16 %v5025
        %v6146 = vunpack.c.l.b16 %v5026
        %v6147 = vunpack.c.l.b16 %v5027
        %v6148 = vunpack.c.l.b16 %v5028
        %v6149 = vunpack.c.l.b16 %v5029
        %v6150 = vunpack.c.l.b16 %v5030
        %v6151 = vunpack.c.l.b16 %v5031
        %v6152 = vunpack.c.l.b16 %v5032
        %v6153 = vunpack.c.l.b16 %v5033
        %v6154 = vunpack.c.l.b16 %v5034
        %v6155 = vunpack.c.l.b16 %v5035
        %v6156 = vunpack.c.l.b16 %v5036
        %v6157 = vunpack.c.l.b16 %v5037
        %v6158 = vunpack.c.l.b16 %v5038
        %v6159 = vunpack.c.l.b16 %v5039
        %v6160 = vunpack.c.l.b16 %v5040
        %v6161 = vunpack.c.l.b16 %v5041
        %v6162 = vunpack.c.l.b16 %v5042
        %v6163 = vunpack.c.l.b16 %v5043
        %v6164 = vunpack.c.l.b16 %v5044
        %v6165 = vunpack.c.l.b16 %v5045
        %v6166 = vunpack.c.l.b16 %v5046
        %v6167 = vunpack.c.l.b16 %v5047
        %v6168 = vunpack.c.l.b16 %v5048
        %v6169 = vunpack.c.l.b16 %v5049
        %v6170 = vunpack.c.l.b16 %v5050
        %v6171 = vunpack.c.l.b16 %v5051
        %v6172 = vunpack.c.l.b16 %v5052
        %v6173 = vunpack.c.l.b16 %v5053
        %v6174 = vunpack.c.l.b16 %v5054
        %v6175 = vunpack.c.l.b16 %v5055
        %v6176 = vunpack.c.l.b16 %v5056
        %v6177 = vunpack.c.l.b16 %v5057
        %v6178 = vunpack.c.l.b16 %v5058
        %v6179 = vunpack.c.l.b16 %v5059
        %v6180 = vunpack.c.l.b16 %v5060
        %v6181 = vunpack.c.l.b16 %v5061
        %v6182 = vunpack.c.l.b16 %v5062
        %v6183 = vunpack.c.l.b16 %v5063
        %v6184 = vunpack.c.l.b16 %v5064
        %v6185 = vunpack.c.l.b16 %v5065
        %v6186 = vunpack.c.l.b16 %v5066
        %v6187 = vunpack.c.l.b16 %v5067
        %v6188 = vunpack.c.l.b16 %v5068
        %v6189 = vunpack.c.l.b16 %v5069
        %v6190 = vunpack.c.l.b16 %v5070
        %v6191 = vunpack.c.l.b16 %v5071
        %v6192 = vunpack.c.l.b16 %v5072
        %v6193 = vunpack.c.l.b16 %v5073
        %v6194 = vunpack.c.l.b16 %v5074
        %v6195 = vunpack.c.l.b16 %v5075
        %v6196 = vunpack.c.l.b16 %v5076
        %v6197 = vunpack.c.l.b16 %v5077
        %v6198 = vunpack.c.l.b16 %v5078
        %v6199 = vunpack.c.l.b16 %v5079
        %v6200 = vunpack.c.l.b16 %v5080
        %v6201 = vunpack.c.l.b16 %v5081
        %v6202 = vunpack.c.l.b16 %v5082
        %v6203 = vunpack.c.l.b16 %v5083
        %v6204 = vunpack.c.l.b16 %v5084
        %v6205 = vunpack.c.l.b16 %v5085
        %v6206 = vunpack.c.l.b16 %v5086
        %v6207 = vunpack.c.l.b16 %v5087
        %v6208 = vunpack.c.l.b16 %v5088
        %v6209 = vunpack.c.l.b16 %v5089
        %v6210 = vunpack.c.l.b16 %v5090
        %v6211 = vunpack.c.l.b16 %v5091
        %v6212 = vunpack.c.l.b16 %v5092
        %v6213 = vunpack.c.l.b16 %v5093
        %v6214 = vunpack.c.l.b16 %v5094
        %v6215 = vunpack.c.l.b16 %v5095
        %v6216 = vunpack.c.l.b16 %v5096
        %v6217 = vunpack.c.l.b16 %v5097
        %v6218 = vunpack.c.l.b16 %v5098
        %v6219 = vunpack.c.l.b16 %v5099
        %v6220 = vunpack.c.l.b16 %v5100
        %v6221 = vunpack.c.l.b16 %v5101
        %v6222 = vunpack.c.l.b16 %v5102
        %v6223 = vunpack.c.l.b16 %v5103
        %v6224 = vunpack.c.l.b16 %v5104
        %v6225 = vunpack.c.l.b16 %v5105
        %v6226 = vunpack.c.l.b16 %v5106
        %v6227 = vunpack.c.l.b16 %v5107
        %v6228 = vunpack.c.l.b16 %v5108
        %v6229 = vunpack.c.l.b16 %v5109
        %v6230 = vunpack.c.l.b16 %v5110
        %v6231 = vunpack.c.l.b16 %v5111
        %v6232 = vunpack.c.l.b16 %v5112
        %v6233 = vunpack.c.l.b16 %v5113
        %v6234 = vunpack.c.l.b16 %v5114
        %v6235 = vunpack.c.l.b16 %v5115
        %v6236 = vunpack.c.l.b16 %v5116
        %v6237 = vunpack.c.l.b16 %v5117
        %v6238 = vunpack.c.l.b16 %v5118
        %v6239 = vunpack.c.l.b16 %v5119
        %v6240 = vunpack.c.l.b16 %v5120
        %v6241 = vunpack.c.l.b16 %v5121
        %v6242 = vunpack.c.l.b16 %v5122
        %v6243 = vunpack.c.l.b16 %v5123
        %v6244 = vunpack.c.l.b16 %v5124
        %v6245 = vunpack.c.l.b16 %v5125
        %v6246 = vunpack.c.l.b16 %v5126
        %v6247 = vunpack.c.l.b16 %v5127
        %v6248 = vunpack.c.l.b16 %v5128
        %v6249 = vunpack.c.l.b16 %v5129
        %v6250 = vunpack.c.l.b16 %v5130
        %v6251 = vunpack.c.l.b16 %v5131
        %v6252 = vunpack.c.l.b16 %v5132
        %v6253 = vunpack.c.l.b16 %v5133
        %v6254 = vunpack.c.l.b16 %v5134
        %v6255 = vunpack.c.l.b16 %v5135
        %v6256 = vunpack.c.l.b16 %v5136
        %v6257 = vunpack.c.l.b16 %v5137
        %v6258 = vunpack.c.l.b16 %v5138
        %v6259 = vunpack.c.l.b16 %v5139
        %v6260 = vunpack.c.l.b16 %v5140
        %v6261 = vunpack.c.l.b16 %v5141
        %v6262 = vunpack.c.l.b16 %v5142
        %v6263 = vunpack.c.l.b16 %v5143
        %v6264 = vpack.c.b16 %v6105, %v6104
        %v6265 = vpack.c.b16 %v6107, %v6106
        %v6266 = vpack.c.b16 %v6109, %v6108
        %v6267 = vpack.c.b16 %v6111, %v6110
        %v6268 = vpack.c.b16 %v6113, %v6112
        %v6269 = vpack.c.b16 %v6115, %v6114
        %v6270 = vpack.c.b16 %v6117, %v6116
        %v6271 = vpack.c.b16 %v6119, %v6118
        %v6272 = vpack.c.b16 %v6121, %v6120
        %v6273 = vpack.c.b16 %v6123, %v6122
        %v6274 = vpack.c.b16 %v6125, %v6124
        %v6275 = vpack.c.b16 %v6127, %v6126
        %v6276 = vpack.c.b16 %v6129, %v6128
        %v6277 = vpack.c.b16 %v6131, %v6130
        %v6278 = vpack.c.b16 %v6133, %v6132
        %v6279 = vpack.c.b16 %v6135, %v6134
        %v6280 = vpack.c.b16 %v6137, %v6136
        %v6281 = vpack.c.b16 %v6139, %v6138
        %v6282 = vpack.c.b16 %v6141, %v6140
        %v6283 = vpack.c.b16 %v6143, %v6142
        %v6284 = vpack.c.b16 %v6145, %v6144
        %v6285 = vpack.c.b16 %v6147, %v6146
        %v6286 = vpack.c.b16 %v6149, %v6148
        %v6287 = vpack.c.b16 %v6151, %v6150
        %v6288 = vpack.c.b16 %v6153, %v6152
        %v6289 = vpack.c.b16 %v6155, %v6154
        %v6290 = vpack.c.b16 %v6157, %v6156
        %v6291 = vpack.c.b16 %v6159, %v6158
        %v6292 = vpack.c.b16 %v6161, %v6160
        %v6293 = vpack.c.b16 %v6163, %v6162
        %v6294 = vpack.c.b16 %v6165, %v6164
        %v6295 = vpack.c.b16 %v6167, %v6166
        %v6296 = vpack.c.b16 %v6169, %v6168
        %v6297 = vpack.c.b16 %v6171, %v6170
        %v6298 = vpack.c.b16 %v6173, %v6172
        %v6299 = vpack.c.b16 %v6175, %v6174
        %v6300 = vpack.c.b16 %v6177, %v6176
        %v6301 = vpack.c.b16 %v6179, %v6178
        %v6302 = vpack.c.b16 %v6181, %v6180
        %v6303 = vpack.c.b16 %v6183, %v6182
        %v6304 = vpack.c.b16 %v6185, %v6184
        %v6305 = vpack.c.b16 %v6187, %v6186
        %v6306 = vpack.c.b16 %v6189, %v6188
        %v6307 = vpack.c.b16 %v6191, %v6190
        %v6308 = vpack.c.b16 %v6193, %v6192
        %v6309 = vpack.c.b16 %v6195, %v6194
        %v6310 = vpack.c.b16 %v6197, %v6196
        %v6311 = vpack.c.b16 %v6199, %v6198
        %v6312 = vpack.c.b16 %v6201, %v6200
        %v6313 = vpack.c.b16 %v6203, %v6202
        %v6314 = vpack.c.b16 %v6205, %v6204
        %v6315 = vpack.c.b16 %v6207, %v6206
        %v6316 = vpack.c.b16 %v6209, %v6208
        %v6317 = vpack.c.b16 %v6211, %v6210
        %v6318 = vpack.c.b16 %v6213, %v6212
        %v6319 = vpack.c.b16 %v6215, %v6214
        %v6320 = vpack.c.b16 %v6217, %v6216
        %v6321 = vpack.c.b16 %v6219, %v6218
        %v6322 = vpack.c.b16 %v6221, %v6220
        %v6323 = vpack.c.b16 %v6223, %v6222
        %v6324 = vpack.c.b16 %v6225, %v6224
        %v6325 = vpack.c.b16 %v6227, %v6226
        %v6326 = vpack.c.b16 %v6229, %v6228
        %v6327 = vpack.c.b16 %v6231, %v6230
        %v6328 = vpack.c.b16 %v6233, %v6232
        %v6329 = vpack.c.b16 %v6235, %v6234
        %v6330 = vpack.c.b16 %v6237, %v6236
        %v6331 = vpack.c.b16 %v6239, %v6238
        %v6332 = vpack.c.b16 %v6241, %v6240
        %v6333 = vpack.c.b16 %v6243, %v6242
        %v6334 = vpack.c.b16 %v6245, %v6244
        %v6335 = vpack.c.b16 %v6247, %v6246
        %v6336 = vpack.c.b16 %v6249, %v6248
        %v6337 = vpack.c.b16 %v6251, %v6250
        %v6338 = vpack.c.b16 %v6253, %v6252
        %v6339 = vpack.c.b16 %v6255, %v6254
        %v6340 = vpack.c.b16 %v6257, %v6256
        %v6341 = vpack.c.b16 %v6259, %v6258
        %v6342 = vpack.c.b16 %v6261, %v6260
        %v6343 = vpack.c.b16 %v6263, %v6262
        %6424 = vmatprep.subr.bf16.mxu0 0
        %6425 = vmatpush1.bf16.msra.mxu0 %v6271
        %6426 = vmatprep.subr.bf16.mxu0 0
        %6427 = vmatpush1.bf16.msra.mxu0 %v6270
        %6428 = vmatprep.subr.bf16.mxu0 0
        %6429 = vmatpush1.bf16.msra.mxu0 %v6269
        %6430 = vmatprep.subr.bf16.mxu0 0
        %6431 = vmatpush1.bf16.msra.mxu0 %v6268
        %6432 = vmatprep.subr.bf16.mxu0 0
        %6433 = vmatpush1.bf16.msra.mxu0 %v6267
        %6434 = vmatprep.subr.bf16.mxu0 0
        %6435 = vmatpush1.bf16.msra.mxu0 %v6266
        %6436 = vmatprep.subr.bf16.mxu0 0
        %6437 = vmatpush1.bf16.msra.mxu0 %v6265
        %6438 = vmatprep.subr.bf16.mxu0 0
        %6439 = vmatpush1.bf16.msra.mxu0 %v6264
        %6440 = vmatprep.subr.bf16.mxu0 0
        %6441 = vmatpush2.bf16.msra.mxu0 %v6279
        %6442 = vmatprep.subr.bf16.mxu0 0
        %6443 = vmatpush2.bf16.msra.mxu0 %v6278
        %6444 = vmatprep.subr.bf16.mxu0 0
        %6445 = vmatpush2.bf16.msra.mxu0 %v6277
        %6446 = vmatprep.subr.bf16.mxu0 0
        %6447 = vmatpush2.bf16.msra.mxu0 %v6276
        %6448 = vmatprep.subr.bf16.mxu0 0
        %6449 = vmatpush2.bf16.msra.mxu0 %v6275
        %6450 = vmatprep.subr.bf16.mxu0 0
        %6451 = vmatpush2.bf16.msra.mxu0 %v6274
        %6452 = vmatprep.subr.bf16.mxu0 0
        %6453 = vmatpush2.bf16.msra.mxu0 %v6273
        %6454 = vmatprep.subr.bf16.mxu0 0
        %6455 = vmatpush2.bf16.msra.mxu0 %v6272
        %6456 = vmatprep.mubr.bf16.mxu0 %v5625
        %6457 = vmatmul.mubr.bf16.gmra.mxu0 %v5624
        %v6458 = vpop.f32.mrf.mxu0
        %v6459 = vadd.f32 0.0, %v6458
        %v6460 = vpop.f32.mrf.mxu0
        %v6461 = vpop.f32.mrf.mxu0
        %v6462 = vadd.f32 0.0, %v6461
        %v6463 = vpop.f32.mrf.mxu0
        %6464 = vmatprep.mubr.bf16.mxu0 %v5635
        %6465 = vmatmul.mubr.bf16.gmra.mxu0 %v5634
        %v6466 = vpop.f32.mrf.mxu0
        %v6467 = vadd.f32 0.0, %v6466
        %v6468 = vpop.f32.mrf.mxu0
        %v6469 = vpop.f32.mrf.mxu0
        %v6470 = vadd.f32 0.0, %v6469
        %v6471 = vpop.f32.mrf.mxu0
        %6472 = vmatprep.mubr.bf16.mxu0 %v5645
        %6473 = vmatmul.mubr.bf16.gmra.mxu0 %v5644
        %v6474 = vpop.f32.mrf.mxu0
        %v6475 = vadd.f32 0.0, %v6474
        %v6476 = vpop.f32.mrf.mxu0
        %v6477 = vpop.f32.mrf.mxu0
        %v6478 = vadd.f32 0.0, %v6477
        %v6479 = vpop.f32.mrf.mxu0
        %6480 = vmatprep.mubr.bf16.mxu0 %v5655
        %6481 = vmatmul.mubr.bf16.gmra.mxu0 %v5654
        %v6482 = vpop.f32.mrf.mxu0
        %v6483 = vadd.f32 0.0, %v6482
        %v6484 = vpop.f32.mrf.mxu0
        %v6485 = vpop.f32.mrf.mxu0
        %v6486 = vadd.f32 0.0, %v6485
        %v6487 = vpop.f32.mrf.mxu0
        %6488 = vmatprep.mubr.bf16.mxu0 %v5665
        %6489 = vmatmul.mubr.bf16.gmra.mxu0 %v5664
        %v6490 = vpop.f32.mrf.mxu0
        %v6491 = vadd.f32 0.0, %v6490
        %v6492 = vpop.f32.mrf.mxu0
        %v6493 = vpop.f32.mrf.mxu0
        %v6494 = vadd.f32 0.0, %v6493
        %v6495 = vpop.f32.mrf.mxu0
        %6496 = vmatprep.mubr.bf16.mxu0 %v5675
        %6497 = vmatmul.mubr.bf16.gmra.mxu0 %v5674
        %v6498 = vpop.f32.mrf.mxu0
        %v6499 = vadd.f32 0.0, %v6498
        %v6500 = vpop.f32.mrf.mxu0
        %v6501 = vpop.f32.mrf.mxu0
        %v6502 = vadd.f32 0.0, %v6501
        %v6503 = vpop.f32.mrf.mxu0
        %6504 = vmatprep.mubr.bf16.mxu0 %v5685
        %6505 = vmatmul.mubr.bf16.gmra.mxu0 %v5684
        %v6506 = vpop.f32.mrf.mxu0
        %v6507 = vadd.f32 0.0, %v6506
        %v6508 = vpop.f32.mrf.mxu0
        %v6509 = vpop.f32.mrf.mxu0
        %v6510 = vadd.f32 0.0, %v6509
        %v6511 = vpop.f32.mrf.mxu0
        %6512 = vmatprep.mubr.bf16.mxu0 %v5695
        %6513 = vmatmul.mubr.bf16.gmra.mxu0 %v5694
        %v6514 = vpop.f32.mrf.mxu0
        %v6515 = vadd.f32 0.0, %v6514
        %v6516 = vpop.f32.mrf.mxu0
        %v6517 = vpop.f32.mrf.mxu0
        %v6518 = vadd.f32 0.0, %v6517
        %v6519 = vpop.f32.mrf.mxu0
        %6520 = vmatprep.mubr.bf16.mxu0 %v5705
        %6521 = vmatmul.mubr.bf16.gmra.mxu0 %v5704
        %v6522 = vpop.f32.mrf.mxu0
        %v6523 = vadd.f32 0.0, %v6522
        %v6524 = vpop.f32.mrf.mxu0
        %v6525 = vpop.f32.mrf.mxu0
        %v6526 = vadd.f32 0.0, %v6525
        %v6527 = vpop.f32.mrf.mxu0
        %6528 = vmatprep.mubr.bf16.mxu0 %v5715
        %6529 = vmatmul.mubr.bf16.gmra.mxu0 %v5714
        %v6530 = vpop.f32.mrf.mxu0
        %v6531 = vadd.f32 0.0, %v6530
        %v6532 = vpop.f32.mrf.mxu0
        %v6533 = vpop.f32.mrf.mxu0
        %v6534 = vadd.f32 0.0, %v6533
        %v6535 = vpop.f32.mrf.mxu0
        %6536 = vmatprep.mubr.bf16.mxu0 %v5725
        %6537 = vmatmul.mubr.bf16.gmra.mxu0 %v5724
        %v6538 = vpop.f32.mrf.mxu0
        %v6539 = vadd.f32 0.0, %v6538
        %v6540 = vpop.f32.mrf.mxu0
        %v6541 = vpop.f32.mrf.mxu0
        %v6542 = vadd.f32 0.0, %v6541
        %v6543 = vpop.f32.mrf.mxu0
        %6544 = vmatprep.mubr.bf16.mxu0 %v5735
        %6545 = vmatmul.mubr.bf16.gmra.mxu0 %v5734
        %v6546 = vpop.f32.mrf.mxu0
        %v6547 = vadd.f32 0.0, %v6546
        %v6548 = vpop.f32.mrf.mxu0
        %v6549 = vpop.f32.mrf.mxu0
        %v6550 = vadd.f32 0.0, %v6549
        %v6551 = vpop.f32.mrf.mxu0
        %6552 = vmatprep.mubr.bf16.mxu0 %v5745
        %6553 = vmatmul.mubr.bf16.gmra.mxu0 %v5744
        %v6554 = vpop.f32.mrf.mxu0
        %v6555 = vadd.f32 0.0, %v6554
        %v6556 = vpop.f32.mrf.mxu0
        %v6557 = vpop.f32.mrf.mxu0
        %v6558 = vadd.f32 0.0, %v6557
        %v6559 = vpop.f32.mrf.mxu0
        %6560 = vmatprep.mubr.bf16.mxu0 %v5755
        %6561 = vmatmul.mubr.bf16.gmra.mxu0 %v5754
        %v6562 = vpop.f32.mrf.mxu0
        %v6563 = vadd.f32 0.0, %v6562
        %v6564 = vpop.f32.mrf.mxu0
        %v6565 = vpop.f32.mrf.mxu0
        %v6566 = vadd.f32 0.0, %v6565
        %v6567 = vpop.f32.mrf.mxu0
        %6568 = vmatprep.mubr.bf16.mxu0 %v5765
        %6569 = vmatmul.mubr.bf16.gmra.mxu0 %v5764
        %v6570 = vpop.f32.mrf.mxu0
        %v6571 = vadd.f32 0.0, %v6570
        %v6572 = vpop.f32.mrf.mxu0
        %v6573 = vpop.f32.mrf.mxu0
        %v6574 = vadd.f32 0.0, %v6573
        %v6575 = vpop.f32.mrf.mxu0
        %6576 = vmatprep.mubr.bf16.mxu0 %v5775
        %6577 = vmatmul.mubr.bf16.gmra.mxu0 %v5774
        %v6578 = vpop.f32.mrf.mxu0
        %v6579 = vadd.f32 0.0, %v6578
        %v6580 = vpop.f32.mrf.mxu0
        %v6581 = vpop.f32.mrf.mxu0
        %v6582 = vadd.f32 0.0, %v6581
        %v6583 = vpop.f32.mrf.mxu0
        %6584 = vdwg.mxu0
        %6585 = vmatprep.subr.bf16.mxu0 0
        %6586 = vmatpush1.bf16.msra.mxu0 %v6287
        %6587 = vmatprep.subr.bf16.mxu0 0
        %6588 = vmatpush1.bf16.msra.mxu0 %v6286
        %6589 = vmatprep.subr.bf16.mxu0 0
        %6590 = vmatpush1.bf16.msra.mxu0 %v6285
        %6591 = vmatprep.subr.bf16.mxu0 0
        %6592 = vmatpush1.bf16.msra.mxu0 %v6284
        %6593 = vmatprep.subr.bf16.mxu0 0
        %6594 = vmatpush1.bf16.msra.mxu0 %v6283
        %6595 = vmatprep.subr.bf16.mxu0 0
        %6596 = vmatpush1.bf16.msra.mxu0 %v6282
        %6597 = vmatprep.subr.bf16.mxu0 0
        %6598 = vmatpush1.bf16.msra.mxu0 %v6281
        %6599 = vmatprep.subr.bf16.mxu0 0
        %6600 = vmatpush1.bf16.msra.mxu0 %v6280
        %6601 = vmatprep.subr.bf16.mxu0 0
        %6602 = vmatpush2.bf16.msra.mxu0 %v6295
        %6603 = vmatprep.subr.bf16.mxu0 0
        %6604 = vmatpush2.bf16.msra.mxu0 %v6294
        %6605 = vmatprep.subr.bf16.mxu0 0
        %6606 = vmatpush2.bf16.msra.mxu0 %v6293
        %6607 = vmatprep.subr.bf16.mxu0 0
        %6608 = vmatpush2.bf16.msra.mxu0 %v6292
        %6609 = vmatprep.subr.bf16.mxu0 0
        %6610 = vmatpush2.bf16.msra.mxu0 %v6291
        %6611 = vmatprep.subr.bf16.mxu0 0
        %6612 = vmatpush2.bf16.msra.mxu0 %v6290
        %6613 = vmatprep.subr.bf16.mxu0 0
        %6614 = vmatpush2.bf16.msra.mxu0 %v6289
        %6615 = vmatprep.subr.bf16.mxu0 0
        %6616 = vmatpush2.bf16.msra.mxu0 %v6288
        %6617 = vmatprep.mubr.bf16.mxu0 %v5627
        %6618 = vmatmul.mubr.bf16.gmra.mxu0 %v5626
        %v6619 = vpop.f32.mrf.mxu0
        %v6620 = vadd.f32 %v6459, %v6619
        %v6621 = vpop.f32.mrf.mxu0
        %v6622 = vpop.f32.mrf.mxu0
        %v6623 = vadd.f32 %v6462, %v6622
        %v6624 = vpop.f32.mrf.mxu0
        %6625 = vmatprep.mubr.bf16.mxu0 %v5637
        %6626 = vmatmul.mubr.bf16.gmra.mxu0 %v5636
        %v6627 = vpop.f32.mrf.mxu0
        %v6628 = vadd.f32 %v6467, %v6627
        %v6629 = vpop.f32.mrf.mxu0
        %v6630 = vpop.f32.mrf.mxu0
        %v6631 = vadd.f32 %v6470, %v6630
        %v6632 = vpop.f32.mrf.mxu0
        %6633 = vmatprep.mubr.bf16.mxu0 %v5647
        %6634 = vmatmul.mubr.bf16.gmra.mxu0 %v5646
        %v6635 = vpop.f32.mrf.mxu0
        %v6636 = vadd.f32 %v6475, %v6635
        %v6637 = vpop.f32.mrf.mxu0
        %v6638 = vpop.f32.mrf.mxu0
        %v6639 = vadd.f32 %v6478, %v6638
        %v6640 = vpop.f32.mrf.mxu0
        %6641 = vmatprep.mubr.bf16.mxu0 %v5657
        %6642 = vmatmul.mubr.bf16.gmra.mxu0 %v5656
        %v6643 = vpop.f32.mrf.mxu0
        %v6644 = vadd.f32 %v6483, %v6643
        %v6645 = vpop.f32.mrf.mxu0
        %v6646 = vpop.f32.mrf.mxu0
        %v6647 = vadd.f32 %v6486, %v6646
        %v6648 = vpop.f32.mrf.mxu0
        %6649 = vmatprep.mubr.bf16.mxu0 %v5667
        %6650 = vmatmul.mubr.bf16.gmra.mxu0 %v5666
        %v6651 = vpop.f32.mrf.mxu0
        %v6652 = vadd.f32 %v6491, %v6651
        %v6653 = vpop.f32.mrf.mxu0
        %v6654 = vpop.f32.mrf.mxu0
        %v6655 = vadd.f32 %v6494, %v6654
        %v6656 = vpop.f32.mrf.mxu0
        %6657 = vmatprep.mubr.bf16.mxu0 %v5677
        %6658 = vmatmul.mubr.bf16.gmra.mxu0 %v5676
        %v6659 = vpop.f32.mrf.mxu0
        %v6660 = vadd.f32 %v6499, %v6659
        %v6661 = vpop.f32.mrf.mxu0
        %v6662 = vpop.f32.mrf.mxu0
        %v6663 = vadd.f32 %v6502, %v6662
        %v6664 = vpop.f32.mrf.mxu0
        %6665 = vmatprep.mubr.bf16.mxu0 %v5687
        %6666 = vmatmul.mubr.bf16.gmra.mxu0 %v5686
        %v6667 = vpop.f32.mrf.mxu0
        %v6668 = vadd.f32 %v6507, %v6667
        %v6669 = vpop.f32.mrf.mxu0
        %v6670 = vpop.f32.mrf.mxu0
        %v6671 = vadd.f32 %v6510, %v6670
        %v6672 = vpop.f32.mrf.mxu0
        %6673 = vmatprep.mubr.bf16.mxu0 %v5697
        %6674 = vmatmul.mubr.bf16.gmra.mxu0 %v5696
        %v6675 = vpop.f32.mrf.mxu0
        %v6676 = vadd.f32 %v6515, %v6675
        %v6677 = vpop.f32.mrf.mxu0
        %v6678 = vpop.f32.mrf.mxu0
        %v6679 = vadd.f32 %v6518, %v6678
        %v6680 = vpop.f32.mrf.mxu0
        %6681 = vmatprep.mubr.bf16.mxu0 %v5707
        %6682 = vmatmul.mubr.bf16.gmra.mxu0 %v5706
        %v6683 = vpop.f32.mrf.mxu0
        %v6684 = vadd.f32 %v6523, %v6683
        %v6685 = vpop.f32.mrf.mxu0
        %v6686 = vpop.f32.mrf.mxu0
        %v6687 = vadd.f32 %v6526, %v6686
        %v6688 = vpop.f32.mrf.mxu0
        %6689 = vmatprep.mubr.bf16.mxu0 %v5717
        %6690 = vmatmul.mubr.bf16.gmra.mxu0 %v5716
        %v6691 = vpop.f32.mrf.mxu0
        %v6692 = vadd.f32 %v6531, %v6691
        %v6693 = vpop.f32.mrf.mxu0
        %v6694 = vpop.f32.mrf.mxu0
        %v6695 = vadd.f32 %v6534, %v6694
        %v6696 = vpop.f32.mrf.mxu0
        %6697 = vmatprep.mubr.bf16.mxu0 %v5727
        %6698 = vmatmul.mubr.bf16.gmra.mxu0 %v5726
        %v6699 = vpop.f32.mrf.mxu0
        %v6700 = vadd.f32 %v6539, %v6699
        %v6701 = vpop.f32.mrf.mxu0
        %v6702 = vpop.f32.mrf.mxu0
        %v6703 = vadd.f32 %v6542, %v6702
        %v6704 = vpop.f32.mrf.mxu0
        %6705 = vmatprep.mubr.bf16.mxu0 %v5737
        %6706 = vmatmul.mubr.bf16.gmra.mxu0 %v5736
        %v6707 = vpop.f32.mrf.mxu0
        %v6708 = vadd.f32 %v6547, %v6707
        %v6709 = vpop.f32.mrf.mxu0
        %v6710 = vpop.f32.mrf.mxu0
        %v6711 = vadd.f32 %v6550, %v6710
        %v6712 = vpop.f32.mrf.mxu0
        %6713 = vmatprep.mubr.bf16.mxu0 %v5747
        %6714 = vmatmul.mubr.bf16.gmra.mxu0 %v5746
        %v6715 = vpop.f32.mrf.mxu0
        %v6716 = vadd.f32 %v6555, %v6715
        %v6717 = vpop.f32.mrf.mxu0
        %v6718 = vpop.f32.mrf.mxu0
        %v6719 = vadd.f32 %v6558, %v6718
        %v6720 = vpop.f32.mrf.mxu0
        %6721 = vmatprep.mubr.bf16.mxu0 %v5757
        %6722 = vmatmul.mubr.bf16.gmra.mxu0 %v5756
        %v6723 = vpop.f32.mrf.mxu0
        %v6724 = vadd.f32 %v6563, %v6723
        %v6725 = vpop.f32.mrf.mxu0
        %v6726 = vpop.f32.mrf.mxu0
        %v6727 = vadd.f32 %v6566, %v6726
        %v6728 = vpop.f32.mrf.mxu0
        %6729 = vmatprep.mubr.bf16.mxu0 %v5767
        %6730 = vmatmul.mubr.bf16.gmra.mxu0 %v5766
        %v6731 = vpop.f32.mrf.mxu0
        %v6732 = vadd.f32 %v6571, %v6731
        %v6733 = vpop.f32.mrf.mxu0
        %v6734 = vpop.f32.mrf.mxu0
        %v6735 = vadd.f32 %v6574, %v6734
        %v6736 = vpop.f32.mrf.mxu0
        %6737 = vmatprep.mubr.bf16.mxu0 %v5777
        %6738 = vmatmul.mubr.bf16.gmra.mxu0 %v5776
        %v6739 = vpop.f32.mrf.mxu0
        %v6740 = vadd.f32 %v6579, %v6739
        %v6741 = vpop.f32.mrf.mxu0
        %v6742 = vpop.f32.mrf.mxu0
        %v6743 = vadd.f32 %v6582, %v6742
        %v6744 = vpop.f32.mrf.mxu0
        %6745 = vdwg.mxu0
        %6746 = vmatprep.subr.bf16.mxu0 0
        %6747 = vmatpush1.bf16.msra.mxu0 %v6303
        %6748 = vmatprep.subr.bf16.mxu0 0
        %6749 = vmatpush1.bf16.msra.mxu0 %v6302
        %6750 = vmatprep.subr.bf16.mxu0 0
        %6751 = vmatpush1.bf16.msra.mxu0 %v6301
        %6752 = vmatprep.subr.bf16.mxu0 0
        %6753 = vmatpush1.bf16.msra.mxu0 %v6300
        %6754 = vmatprep.subr.bf16.mxu0 0
        %6755 = vmatpush1.bf16.msra.mxu0 %v6299
        %6756 = vmatprep.subr.bf16.mxu0 0
        %6757 = vmatpush1.bf16.msra.mxu0 %v6298
        %6758 = vmatprep.subr.bf16.mxu0 0
        %6759 = vmatpush1.bf16.msra.mxu0 %v6297
        %6760 = vmatprep.subr.bf16.mxu0 0
        %6761 = vmatpush1.bf16.msra.mxu0 %v6296
        %6762 = vmatprep.subr.bf16.mxu0 0
        %6763 = vmatpush2.bf16.msra.mxu0 %v6311
        %6764 = vmatprep.subr.bf16.mxu0 0
        %6765 = vmatpush2.bf16.msra.mxu0 %v6310
        %6766 = vmatprep.subr.bf16.mxu0 0
        %6767 = vmatpush2.bf16.msra.mxu0 %v6309
        %6768 = vmatprep.subr.bf16.mxu0 0
        %6769 = vmatpush2.bf16.msra.mxu0 %v6308
        %6770 = vmatprep.subr.bf16.mxu0 0
        %6771 = vmatpush2.bf16.msra.mxu0 %v6307
        %6772 = vmatprep.subr.bf16.mxu0 0
        %6773 = vmatpush2.bf16.msra.mxu0 %v6306
        %6774 = vmatprep.subr.bf16.mxu0 0
        %6775 = vmatpush2.bf16.msra.mxu0 %v6305
        %6776 = vmatprep.subr.bf16.mxu0 0
        %6777 = vmatpush2.bf16.msra.mxu0 %v6304
        %6778 = vmatprep.mubr.bf16.mxu0 %v5629
        %6779 = vmatmul.mubr.bf16.gmra.mxu0 %v5628
        %v6780 = vpop.f32.mrf.mxu0
        %v6781 = vadd.f32 %v6620, %v6780
        %v6782 = vpop.f32.mrf.mxu0
        %v6783 = vpop.f32.mrf.mxu0
        %v6784 = vadd.f32 %v6623, %v6783
        %v6785 = vpop.f32.mrf.mxu0
        %6786 = vmatprep.mubr.bf16.mxu0 %v5639
        %6787 = vmatmul.mubr.bf16.gmra.mxu0 %v5638
        %v6788 = vpop.f32.mrf.mxu0
        %v6789 = vadd.f32 %v6628, %v6788
        %v6790 = vpop.f32.mrf.mxu0
        %v6791 = vpop.f32.mrf.mxu0
        %v6792 = vadd.f32 %v6631, %v6791
        %v6793 = vpop.f32.mrf.mxu0
        %6794 = vmatprep.mubr.bf16.mxu0 %v5649
        %6795 = vmatmul.mubr.bf16.gmra.mxu0 %v5648
        %v6796 = vpop.f32.mrf.mxu0
        %v6797 = vadd.f32 %v6636, %v6796
        %v6798 = vpop.f32.mrf.mxu0
        %v6799 = vpop.f32.mrf.mxu0
        %v6800 = vadd.f32 %v6639, %v6799
        %v6801 = vpop.f32.mrf.mxu0
        %6802 = vmatprep.mubr.bf16.mxu0 %v5659
        %6803 = vmatmul.mubr.bf16.gmra.mxu0 %v5658
        %v6804 = vpop.f32.mrf.mxu0
        %v6805 = vadd.f32 %v6644, %v6804
        %v6806 = vpop.f32.mrf.mxu0
        %v6807 = vpop.f32.mrf.mxu0
        %v6808 = vadd.f32 %v6647, %v6807
        %v6809 = vpop.f32.mrf.mxu0
        %6810 = vmatprep.mubr.bf16.mxu0 %v5669
        %6811 = vmatmul.mubr.bf16.gmra.mxu0 %v5668
        %v6812 = vpop.f32.mrf.mxu0
        %v6813 = vadd.f32 %v6652, %v6812
        %v6814 = vpop.f32.mrf.mxu0
        %v6815 = vpop.f32.mrf.mxu0
        %v6816 = vadd.f32 %v6655, %v6815
        %v6817 = vpop.f32.mrf.mxu0
        %6818 = vmatprep.mubr.bf16.mxu0 %v5679
        %6819 = vmatmul.mubr.bf16.gmra.mxu0 %v5678
        %v6820 = vpop.f32.mrf.mxu0
        %v6821 = vadd.f32 %v6660, %v6820
        %v6822 = vpop.f32.mrf.mxu0
        %v6823 = vpop.f32.mrf.mxu0
        %v6824 = vadd.f32 %v6663, %v6823
        %v6825 = vpop.f32.mrf.mxu0
        %6826 = vmatprep.mubr.bf16.mxu0 %v5689
        %6827 = vmatmul.mubr.bf16.gmra.mxu0 %v5688
        %v6828 = vpop.f32.mrf.mxu0
        %v6829 = vadd.f32 %v6668, %v6828
        %v6830 = vpop.f32.mrf.mxu0
        %v6831 = vpop.f32.mrf.mxu0
        %v6832 = vadd.f32 %v6671, %v6831
        %v6833 = vpop.f32.mrf.mxu0
        %6834 = vmatprep.mubr.bf16.mxu0 %v5699
        %6835 = vmatmul.mubr.bf16.gmra.mxu0 %v5698
        %v6836 = vpop.f32.mrf.mxu0
        %v6837 = vadd.f32 %v6676, %v6836
        %v6838 = vpop.f32.mrf.mxu0
        %v6839 = vpop.f32.mrf.mxu0
        %v6840 = vadd.f32 %v6679, %v6839
        %v6841 = vpop.f32.mrf.mxu0
        %6842 = vmatprep.mubr.bf16.mxu0 %v5709
        %6843 = vmatmul.mubr.bf16.gmra.mxu0 %v5708
        %v6844 = vpop.f32.mrf.mxu0
        %v6845 = vadd.f32 %v6684, %v6844
        %v6846 = vpop.f32.mrf.mxu0
        %v6847 = vpop.f32.mrf.mxu0
        %v6848 = vadd.f32 %v6687, %v6847
        %v6849 = vpop.f32.mrf.mxu0
        %6850 = vmatprep.mubr.bf16.mxu0 %v5719
        %6851 = vmatmul.mubr.bf16.gmra.mxu0 %v5718
        %v6852 = vpop.f32.mrf.mxu0
        %v6853 = vadd.f32 %v6692, %v6852
        %v6854 = vpop.f32.mrf.mxu0
        %v6855 = vpop.f32.mrf.mxu0
        %v6856 = vadd.f32 %v6695, %v6855
        %v6857 = vpop.f32.mrf.mxu0
        %6858 = vmatprep.mubr.bf16.mxu0 %v5729
        %6859 = vmatmul.mubr.bf16.gmra.mxu0 %v5728
        %v6860 = vpop.f32.mrf.mxu0
        %v6861 = vadd.f32 %v6700, %v6860
        %v6862 = vpop.f32.mrf.mxu0
        %v6863 = vpop.f32.mrf.mxu0
        %v6864 = vadd.f32 %v6703, %v6863
        %v6865 = vpop.f32.mrf.mxu0
        %6866 = vmatprep.mubr.bf16.mxu0 %v5739
        %6867 = vmatmul.mubr.bf16.gmra.mxu0 %v5738
        %v6868 = vpop.f32.mrf.mxu0
        %v6869 = vadd.f32 %v6708, %v6868
        %v6870 = vpop.f32.mrf.mxu0
        %v6871 = vpop.f32.mrf.mxu0
        %v6872 = vadd.f32 %v6711, %v6871
        %v6873 = vpop.f32.mrf.mxu0
        %6874 = vmatprep.mubr.bf16.mxu0 %v5749
        %6875 = vmatmul.mubr.bf16.gmra.mxu0 %v5748
        %v6876 = vpop.f32.mrf.mxu0
        %v6877 = vadd.f32 %v6716, %v6876
        %v6878 = vpop.f32.mrf.mxu0
        %v6879 = vpop.f32.mrf.mxu0
        %v6880 = vadd.f32 %v6719, %v6879
        %v6881 = vpop.f32.mrf.mxu0
        %6882 = vmatprep.mubr.bf16.mxu0 %v5759
        %6883 = vmatmul.mubr.bf16.gmra.mxu0 %v5758
        %v6884 = vpop.f32.mrf.mxu0
        %v6885 = vadd.f32 %v6724, %v6884
        %v6886 = vpop.f32.mrf.mxu0
        %v6887 = vpop.f32.mrf.mxu0
        %v6888 = vadd.f32 %v6727, %v6887
        %v6889 = vpop.f32.mrf.mxu0
        %6890 = vmatprep.mubr.bf16.mxu0 %v5769
        %6891 = vmatmul.mubr.bf16.gmra.mxu0 %v5768
        %v6892 = vpop.f32.mrf.mxu0
        %v6893 = vadd.f32 %v6732, %v6892
        %v6894 = vpop.f32.mrf.mxu0
        %v6895 = vpop.f32.mrf.mxu0
        %v6896 = vadd.f32 %v6735, %v6895
        %v6897 = vpop.f32.mrf.mxu0
        %6898 = vmatprep.mubr.bf16.mxu0 %v5779
        %6899 = vmatmul.mubr.bf16.gmra.mxu0 %v5778
        %v6900 = vpop.f32.mrf.mxu0
        %v6901 = vadd.f32 %v6740, %v6900
        %v6902 = vpop.f32.mrf.mxu0
        %v6903 = vpop.f32.mrf.mxu0
        %v6904 = vadd.f32 %v6743, %v6903
        %v6905 = vpop.f32.mrf.mxu0
        %6906 = vdwg.mxu0
        %6907 = vmatprep.subr.bf16.mxu0 0
        %6908 = vmatpush1.bf16.msra.mxu0 %v6319
        %6909 = vmatprep.subr.bf16.mxu0 0
        %6910 = vmatpush1.bf16.msra.mxu0 %v6318
        %6911 = vmatprep.subr.bf16.mxu0 0
        %6912 = vmatpush1.bf16.msra.mxu0 %v6317
        %6913 = vmatprep.subr.bf16.mxu0 0
        %6914 = vmatpush1.bf16.msra.mxu0 %v6316
        %6915 = vmatprep.subr.bf16.mxu0 0
        %6916 = vmatpush1.bf16.msra.mxu0 %v6315
        %6917 = vmatprep.subr.bf16.mxu0 0
        %6918 = vmatpush1.bf16.msra.mxu0 %v6314
        %6919 = vmatprep.subr.bf16.mxu0 0
        %6920 = vmatpush1.bf16.msra.mxu0 %v6313
        %6921 = vmatprep.subr.bf16.mxu0 0
        %6922 = vmatpush1.bf16.msra.mxu0 %v6312
        %6923 = vmatprep.subr.bf16.mxu0 0
        %6924 = vmatpush2.bf16.msra.mxu0 %v6327
        %6925 = vmatprep.subr.bf16.mxu0 0
        %6926 = vmatpush2.bf16.msra.mxu0 %v6326
        %6927 = vmatprep.subr.bf16.mxu0 0
        %6928 = vmatpush2.bf16.msra.mxu0 %v6325
        %6929 = vmatprep.subr.bf16.mxu0 0
        %6930 = vmatpush2.bf16.msra.mxu0 %v6324
        %6931 = vmatprep.subr.bf16.mxu0 0
        %6932 = vmatpush2.bf16.msra.mxu0 %v6323
        %6933 = vmatprep.subr.bf16.mxu0 0
        %6934 = vmatpush2.bf16.msra.mxu0 %v6322
        %6935 = vmatprep.subr.bf16.mxu0 0
        %6936 = vmatpush2.bf16.msra.mxu0 %v6321
        %6937 = vmatprep.subr.bf16.mxu0 0
        %6938 = vmatpush2.bf16.msra.mxu0 %v6320
        %6939 = vmatprep.mubr.bf16.mxu0 %v5631
        %6940 = vmatmul.mubr.bf16.gmra.mxu0 %v5630
        %v6941 = vpop.f32.mrf.mxu0
        %v6942 = vadd.f32 %v6781, %v6941
        %v6943 = vpop.f32.mrf.mxu0
        %v6944 = vpop.f32.mrf.mxu0
        %v6945 = vadd.f32 %v6784, %v6944
        %v6946 = vpop.f32.mrf.mxu0
        %6947 = vmatprep.mubr.bf16.mxu0 %v5641
        %6948 = vmatmul.mubr.bf16.gmra.mxu0 %v5640
        %v6949 = vpop.f32.mrf.mxu0
        %v6950 = vadd.f32 %v6789, %v6949
        %v6951 = vpop.f32.mrf.mxu0
        %v6952 = vpop.f32.mrf.mxu0
        %v6953 = vadd.f32 %v6792, %v6952
        %v6954 = vpop.f32.mrf.mxu0
        %6955 = vmatprep.mubr.bf16.mxu0 %v5651
        %6956 = vmatmul.mubr.bf16.gmra.mxu0 %v5650
        %v6957 = vpop.f32.mrf.mxu0
        %v6958 = vadd.f32 %v6797, %v6957
        %v6959 = vpop.f32.mrf.mxu0
        %v6960 = vpop.f32.mrf.mxu0
        %v6961 = vadd.f32 %v6800, %v6960
        %v6962 = vpop.f32.mrf.mxu0
        %6963 = vmatprep.mubr.bf16.mxu0 %v5661
        %6964 = vmatmul.mubr.bf16.gmra.mxu0 %v5660
        %v6965 = vpop.f32.mrf.mxu0
        %v6966 = vadd.f32 %v6805, %v6965
        %v6967 = vpop.f32.mrf.mxu0
        %v6968 = vpop.f32.mrf.mxu0
        %v6969 = vadd.f32 %v6808, %v6968
        %v6970 = vpop.f32.mrf.mxu0
        %6971 = vmatprep.mubr.bf16.mxu0 %v5671
        %6972 = vmatmul.mubr.bf16.gmra.mxu0 %v5670
        %v6973 = vpop.f32.mrf.mxu0
        %v6974 = vadd.f32 %v6813, %v6973
        %v6975 = vpop.f32.mrf.mxu0
        %v6976 = vpop.f32.mrf.mxu0
        %v6977 = vadd.f32 %v6816, %v6976
        %v6978 = vpop.f32.mrf.mxu0
        %6979 = vmatprep.mubr.bf16.mxu0 %v5681
        %6980 = vmatmul.mubr.bf16.gmra.mxu0 %v5680
        %v6981 = vpop.f32.mrf.mxu0
        %v6982 = vadd.f32 %v6821, %v6981
        %v6983 = vpop.f32.mrf.mxu0
        %v6984 = vpop.f32.mrf.mxu0
        %v6985 = vadd.f32 %v6824, %v6984
        %v6986 = vpop.f32.mrf.mxu0
        %6987 = vmatprep.mubr.bf16.mxu0 %v5691
        %6988 = vmatmul.mubr.bf16.gmra.mxu0 %v5690
        %v6989 = vpop.f32.mrf.mxu0
        %v6990 = vadd.f32 %v6829, %v6989
        %v6991 = vpop.f32.mrf.mxu0
        %v6992 = vpop.f32.mrf.mxu0
        %v6993 = vadd.f32 %v6832, %v6992
        %v6994 = vpop.f32.mrf.mxu0
        %6995 = vmatprep.mubr.bf16.mxu0 %v5701
        %6996 = vmatmul.mubr.bf16.gmra.mxu0 %v5700
        %v6997 = vpop.f32.mrf.mxu0
        %v6998 = vadd.f32 %v6837, %v6997
        %v6999 = vpop.f32.mrf.mxu0
        %v7000 = vpop.f32.mrf.mxu0
        %v7001 = vadd.f32 %v6840, %v7000
        %v7002 = vpop.f32.mrf.mxu0
        %7003 = vmatprep.mubr.bf16.mxu0 %v5711
        %7004 = vmatmul.mubr.bf16.gmra.mxu0 %v5710
        %v7005 = vpop.f32.mrf.mxu0
        %v7006 = vadd.f32 %v6845, %v7005
        %v7007 = vpop.f32.mrf.mxu0
        %v7008 = vpop.f32.mrf.mxu0
        %v7009 = vadd.f32 %v6848, %v7008
        %v7010 = vpop.f32.mrf.mxu0
        %7011 = vmatprep.mubr.bf16.mxu0 %v5721
        %7012 = vmatmul.mubr.bf16.gmra.mxu0 %v5720
        %v7013 = vpop.f32.mrf.mxu0
        %v7014 = vadd.f32 %v6853, %v7013
        %v7015 = vpop.f32.mrf.mxu0
        %v7016 = vpop.f32.mrf.mxu0
        %v7017 = vadd.f32 %v6856, %v7016
        %v7018 = vpop.f32.mrf.mxu0
        %7019 = vmatprep.mubr.bf16.mxu0 %v5731
        %7020 = vmatmul.mubr.bf16.gmra.mxu0 %v5730
        %v7021 = vpop.f32.mrf.mxu0
        %v7022 = vadd.f32 %v6861, %v7021
        %v7023 = vpop.f32.mrf.mxu0
        %v7024 = vpop.f32.mrf.mxu0
        %v7025 = vadd.f32 %v6864, %v7024
        %v7026 = vpop.f32.mrf.mxu0
        %7027 = vmatprep.mubr.bf16.mxu0 %v5741
        %7028 = vmatmul.mubr.bf16.gmra.mxu0 %v5740
        %v7029 = vpop.f32.mrf.mxu0
        %v7030 = vadd.f32 %v6869, %v7029
        %v7031 = vpop.f32.mrf.mxu0
        %v7032 = vpop.f32.mrf.mxu0
        %v7033 = vadd.f32 %v6872, %v7032
        %v7034 = vpop.f32.mrf.mxu0
        %7035 = vmatprep.mubr.bf16.mxu0 %v5751
        %7036 = vmatmul.mubr.bf16.gmra.mxu0 %v5750
        %v7037 = vpop.f32.mrf.mxu0
        %v7038 = vadd.f32 %v6877, %v7037
        %v7039 = vpop.f32.mrf.mxu0
        %v7040 = vpop.f32.mrf.mxu0
        %v7041 = vadd.f32 %v6880, %v7040
        %v7042 = vpop.f32.mrf.mxu0
        %7043 = vmatprep.mubr.bf16.mxu0 %v5761
        %7044 = vmatmul.mubr.bf16.gmra.mxu0 %v5760
        %v7045 = vpop.f32.mrf.mxu0
        %v7046 = vadd.f32 %v6885, %v7045
        %v7047 = vpop.f32.mrf.mxu0
        %v7048 = vpop.f32.mrf.mxu0
        %v7049 = vadd.f32 %v6888, %v7048
        %v7050 = vpop.f32.mrf.mxu0
        %7051 = vmatprep.mubr.bf16.mxu0 %v5771
        %7052 = vmatmul.mubr.bf16.gmra.mxu0 %v5770
        %v7053 = vpop.f32.mrf.mxu0
        %v7054 = vadd.f32 %v6893, %v7053
        %v7055 = vpop.f32.mrf.mxu0
        %v7056 = vpop.f32.mrf.mxu0
        %v7057 = vadd.f32 %v6896, %v7056
        %v7058 = vpop.f32.mrf.mxu0
        %7059 = vmatprep.mubr.bf16.mxu0 %v5781
        %7060 = vmatmul.mubr.bf16.gmra.mxu0 %v5780
        %v7061 = vpop.f32.mrf.mxu0
        %v7062 = vadd.f32 %v6901, %v7061
        %v7063 = vpop.f32.mrf.mxu0
        %v7064 = vpop.f32.mrf.mxu0
        %v7065 = vadd.f32 %v6904, %v7064
        %v7066 = vpop.f32.mrf.mxu0
        %7067 = vdwg.mxu0
        %7068 = vmatprep.subr.bf16.mxu0 0
        %7069 = vmatpush1.bf16.msra.mxu0 %v6335
        %7070 = vmatprep.subr.bf16.mxu0 0
        %7071 = vmatpush1.bf16.msra.mxu0 %v6334
        %7072 = vmatprep.subr.bf16.mxu0 0
        %7073 = vmatpush1.bf16.msra.mxu0 %v6333
        %7074 = vmatprep.subr.bf16.mxu0 0
        %7075 = vmatpush1.bf16.msra.mxu0 %v6332
        %7076 = vmatprep.subr.bf16.mxu0 0
        %7077 = vmatpush1.bf16.msra.mxu0 %v6331
        %7078 = vmatprep.subr.bf16.mxu0 0
        %7079 = vmatpush1.bf16.msra.mxu0 %v6330
        %7080 = vmatprep.subr.bf16.mxu0 0
        %7081 = vmatpush1.bf16.msra.mxu0 %v6329
        %7082 = vmatprep.subr.bf16.mxu0 0
        %7083 = vmatpush1.bf16.msra.mxu0 %v6328
        %7084 = vmatprep.subr.bf16.mxu0 0
        %7085 = vmatpush2.bf16.msra.mxu0 %v6343
        %7086 = vmatprep.subr.bf16.mxu0 0
        %7087 = vmatpush2.bf16.msra.mxu0 %v6342
        %7088 = vmatprep.subr.bf16.mxu0 0
        %7089 = vmatpush2.bf16.msra.mxu0 %v6341
        %7090 = vmatprep.subr.bf16.mxu0 0
        %7091 = vmatpush2.bf16.msra.mxu0 %v6340
        %7092 = vmatprep.subr.bf16.mxu0 0
        %7093 = vmatpush2.bf16.msra.mxu0 %v6339
        %7094 = vmatprep.subr.bf16.mxu0 0
        %7095 = vmatpush2.bf16.msra.mxu0 %v6338
        %7096 = vmatprep.subr.bf16.mxu0 0
        %7097 = vmatpush2.bf16.msra.mxu0 %v6337
        %7098 = vmatprep.subr.bf16.mxu0 0
        %7099 = vmatpush2.bf16.msra.mxu0 %v6336
        %7100 = vmatprep.mubr.bf16.mxu0 %v5633
        %7101 = vmatmul.mubr.bf16.gmra.mxu0 %v5632
        %v7102 = vpop.f32.mrf.mxu0
        %v7103 = vadd.f32 %v6942, %v7102
        %v7104 = vpop.f32.mrf.mxu0
        %v7105 = vpop.f32.mrf.mxu0
        %v7106 = vadd.f32 %v6945, %v7105
        %v7107 = vpop.f32.mrf.mxu0
        %7108 = vmatprep.mubr.bf16.mxu0 %v5643
        %7109 = vmatmul.mubr.bf16.gmra.mxu0 %v5642
        %v7110 = vpop.f32.mrf.mxu0
        %v7111 = vadd.f32 %v6950, %v7110
        %v7112 = vpop.f32.mrf.mxu0
        %v7113 = vpop.f32.mrf.mxu0
        %v7114 = vadd.f32 %v6953, %v7113
        %v7115 = vpop.f32.mrf.mxu0
        %7116 = vmatprep.mubr.bf16.mxu0 %v5653
        %7117 = vmatmul.mubr.bf16.gmra.mxu0 %v5652
        %v7118 = vpop.f32.mrf.mxu0
        %v7119 = vadd.f32 %v6958, %v7118
        %v7120 = vpop.f32.mrf.mxu0
        %v7121 = vpop.f32.mrf.mxu0
        %v7122 = vadd.f32 %v6961, %v7121
        %v7123 = vpop.f32.mrf.mxu0
        %7124 = vmatprep.mubr.bf16.mxu0 %v5663
        %7125 = vmatmul.mubr.bf16.gmra.mxu0 %v5662
        %v7126 = vpop.f32.mrf.mxu0
        %v7127 = vadd.f32 %v6966, %v7126
        %v7128 = vpop.f32.mrf.mxu0
        %v7129 = vpop.f32.mrf.mxu0
        %v7130 = vadd.f32 %v6969, %v7129
        %v7131 = vpop.f32.mrf.mxu0
        %7132 = vmatprep.mubr.bf16.mxu0 %v5673
        %7133 = vmatmul.mubr.bf16.gmra.mxu0 %v5672
        %v7134 = vpop.f32.mrf.mxu0
        %v7135 = vadd.f32 %v6974, %v7134
        %v7136 = vpop.f32.mrf.mxu0
        %v7137 = vpop.f32.mrf.mxu0
        %v7138 = vadd.f32 %v6977, %v7137
        %v7139 = vpop.f32.mrf.mxu0
        %7140 = vmatprep.mubr.bf16.mxu0 %v5683
        %7141 = vmatmul.mubr.bf16.gmra.mxu0 %v5682
        %v7142 = vpop.f32.mrf.mxu0
        %v7143 = vadd.f32 %v6982, %v7142
        %v7144 = vpop.f32.mrf.mxu0
        %v7145 = vpop.f32.mrf.mxu0
        %v7146 = vadd.f32 %v6985, %v7145
        %v7147 = vpop.f32.mrf.mxu0
        %7148 = vmatprep.mubr.bf16.mxu0 %v5693
        %7149 = vmatmul.mubr.bf16.gmra.mxu0 %v5692
        %v7150 = vpop.f32.mrf.mxu0
        %v7151 = vadd.f32 %v6990, %v7150
        %v7152 = vpop.f32.mrf.mxu0
        %v7153 = vpop.f32.mrf.mxu0
        %v7154 = vadd.f32 %v6993, %v7153
        %v7155 = vpop.f32.mrf.mxu0
        %7156 = vmatprep.mubr.bf16.mxu0 %v5703
        %7157 = vmatmul.mubr.bf16.gmra.mxu0 %v5702
        %v7158 = vpop.f32.mrf.mxu0
        %v7159 = vadd.f32 %v6998, %v7158
        %v7160 = vpop.f32.mrf.mxu0
        %v7161 = vpop.f32.mrf.mxu0
        %v7162 = vadd.f32 %v7001, %v7161
        %v7163 = vpop.f32.mrf.mxu0
        %7164 = vmatprep.mubr.bf16.mxu0 %v5713
        %7165 = vmatmul.mubr.bf16.gmra.mxu0 %v5712
        %v7166 = vpop.f32.mrf.mxu0
        %v7167 = vadd.f32 %v7006, %v7166
        %v7168 = vpop.f32.mrf.mxu0
        %v7169 = vpop.f32.mrf.mxu0
        %v7170 = vadd.f32 %v7009, %v7169
        %v7171 = vpop.f32.mrf.mxu0
        %7172 = vmatprep.mubr.bf16.mxu0 %v5723
        %7173 = vmatmul.mubr.bf16.gmra.mxu0 %v5722
        %v7174 = vpop.f32.mrf.mxu0
        %v7175 = vadd.f32 %v7014, %v7174
        %v7176 = vpop.f32.mrf.mxu0
        %v7177 = vpop.f32.mrf.mxu0
        %v7178 = vadd.f32 %v7017, %v7177
        %v7179 = vpop.f32.mrf.mxu0
        %7180 = vmatprep.mubr.bf16.mxu0 %v5733
        %7181 = vmatmul.mubr.bf16.gmra.mxu0 %v5732
        %v7182 = vpop.f32.mrf.mxu0
        %v7183 = vadd.f32 %v7022, %v7182
        %v7184 = vpop.f32.mrf.mxu0
        %v7185 = vpop.f32.mrf.mxu0
        %v7186 = vadd.f32 %v7025, %v7185
        %v7187 = vpop.f32.mrf.mxu0
        %7188 = vmatprep.mubr.bf16.mxu0 %v5743
        %7189 = vmatmul.mubr.bf16.gmra.mxu0 %v5742
        %v7190 = vpop.f32.mrf.mxu0
        %v7191 = vadd.f32 %v7030, %v7190
        %v7192 = vpop.f32.mrf.mxu0
        %v7193 = vpop.f32.mrf.mxu0
        %v7194 = vadd.f32 %v7033, %v7193
        %v7195 = vpop.f32.mrf.mxu0
        %7196 = vmatprep.mubr.bf16.mxu0 %v5753
        %7197 = vmatmul.mubr.bf16.gmra.mxu0 %v5752
        %v7198 = vpop.f32.mrf.mxu0
        %v7199 = vadd.f32 %v7038, %v7198
        %v7200 = vpop.f32.mrf.mxu0
        %v7201 = vpop.f32.mrf.mxu0
        %v7202 = vadd.f32 %v7041, %v7201
        %v7203 = vpop.f32.mrf.mxu0
        %7204 = vmatprep.mubr.bf16.mxu0 %v5763
        %7205 = vmatmul.mubr.bf16.gmra.mxu0 %v5762
        %v7206 = vpop.f32.mrf.mxu0
        %v7207 = vadd.f32 %v7046, %v7206
        %v7208 = vpop.f32.mrf.mxu0
        %v7209 = vpop.f32.mrf.mxu0
        %v7210 = vadd.f32 %v7049, %v7209
        %v7211 = vpop.f32.mrf.mxu0
        %7212 = vmatprep.mubr.bf16.mxu0 %v5773
        %7213 = vmatmul.mubr.bf16.gmra.mxu0 %v5772
        %v7214 = vpop.f32.mrf.mxu0
        %v7215 = vadd.f32 %v7054, %v7214
        %v7216 = vpop.f32.mrf.mxu0
        %v7217 = vpop.f32.mrf.mxu0
        %v7218 = vadd.f32 %v7057, %v7217
        %v7219 = vpop.f32.mrf.mxu0
        %7220 = vmatprep.mubr.bf16.mxu0 %v5783
        %7221 = vmatmul.mubr.bf16.gmra.mxu0 %v5782
        %v7222 = vpop.f32.mrf.mxu0
        %v7223 = vadd.f32 %v7062, %v7222
        %v7224 = vpop.f32.mrf.mxu0
        %v7225 = vpop.f32.mrf.mxu0
        %v7226 = vadd.f32 %v7065, %v7225
        %v7227 = vpop.f32.mrf.mxu0
        %7228 = vdwg.mxu0
        %7229 = vst [vmem:[%s325] sm:$0xff] %v7103
        %7230 = vst [vmem:[%s325 + $0x8] sm:$0xff] %v7106
        %7231 = vst [vmem:[%s325 + $0x10] sm:$0xff] %v7111
        %7232 = vst [vmem:[%s325 + $0x18] sm:$0xff] %v7114
        %7233 = vst [vmem:[%s325 + $0x20] sm:$0xff] %v7119
        %7234 = vst [vmem:[%s325 + $0x28] sm:$0xff] %v7122
        %7235 = vst [vmem:[%s325 + $0x30] sm:$0xff] %v7127
        %7236 = vst [vmem:[%s325 + $0x38] sm:$0xff] %v7130
        %7237 = vst [vmem:[%s325 + $0x40] sm:$0xff] %v7135
        %7238 = vst [vmem:[%s325 + $0x48] sm:$0xff] %v7138
        %7239 = vst [vmem:[%s325 + $0x50] sm:$0xff] %v7143
        %7240 = vst [vmem:[%s325 + $0x58] sm:$0xff] %v7146
        %7241 = vst [vmem:[%s325 + $0x60] sm:$0xff] %v7151
        %7242 = vst [vmem:[%s325 + $0x68] sm:$0xff] %v7154
        %7243 = vst [vmem:[%s325 + $0x70] sm:$0xff] %v7159
        %7244 = vst [vmem:[%s325 + $0x78] sm:$0xff] %v7162
        %7245 = vst [vmem:[%s325 + $0x80] sm:$0xff] %v7167
        %7246 = vst [vmem:[%s325 + $0x88] sm:$0xff] %v7170
        %7247 = vst [vmem:[%s325 + $0x90] sm:$0xff] %v7175
        %7248 = vst [vmem:[%s325 + $0x98] sm:$0xff] %v7178
        %7249 = vst [vmem:[%s325 + $0xa0] sm:$0xff] %v7183
        %7250 = vst [vmem:[%s325 + $0xa8] sm:$0xff] %v7186
        %7251 = vst [vmem:[%s325 + $0xb0] sm:$0xff] %v7191
        %7252 = vst [vmem:[%s325 + $0xb8] sm:$0xff] %v7194
        %7253 = vst [vmem:[%s325 + $0xc0] sm:$0xff] %v7199
        %7254 = vst [vmem:[%s325 + $0xc8] sm:$0xff] %v7202
        %7255 = vst [vmem:[%s325 + $0xd0] sm:$0xff] %v7207
        %7256 = vst [vmem:[%s325 + $0xd8] sm:$0xff] %v7210
        %7257 = vst [vmem:[%s325 + $0xe0] sm:$0xff] %v7215
        %7258 = vst [vmem:[%s325 + $0xe8] sm:$0xff] %v7218
        %7259 = vst [vmem:[%s325 + $0xf0] sm:$0xff] %v7223
        %7260 = vst [vmem:[%s325 + $0xf8] sm:$0xff] %v7226
        %s7261 = sand.u32 %s185, 1
        %s7262 = scalar_lea.sflag [#allocation7], %s7261
        %s7263 = sand.u32 %s185, 1
        %s7264 = smul.addr %s7263, 256
        %s7265 = scalar_lea.vmem [#allocation11], %s7264
        // Predicated region
        $region61: #{tpu_custom_call.1} parent=47 // pred_check
          %p7266 = pneg %p195
        $region62: #{tpu_custom_call.1} parent=47 // pred_check_branch
          %7268 = sbr.rel (%p7266) target = $region64
        $region63: #{tpu_custom_call.1} parent=47 // pred_region
          %s7270 = ssub.s32 4096, 4096
          %7271 = vsyncadd %s7262, %s7270
          %s7272 = smul.addr %s25, 32
          %s7273 = smul.addr %s7272, 128
          %s7274 = scalar_lea.hbm %s7, %s7273
          %s7275 = sshll.u32 %s7265, 4
          %s7276 = int_to_ptr.vmem [resolvable:$true] %s7275
          %7281 = dma.vmem_to_hbm [thread:$0]  %s7276, 4096, %s7274, %s7262, 128, 128, 8
        $region64: #{tpu_custom_call.1} parent=47 // pred_fallthru
          _
      $region48: #{tpu_custom_call.1} parent=5 // pred_fallthru
        _
      %p7282 = scmp.le.s32.totalorder 2, %s20
      // Predicated region
      $region65: #{tpu_custom_call.1} parent=5 // pred_check
        %p7283 = pneg %p7282
      $region66: #{tpu_custom_call.1} parent=5 // pred_check_branch
        %7285 = sbr.rel (%p7283) target = $region68
      $region67: #{tpu_custom_call.1} parent=5 // pred_region
        %s7286 = ssub.s32 %s20, 2
        // Predicated region
        $region69: #{tpu_custom_call.1} parent=67 // pred_check
          %p7287 = pneg %p201
        $region70: #{tpu_custom_call.1} parent=67 // pred_check_branch
          %7289 = sbr.rel (%p7287) target = $region72
        $region71: #{tpu_custom_call.1} parent=67 // pred_region
          %s7290 = sand.u32 %s186, 1
          %s7291 = scalar_lea.sflag [#allocation7], %s7290
          %s7292 = sand.u32 %s186, 1
          %s7293 = smul.addr %s7292, 256
          %s7294 = scalar_lea.vmem [#allocation11], %s7293
          %7295 = dma.done %s7291, 4096
        $region72: #{tpu_custom_call.1} parent=67 // pred_fallthru
          _
      $region68: #{tpu_custom_call.1} parent=5 // pred_fallthru
        _
    $region6: #{tpu_custom_call.1} parent=1 // loop_footer
      %s24 = sadd.s32 1, %s20
    $region7: #{tpu_custom_call.1} parent=1 // loop_footer_branch
      %19 = sbr.rel target = $region3
    $region8: #{tpu_custom_call.1} parent=1 // loop_exit
      _
    %7296 = vsyncpa [#allocation6], 1
    %s7297 = scalar_lea.sflag [#allocation6], 1
    %7298 = vsyncpa %s7297, 1
    %7299 = vsyncpa [#allocation9], 1
    %7300 = vsyncpa [#allocation7], 1
    %s7301 = scalar_lea.sflag [#allocation7], 1
    %7302 = vsyncpa %s7301, 1

</llo_original>
